<compile_context>
chip_gen: v7x
topology: tpu7x:2x2x1
jax: 0.10.0
libtpu: 0.0.40
codegen_flags: <defaults>
</compile_context>

<pallas_src>
import jax
import jax.numpy as jnp
from jax.experimental import pallas as pl
from jax.experimental.pallas import tpu as pltpu

IN_FEATURES = 28 * 28   # forced by x.view(-1, 28*28) in the reference forward
HIDDEN = 1200
OUT_DIM = 10            # MNIST classifier head (output_dim)

# lane-aligned padded sizes (multiples of 128)
IN_PAD = 896            # 784 -> 896
HIDDEN_PAD = 1280       # 1200 -> 1280
OUT_PAD = 128           # 10 -> 128


def bnn_mlp_kernel(x_ref, w1_hbm, b1_ref, w2_hbm, b2_ref, w3_hbm, b3_ref,
                   o_ref, w1_vmem, w2_vmem, w3_vmem, sem):
    """relu(relu(x@W1+b1)@W2+b2)@W3+b3 for one batch tile.

    Weights live in HBM (pl.ANY) and are copied once (grid step 0) into
    single-buffered VMEM scratch; W2/W3 waits are deferred until just before
    their matmuls so the DMAs overlap the earlier layers' compute.  x / W are
    bf16 on the MXU, accumulation + bias-add + ReLU are f32.
    """
    first = pl.program_id(0) == 0

    @pl.when(first)
    def _issue_and_wait_w1():
        pltpu.make_async_copy(w1_hbm, w1_vmem, sem.at[0]).start()
        pltpu.make_async_copy(w2_hbm, w2_vmem, sem.at[1]).start()
        pltpu.make_async_copy(w3_hbm, w3_vmem, sem.at[2]).start()
        pltpu.make_async_copy(w1_hbm, w1_vmem, sem.at[0]).wait()

    h1 = jnp.dot(x_ref[...], w1_vmem[...], preferred_element_type=jnp.float32)
    h1 = jnp.maximum(h1 + b1_ref[...], 0.0).astype(jnp.bfloat16)

    @pl.when(first)
    def _wait_w2():
        pltpu.make_async_copy(w2_hbm, w2_vmem, sem.at[1]).wait()

    h2 = jnp.dot(h1, w2_vmem[...], preferred_element_type=jnp.float32)
    h2 = jnp.maximum(h2 + b2_ref[...], 0.0).astype(jnp.bfloat16)

    @pl.when(first)
    def _wait_w3():
        pltpu.make_async_copy(w3_hbm, w3_vmem, sem.at[2]).wait()

    o_ref[...] = (
        jnp.dot(h2, w3_vmem[...], preferred_element_type=jnp.float32) + b3_ref[...]
    )


def _pad2(a, rows, cols):
    return jnp.pad(a, ((0, rows - a.shape[0]), (0, cols - a.shape[1])))


def prepare_params(params):
    """Pad to lane-aligned shapes, cast weights to bf16 (biases stay f32)."""
    w1, b1, w2, b2, w3, b3 = params
    return (
        _pad2(w1, IN_PAD, HIDDEN_PAD).astype(jnp.bfloat16),
        _pad2(b1, 1, HIDDEN_PAD).astype(jnp.float32),
        _pad2(w2, HIDDEN_PAD, HIDDEN_PAD).astype(jnp.bfloat16),
        _pad2(b2, 1, HIDDEN_PAD).astype(jnp.float32),
        _pad2(w3, HIDDEN_PAD, OUT_PAD).astype(jnp.bfloat16),
        _pad2(b3, 1, OUT_PAD).astype(jnp.float32),
    )


@jax.jit
def bayesian_network_forward(x, padded_params):
    """x: any shape that flattens to (-1, 784) (e.g. NCHW MNIST images)."""
    w1, b1, w2, b2, w3, b3 = padded_params

    # single cast + single pad (no extra f32 pass / no zeros+set round trip)
    x2 = x.reshape(-1, IN_FEATURES).astype(jnp.bfloat16)
    B = x2.shape[0]
    # 128 rows fully feeds the v5e MXU; 256 better fills v6e/v7x's 256-wide MXU
    # and halves per-step overhead once the batch is large enough.
    batch_tile = 128 if B <= 128 else 256
    Bp = pl.cdiv(B, batch_tile) * batch_tile
    xp = jnp.pad(x2, ((0, Bp - B), (0, IN_PAD - IN_FEATURES)))

    grid = (Bp // batch_tile,)
    bias_spec = lambda a: pl.BlockSpec(a.shape, lambda i: (0, 0))
    hbm_spec = pl.BlockSpec(memory_space=pl.ANY)  # weights: load manually once

    out_padded = pl.pallas_call(
        bnn_mlp_kernel,
        out_shape=jax.ShapeDtypeStruct((Bp, OUT_PAD), jnp.float32),
        grid=grid,
        in_specs=[
            pl.BlockSpec((batch_tile, IN_PAD), lambda i: (i, 0)),  # x tile
            hbm_spec,       # W1 (896, 1280)  bf16, HBM
            bias_spec(b1),  # b1 (1, 1280)    f32
            hbm_spec,       # W2 (1280, 1280) bf16, HBM
            bias_spec(b2),  # b2 (1, 1280)    f32
            hbm_spec,       # W3 (1280, 128)  bf16, HBM
            bias_spec(b3),  # b3 (1, 128)     f32
        ],
        out_specs=pl.BlockSpec((batch_tile, OUT_PAD), lambda i: (i, 0)),
        scratch_shapes=[
            pltpu.VMEM((IN_PAD, HIDDEN_PAD), jnp.bfloat16),      # W1 (~2.3 MB)
            pltpu.VMEM((HIDDEN_PAD, HIDDEN_PAD), jnp.bfloat16),  # W2 (~3.3 MB)
            pltpu.VMEM((HIDDEN_PAD, OUT_PAD), jnp.bfloat16),     # W3 (~0.3 MB)
            pltpu.SemaphoreType.DMA((3,)),
        ],
        compiler_params=pltpu.CompilerParams(
            # "arbitrary": grid runs sequentially starting at step 0, which the
            # load-weights-once-into-scratch scheme relies on.
            dimension_semantics=("arbitrary",),
            vmem_limit_bytes=32 * 1024 * 1024,
        ),
    )(xp, w1, b1, w2, b2, w3, b3)

    return out_padded[:B, :OUT_DIM]


# ---------------------------------------------------------------------------
# Parameter setup (BayesLinear reparameterization) + f32 reference
# ---------------------------------------------------------------------------
def _softplus(x):
    return jnp.log1p(jnp.exp(x))


def sample_bayes_linear(key, in_f, out_f):
    """Deterministic BayesLinear sample: w = w_mu + softplus(w_rho) * eps."""
    kwmu, kwrho, kbmu, keps_w, keps_b = jax.random.split(key, 5)
    w_mu = 0.1 * jax.random.normal(kwmu, (in_f, out_f), dtype=jnp.float32)
    w_rho = -3.0 + 0.05 * jax.random.normal(kwrho, (in_f, out_f), dtype=jnp.float32)
    b_mu = 0.1 * jax.random.normal(kbmu, (out_f,), dtype=jnp.float32)
    b_rho = jnp.full((out_f,), -3.0, dtype=jnp.float32)
    eps_w = jax.random.normal(keps_w, (in_f, out_f), dtype=jnp.float32)
    eps_b = jax.random.normal(keps_b, (out_f,), dtype=jnp.float32)
    w = w_mu + _softplus(w_rho) * eps_w
    b = b_mu + _softplus(b_rho) * eps_b
    return w, b.reshape(1, out_f)


def make_params(key):
    k1, k2, k3 = jax.random.split(key, 3)
    w1, b1 = sample_bayes_linear(k1, IN_FEATURES, HIDDEN)
    w2, b2 = sample_bayes_linear(k2, HIDDEN, HIDDEN)
    w3, b3 = sample_bayes_linear(k3, HIDDEN, OUT_DIM)
    return (w1, b1, w2, b2, w3, b3)


def reference_forward(x, params):
    """Full-precision (f32) reference of the PyTorch forward."""
    w1, b1, w2, b2, w3, b3 = params
    x2 = x.reshape(-1, IN_FEATURES).astype(jnp.float32)
    h1 = jax.nn.relu(x2 @ w1 + b1)
    h2 = jax.nn.relu(h1 @ w2 + b2)
    return h2 @ w3 + b3


if __name__ == "__main__":
    key = jax.random.PRNGKey(0)
    kx, kp = jax.random.split(key)
    # NCHW MNIST-like input; forward flattens it to (-1, 784).
    x = jax.random.normal(kx, (8, 1, 28, 28), dtype=jnp.float32)
    params = make_params(kp)
    padded_params = prepare_params(params)

    out = jax.block_until_ready(bayesian_network_forward(x, padded_params))
    ref = jax.block_until_ready(reference_forward(x, params))

    assert out.shape == (8, OUT_DIM), out.shape
    # bf16 MXU inputs with f32 accumulation vs. full-f32 reference:
    # outputs have std ~20, expected abs error ~0.1, so these bounds are tight
    # enough to catch layout/broadcast/DMA-ordering bugs while tolerating bf16
    # rounding.
    max_err = float(jnp.max(jnp.abs(out - ref)))
    rel_err = float(jnp.linalg.norm(out - ref) / jnp.linalg.norm(ref))
    assert jnp.allclose(out, ref, atol=1.0, rtol=0.02), (max_err, rel_err)
    assert rel_err < 0.02, rel_err
    print("KERNEL_OK")
</pallas_src>

<mosaic_0001>
module attributes {stable_mosaic.version = 11 : i64} {
  func.func @bnn_mlp_kernel(%arg0: i32, %arg1: memref<128x896xbf16, #tpu.memory_space<vmem>>, %arg2: memref<896x1280xbf16, #tpu.memory_space<any>>, %arg3: memref<1x1280xf32, #tpu.memory_space<vmem>>, %arg4: memref<1280x1280xbf16, #tpu.memory_space<any>>, %arg5: memref<1x1280xf32, #tpu.memory_space<vmem>>, %arg6: memref<1280x128xbf16, #tpu.memory_space<any>>, %arg7: memref<1x128xf32, #tpu.memory_space<vmem>>, %arg8: memref<128x128xf32, #tpu.memory_space<vmem>>, %arg9: memref<896x1280xbf16, #tpu.memory_space<vmem>>, %arg10: memref<1280x1280xbf16, #tpu.memory_space<vmem>>, %arg11: memref<1280x128xbf16, #tpu.memory_space<vmem>>, %arg12: memref<3x!tpu.dma_semaphore, #tpu.memory_space<semaphore_mem>>) attributes {dimension_semantics = [#tpu.dimension_semantics<arbitrary>], iteration_bounds = array<i64: 1>, scalar_prefetch = 0 : i64, scratch_operands = 4 : i64, tpu.core_type = #tpu.core_type<tc>, window_params = [{transform_indices = @transform_0, window_bounds = array<i64: 128, 896>}, {}, {pipeline_mode = #tpu.pipeline_mode<synchronous>, transform_indices = @transform_2, window_bounds = array<i64: 1, 1280>}, {}, {pipeline_mode = #tpu.pipeline_mode<synchronous>, transform_indices = @transform_4, window_bounds = array<i64: 1, 1280>}, {}, {pipeline_mode = #tpu.pipeline_mode<synchronous>, transform_indices = @transform_6, window_bounds = array<i64: 1, 128>}, {transform_indices = @transform_7, window_bounds = array<i64: 128, 128>}]} {
    %c0_i32 = arith.constant 0 : i32
    %0 = arith.cmpi eq, %arg0, %c0_i32 : i32
    %1 = arith.extui %0 : i1 to i32
    %c0_i32_0 = arith.constant 0 : i32
    %2 = arith.cmpi ne, %1, %c0_i32_0 : i32
    scf.if %2 {
      %c0_i32_22 = arith.constant 0 : i32
      %30 = tpu.memref_slice %arg12[%c0_i32_22] : memref<3x!tpu.dma_semaphore, #tpu.memory_space<semaphore_mem>> -> memref<1x!tpu.dma_semaphore, #tpu.memory_space<semaphore_mem>>
      %31 = tpu.memref_squeeze %30 : memref<1x!tpu.dma_semaphore, #tpu.memory_space<semaphore_mem>> -> memref<!tpu.dma_semaphore, #tpu.memory_space<semaphore_mem>>
      tpu.enqueue_dma source(%arg2 : memref<896x1280xbf16, #tpu.memory_space<any>>) target(%arg9 : memref<896x1280xbf16, #tpu.memory_space<vmem>>) target_semaphore(%31 : memref<!tpu.dma_semaphore, #tpu.memory_space<semaphore_mem>>)
      %c1_i32 = arith.constant 1 : i32
      %32 = tpu.memref_slice %arg12[%c1_i32] : memref<3x!tpu.dma_semaphore, #tpu.memory_space<semaphore_mem>> -> memref<1x!tpu.dma_semaphore, #tpu.memory_space<semaphore_mem>>
      %33 = tpu.memref_squeeze %32 : memref<1x!tpu.dma_semaphore, #tpu.memory_space<semaphore_mem>> -> memref<!tpu.dma_semaphore, #tpu.memory_space<semaphore_mem>>
      tpu.enqueue_dma source(%arg4 : memref<1280x1280xbf16, #tpu.memory_space<any>>) target(%arg10 : memref<1280x1280xbf16, #tpu.memory_space<vmem>>) target_semaphore(%33 : memref<!tpu.dma_semaphore, #tpu.memory_space<semaphore_mem>>)
      %c2_i32 = arith.constant 2 : i32
      %34 = tpu.memref_slice %arg12[%c2_i32] : memref<3x!tpu.dma_semaphore, #tpu.memory_space<semaphore_mem>> -> memref<1x!tpu.dma_semaphore, #tpu.memory_space<semaphore_mem>>
      %35 = tpu.memref_squeeze %34 : memref<1x!tpu.dma_semaphore, #tpu.memory_space<semaphore_mem>> -> memref<!tpu.dma_semaphore, #tpu.memory_space<semaphore_mem>>
      tpu.enqueue_dma source(%arg6 : memref<1280x128xbf16, #tpu.memory_space<any>>) target(%arg11 : memref<1280x128xbf16, #tpu.memory_space<vmem>>) target_semaphore(%35 : memref<!tpu.dma_semaphore, #tpu.memory_space<semaphore_mem>>)
      %c0_i32_23 = arith.constant 0 : i32
      %36 = tpu.memref_slice %arg12[%c0_i32_23] : memref<3x!tpu.dma_semaphore, #tpu.memory_space<semaphore_mem>> -> memref<1x!tpu.dma_semaphore, #tpu.memory_space<semaphore_mem>>
      %37 = tpu.memref_squeeze %36 : memref<1x!tpu.dma_semaphore, #tpu.memory_space<semaphore_mem>> -> memref<!tpu.dma_semaphore, #tpu.memory_space<semaphore_mem>>
      tpu.wait_dma2 semaphore(%37 : memref<!tpu.dma_semaphore, #tpu.memory_space<semaphore_mem>>) src(%arg2 : memref<896x1280xbf16, #tpu.memory_space<any>>) dst(%arg9 : memref<896x1280xbf16, #tpu.memory_space<vmem>>)
    } else {
    }
    %c0 = arith.constant 0 : index
    %c0_1 = arith.constant 0 : index
    %3 = vector.load %arg1[%c0, %c0_1] : memref<128x896xbf16, #tpu.memory_space<vmem>>, vector<128x896xbf16>
    %c0_2 = arith.constant 0 : index
    %c0_3 = arith.constant 0 : index
    %4 = vector.load %arg9[%c0_2, %c0_3] : memref<896x1280xbf16, #tpu.memory_space<vmem>>, vector<896x1280xbf16>
    %cst = arith.constant dense<0.000000e+00> : vector<128x1280xf32>
    %5 = tpu.matmul %3, %4, %cst {dimension_numbers = #tpu.dot_dimension_numbers<[1], [0], [0], [1], [0, 0, 1, 1], [], []>} : vector<128x896xbf16>, vector<896x1280xbf16>, vector<128x1280xf32> -> vector<128x1280xf32>
    %c0_4 = arith.constant 0 : index
    %c0_5 = arith.constant 0 : index
    %6 = vector.load %arg3[%c0_4, %c0_5] : memref<1x1280xf32, #tpu.memory_space<vmem>>, vector<1x1280xf32>
    %7 = vector.broadcast %6 : vector<1x1280xf32> to vector<128x1280xf32>
    %8 = arith.addf %5, %7 : vector<128x1280xf32>
    %cst_6 = arith.constant 0.000000e+00 : f32
    %9 = vector.broadcast %cst_6 : f32 to vector<128x1280xf32>
    %10 = arith.maximumf %8, %9 : vector<128x1280xf32>
    %11 = arith.truncf %10 : vector<128x1280xf32> to vector<128x1280xbf16>
    %12 = arith.extui %0 : i1 to i32
    %c0_i32_7 = arith.constant 0 : i32
    %13 = arith.cmpi ne, %12, %c0_i32_7 : i32
    scf.if %13 {
      %c1_i32 = arith.constant 1 : i32
      %30 = tpu.memref_slice %arg12[%c1_i32] : memref<3x!tpu.dma_semaphore, #tpu.memory_space<semaphore_mem>> -> memref<1x!tpu.dma_semaphore, #tpu.memory_space<semaphore_mem>>
      %31 = tpu.memref_squeeze %30 : memref<1x!tpu.dma_semaphore, #tpu.memory_space<semaphore_mem>> -> memref<!tpu.dma_semaphore, #tpu.memory_space<semaphore_mem>>
      tpu.wait_dma2 semaphore(%31 : memref<!tpu.dma_semaphore, #tpu.memory_space<semaphore_mem>>) src(%arg4 : memref<1280x1280xbf16, #tpu.memory_space<any>>) dst(%arg10 : memref<1280x1280xbf16, #tpu.memory_space<vmem>>)
    } else {
    }
    %c0_8 = arith.constant 0 : index
    %c0_9 = arith.constant 0 : index
    %14 = vector.load %arg10[%c0_8, %c0_9] : memref<1280x1280xbf16, #tpu.memory_space<vmem>>, vector<1280x1280xbf16>
    %cst_10 = arith.constant dense<0.000000e+00> : vector<128x1280xf32>
    %15 = tpu.matmul %11, %14, %cst_10 {dimension_numbers = #tpu.dot_dimension_numbers<[1], [0], [0], [1], [0, 0, 1, 1], [], []>} : vector<128x1280xbf16>, vector<1280x1280xbf16>, vector<128x1280xf32> -> vector<128x1280xf32>
    %c0_11 = arith.constant 0 : index
    %c0_12 = arith.constant 0 : index
    %16 = vector.load %arg5[%c0_11, %c0_12] : memref<1x1280xf32, #tpu.memory_space<vmem>>, vector<1x1280xf32>
    %17 = vector.broadcast %16 : vector<1x1280xf32> to vector<128x1280xf32>
    %18 = arith.addf %15, %17 : vector<128x1280xf32>
    %cst_13 = arith.constant 0.000000e+00 : f32
    %19 = vector.broadcast %cst_13 : f32 to vector<128x1280xf32>
    %20 = arith.maximumf %18, %19 : vector<128x1280xf32>
    %21 = arith.truncf %20 : vector<128x1280xf32> to vector<128x1280xbf16>
    %22 = arith.extui %0 : i1 to i32
    %c0_i32_14 = arith.constant 0 : i32
    %23 = arith.cmpi ne, %22, %c0_i32_14 : i32
    scf.if %23 {
      %c2_i32 = arith.constant 2 : i32
      %30 = tpu.memref_slice %arg12[%c2_i32] : memref<3x!tpu.dma_semaphore, #tpu.memory_space<semaphore_mem>> -> memref<1x!tpu.dma_semaphore, #tpu.memory_space<semaphore_mem>>
      %31 = tpu.memref_squeeze %30 : memref<1x!tpu.dma_semaphore, #tpu.memory_space<semaphore_mem>> -> memref<!tpu.dma_semaphore, #tpu.memory_space<semaphore_mem>>
      tpu.wait_dma2 semaphore(%31 : memref<!tpu.dma_semaphore, #tpu.memory_space<semaphore_mem>>) src(%arg6 : memref<1280x128xbf16, #tpu.memory_space<any>>) dst(%arg11 : memref<1280x128xbf16, #tpu.memory_space<vmem>>)
    } else {
    }
    %c0_15 = arith.constant 0 : index
    %c0_16 = arith.constant 0 : index
    %24 = vector.load %arg11[%c0_15, %c0_16] : memref<1280x128xbf16, #tpu.memory_space<vmem>>, vector<1280x128xbf16>
    %cst_17 = arith.constant dense<0.000000e+00> : vector<128x128xf32>
    %25 = tpu.matmul %21, %24, %cst_17 {dimension_numbers = #tpu.dot_dimension_numbers<[1], [0], [0], [1], [0, 0, 1, 1], [], []>} : vector<128x1280xbf16>, vector<1280x128xbf16>, vector<128x128xf32> -> vector<128x128xf32>
    %c0_18 = arith.constant 0 : index
    %c0_19 = arith.constant 0 : index
    %26 = vector.load %arg7[%c0_18, %c0_19] : memref<1x128xf32, #tpu.memory_space<vmem>>, vector<1x128xf32>
    %27 = vector.broadcast %26 : vector<1x128xf32> to vector<128x128xf32>
    %28 = arith.addf %25, %27 : vector<128x128xf32>
    %c0_20 = arith.constant 0 : index
    %c0_21 = arith.constant 0 : index
    %29 = vector.load %arg8[%c0_20, %c0_21] : memref<128x128xf32, #tpu.memory_space<vmem>>, vector<128x128xf32>
    tpu.vector_store %arg8[%c0_20, %c0_21], %28 {strides = array<i32>} : memref<128x128xf32, #tpu.memory_space<vmem>>, vector<128x128xf32>,
    return
  }
  func.func @transform_0(%arg0: i32) -> (i32, i32) {
    %c0_i32 = arith.constant 0 : i32
    %c0_i32_0 = arith.constant 0 : i32
    return %arg0, %c0_i32 : i32, i32
  }
  func.func @transform_2(%arg0: i32) -> (i32, i32) {
    %c0_i32 = arith.constant 0 : i32
    %c0_i32_0 = arith.constant 0 : i32
    %c0_i32_1 = arith.constant 0 : i32
    return %c0_i32, %c0_i32_0 : i32, i32
  }
  func.func @transform_4(%arg0: i32) -> (i32, i32) {
    %c0_i32 = arith.constant 0 : i32
    %c0_i32_0 = arith.constant 0 : i32
    %c0_i32_1 = arith.constant 0 : i32
    return %c0_i32, %c0_i32_0 : i32, i32
  }
  func.func @transform_6(%arg0: i32) -> (i32, i32) {
    %c0_i32 = arith.constant 0 : i32
    %c0_i32_0 = arith.constant 0 : i32
    %c0_i32_1 = arith.constant 0 : i32
    return %c0_i32, %c0_i32_0 : i32, i32
  }
  func.func @transform_7(%arg0: i32) -> (i32, i32) {
    %c0_i32 = arith.constant 0 : i32
    %c0_i32_0 = arith.constant 0 : i32
    return %arg0, %c0_i32 : i32, i32
  }
}

</mosaic_0001>

<llo_original>
// kernel: bayesian_network_forward.1
$region0: #{bayesian_network_forward.1}
  #allocation0 [shape = 'u32[]', space=smem, size = 0x4, offset = 0x4, fixed_abs, tag = 'smem constant byte address 0x4 - core index']
  #allocation1 [shape = 'u32[144,128]{1,0:T(1,128)}', space=vmem, size = 0x12000, scoped, tag = 'internal scratch']
  #allocation2 [shape = 'bf16[896,1280]{1,0:T(16,128)(2,1)}', space=vmem, size = 0x230000, scoped, tag = 'scratch operand']
  #allocation3 [shape = 'bf16[1280,1280]{1,0:T(16,128)(2,1)}', space=vmem, size = 0x320000, scoped, tag = 'scratch operand']
  #allocation4 [shape = 'bf16[1280,128]{1,0:T(16,128)(2,1)}', space=vmem, size = 0x50000, scoped, tag = 'scratch operand']
  #allocation5 [shape = 's32[3]{0}', space=sflag, size = 0xc, scoped, tag = 'scratch operand']
  #allocation11 [shape = 's32[]', space=sflag, size = 0x4, offset = 0, fixed_abs, tag = 'sflag constant byte address 0x0 - dummy sync flag']
  #allocation13 [shape = 's32[]', space=sflag, size = 0x4, offset = 0, fixed_abs, tag = 'sflag constant byte address 0x0 - dummy sync flag']
  #allocation15 [shape = 's32[]', space=sflag, size = 0x4, offset = 0, fixed_abs, tag = 'sflag constant byte address 0x0 - dummy sync flag']
  #allocation16 [shape = 's32[]', space=sflag, size = 0x4, offset = 0, fixed_abs, tag = 'sflag constant byte address 0x0 - dummy sync flag']
  #allocation17 [shape = 'u32[]', space=smem, size = 0x4, offset = 0x44, fixed_abs, tag = 'smem constant byte address 0x44 - assertion arg 0']
  #allocation18 [shape = 'u32[]', space=smem, size = 0x4, offset = 0x48, fixed_abs, tag = 'smem constant byte address 0x48 - assertion arg 1']
  %s0 = inlined_call_operand.vmem [shape: bf16[128,896], index: 0, kind: input, shape index: {}]
  %s1 = inlined_call_operand.hbm [shape: bf16[896,1280], index: 1, kind: input, shape index: {}]
  %s2 = inlined_call_operand.hbm [shape: f32[1,1280], index: 2, kind: input, shape index: {}]
  %s3 = inlined_call_operand.hbm [shape: bf16[1280,1280], index: 3, kind: input, shape index: {}]
  %s4 = inlined_call_operand.hbm [shape: f32[1,1280], index: 4, kind: input, shape index: {}]
  %s5 = inlined_call_operand.hbm [shape: bf16[1280,128], index: 5, kind: input, shape index: {}]
  %s6 = inlined_call_operand.hbm [shape: f32[1,128], index: 6, kind: input, shape index: {}]
  %s7 = inlined_call_operand.vmem [shape: f32[128,128], index: 7, kind: output, shape index: {}]
  %s8 = sld [smem:[#allocation0]]
  $region54: #{bayesian_network_forward.1} parent=0
    _
  %s10 = ssub.s32 1, %s8
  %s11 = scalar_select 0, %s10, %s8
  $region1: #{bayesian_network_forward.1} parent=0
    #allocation6 [shape = 'u8[5120]{0}', space=vmem, size = 0x1400, scoped, tag = 'input window, operand 2, single buffered']
    #allocation7 [shape = 's32[1]{0}', space=sflag, size = 0x4, scoped, tag = 'scoped memory for bayesian_network_forward.1']
    #allocation8 [shape = 'u8[5120]{0}', space=vmem, size = 0x1400, scoped, tag = 'input window, operand 4, single buffered']
    #allocation9 [shape = 's32[1]{0}', space=sflag, size = 0x4, scoped, tag = 'scoped memory for bayesian_network_forward.1']
    #allocation10 [shape = 'u8[512]{0}', space=vmem, size = 0x400, scoped, tag = 'input window, operand 6, single buffered']
    %12 = vsyncpa [#allocation7], 0
    %13 = vsyncpa [#allocation9], 0
    // Predicated region
    $region2: #{bayesian_network_forward.1} parent=1 // pred_check
      _
    $region3: #{bayesian_network_forward.1} parent=1 // pred_check_branch
      %15 = sbr.rel (0) target = $region5
    $region4: #{bayesian_network_forward.1} parent=1 // pred_region
      _
    $region5: #{bayesian_network_forward.1} parent=1 // pred_fallthru
      _
    // Predicated region
    $region6: #{bayesian_network_forward.1} parent=1 // pred_check
      _
    $region7: #{bayesian_network_forward.1} parent=1 // pred_check_branch
      %17 = sbr.rel (0) target = $region9
    $region8: #{bayesian_network_forward.1} parent=1 // pred_region
      %s19 = ssub.s32 160, 160
      %20 = vsyncadd [#allocation7], %s19
      %s22 = sshll.u32 [#allocation6], 4
      %s23 = int_to_ptr.vmem [resolvable:$true] %s22
      %25 = dma.hbm_to_vmem [thread:$0]  %s2, 160, %s23, [#allocation7]
    $region9: #{bayesian_network_forward.1} parent=1 // pred_fallthru
      _
    // Predicated region
    $region10: #{bayesian_network_forward.1} parent=1 // pred_check
      _
    $region11: #{bayesian_network_forward.1} parent=1 // pred_check_branch
      %27 = sbr.rel (0) target = $region13
    $region12: #{bayesian_network_forward.1} parent=1 // pred_region
      %s29 = ssub.s32 160, 160
      %30 = vsyncadd [#allocation9], %s29
      %s32 = sshll.u32 [#allocation8], 4
      %s33 = int_to_ptr.vmem [resolvable:$true] %s32
      %35 = dma.hbm_to_vmem [thread:$0]  %s4, 160, %s33, [#allocation9]
    $region13: #{bayesian_network_forward.1} parent=1 // pred_fallthru
      _
    // Predicated region
    $region14: #{bayesian_network_forward.1} parent=1 // pred_check
      _
    $region15: #{bayesian_network_forward.1} parent=1 // pred_check_branch
      %37 = sbr.rel (0) target = $region17
    $region16: #{bayesian_network_forward.1} parent=1 // pred_region
      %s39 = ssub.s32 16, 16
      %40 = vsyncadd [#allocation9], %s39
      %s42 = sshll.u32 [#allocation10], 4
      %s43 = int_to_ptr.vmem [resolvable:$true] %s42
      %45 = dma.hbm_to_vmem [thread:$0]  %s6, 16, %s43, [#allocation9]
    $region17: #{bayesian_network_forward.1} parent=1 // pred_fallthru
      _
    // Predicated region
    $region18: #{bayesian_network_forward.1} parent=1 // pred_check
      _
    $region19: #{bayesian_network_forward.1} parent=1 // pred_check_branch
      %47 = sbr.rel (0) target = $region21
    $region20: #{bayesian_network_forward.1} parent=1 // pred_region
      %48 = dma.done [#allocation7], 160
    $region21: #{bayesian_network_forward.1} parent=1 // pred_fallthru
      _
    // Predicated region
    $region22: #{bayesian_network_forward.1} parent=1 // pred_check
      _
    $region23: #{bayesian_network_forward.1} parent=1 // pred_check_branch
      %50 = sbr.rel (0) target = $region25
    $region24: #{bayesian_network_forward.1} parent=1 // pred_region
      %51 = dma.done [#allocation9], 160
    $region25: #{bayesian_network_forward.1} parent=1 // pred_fallthru
      _
    // Predicated region
    $region26: #{bayesian_network_forward.1} parent=1 // pred_check
      _
    $region27: #{bayesian_network_forward.1} parent=1 // pred_check_branch
      %53 = sbr.rel (0) target = $region29
    $region28: #{bayesian_network_forward.1} parent=1 // pred_region
      %54 = dma.done [#allocation9], 16
    $region29: #{bayesian_network_forward.1} parent=1 // pred_fallthru
      _
    %p56 = scmp.eq.s32.totalorder 0, 0
    // Predicated region
    $region30: #{bayesian_network_forward.1} parent=1 // pred_check
      %p57 = pneg %p56
    $region31: #{bayesian_network_forward.1} parent=1 // pred_check_branch
      %59 = sbr.rel (%p57) target = $region33
    $region32: #{bayesian_network_forward.1} parent=1 // pred_region
      #allocation12 [shape = 'u32[9]{0}', space=smem, size = 0x24, scoped, tag = 'DMA stride descriptor']
      #allocation14 [shape = 'u32[9]{0}', space=smem, size = 0x24, scoped, tag = 'DMA stride descriptor']
      %s61 = sshll.u32 1, 14
      %s62 = sxor.u32 4294967295, %s61
      %s64 = sld [smem:[#allocation0]]
      %s65 = sadd.s32 2, %s64
      %s67 = sshll.u32 7, 26
      %s68 = sxor.u32 4294967295, %s67
      %s69 = sand.u32 0, %s68
      %s70 = sshll.u32 %s65, 26
      %s71 = sor.u32 %s69, %s70
      %s72 = sshll.u32 [#allocation2], 4
      %s73 = int_to_ptr.vmem [resolvable:$true] %s72
      %76 = sst [smem:[#allocation12]] 1280
      %s77 = scalar_lea.smem [#allocation12], 1
      %78 = sst [smem:[%s77]] 1280
      %s79 = scalar_lea.smem [#allocation12], 2
      %80 = sst [smem:[%s79]] 10
      %s81 = scalar_lea.smem [#allocation12], 3
      %82 = sst [smem:[%s81]] 64
      %s83 = scalar_lea.smem [#allocation12], 4
      %84 = sst [smem:[%s83]] 128
      %s85 = scalar_lea.smem [#allocation12], 5
      %86 = sst [smem:[%s85]] 2
      %s87 = scalar_lea.smem [#allocation12], 6
      %88 = sst [smem:[%s87]] 640
      %s89 = scalar_lea.smem [#allocation12], 7
      %90 = sst [smem:[%s89]] 64
      %s91 = scalar_lea.smem [#allocation12], 8
      %92 = sst [smem:[%s91]] 4
      %94 = dma.general %s1, 71680, %s73, [#allocation5], [#allocation11], [#allocation12], %s71, 0
      %s95 = scalar_lea.sflag [#allocation5], 1
      %s97 = sshll.u32 1, 14
      %s98 = sxor.u32 4294967295, %s97
      %s100 = sadd.s32 2, %s64
      %s102 = sshll.u32 7, 26
      %s103 = sxor.u32 4294967295, %s102
      %s104 = sand.u32 0, %s103
      %s105 = sshll.u32 %s100, 26
      %s106 = sor.u32 %s104, %s105
      %s107 = sshll.u32 [#allocation3], 4
      %s108 = int_to_ptr.vmem [resolvable:$true] %s107
      %111 = sst [smem:[#allocation14]] 1280
      %s112 = scalar_lea.smem [#allocation14], 1
      %113 = sst [smem:[%s112]] 1280
      %s114 = scalar_lea.smem [#allocation14], 2
      %115 = sst [smem:[%s114]] 10
      %s116 = scalar_lea.smem [#allocation14], 3
      %117 = sst [smem:[%s116]] 64
      %s118 = scalar_lea.smem [#allocation14], 4
      %119 = sst [smem:[%s118]] 128
      %s120 = scalar_lea.smem [#allocation14], 5
      %121 = sst [smem:[%s120]] 2
      %s122 = scalar_lea.smem [#allocation14], 6
      %123 = sst [smem:[%s122]] 640
      %s124 = scalar_lea.smem [#allocation14], 7
      %125 = sst [smem:[%s124]] 64
      %s126 = scalar_lea.smem [#allocation14], 8
      %127 = sst [smem:[%s126]] 4
      %129 = dma.general %s3, 102400, %s108, %s95, [#allocation13], [#allocation14], %s106, 0
      %s130 = scalar_lea.sflag [#allocation5], 2
      // Predicated region
      $region34: #{bayesian_network_forward.1} parent=32 // pred_check
        _
      $region35: #{bayesian_network_forward.1} parent=32 // pred_check_branch
        %132 = sbr.rel target = $region37
      $region36: #{bayesian_network_forward.1} parent=32 // pred_region
        %133 = sst [smem:[#allocation17]] [#allocation16]
        %134 = sst [smem:[#allocation18]] [#allocation15]
      $region37: #{bayesian_network_forward.1} parent=32 // pred_fallthru
        _
      %136 = shalt.err (0)
      %s138 = sshll.u32 [#allocation4], 4
      %s139 = int_to_ptr.vmem [resolvable:$true] %s138
      %141 = dma.hbm_to_vmem [thread:$0]  %s5, 10240, %s139, %s130
      %s142 = smul.u32 4, 112
      %s143 = smul.u32 %s142, 10
      %s144 = sshll.u32 %s143, 4
      %145 = dma.done [#allocation5], %s144
    $region33: #{bayesian_network_forward.1} parent=1 // pred_fallthru
      _
    %v146 = vld [vmem:[%s0] sm:$0xff]
    %v147 = vld [vmem:[%s0 + $0x8] sm:$0xff]
    %v148 = vld [vmem:[%s0 + $0x10] sm:$0xff]
    %v149 = vld [vmem:[%s0 + $0x18] sm:$0xf]
    %v150 = vld [vmem:[%s0 + $0x1c] sm:$0xff]
    %v151 = vld [vmem:[%s0 + $0x24] sm:$0xff]
    %v152 = vld [vmem:[%s0 + $0x2c] sm:$0xff]
    %v153 = vld [vmem:[%s0 + $0x34] sm:$0xf]
    %v154 = vld [vmem:[%s0 + $0x38] sm:$0xff]
    %v155 = vld [vmem:[%s0 + $0x40] sm:$0xff]
    %v156 = vld [vmem:[%s0 + $0x48] sm:$0xff]
    %v157 = vld [vmem:[%s0 + $0x50] sm:$0xf]
    %v158 = vld [vmem:[%s0 + $0x54] sm:$0xff]
    %v159 = vld [vmem:[%s0 + $0x5c] sm:$0xff]
    %v160 = vld [vmem:[%s0 + $0x64] sm:$0xff]
    %v161 = vld [vmem:[%s0 + $0x6c] sm:$0xf]
    %v162 = vld [vmem:[%s0 + $0x70] sm:$0xff]
    %v163 = vld [vmem:[%s0 + $0x78] sm:$0xff]
    %v164 = vld [vmem:[%s0 + $0x80] sm:$0xff]
    %v165 = vld [vmem:[%s0 + $0x88] sm:$0xf]
    %v166 = vld [vmem:[%s0 + $0x8c] sm:$0xff]
    %v167 = vld [vmem:[%s0 + $0x94] sm:$0xff]
    %v168 = vld [vmem:[%s0 + $0x9c] sm:$0xff]
    %v169 = vld [vmem:[%s0 + $0xa4] sm:$0xf]
    %v170 = vld [vmem:[%s0 + $0xa8] sm:$0xff]
    %v171 = vld [vmem:[%s0 + $0xb0] sm:$0xff]
    %v172 = vld [vmem:[%s0 + $0xb8] sm:$0xff]
    %v173 = vld [vmem:[%s0 + $0xc0] sm:$0xf]
    %v174 = vld [vmem:[%s0 + $0xc4] sm:$0xff]
    %v175 = vld [vmem:[%s0 + $0xcc] sm:$0xff]
    %v176 = vld [vmem:[%s0 + $0xd4] sm:$0xff]
    %v177 = vld [vmem:[%s0 + $0xdc] sm:$0xf]
    %v178 = vld [vmem:[%s0 + $0xe0] sm:$0xff]
    %v179 = vld [vmem:[%s0 + $0xe8] sm:$0xff]
    %v180 = vld [vmem:[%s0 + $0xf0] sm:$0xff]
    %v181 = vld [vmem:[%s0 + $0xf8] sm:$0xf]
    %v182 = vld [vmem:[%s0 + $0xfc] sm:$0xff]
    %v183 = vld [vmem:[%s0 + $0x104] sm:$0xff]
    %v184 = vld [vmem:[%s0 + $0x10c] sm:$0xff]
    %v185 = vld [vmem:[%s0 + $0x114] sm:$0xf]
    %v186 = vld [vmem:[%s0 + $0x118] sm:$0xff]
    %v187 = vld [vmem:[%s0 + $0x120] sm:$0xff]
    %v188 = vld [vmem:[%s0 + $0x128] sm:$0xff]
    %v189 = vld [vmem:[%s0 + $0x130] sm:$0xf]
    %v190 = vld [vmem:[%s0 + $0x134] sm:$0xff]
    %v191 = vld [vmem:[%s0 + $0x13c] sm:$0xff]
    %v192 = vld [vmem:[%s0 + $0x144] sm:$0xff]
    %v193 = vld [vmem:[%s0 + $0x14c] sm:$0xf]
    %v194 = vld [vmem:[%s0 + $0x150] sm:$0xff]
    %v195 = vld [vmem:[%s0 + $0x158] sm:$0xff]
    %v196 = vld [vmem:[%s0 + $0x160] sm:$0xff]
    %v197 = vld [vmem:[%s0 + $0x168] sm:$0xf]
    %v198 = vld [vmem:[%s0 + $0x16c] sm:$0xff]
    %v199 = vld [vmem:[%s0 + $0x174] sm:$0xff]
    %v200 = vld [vmem:[%s0 + $0x17c] sm:$0xff]
    %v201 = vld [vmem:[%s0 + $0x184] sm:$0xf]
    %v202 = vld [vmem:[%s0 + $0x188] sm:$0xff]
    %v203 = vld [vmem:[%s0 + $0x190] sm:$0xff]
    %v204 = vld [vmem:[%s0 + $0x198] sm:$0xff]
    %v205 = vld [vmem:[%s0 + $0x1a0] sm:$0xf]
    %v206 = vld [vmem:[%s0 + $0x1a4] sm:$0xff]
    %v207 = vld [vmem:[%s0 + $0x1ac] sm:$0xff]
    %v208 = vld [vmem:[%s0 + $0x1b4] sm:$0xff]
    %v209 = vld [vmem:[%s0 + $0x1bc] sm:$0xf]
    %v210 = vld [vmem:[#allocation2] sm:$0xff]
    %v211 = vld [vmem:[#allocation2 + $0x8] sm:$0xff]
    %v212 = vld [vmem:[#allocation2 + $0x10] sm:$0xff]
    %v213 = vld [vmem:[#allocation2 + $0x18] sm:$0xff]
    %v214 = vld [vmem:[#allocation2 + $0x20] sm:$0xff]
    %v215 = vld [vmem:[#allocation2 + $0x28] sm:$0xff]
    %v216 = vld [vmem:[#allocation2 + $0x30] sm:$0xff]
    %v217 = vld [vmem:[#allocation2 + $0x38] sm:$0xff]
    %v218 = vld [vmem:[#allocation2 + $0x40] sm:$0xff]
    %v219 = vld [vmem:[#allocation2 + $0x48] sm:$0xff]
    %v220 = vld [vmem:[#allocation2 + $0x50] sm:$0xff]
    %v221 = vld [vmem:[#allocation2 + $0x58] sm:$0xff]
    %v222 = vld [vmem:[#allocation2 + $0x60] sm:$0xff]
    %v223 = vld [vmem:[#allocation2 + $0x68] sm:$0xff]
    %v224 = vld [vmem:[#allocation2 + $0x70] sm:$0xff]
    %v225 = vld [vmem:[#allocation2 + $0x78] sm:$0xff]
    %v226 = vld [vmem:[#allocation2 + $0x80] sm:$0xff]
    %v227 = vld [vmem:[#allocation2 + $0x88] sm:$0xff]
    %v228 = vld [vmem:[#allocation2 + $0x90] sm:$0xff]
    %v229 = vld [vmem:[#allocation2 + $0x98] sm:$0xff]
    %v230 = vld [vmem:[#allocation2 + $0xa0] sm:$0xff]
    %v231 = vld [vmem:[#allocation2 + $0xa8] sm:$0xff]
    %v232 = vld [vmem:[#allocation2 + $0xb0] sm:$0xff]
    %v233 = vld [vmem:[#allocation2 + $0xb8] sm:$0xff]
    %v234 = vld [vmem:[#allocation2 + $0xc0] sm:$0xff]
    %v235 = vld [vmem:[#allocation2 + $0xc8] sm:$0xff]
    %v236 = vld [vmem:[#allocation2 + $0xd0] sm:$0xff]
    %v237 = vld [vmem:[#allocation2 + $0xd8] sm:$0xff]
    %v238 = vld [vmem:[#allocation2 + $0xe0] sm:$0xff]
    %v239 = vld [vmem:[#allocation2 + $0xe8] sm:$0xff]
    %v240 = vld [vmem:[#allocation2 + $0xf0] sm:$0xff]
    %v241 = vld [vmem:[#allocation2 + $0xf8] sm:$0xff]
    %v242 = vld [vmem:[#allocation2 + $0x100] sm:$0xff]
    %v243 = vld [vmem:[#allocation2 + $0x108] sm:$0xff]
    %v244 = vld [vmem:[#allocation2 + $0x110] sm:$0xff]
    %v245 = vld [vmem:[#allocation2 + $0x118] sm:$0xff]
    %v246 = vld [vmem:[#allocation2 + $0x120] sm:$0xff]
    %v247 = vld [vmem:[#allocation2 + $0x128] sm:$0xff]
    %v248 = vld [vmem:[#allocation2 + $0x130] sm:$0xff]
    %v249 = vld [vmem:[#allocation2 + $0x138] sm:$0xff]
    %v250 = vld [vmem:[#allocation2 + $0x140] sm:$0xff]
    %v251 = vld [vmem:[#allocation2 + $0x148] sm:$0xff]
    %v252 = vld [vmem:[#allocation2 + $0x150] sm:$0xff]
    %v253 = vld [vmem:[#allocation2 + $0x158] sm:$0xff]
    %v254 = vld [vmem:[#allocation2 + $0x160] sm:$0xff]
    %v255 = vld [vmem:[#allocation2 + $0x168] sm:$0xff]
    %v256 = vld [vmem:[#allocation2 + $0x170] sm:$0xff]
    %v257 = vld [vmem:[#allocation2 + $0x178] sm:$0xff]
    %v258 = vld [vmem:[#allocation2 + $0x180] sm:$0xff]
    %v259 = vld [vmem:[#allocation2 + $0x188] sm:$0xff]
    %v260 = vld [vmem:[#allocation2 + $0x190] sm:$0xff]
    %v261 = vld [vmem:[#allocation2 + $0x198] sm:$0xff]
    %v262 = vld [vmem:[#allocation2 + $0x1a0] sm:$0xff]
    %v263 = vld [vmem:[#allocation2 + $0x1a8] sm:$0xff]
    %v264 = vld [vmem:[#allocation2 + $0x1b0] sm:$0xff]
    %v265 = vld [vmem:[#allocation2 + $0x1b8] sm:$0xff]
    %v266 = vld [vmem:[#allocation2 + $0x1c0] sm:$0xff]
    %v267 = vld [vmem:[#allocation2 + $0x1c8] sm:$0xff]
    %v268 = vld [vmem:[#allocation2 + $0x1d0] sm:$0xff]
    %v269 = vld [vmem:[#allocation2 + $0x1d8] sm:$0xff]
    %v270 = vld [vmem:[#allocation2 + $0x1e0] sm:$0xff]
    %v271 = vld [vmem:[#allocation2 + $0x1e8] sm:$0xff]
    %v272 = vld [vmem:[#allocation2 + $0x1f0] sm:$0xff]
    %v273 = vld [vmem:[#allocation2 + $0x1f8] sm:$0xff]
    %v274 = vld [vmem:[#allocation2 + $0x200] sm:$0xff]
    %v275 = vld [vmem:[#allocation2 + $0x208] sm:$0xff]
    %v276 = vld [vmem:[#allocation2 + $0x210] sm:$0xff]
    %v277 = vld [vmem:[#allocation2 + $0x218] sm:$0xff]
    %v278 = vld [vmem:[#allocation2 + $0x220] sm:$0xff]
    %v279 = vld [vmem:[#allocation2 + $0x228] sm:$0xff]
    %v280 = vld [vmem:[#allocation2 + $0x230] sm:$0xff]
    %v281 = vld [vmem:[#allocation2 + $0x238] sm:$0xff]
    %v282 = vld [vmem:[#allocation2 + $0x240] sm:$0xff]
    %v283 = vld [vmem:[#allocation2 + $0x248] sm:$0xff]
    %v284 = vld [vmem:[#allocation2 + $0x250] sm:$0xff]
    %v285 = vld [vmem:[#allocation2 + $0x258] sm:$0xff]
    %v286 = vld [vmem:[#allocation2 + $0x260] sm:$0xff]
    %v287 = vld [vmem:[#allocation2 + $0x268] sm:$0xff]
    %v288 = vld [vmem:[#allocation2 + $0x270] sm:$0xff]
    %v289 = vld [vmem:[#allocation2 + $0x278] sm:$0xff]
    %v290 = vld [vmem:[#allocation2 + $0x280] sm:$0xff]
    %v291 = vld [vmem:[#allocation2 + $0x288] sm:$0xff]
    %v292 = vld [vmem:[#allocation2 + $0x290] sm:$0xff]
    %v293 = vld [vmem:[#allocation2 + $0x298] sm:$0xff]
    %v294 = vld [vmem:[#allocation2 + $0x2a0] sm:$0xff]
    %v295 = vld [vmem:[#allocation2 + $0x2a8] sm:$0xff]
    %v296 = vld [vmem:[#allocation2 + $0x2b0] sm:$0xff]
    %v297 = vld [vmem:[#allocation2 + $0x2b8] sm:$0xff]
    %v298 = vld [vmem:[#allocation2 + $0x2c0] sm:$0xff]
    %v299 = vld [vmem:[#allocation2 + $0x2c8] sm:$0xff]
    %v300 = vld [vmem:[#allocation2 + $0x2d0] sm:$0xff]
    %v301 = vld [vmem:[#allocation2 + $0x2d8] sm:$0xff]
    %v302 = vld [vmem:[#allocation2 + $0x2e0] sm:$0xff]
    %v303 = vld [vmem:[#allocation2 + $0x2e8] sm:$0xff]
    %v304 = vld [vmem:[#allocation2 + $0x2f0] sm:$0xff]
    %v305 = vld [vmem:[#allocation2 + $0x2f8] sm:$0xff]
    %v306 = vld [vmem:[#allocation2 + $0x300] sm:$0xff]
    %v307 = vld [vmem:[#allocation2 + $0x308] sm:$0xff]
    %v308 = vld [vmem:[#allocation2 + $0x310] sm:$0xff]
    %v309 = vld [vmem:[#allocation2 + $0x318] sm:$0xff]
    %v310 = vld [vmem:[#allocation2 + $0x320] sm:$0xff]
    %v311 = vld [vmem:[#allocation2 + $0x328] sm:$0xff]
    %v312 = vld [vmem:[#allocation2 + $0x330] sm:$0xff]
    %v313 = vld [vmem:[#allocation2 + $0x338] sm:$0xff]
    %v314 = vld [vmem:[#allocation2 + $0x340] sm:$0xff]
    %v315 = vld [vmem:[#allocation2 + $0x348] sm:$0xff]
    %v316 = vld [vmem:[#allocation2 + $0x350] sm:$0xff]
    %v317 = vld [vmem:[#allocation2 + $0x358] sm:$0xff]
    %v318 = vld [vmem:[#allocation2 + $0x360] sm:$0xff]
    %v319 = vld [vmem:[#allocation2 + $0x368] sm:$0xff]
    %v320 = vld [vmem:[#allocation2 + $0x370] sm:$0xff]
    %v321 = vld [vmem:[#allocation2 + $0x378] sm:$0xff]
    %v322 = vld [vmem:[#allocation2 + $0x380] sm:$0xff]
    %v323 = vld [vmem:[#allocation2 + $0x388] sm:$0xff]
    %v324 = vld [vmem:[#allocation2 + $0x390] sm:$0xff]
    %v325 = vld [vmem:[#allocation2 + $0x398] sm:$0xff]
    %v326 = vld [vmem:[#allocation2 + $0x3a0] sm:$0xff]
    %v327 = vld [vmem:[#allocation2 + $0x3a8] sm:$0xff]
    %v328 = vld [vmem:[#allocation2 + $0x3b0] sm:$0xff]
    %v329 = vld [vmem:[#allocation2 + $0x3b8] sm:$0xff]
    %v330 = vld [vmem:[#allocation2 + $0x3c0] sm:$0xff]
    %v331 = vld [vmem:[#allocation2 + $0x3c8] sm:$0xff]
    %v332 = vld [vmem:[#allocation2 + $0x3d0] sm:$0xff]
    %v333 = vld [vmem:[#allocation2 + $0x3d8] sm:$0xff]
    %v334 = vld [vmem:[#allocation2 + $0x3e0] sm:$0xff]
    %v335 = vld [vmem:[#allocation2 + $0x3e8] sm:$0xff]
    %v336 = vld [vmem:[#allocation2 + $0x3f0] sm:$0xff]
    %v337 = vld [vmem:[#allocation2 + $0x3f8] sm:$0xff]
    %v338 = vld [vmem:[#allocation2 + $0x400] sm:$0xff]
    %v339 = vld [vmem:[#allocation2 + $0x408] sm:$0xff]
    %v340 = vld [vmem:[#allocation2 + $0x410] sm:$0xff]
    %v341 = vld [vmem:[#allocation2 + $0x418] sm:$0xff]
    %v342 = vld [vmem:[#allocation2 + $0x420] sm:$0xff]
    %v343 = vld [vmem:[#allocation2 + $0x428] sm:$0xff]
    %v344 = vld [vmem:[#allocation2 + $0x430] sm:$0xff]
    %v345 = vld [vmem:[#allocation2 + $0x438] sm:$0xff]
    %v346 = vld [vmem:[#allocation2 + $0x440] sm:$0xff]
    %v347 = vld [vmem:[#allocation2 + $0x448] sm:$0xff]
    %v348 = vld [vmem:[#allocation2 + $0x450] sm:$0xff]
    %v349 = vld [vmem:[#allocation2 + $0x458] sm:$0xff]
    %v350 = vld [vmem:[#allocation2 + $0x460] sm:$0xff]
    %v351 = vld [vmem:[#allocation2 + $0x468] sm:$0xff]
    %v352 = vld [vmem:[#allocation2 + $0x470] sm:$0xff]
    %v353 = vld [vmem:[#allocation2 + $0x478] sm:$0xff]
    %v354 = vld [vmem:[#allocation2 + $0x480] sm:$0xff]
    %v355 = vld [vmem:[#allocation2 + $0x488] sm:$0xff]
    %v356 = vld [vmem:[#allocation2 + $0x490] sm:$0xff]
    %v357 = vld [vmem:[#allocation2 + $0x498] sm:$0xff]
    %v358 = vld [vmem:[#allocation2 + $0x4a0] sm:$0xff]
    %v359 = vld [vmem:[#allocation2 + $0x4a8] sm:$0xff]
    %v360 = vld [vmem:[#allocation2 + $0x4b0] sm:$0xff]
    %v361 = vld [vmem:[#allocation2 + $0x4b8] sm:$0xff]
    %v362 = vld [vmem:[#allocation2 + $0x4c0] sm:$0xff]
    %v363 = vld [vmem:[#allocation2 + $0x4c8] sm:$0xff]
    %v364 = vld [vmem:[#allocation2 + $0x4d0] sm:$0xff]
    %v365 = vld [vmem:[#allocation2 + $0x4d8] sm:$0xff]
    %v366 = vld [vmem:[#allocation2 + $0x4e0] sm:$0xff]
    %v367 = vld [vmem:[#allocation2 + $0x4e8] sm:$0xff]
    %v368 = vld [vmem:[#allocation2 + $0x4f0] sm:$0xff]
    %v369 = vld [vmem:[#allocation2 + $0x4f8] sm:$0xff]
    %v370 = vld [vmem:[#allocation2 + $0x500] sm:$0xff]
    %v371 = vld [vmem:[#allocation2 + $0x508] sm:$0xff]
    %v372 = vld [vmem:[#allocation2 + $0x510] sm:$0xff]
    %v373 = vld [vmem:[#allocation2 + $0x518] sm:$0xff]
    %v374 = vld [vmem:[#allocation2 + $0x520] sm:$0xff]
    %v375 = vld [vmem:[#allocation2 + $0x528] sm:$0xff]
    %v376 = vld [vmem:[#allocation2 + $0x530] sm:$0xff]
    %v377 = vld [vmem:[#allocation2 + $0x538] sm:$0xff]
    %v378 = vld [vmem:[#allocation2 + $0x540] sm:$0xff]
    %v379 = vld [vmem:[#allocation2 + $0x548] sm:$0xff]
    %v380 = vld [vmem:[#allocation2 + $0x550] sm:$0xff]
    %v381 = vld [vmem:[#allocation2 + $0x558] sm:$0xff]
    %v382 = vld [vmem:[#allocation2 + $0x560] sm:$0xff]
    %v383 = vld [vmem:[#allocation2 + $0x568] sm:$0xff]
    %v384 = vld [vmem:[#allocation2 + $0x570] sm:$0xff]
    %v385 = vld [vmem:[#allocation2 + $0x578] sm:$0xff]
    %v386 = vld [vmem:[#allocation2 + $0x580] sm:$0xff]
    %v387 = vld [vmem:[#allocation2 + $0x588] sm:$0xff]
    %v388 = vld [vmem:[#allocation2 + $0x590] sm:$0xff]
    %v389 = vld [vmem:[#allocation2 + $0x598] sm:$0xff]
    %v390 = vld [vmem:[#allocation2 + $0x5a0] sm:$0xff]
    %v391 = vld [vmem:[#allocation2 + $0x5a8] sm:$0xff]
    %v392 = vld [vmem:[#allocation2 + $0x5b0] sm:$0xff]
    %v393 = vld [vmem:[#allocation2 + $0x5b8] sm:$0xff]
    %v394 = vld [vmem:[#allocation2 + $0x5c0] sm:$0xff]
    %v395 = vld [vmem:[#allocation2 + $0x5c8] sm:$0xff]
    %v396 = vld [vmem:[#allocation2 + $0x5d0] sm:$0xff]
    %v397 = vld [vmem:[#allocation2 + $0x5d8] sm:$0xff]
    %v398 = vld [vmem:[#allocation2 + $0x5e0] sm:$0xff]
    %v399 = vld [vmem:[#allocation2 + $0x5e8] sm:$0xff]
    %v400 = vld [vmem:[#allocation2 + $0x5f0] sm:$0xff]
    %v401 = vld [vmem:[#allocation2 + $0x5f8] sm:$0xff]
    %v402 = vld [vmem:[#allocation2 + $0x600] sm:$0xff]
    %v403 = vld [vmem:[#allocation2 + $0x608] sm:$0xff]
    %v404 = vld [vmem:[#allocation2 + $0x610] sm:$0xff]
    %v405 = vld [vmem:[#allocation2 + $0x618] sm:$0xff]
    %v406 = vld [vmem:[#allocation2 + $0x620] sm:$0xff]
    %v407 = vld [vmem:[#allocation2 + $0x628] sm:$0xff]
    %v408 = vld [vmem:[#allocation2 + $0x630] sm:$0xff]
    %v409 = vld [vmem:[#allocation2 + $0x638] sm:$0xff]
    %v410 = vld [vmem:[#allocation2 + $0x640] sm:$0xff]
    %v411 = vld [vmem:[#allocation2 + $0x648] sm:$0xff]
    %v412 = vld [vmem:[#allocation2 + $0x650] sm:$0xff]
    %v413 = vld [vmem:[#allocation2 + $0x658] sm:$0xff]
    %v414 = vld [vmem:[#allocation2 + $0x660] sm:$0xff]
    %v415 = vld [vmem:[#allocation2 + $0x668] sm:$0xff]
    %v416 = vld [vmem:[#allocation2 + $0x670] sm:$0xff]
    %v417 = vld [vmem:[#allocation2 + $0x678] sm:$0xff]
    %v418 = vld [vmem:[#allocation2 + $0x680] sm:$0xff]
    %v419 = vld [vmem:[#allocation2 + $0x688] sm:$0xff]
    %v420 = vld [vmem:[#allocation2 + $0x690] sm:$0xff]
    %v421 = vld [vmem:[#allocation2 + $0x698] sm:$0xff]
    %v422 = vld [vmem:[#allocation2 + $0x6a0] sm:$0xff]
    %v423 = vld [vmem:[#allocation2 + $0x6a8] sm:$0xff]
    %v424 = vld [vmem:[#allocation2 + $0x6b0] sm:$0xff]
    %v425 = vld [vmem:[#allocation2 + $0x6b8] sm:$0xff]
    %v426 = vld [vmem:[#allocation2 + $0x6c0] sm:$0xff]
    %v427 = vld [vmem:[#allocation2 + $0x6c8] sm:$0xff]
    %v428 = vld [vmem:[#allocation2 + $0x6d0] sm:$0xff]
    %v429 = vld [vmem:[#allocation2 + $0x6d8] sm:$0xff]
    %v430 = vld [vmem:[#allocation2 + $0x6e0] sm:$0xff]
    %v431 = vld [vmem:[#allocation2 + $0x6e8] sm:$0xff]
    %v432 = vld [vmem:[#allocation2 + $0x6f0] sm:$0xff]
    %v433 = vld [vmem:[#allocation2 + $0x6f8] sm:$0xff]
    %v434 = vld [vmem:[#allocation2 + $0x700] sm:$0xff]
    %v435 = vld [vmem:[#allocation2 + $0x708] sm:$0xff]
    %v436 = vld [vmem:[#allocation2 + $0x710] sm:$0xff]
    %v437 = vld [vmem:[#allocation2 + $0x718] sm:$0xff]
    %v438 = vld [vmem:[#allocation2 + $0x720] sm:$0xff]
    %v439 = vld [vmem:[#allocation2 + $0x728] sm:$0xff]
    %v440 = vld [vmem:[#allocation2 + $0x730] sm:$0xff]
    %v441 = vld [vmem:[#allocation2 + $0x738] sm:$0xff]
    %v442 = vld [vmem:[#allocation2 + $0x740] sm:$0xff]
    %v443 = vld [vmem:[#allocation2 + $0x748] sm:$0xff]
    %v444 = vld [vmem:[#allocation2 + $0x750] sm:$0xff]
    %v445 = vld [vmem:[#allocation2 + $0x758] sm:$0xff]
    %v446 = vld [vmem:[#allocation2 + $0x760] sm:$0xff]
    %v447 = vld [vmem:[#allocation2 + $0x768] sm:$0xff]
    %v448 = vld [vmem:[#allocation2 + $0x770] sm:$0xff]
    %v449 = vld [vmem:[#allocation2 + $0x778] sm:$0xff]
    %v450 = vld [vmem:[#allocation2 + $0x780] sm:$0xff]
    %v451 = vld [vmem:[#allocation2 + $0x788] sm:$0xff]
    %v452 = vld [vmem:[#allocation2 + $0x790] sm:$0xff]
    %v453 = vld [vmem:[#allocation2 + $0x798] sm:$0xff]
    %v454 = vld [vmem:[#allocation2 + $0x7a0] sm:$0xff]
    %v455 = vld [vmem:[#allocation2 + $0x7a8] sm:$0xff]
    %v456 = vld [vmem:[#allocation2 + $0x7b0] sm:$0xff]
    %v457 = vld [vmem:[#allocation2 + $0x7b8] sm:$0xff]
    %v458 = vld [vmem:[#allocation2 + $0x7c0] sm:$0xff]
    %v459 = vld [vmem:[#allocation2 + $0x7c8] sm:$0xff]
    %v460 = vld [vmem:[#allocation2 + $0x7d0] sm:$0xff]
    %v461 = vld [vmem:[#allocation2 + $0x7d8] sm:$0xff]
    %v462 = vld [vmem:[#allocation2 + $0x7e0] sm:$0xff]
    %v463 = vld [vmem:[#allocation2 + $0x7e8] sm:$0xff]
    %v464 = vld [vmem:[#allocation2 + $0x7f0] sm:$0xff]
    %v465 = vld [vmem:[#allocation2 + $0x7f8] sm:$0xff]
    %v466 = vld [vmem:[#allocation2 + $0x800] sm:$0xff]
    %v467 = vld [vmem:[#allocation2 + $0x808] sm:$0xff]
    %v468 = vld [vmem:[#allocation2 + $0x810] sm:$0xff]
    %v469 = vld [vmem:[#allocation2 + $0x818] sm:$0xff]
    %v470 = vld [vmem:[#allocation2 + $0x820] sm:$0xff]
    %v471 = vld [vmem:[#allocation2 + $0x828] sm:$0xff]
    %v472 = vld [vmem:[#allocation2 + $0x830] sm:$0xff]
    %v473 = vld [vmem:[#allocation2 + $0x838] sm:$0xff]
    %v474 = vld [vmem:[#allocation2 + $0x840] sm:$0xff]
    %v475 = vld [vmem:[#allocation2 + $0x848] sm:$0xff]
    %v476 = vld [vmem:[#allocation2 + $0x850] sm:$0xff]
    %v477 = vld [vmem:[#allocation2 + $0x858] sm:$0xff]
    %v478 = vld [vmem:[#allocation2 + $0x860] sm:$0xff]
    %v479 = vld [vmem:[#allocation2 + $0x868] sm:$0xff]
    %v480 = vld [vmem:[#allocation2 + $0x870] sm:$0xff]
    %v481 = vld [vmem:[#allocation2 + $0x878] sm:$0xff]
    %v482 = vld [vmem:[#allocation2 + $0x880] sm:$0xff]
    %v483 = vld [vmem:[#allocation2 + $0x888] sm:$0xff]
    %v484 = vld [vmem:[#allocation2 + $0x890] sm:$0xff]
    %v485 = vld [vmem:[#allocation2 + $0x898] sm:$0xff]
    %v486 = vld [vmem:[#allocation2 + $0x8a0] sm:$0xff]
    %v487 = vld [vmem:[#allocation2 + $0x8a8] sm:$0xff]
    %v488 = vld [vmem:[#allocation2 + $0x8b0] sm:$0xff]
    %v489 = vld [vmem:[#allocation2 + $0x8b8] sm:$0xff]
    %v490 = vld [vmem:[#allocation2 + $0x8c0] sm:$0xff]
    %v491 = vld [vmem:[#allocation2 + $0x8c8] sm:$0xff]
    %v492 = vld [vmem:[#allocation2 + $0x8d0] sm:$0xff]
    %v493 = vld [vmem:[#allocation2 + $0x8d8] sm:$0xff]
    %v494 = vld [vmem:[#allocation2 + $0x8e0] sm:$0xff]
    %v495 = vld [vmem:[#allocation2 + $0x8e8] sm:$0xff]
    %v496 = vld [vmem:[#allocation2 + $0x8f0] sm:$0xff]
    %v497 = vld [vmem:[#allocation2 + $0x8f8] sm:$0xff]
    %v498 = vld [vmem:[#allocation2 + $0x900] sm:$0xff]
    %v499 = vld [vmem:[#allocation2 + $0x908] sm:$0xff]
    %v500 = vld [vmem:[#allocation2 + $0x910] sm:$0xff]
    %v501 = vld [vmem:[#allocation2 + $0x918] sm:$0xff]
    %v502 = vld [vmem:[#allocation2 + $0x920] sm:$0xff]
    %v503 = vld [vmem:[#allocation2 + $0x928] sm:$0xff]
    %v504 = vld [vmem:[#allocation2 + $0x930] sm:$0xff]
    %v505 = vld [vmem:[#allocation2 + $0x938] sm:$0xff]
    %v506 = vld [vmem:[#allocation2 + $0x940] sm:$0xff]
    %v507 = vld [vmem:[#allocation2 + $0x948] sm:$0xff]
    %v508 = vld [vmem:[#allocation2 + $0x950] sm:$0xff]
    %v509 = vld [vmem:[#allocation2 + $0x958] sm:$0xff]
    %v510 = vld [vmem:[#allocation2 + $0x960] sm:$0xff]
    %v511 = vld [vmem:[#allocation2 + $0x968] sm:$0xff]
    %v512 = vld [vmem:[#allocation2 + $0x970] sm:$0xff]
    %v513 = vld [vmem:[#allocation2 + $0x978] sm:$0xff]
    %v514 = vld [vmem:[#allocation2 + $0x980] sm:$0xff]
    %v515 = vld [vmem:[#allocation2 + $0x988] sm:$0xff]
    %v516 = vld [vmem:[#allocation2 + $0x990] sm:$0xff]
    %v517 = vld [vmem:[#allocation2 + $0x998] sm:$0xff]
    %v518 = vld [vmem:[#allocation2 + $0x9a0] sm:$0xff]
    %v519 = vld [vmem:[#allocation2 + $0x9a8] sm:$0xff]
    %v520 = vld [vmem:[#allocation2 + $0x9b0] sm:$0xff]
    %v521 = vld [vmem:[#allocation2 + $0x9b8] sm:$0xff]
    %v522 = vld [vmem:[#allocation2 + $0x9c0] sm:$0xff]
    %v523 = vld [vmem:[#allocation2 + $0x9c8] sm:$0xff]
    %v524 = vld [vmem:[#allocation2 + $0x9d0] sm:$0xff]
    %v525 = vld [vmem:[#allocation2 + $0x9d8] sm:$0xff]
    %v526 = vld [vmem:[#allocation2 + $0x9e0] sm:$0xff]
    %v527 = vld [vmem:[#allocation2 + $0x9e8] sm:$0xff]
    %v528 = vld [vmem:[#allocation2 + $0x9f0] sm:$0xff]
    %v529 = vld [vmem:[#allocation2 + $0x9f8] sm:$0xff]
    %v530 = vld [vmem:[#allocation2 + $0xa00] sm:$0xff]
    %v531 = vld [vmem:[#allocation2 + $0xa08] sm:$0xff]
    %v532 = vld [vmem:[#allocation2 + $0xa10] sm:$0xff]
    %v533 = vld [vmem:[#allocation2 + $0xa18] sm:$0xff]
    %v534 = vld [vmem:[#allocation2 + $0xa20] sm:$0xff]
    %v535 = vld [vmem:[#allocation2 + $0xa28] sm:$0xff]
    %v536 = vld [vmem:[#allocation2 + $0xa30] sm:$0xff]
    %v537 = vld [vmem:[#allocation2 + $0xa38] sm:$0xff]
    %v538 = vld [vmem:[#allocation2 + $0xa40] sm:$0xff]
    %v539 = vld [vmem:[#allocation2 + $0xa48] sm:$0xff]
    %v540 = vld [vmem:[#allocation2 + $0xa50] sm:$0xff]
    %v541 = vld [vmem:[#allocation2 + $0xa58] sm:$0xff]
    %v542 = vld [vmem:[#allocation2 + $0xa60] sm:$0xff]
    %v543 = vld [vmem:[#allocation2 + $0xa68] sm:$0xff]
    %v544 = vld [vmem:[#allocation2 + $0xa70] sm:$0xff]
    %v545 = vld [vmem:[#allocation2 + $0xa78] sm:$0xff]
    %v546 = vld [vmem:[#allocation2 + $0xa80] sm:$0xff]
    %v547 = vld [vmem:[#allocation2 + $0xa88] sm:$0xff]
    %v548 = vld [vmem:[#allocation2 + $0xa90] sm:$0xff]
    %v549 = vld [vmem:[#allocation2 + $0xa98] sm:$0xff]
    %v550 = vld [vmem:[#allocation2 + $0xaa0] sm:$0xff]
    %v551 = vld [vmem:[#allocation2 + $0xaa8] sm:$0xff]
    %v552 = vld [vmem:[#allocation2 + $0xab0] sm:$0xff]
    %v553 = vld [vmem:[#allocation2 + $0xab8] sm:$0xff]
    %v554 = vld [vmem:[#allocation2 + $0xac0] sm:$0xff]
    %v555 = vld [vmem:[#allocation2 + $0xac8] sm:$0xff]
    %v556 = vld [vmem:[#allocation2 + $0xad0] sm:$0xff]
    %v557 = vld [vmem:[#allocation2 + $0xad8] sm:$0xff]
    %v558 = vld [vmem:[#allocation2 + $0xae0] sm:$0xff]
    %v559 = vld [vmem:[#allocation2 + $0xae8] sm:$0xff]
    %v560 = vld [vmem:[#allocation2 + $0xaf0] sm:$0xff]
    %v561 = vld [vmem:[#allocation2 + $0xaf8] sm:$0xff]
    %v562 = vld [vmem:[#allocation2 + $0xb00] sm:$0xff]
    %v563 = vld [vmem:[#allocation2 + $0xb08] sm:$0xff]
    %v564 = vld [vmem:[#allocation2 + $0xb10] sm:$0xff]
    %v565 = vld [vmem:[#allocation2 + $0xb18] sm:$0xff]
    %v566 = vld [vmem:[#allocation2 + $0xb20] sm:$0xff]
    %v567 = vld [vmem:[#allocation2 + $0xb28] sm:$0xff]
    %v568 = vld [vmem:[#allocation2 + $0xb30] sm:$0xff]
    %v569 = vld [vmem:[#allocation2 + $0xb38] sm:$0xff]
    %v570 = vld [vmem:[#allocation2 + $0xb40] sm:$0xff]
    %v571 = vld [vmem:[#allocation2 + $0xb48] sm:$0xff]
    %v572 = vld [vmem:[#allocation2 + $0xb50] sm:$0xff]
    %v573 = vld [vmem:[#allocation2 + $0xb58] sm:$0xff]
    %v574 = vld [vmem:[#allocation2 + $0xb60] sm:$0xff]
    %v575 = vld [vmem:[#allocation2 + $0xb68] sm:$0xff]
    %v576 = vld [vmem:[#allocation2 + $0xb70] sm:$0xff]
    %v577 = vld [vmem:[#allocation2 + $0xb78] sm:$0xff]
    %v578 = vld [vmem:[#allocation2 + $0xb80] sm:$0xff]
    %v579 = vld [vmem:[#allocation2 + $0xb88] sm:$0xff]
    %v580 = vld [vmem:[#allocation2 + $0xb90] sm:$0xff]
    %v581 = vld [vmem:[#allocation2 + $0xb98] sm:$0xff]
    %v582 = vld [vmem:[#allocation2 + $0xba0] sm:$0xff]
    %v583 = vld [vmem:[#allocation2 + $0xba8] sm:$0xff]
    %v584 = vld [vmem:[#allocation2 + $0xbb0] sm:$0xff]
    %v585 = vld [vmem:[#allocation2 + $0xbb8] sm:$0xff]
    %v586 = vld [vmem:[#allocation2 + $0xbc0] sm:$0xff]
    %v587 = vld [vmem:[#allocation2 + $0xbc8] sm:$0xff]
    %v588 = vld [vmem:[#allocation2 + $0xbd0] sm:$0xff]
    %v589 = vld [vmem:[#allocation2 + $0xbd8] sm:$0xff]
    %v590 = vld [vmem:[#allocation2 + $0xbe0] sm:$0xff]
    %v591 = vld [vmem:[#allocation2 + $0xbe8] sm:$0xff]
    %v592 = vld [vmem:[#allocation2 + $0xbf0] sm:$0xff]
    %v593 = vld [vmem:[#allocation2 + $0xbf8] sm:$0xff]
    %v594 = vld [vmem:[#allocation2 + $0xc00] sm:$0xff]
    %v595 = vld [vmem:[#allocation2 + $0xc08] sm:$0xff]
    %v596 = vld [vmem:[#allocation2 + $0xc10] sm:$0xff]
    %v597 = vld [vmem:[#allocation2 + $0xc18] sm:$0xff]
    %v598 = vld [vmem:[#allocation2 + $0xc20] sm:$0xff]
    %v599 = vld [vmem:[#allocation2 + $0xc28] sm:$0xff]
    %v600 = vld [vmem:[#allocation2 + $0xc30] sm:$0xff]
    %v601 = vld [vmem:[#allocation2 + $0xc38] sm:$0xff]
    %v602 = vld [vmem:[#allocation2 + $0xc40] sm:$0xff]
    %v603 = vld [vmem:[#allocation2 + $0xc48] sm:$0xff]
    %v604 = vld [vmem:[#allocation2 + $0xc50] sm:$0xff]
    %v605 = vld [vmem:[#allocation2 + $0xc58] sm:$0xff]
    %v606 = vld [vmem:[#allocation2 + $0xc60] sm:$0xff]
    %v607 = vld [vmem:[#allocation2 + $0xc68] sm:$0xff]
    %v608 = vld [vmem:[#allocation2 + $0xc70] sm:$0xff]
    %v609 = vld [vmem:[#allocation2 + $0xc78] sm:$0xff]
    %v610 = vld [vmem:[#allocation2 + $0xc80] sm:$0xff]
    %v611 = vld [vmem:[#allocation2 + $0xc88] sm:$0xff]
    %v612 = vld [vmem:[#allocation2 + $0xc90] sm:$0xff]
    %v613 = vld [vmem:[#allocation2 + $0xc98] sm:$0xff]
    %v614 = vld [vmem:[#allocation2 + $0xca0] sm:$0xff]
    %v615 = vld [vmem:[#allocation2 + $0xca8] sm:$0xff]
    %v616 = vld [vmem:[#allocation2 + $0xcb0] sm:$0xff]
    %v617 = vld [vmem:[#allocation2 + $0xcb8] sm:$0xff]
    %v618 = vld [vmem:[#allocation2 + $0xcc0] sm:$0xff]
    %v619 = vld [vmem:[#allocation2 + $0xcc8] sm:$0xff]
    %v620 = vld [vmem:[#allocation2 + $0xcd0] sm:$0xff]
    %v621 = vld [vmem:[#allocation2 + $0xcd8] sm:$0xff]
    %v622 = vld [vmem:[#allocation2 + $0xce0] sm:$0xff]
    %v623 = vld [vmem:[#allocation2 + $0xce8] sm:$0xff]
    %v624 = vld [vmem:[#allocation2 + $0xcf0] sm:$0xff]
    %v625 = vld [vmem:[#allocation2 + $0xcf8] sm:$0xff]
    %v626 = vld [vmem:[#allocation2 + $0xd00] sm:$0xff]
    %v627 = vld [vmem:[#allocation2 + $0xd08] sm:$0xff]
    %v628 = vld [vmem:[#allocation2 + $0xd10] sm:$0xff]
    %v629 = vld [vmem:[#allocation2 + $0xd18] sm:$0xff]
    %v630 = vld [vmem:[#allocation2 + $0xd20] sm:$0xff]
    %v631 = vld [vmem:[#allocation2 + $0xd28] sm:$0xff]
    %v632 = vld [vmem:[#allocation2 + $0xd30] sm:$0xff]
    %v633 = vld [vmem:[#allocation2 + $0xd38] sm:$0xff]
    %v634 = vld [vmem:[#allocation2 + $0xd40] sm:$0xff]
    %v635 = vld [vmem:[#allocation2 + $0xd48] sm:$0xff]
    %v636 = vld [vmem:[#allocation2 + $0xd50] sm:$0xff]
    %v637 = vld [vmem:[#allocation2 + $0xd58] sm:$0xff]
    %v638 = vld [vmem:[#allocation2 + $0xd60] sm:$0xff]
    %v639 = vld [vmem:[#allocation2 + $0xd68] sm:$0xff]
    %v640 = vld [vmem:[#allocation2 + $0xd70] sm:$0xff]
    %v641 = vld [vmem:[#allocation2 + $0xd78] sm:$0xff]
    %v642 = vld [vmem:[#allocation2 + $0xd80] sm:$0xff]
    %v643 = vld [vmem:[#allocation2 + $0xd88] sm:$0xff]
    %v644 = vld [vmem:[#allocation2 + $0xd90] sm:$0xff]
    %v645 = vld [vmem:[#allocation2 + $0xd98] sm:$0xff]
    %v646 = vld [vmem:[#allocation2 + $0xda0] sm:$0xff]
    %v647 = vld [vmem:[#allocation2 + $0xda8] sm:$0xff]
    %v648 = vld [vmem:[#allocation2 + $0xdb0] sm:$0xff]
    %v649 = vld [vmem:[#allocation2 + $0xdb8] sm:$0xff]
    %v650 = vld [vmem:[#allocation2 + $0xdc0] sm:$0xff]
    %v651 = vld [vmem:[#allocation2 + $0xdc8] sm:$0xff]
    %v652 = vld [vmem:[#allocation2 + $0xdd0] sm:$0xff]
    %v653 = vld [vmem:[#allocation2 + $0xdd8] sm:$0xff]
    %v654 = vld [vmem:[#allocation2 + $0xde0] sm:$0xff]
    %v655 = vld [vmem:[#allocation2 + $0xde8] sm:$0xff]
    %v656 = vld [vmem:[#allocation2 + $0xdf0] sm:$0xff]
    %v657 = vld [vmem:[#allocation2 + $0xdf8] sm:$0xff]
    %v658 = vld [vmem:[#allocation2 + $0xe00] sm:$0xff]
    %v659 = vld [vmem:[#allocation2 + $0xe08] sm:$0xff]
    %v660 = vld [vmem:[#allocation2 + $0xe10] sm:$0xff]
    %v661 = vld [vmem:[#allocation2 + $0xe18] sm:$0xff]
    %v662 = vld [vmem:[#allocation2 + $0xe20] sm:$0xff]
    %v663 = vld [vmem:[#allocation2 + $0xe28] sm:$0xff]
    %v664 = vld [vmem:[#allocation2 + $0xe30] sm:$0xff]
    %v665 = vld [vmem:[#allocation2 + $0xe38] sm:$0xff]
    %v666 = vld [vmem:[#allocation2 + $0xe40] sm:$0xff]
    %v667 = vld [vmem:[#allocation2 + $0xe48] sm:$0xff]
    %v668 = vld [vmem:[#allocation2 + $0xe50] sm:$0xff]
    %v669 = vld [vmem:[#allocation2 + $0xe58] sm:$0xff]
    %v670 = vld [vmem:[#allocation2 + $0xe60] sm:$0xff]
    %v671 = vld [vmem:[#allocation2 + $0xe68] sm:$0xff]
    %v672 = vld [vmem:[#allocation2 + $0xe70] sm:$0xff]
    %v673 = vld [vmem:[#allocation2 + $0xe78] sm:$0xff]
    %v674 = vld [vmem:[#allocation2 + $0xe80] sm:$0xff]
    %v675 = vld [vmem:[#allocation2 + $0xe88] sm:$0xff]
    %v676 = vld [vmem:[#allocation2 + $0xe90] sm:$0xff]
    %v677 = vld [vmem:[#allocation2 + $0xe98] sm:$0xff]
    %v678 = vld [vmem:[#allocation2 + $0xea0] sm:$0xff]
    %v679 = vld [vmem:[#allocation2 + $0xea8] sm:$0xff]
    %v680 = vld [vmem:[#allocation2 + $0xeb0] sm:$0xff]
    %v681 = vld [vmem:[#allocation2 + $0xeb8] sm:$0xff]
    %v682 = vld [vmem:[#allocation2 + $0xec0] sm:$0xff]
    %v683 = vld [vmem:[#allocation2 + $0xec8] sm:$0xff]
    %v684 = vld [vmem:[#allocation2 + $0xed0] sm:$0xff]
    %v685 = vld [vmem:[#allocation2 + $0xed8] sm:$0xff]
    %v686 = vld [vmem:[#allocation2 + $0xee0] sm:$0xff]
    %v687 = vld [vmem:[#allocation2 + $0xee8] sm:$0xff]
    %v688 = vld [vmem:[#allocation2 + $0xef0] sm:$0xff]
    %v689 = vld [vmem:[#allocation2 + $0xef8] sm:$0xff]
    %v690 = vld [vmem:[#allocation2 + $0xf00] sm:$0xff]
    %v691 = vld [vmem:[#allocation2 + $0xf08] sm:$0xff]
    %v692 = vld [vmem:[#allocation2 + $0xf10] sm:$0xff]
    %v693 = vld [vmem:[#allocation2 + $0xf18] sm:$0xff]
    %v694 = vld [vmem:[#allocation2 + $0xf20] sm:$0xff]
    %v695 = vld [vmem:[#allocation2 + $0xf28] sm:$0xff]
    %v696 = vld [vmem:[#allocation2 + $0xf30] sm:$0xff]
    %v697 = vld [vmem:[#allocation2 + $0xf38] sm:$0xff]
    %v698 = vld [vmem:[#allocation2 + $0xf40] sm:$0xff]
    %v699 = vld [vmem:[#allocation2 + $0xf48] sm:$0xff]
    %v700 = vld [vmem:[#allocation2 + $0xf50] sm:$0xff]
    %v701 = vld [vmem:[#allocation2 + $0xf58] sm:$0xff]
    %v702 = vld [vmem:[#allocation2 + $0xf60] sm:$0xff]
    %v703 = vld [vmem:[#allocation2 + $0xf68] sm:$0xff]
    %v704 = vld [vmem:[#allocation2 + $0xf70] sm:$0xff]
    %v705 = vld [vmem:[#allocation2 + $0xf78] sm:$0xff]
    %v706 = vld [vmem:[#allocation2 + $0xf80] sm:$0xff]
    %v707 = vld [vmem:[#allocation2 + $0xf88] sm:$0xff]
    %v708 = vld [vmem:[#allocation2 + $0xf90] sm:$0xff]
    %v709 = vld [vmem:[#allocation2 + $0xf98] sm:$0xff]
    %v710 = vld [vmem:[#allocation2 + $0xfa0] sm:$0xff]
    %v711 = vld [vmem:[#allocation2 + $0xfa8] sm:$0xff]
    %v712 = vld [vmem:[#allocation2 + $0xfb0] sm:$0xff]
    %v713 = vld [vmem:[#allocation2 + $0xfb8] sm:$0xff]
    %v714 = vld [vmem:[#allocation2 + $0xfc0] sm:$0xff]
    %v715 = vld [vmem:[#allocation2 + $0xfc8] sm:$0xff]
    %v716 = vld [vmem:[#allocation2 + $0xfd0] sm:$0xff]
    %v717 = vld [vmem:[#allocation2 + $0xfd8] sm:$0xff]
    %v718 = vld [vmem:[#allocation2 + $0xfe0] sm:$0xff]
    %v719 = vld [vmem:[#allocation2 + $0xfe8] sm:$0xff]
    %v720 = vld [vmem:[#allocation2 + $0xff0] sm:$0xff]
    %v721 = vld [vmem:[#allocation2 + $0xff8] sm:$0xff]
    %v722 = vld [vmem:[#allocation2 + $0x1000] sm:$0xff]
    %v723 = vld [vmem:[#allocation2 + $0x1008] sm:$0xff]
    %v724 = vld [vmem:[#allocation2 + $0x1010] sm:$0xff]
    %v725 = vld [vmem:[#allocation2 + $0x1018] sm:$0xff]
    %v726 = vld [vmem:[#allocation2 + $0x1020] sm:$0xff]
    %v727 = vld [vmem:[#allocation2 + $0x1028] sm:$0xff]
    %v728 = vld [vmem:[#allocation2 + $0x1030] sm:$0xff]
    %v729 = vld [vmem:[#allocation2 + $0x1038] sm:$0xff]
    %v730 = vld [vmem:[#allocation2 + $0x1040] sm:$0xff]
    %v731 = vld [vmem:[#allocation2 + $0x1048] sm:$0xff]
    %v732 = vld [vmem:[#allocation2 + $0x1050] sm:$0xff]
    %v733 = vld [vmem:[#allocation2 + $0x1058] sm:$0xff]
    %v734 = vld [vmem:[#allocation2 + $0x1060] sm:$0xff]
    %v735 = vld [vmem:[#allocation2 + $0x1068] sm:$0xff]
    %v736 = vld [vmem:[#allocation2 + $0x1070] sm:$0xff]
    %v737 = vld [vmem:[#allocation2 + $0x1078] sm:$0xff]
    %v738 = vld [vmem:[#allocation2 + $0x1080] sm:$0xff]
    %v739 = vld [vmem:[#allocation2 + $0x1088] sm:$0xff]
    %v740 = vld [vmem:[#allocation2 + $0x1090] sm:$0xff]
    %v741 = vld [vmem:[#allocation2 + $0x1098] sm:$0xff]
    %v742 = vld [vmem:[#allocation2 + $0x10a0] sm:$0xff]
    %v743 = vld [vmem:[#allocation2 + $0x10a8] sm:$0xff]
    %v744 = vld [vmem:[#allocation2 + $0x10b0] sm:$0xff]
    %v745 = vld [vmem:[#allocation2 + $0x10b8] sm:$0xff]
    %v746 = vld [vmem:[#allocation2 + $0x10c0] sm:$0xff]
    %v747 = vld [vmem:[#allocation2 + $0x10c8] sm:$0xff]
    %v748 = vld [vmem:[#allocation2 + $0x10d0] sm:$0xff]
    %v749 = vld [vmem:[#allocation2 + $0x10d8] sm:$0xff]
    %v750 = vld [vmem:[#allocation2 + $0x10e0] sm:$0xff]
    %v751 = vld [vmem:[#allocation2 + $0x10e8] sm:$0xff]
    %v752 = vld [vmem:[#allocation2 + $0x10f0] sm:$0xff]
    %v753 = vld [vmem:[#allocation2 + $0x10f8] sm:$0xff]
    %v754 = vld [vmem:[#allocation2 + $0x1100] sm:$0xff]
    %v755 = vld [vmem:[#allocation2 + $0x1108] sm:$0xff]
    %v756 = vld [vmem:[#allocation2 + $0x1110] sm:$0xff]
    %v757 = vld [vmem:[#allocation2 + $0x1118] sm:$0xff]
    %v758 = vld [vmem:[#allocation2 + $0x1120] sm:$0xff]
    %v759 = vld [vmem:[#allocation2 + $0x1128] sm:$0xff]
    %v760 = vld [vmem:[#allocation2 + $0x1130] sm:$0xff]
    %v761 = vld [vmem:[#allocation2 + $0x1138] sm:$0xff]
    %v762 = vld [vmem:[#allocation2 + $0x1140] sm:$0xff]
    %v763 = vld [vmem:[#allocation2 + $0x1148] sm:$0xff]
    %v764 = vld [vmem:[#allocation2 + $0x1150] sm:$0xff]
    %v765 = vld [vmem:[#allocation2 + $0x1158] sm:$0xff]
    %v766 = vld [vmem:[#allocation2 + $0x1160] sm:$0xff]
    %v767 = vld [vmem:[#allocation2 + $0x1168] sm:$0xff]
    %v768 = vld [vmem:[#allocation2 + $0x1170] sm:$0xff]
    %v769 = vld [vmem:[#allocation2 + $0x1178] sm:$0xff]
    %v770 = vld [vmem:[#allocation6] sm:$0xff]
    %v771 = vld [vmem:[#allocation6 + $0x8] sm:$0x3]
    %v774 = vlaneseq
    %v775 = vshrl.u32 %v774, 7
    %v776 = vsub.s32 0, %v775
    %v777 = vrot.slane %v770, %v776
    %v778 = vlaneseq
    %v779 = vshrl.u32 %v778, 7
    %v780 = vsub.s32 1, %v779
    %v781 = vrot.slane %v770, %v780
    %v782 = vlaneseq
    %v783 = vshrl.u32 %v782, 7
    %v784 = vsub.s32 2, %v783
    %v785 = vrot.slane %v770, %v784
    %v786 = vlaneseq
    %v787 = vshrl.u32 %v786, 7
    %v788 = vsub.s32 3, %v787
    %v789 = vrot.slane %v770, %v788
    %v790 = vlaneseq
    %v791 = vshrl.u32 %v790, 7
    %v792 = vsub.s32 4, %v791
    %v793 = vrot.slane %v770, %v792
    %v794 = vlaneseq
    %v795 = vshrl.u32 %v794, 7
    %v796 = vsub.s32 5, %v795
    %v797 = vrot.slane %v770, %v796
    %v798 = vlaneseq
    %v799 = vshrl.u32 %v798, 7
    %v800 = vsub.s32 6, %v799
    %v801 = vrot.slane %v770, %v800
    %v802 = vlaneseq
    %v803 = vshrl.u32 %v802, 7
    %v804 = vsub.s32 7, %v803
    %v805 = vrot.slane %v770, %v804
    %v806 = vlaneseq
    %v807 = vshrl.u32 %v806, 7
    %v808 = vsub.s32 0, %v807
    %v809 = vrot.slane %v771, %v808
    %v810 = vlaneseq
    %v811 = vshrl.u32 %v810, 7
    %v812 = vsub.s32 1, %v811
    %v813 = vrot.slane %v771, %v812
    %v888 = vunpack.c.l.b16 %v146
    %v889 = vunpack.c.h.b16 %v146
    %v890 = vunpack.c.l.b16 %v147
    %v891 = vunpack.c.h.b16 %v147
    %v892 = vunpack.c.l.b16 %v148
    %v893 = vunpack.c.h.b16 %v148
    %v894 = vunpack.c.l.b16 %v149
    %v895 = vunpack.c.l.b16 %v150
    %v896 = vunpack.c.h.b16 %v150
    %v897 = vunpack.c.l.b16 %v151
    %v898 = vunpack.c.h.b16 %v151
    %v899 = vunpack.c.l.b16 %v152
    %v900 = vunpack.c.h.b16 %v152
    %v901 = vunpack.c.l.b16 %v153
    %v902 = vunpack.c.l.b16 %v154
    %v903 = vunpack.c.h.b16 %v154
    %v904 = vunpack.c.l.b16 %v155
    %v905 = vunpack.c.h.b16 %v155
    %v906 = vunpack.c.l.b16 %v156
    %v907 = vunpack.c.h.b16 %v156
    %v908 = vunpack.c.l.b16 %v157
    %v909 = vunpack.c.l.b16 %v158
    %v910 = vunpack.c.h.b16 %v158
    %v911 = vunpack.c.l.b16 %v159
    %v912 = vunpack.c.h.b16 %v159
    %v913 = vunpack.c.l.b16 %v160
    %v914 = vunpack.c.h.b16 %v160
    %v915 = vunpack.c.l.b16 %v161
    %v916 = vunpack.c.l.b16 %v162
    %v917 = vunpack.c.h.b16 %v162
    %v918 = vunpack.c.l.b16 %v163
    %v919 = vunpack.c.h.b16 %v163
    %v920 = vunpack.c.l.b16 %v164
    %v921 = vunpack.c.h.b16 %v164
    %v922 = vunpack.c.l.b16 %v165
    %v923 = vunpack.c.l.b16 %v166
    %v924 = vunpack.c.h.b16 %v166
    %v925 = vunpack.c.l.b16 %v167
    %v926 = vunpack.c.h.b16 %v167
    %v927 = vunpack.c.l.b16 %v168
    %v928 = vunpack.c.h.b16 %v168
    %v929 = vunpack.c.l.b16 %v169
    %v930 = vunpack.c.l.b16 %v170
    %v931 = vunpack.c.h.b16 %v170
    %v932 = vunpack.c.l.b16 %v171
    %v933 = vunpack.c.h.b16 %v171
    %v934 = vunpack.c.l.b16 %v172
    %v935 = vunpack.c.h.b16 %v172
    %v936 = vunpack.c.l.b16 %v173
    %v937 = vunpack.c.l.b16 %v174
    %v938 = vunpack.c.h.b16 %v174
    %v939 = vunpack.c.l.b16 %v175
    %v940 = vunpack.c.h.b16 %v175
    %v941 = vunpack.c.l.b16 %v176
    %v942 = vunpack.c.h.b16 %v176
    %v943 = vunpack.c.l.b16 %v177
    %v944 = vunpack.c.l.b16 %v178
    %v945 = vunpack.c.h.b16 %v178
    %v946 = vunpack.c.l.b16 %v179
    %v947 = vunpack.c.h.b16 %v179
    %v948 = vunpack.c.l.b16 %v180
    %v949 = vunpack.c.h.b16 %v180
    %v950 = vunpack.c.l.b16 %v181
    %v951 = vunpack.c.l.b16 %v182
    %v952 = vunpack.c.h.b16 %v182
    %v953 = vunpack.c.l.b16 %v183
    %v954 = vunpack.c.h.b16 %v183
    %v955 = vunpack.c.l.b16 %v184
    %v956 = vunpack.c.h.b16 %v184
    %v957 = vunpack.c.l.b16 %v185
    %v958 = vunpack.c.l.b16 %v186
    %v959 = vunpack.c.h.b16 %v186
    %v960 = vunpack.c.l.b16 %v187
    %v961 = vunpack.c.h.b16 %v187
    %v962 = vunpack.c.l.b16 %v188
    %v963 = vunpack.c.h.b16 %v188
    %v964 = vunpack.c.l.b16 %v189
    %v965 = vunpack.c.l.b16 %v190
    %v966 = vunpack.c.h.b16 %v190
    %v967 = vunpack.c.l.b16 %v191
    %v968 = vunpack.c.h.b16 %v191
    %v969 = vunpack.c.l.b16 %v192
    %v970 = vunpack.c.h.b16 %v192
    %v971 = vunpack.c.l.b16 %v193
    %v972 = vunpack.c.l.b16 %v194
    %v973 = vunpack.c.h.b16 %v194
    %v974 = vunpack.c.l.b16 %v195
    %v975 = vunpack.c.h.b16 %v195
    %v976 = vunpack.c.l.b16 %v196
    %v977 = vunpack.c.h.b16 %v196
    %v978 = vunpack.c.l.b16 %v197
    %v979 = vunpack.c.l.b16 %v198
    %v980 = vunpack.c.h.b16 %v198
    %v981 = vunpack.c.l.b16 %v199
    %v982 = vunpack.c.h.b16 %v199
    %v983 = vunpack.c.l.b16 %v200
    %v984 = vunpack.c.h.b16 %v200
    %v985 = vunpack.c.l.b16 %v201
    %v986 = vunpack.c.l.b16 %v202
    %v987 = vunpack.c.h.b16 %v202
    %v988 = vunpack.c.l.b16 %v203
    %v989 = vunpack.c.h.b16 %v203
    %v990 = vunpack.c.l.b16 %v204
    %v991 = vunpack.c.h.b16 %v204
    %v992 = vunpack.c.l.b16 %v205
    %v993 = vunpack.c.l.b16 %v206
    %v994 = vunpack.c.h.b16 %v206
    %v995 = vunpack.c.l.b16 %v207
    %v996 = vunpack.c.h.b16 %v207
    %v997 = vunpack.c.l.b16 %v208
    %v998 = vunpack.c.h.b16 %v208
    %v999 = vunpack.c.l.b16 %v209
    %v1000 = vpack.c.b16 %v895, %v888
    %v1001 = vpack.c.b16 %v896, %v889
    %v1002 = vpack.c.b16 %v897, %v890
    %v1003 = vpack.c.b16 %v898, %v891
    %v1004 = vpack.c.b16 %v899, %v892
    %v1005 = vpack.c.b16 %v900, %v893
    %v1006 = vpack.c.b16 %v901, %v894
    %v1007 = vpack.c.b16 %v909, %v902
    %v1008 = vpack.c.b16 %v910, %v903
    %v1009 = vpack.c.b16 %v911, %v904
    %v1010 = vpack.c.b16 %v912, %v905
    %v1011 = vpack.c.b16 %v913, %v906
    %v1012 = vpack.c.b16 %v914, %v907
    %v1013 = vpack.c.b16 %v915, %v908
    %v1014 = vpack.c.b16 %v923, %v916
    %v1015 = vpack.c.b16 %v924, %v917
    %v1016 = vpack.c.b16 %v925, %v918
    %v1017 = vpack.c.b16 %v926, %v919
    %v1018 = vpack.c.b16 %v927, %v920
    %v1019 = vpack.c.b16 %v928, %v921
    %v1020 = vpack.c.b16 %v929, %v922
    %v1021 = vpack.c.b16 %v937, %v930
    %v1022 = vpack.c.b16 %v938, %v931
    %v1023 = vpack.c.b16 %v939, %v932
    %v1024 = vpack.c.b16 %v940, %v933
    %v1025 = vpack.c.b16 %v941, %v934
    %v1026 = vpack.c.b16 %v942, %v935
    %v1027 = vpack.c.b16 %v943, %v936
    %v1028 = vpack.c.b16 %v951, %v944
    %v1029 = vpack.c.b16 %v952, %v945
    %v1030 = vpack.c.b16 %v953, %v946
    %v1031 = vpack.c.b16 %v954, %v947
    %v1032 = vpack.c.b16 %v955, %v948
    %v1033 = vpack.c.b16 %v956, %v949
    %v1034 = vpack.c.b16 %v957, %v950
    %v1035 = vpack.c.b16 %v965, %v958
    %v1036 = vpack.c.b16 %v966, %v959
    %v1037 = vpack.c.b16 %v967, %v960
    %v1038 = vpack.c.b16 %v968, %v961
    %v1039 = vpack.c.b16 %v969, %v962
    %v1040 = vpack.c.b16 %v970, %v963
    %v1041 = vpack.c.b16 %v971, %v964
    %v1042 = vpack.c.b16 %v979, %v972
    %v1043 = vpack.c.b16 %v980, %v973
    %v1044 = vpack.c.b16 %v981, %v974
    %v1045 = vpack.c.b16 %v982, %v975
    %v1046 = vpack.c.b16 %v983, %v976
    %v1047 = vpack.c.b16 %v984, %v977
    %v1048 = vpack.c.b16 %v985, %v978
    %v1049 = vpack.c.b16 %v993, %v986
    %v1050 = vpack.c.b16 %v994, %v987
    %v1051 = vpack.c.b16 %v995, %v988
    %v1052 = vpack.c.b16 %v996, %v989
    %v1053 = vpack.c.b16 %v997, %v990
    %v1054 = vpack.c.b16 %v998, %v991
    %v1055 = vpack.c.b16 %v999, %v992
    %1112 = vmatprep.subr.bf16.mxu0 %v211
    %1113 = vmatpush1.bf16.msra.mxu0 %v210
    %1114 = vmatprep.subr.bf16.mxu0 %v221
    %1115 = vmatpush1.bf16.msra.mxu0 %v220
    %1116 = vmatprep.subr.bf16.mxu0 %v231
    %1117 = vmatpush1.bf16.msra.mxu0 %v230
    %1118 = vmatprep.subr.bf16.mxu0 %v241
    %1119 = vmatpush1.bf16.msra.mxu0 %v240
    %1120 = vmatprep.subr.bf16.mxu0 %v251
    %1121 = vmatpush1.bf16.msra.mxu0 %v250
    %1122 = vmatprep.subr.bf16.mxu0 %v261
    %1123 = vmatpush1.bf16.msra.mxu0 %v260
    %1124 = vmatprep.subr.bf16.mxu0 %v271
    %1125 = vmatpush1.bf16.msra.mxu0 %v270
    %1126 = vmatprep.subr.bf16.mxu0 %v281
    %1127 = vmatpush1.bf16.msra.mxu0 %v280
    %1128 = vmatprep.subr.bf16.mxu0 %v291
    %1129 = vmatpush1.bf16.msra.mxu0 %v290
    %1130 = vmatprep.subr.bf16.mxu0 %v301
    %1131 = vmatpush1.bf16.msra.mxu0 %v300
    %1132 = vmatprep.subr.bf16.mxu0 %v311
    %1133 = vmatpush1.bf16.msra.mxu0 %v310
    %1134 = vmatprep.subr.bf16.mxu0 %v321
    %1135 = vmatpush1.bf16.msra.mxu0 %v320
    %1136 = vmatprep.subr.bf16.mxu0 %v331
    %1137 = vmatpush1.bf16.msra.mxu0 %v330
    %1138 = vmatprep.subr.bf16.mxu0 %v341
    %1139 = vmatpush1.bf16.msra.mxu0 %v340
    %1140 = vmatprep.subr.bf16.mxu0 %v351
    %1141 = vmatpush1.bf16.msra.mxu0 %v350
    %1142 = vmatprep.subr.bf16.mxu0 %v361
    %1143 = vmatpush1.bf16.msra.mxu0 %v360
    %1144 = vmatprep.mubr.bf16.mxu0 %v1001
    %1145 = vmatmul.mubr.bf16.gmra.mrb[0].mxu0 %v1000
    %v1146 = vpop.f32.mrb[0].mxu0
    %v1147 = vadd.f32 %v777, %v1146
    %v1148 = vpop.f32.mrb[0].mxu0
    %v1149 = vadd.f32 %v781, %v1148
    %v1150 = vpop.f32.mrb[0].mxu0
    %v1151 = vadd.f32 %v777, %v1150
    %v1152 = vpop.f32.mrb[0].mxu0
    %v1153 = vadd.f32 %v781, %v1152
    %1154 = vmatprep.mubr.bf16.mxu0 %v1008
    %1155 = vmatmul.mubr.bf16.gmra.mrb[0].mxu0 %v1007
    %v1156 = vpop.f32.mrb[0].mxu0
    %v1157 = vadd.f32 %v777, %v1156
    %v1158 = vpop.f32.mrb[0].mxu0
    %v1159 = vadd.f32 %v781, %v1158
    %v1160 = vpop.f32.mrb[0].mxu0
    %v1161 = vadd.f32 %v777, %v1160
    %v1162 = vpop.f32.mrb[0].mxu0
    %v1163 = vadd.f32 %v781, %v1162
    %1164 = vmatprep.mubr.bf16.mxu0 %v1015
    %1165 = vmatmul.mubr.bf16.gmra.mrb[0].mxu0 %v1014
    %v1166 = vpop.f32.mrb[0].mxu0
    %v1167 = vadd.f32 %v777, %v1166
    %v1168 = vpop.f32.mrb[0].mxu0
    %v1169 = vadd.f32 %v781, %v1168
    %v1170 = vpop.f32.mrb[0].mxu0
    %v1171 = vadd.f32 %v777, %v1170
    %v1172 = vpop.f32.mrb[0].mxu0
    %v1173 = vadd.f32 %v781, %v1172
    %1174 = vmatprep.mubr.bf16.mxu0 %v1022
    %1175 = vmatmul.mubr.bf16.gmra.mrb[0].mxu0 %v1021
    %v1176 = vpop.f32.mrb[0].mxu0
    %v1177 = vadd.f32 %v777, %v1176
    %v1178 = vpop.f32.mrb[0].mxu0
    %v1179 = vadd.f32 %v781, %v1178
    %v1180 = vpop.f32.mrb[0].mxu0
    %v1181 = vadd.f32 %v777, %v1180
    %v1182 = vpop.f32.mrb[0].mxu0
    %v1183 = vadd.f32 %v781, %v1182
    %1184 = vmatprep.mubr.bf16.mxu0 %v1029
    %1185 = vmatmul.mubr.bf16.gmra.mrb[0].mxu0 %v1028
    %v1186 = vpop.f32.mrb[0].mxu0
    %v1187 = vadd.f32 %v777, %v1186
    %v1188 = vpop.f32.mrb[0].mxu0
    %v1189 = vadd.f32 %v781, %v1188
    %v1190 = vpop.f32.mrb[0].mxu0
    %v1191 = vadd.f32 %v777, %v1190
    %v1192 = vpop.f32.mrb[0].mxu0
    %v1193 = vadd.f32 %v781, %v1192
    %1194 = vmatprep.mubr.bf16.mxu0 %v1036
    %1195 = vmatmul.mubr.bf16.gmra.mrb[0].mxu0 %v1035
    %v1196 = vpop.f32.mrb[0].mxu0
    %v1197 = vadd.f32 %v777, %v1196
    %v1198 = vpop.f32.mrb[0].mxu0
    %v1199 = vadd.f32 %v781, %v1198
    %v1200 = vpop.f32.mrb[0].mxu0
    %v1201 = vadd.f32 %v777, %v1200
    %v1202 = vpop.f32.mrb[0].mxu0
    %v1203 = vadd.f32 %v781, %v1202
    %1204 = vmatprep.mubr.bf16.mxu0 %v1043
    %1205 = vmatmul.mubr.bf16.gmra.mrb[0].mxu0 %v1042
    %v1206 = vpop.f32.mrb[0].mxu0
    %v1207 = vadd.f32 %v777, %v1206
    %v1208 = vpop.f32.mrb[0].mxu0
    %v1209 = vadd.f32 %v781, %v1208
    %v1210 = vpop.f32.mrb[0].mxu0
    %v1211 = vadd.f32 %v777, %v1210
    %v1212 = vpop.f32.mrb[0].mxu0
    %v1213 = vadd.f32 %v781, %v1212
    %1214 = vmatprep.mubr.bf16.mxu0 %v1050
    %1215 = vmatmul.mubr.bf16.gmra.mrb[0].mxu0 %v1049
    %v1216 = vpop.f32.mrb[0].mxu0
    %v1217 = vadd.f32 %v777, %v1216
    %v1218 = vpop.f32.mrb[0].mxu0
    %v1219 = vadd.f32 %v781, %v1218
    %v1220 = vpop.f32.mrb[0].mxu0
    %v1221 = vadd.f32 %v777, %v1220
    %v1222 = vpop.f32.mrb[0].mxu0
    %v1223 = vadd.f32 %v781, %v1222
    %1224 = vdwg.mxu0
    %1225 = vmatprep.subr.bf16.mxu0 %v371
    %1226 = vmatpush1.bf16.msra.mxu0 %v370
    %1227 = vmatprep.subr.bf16.mxu0 %v381
    %1228 = vmatpush1.bf16.msra.mxu0 %v380
    %1229 = vmatprep.subr.bf16.mxu0 %v391
    %1230 = vmatpush1.bf16.msra.mxu0 %v390
    %1231 = vmatprep.subr.bf16.mxu0 %v401
    %1232 = vmatpush1.bf16.msra.mxu0 %v400
    %1233 = vmatprep.subr.bf16.mxu0 %v411
    %1234 = vmatpush1.bf16.msra.mxu0 %v410
    %1235 = vmatprep.subr.bf16.mxu0 %v421
    %1236 = vmatpush1.bf16.msra.mxu0 %v420
    %1237 = vmatprep.subr.bf16.mxu0 %v431
    %1238 = vmatpush1.bf16.msra.mxu0 %v430
    %1239 = vmatprep.subr.bf16.mxu0 %v441
    %1240 = vmatpush1.bf16.msra.mxu0 %v440
    %1241 = vmatprep.subr.bf16.mxu0 %v451
    %1242 = vmatpush1.bf16.msra.mxu0 %v450
    %1243 = vmatprep.subr.bf16.mxu0 %v461
    %1244 = vmatpush1.bf16.msra.mxu0 %v460
    %1245 = vmatprep.subr.bf16.mxu0 %v471
    %1246 = vmatpush1.bf16.msra.mxu0 %v470
    %1247 = vmatprep.subr.bf16.mxu0 %v481
    %1248 = vmatpush1.bf16.msra.mxu0 %v480
    %1249 = vmatprep.subr.bf16.mxu0 %v491
    %1250 = vmatpush1.bf16.msra.mxu0 %v490
    %1251 = vmatprep.subr.bf16.mxu0 %v501
    %1252 = vmatpush1.bf16.msra.mxu0 %v500
    %1253 = vmatprep.subr.bf16.mxu0 %v511
    %1254 = vmatpush1.bf16.msra.mxu0 %v510
    %1255 = vmatprep.subr.bf16.mxu0 %v521
    %1256 = vmatpush1.bf16.msra.mxu0 %v520
    %1257 = vmatprep.mubr.bf16.mxu0 %v1003
    %1258 = vmatmul.mubr.bf16.gmra.mrb[0].mxu0 %v1002
    %v1259 = vpop.f32.mrb[0].mxu0
    %v1260 = vadd.f32 %v1147, %v1259
    %v1261 = vpop.f32.mrb[0].mxu0
    %v1262 = vadd.f32 %v1149, %v1261
    %v1263 = vpop.f32.mrb[0].mxu0
    %v1264 = vadd.f32 %v1151, %v1263
    %v1265 = vpop.f32.mrb[0].mxu0
    %v1266 = vadd.f32 %v1153, %v1265
    %1267 = vmatprep.mubr.bf16.mxu0 %v1010
    %1268 = vmatmul.mubr.bf16.gmra.mrb[0].mxu0 %v1009
    %v1269 = vpop.f32.mrb[0].mxu0
    %v1270 = vadd.f32 %v1157, %v1269
    %v1271 = vpop.f32.mrb[0].mxu0
    %v1272 = vadd.f32 %v1159, %v1271
    %v1273 = vpop.f32.mrb[0].mxu0
    %v1274 = vadd.f32 %v1161, %v1273
    %v1275 = vpop.f32.mrb[0].mxu0
    %v1276 = vadd.f32 %v1163, %v1275
    %1277 = vmatprep.mubr.bf16.mxu0 %v1017
    %1278 = vmatmul.mubr.bf16.gmra.mrb[0].mxu0 %v1016
    %v1279 = vpop.f32.mrb[0].mxu0
    %v1280 = vadd.f32 %v1167, %v1279
    %v1281 = vpop.f32.mrb[0].mxu0
    %v1282 = vadd.f32 %v1169, %v1281
    %v1283 = vpop.f32.mrb[0].mxu0
    %v1284 = vadd.f32 %v1171, %v1283
    %v1285 = vpop.f32.mrb[0].mxu0
    %v1286 = vadd.f32 %v1173, %v1285
    %1287 = vmatprep.mubr.bf16.mxu0 %v1024
    %1288 = vmatmul.mubr.bf16.gmra.mrb[0].mxu0 %v1023
    %v1289 = vpop.f32.mrb[0].mxu0
    %v1290 = vadd.f32 %v1177, %v1289
    %v1291 = vpop.f32.mrb[0].mxu0
    %v1292 = vadd.f32 %v1179, %v1291
    %v1293 = vpop.f32.mrb[0].mxu0
    %v1294 = vadd.f32 %v1181, %v1293
    %v1295 = vpop.f32.mrb[0].mxu0
    %v1296 = vadd.f32 %v1183, %v1295
    %1297 = vmatprep.mubr.bf16.mxu0 %v1031
    %1298 = vmatmul.mubr.bf16.gmra.mrb[0].mxu0 %v1030
    %v1299 = vpop.f32.mrb[0].mxu0
    %v1300 = vadd.f32 %v1187, %v1299
    %v1301 = vpop.f32.mrb[0].mxu0
    %v1302 = vadd.f32 %v1189, %v1301
    %v1303 = vpop.f32.mrb[0].mxu0
    %v1304 = vadd.f32 %v1191, %v1303
    %v1305 = vpop.f32.mrb[0].mxu0
    %v1306 = vadd.f32 %v1193, %v1305
    %1307 = vmatprep.mubr.bf16.mxu0 %v1038
    %1308 = vmatmul.mubr.bf16.gmra.mrb[0].mxu0 %v1037
    %v1309 = vpop.f32.mrb[0].mxu0
    %v1310 = vadd.f32 %v1197, %v1309
    %v1311 = vpop.f32.mrb[0].mxu0
    %v1312 = vadd.f32 %v1199, %v1311
    %v1313 = vpop.f32.mrb[0].mxu0
    %v1314 = vadd.f32 %v1201, %v1313
    %v1315 = vpop.f32.mrb[0].mxu0
    %v1316 = vadd.f32 %v1203, %v1315
    %1317 = vmatprep.mubr.bf16.mxu0 %v1045
    %1318 = vmatmul.mubr.bf16.gmra.mrb[0].mxu0 %v1044
    %v1319 = vpop.f32.mrb[0].mxu0
    %v1320 = vadd.f32 %v1207, %v1319
    %v1321 = vpop.f32.mrb[0].mxu0
    %v1322 = vadd.f32 %v1209, %v1321
    %v1323 = vpop.f32.mrb[0].mxu0
    %v1324 = vadd.f32 %v1211, %v1323
    %v1325 = vpop.f32.mrb[0].mxu0
    %v1326 = vadd.f32 %v1213, %v1325
    %1327 = vmatprep.mubr.bf16.mxu0 %v1052
    %1328 = vmatmul.mubr.bf16.gmra.mrb[0].mxu0 %v1051
    %v1329 = vpop.f32.mrb[0].mxu0
    %v1330 = vadd.f32 %v1217, %v1329
    %v1331 = vpop.f32.mrb[0].mxu0
    %v1332 = vadd.f32 %v1219, %v1331
    %v1333 = vpop.f32.mrb[0].mxu0
    %v1334 = vadd.f32 %v1221, %v1333
    %v1335 = vpop.f32.mrb[0].mxu0
    %v1336 = vadd.f32 %v1223, %v1335
    %1337 = vdwg.mxu0
    %1338 = vmatprep.subr.bf16.mxu0 %v531
    %1339 = vmatpush1.bf16.msra.mxu0 %v530
    %1340 = vmatprep.subr.bf16.mxu0 %v541
    %1341 = vmatpush1.bf16.msra.mxu0 %v540
    %1342 = vmatprep.subr.bf16.mxu0 %v551
    %1343 = vmatpush1.bf16.msra.mxu0 %v550
    %1344 = vmatprep.subr.bf16.mxu0 %v561
    %1345 = vmatpush1.bf16.msra.mxu0 %v560
    %1346 = vmatprep.subr.bf16.mxu0 %v571
    %1347 = vmatpush1.bf16.msra.mxu0 %v570
    %1348 = vmatprep.subr.bf16.mxu0 %v581
    %1349 = vmatpush1.bf16.msra.mxu0 %v580
    %1350 = vmatprep.subr.bf16.mxu0 %v591
    %1351 = vmatpush1.bf16.msra.mxu0 %v590
    %1352 = vmatprep.subr.bf16.mxu0 %v601
    %1353 = vmatpush1.bf16.msra.mxu0 %v600
    %1354 = vmatprep.subr.bf16.mxu0 %v611
    %1355 = vmatpush1.bf16.msra.mxu0 %v610
    %1356 = vmatprep.subr.bf16.mxu0 %v621
    %1357 = vmatpush1.bf16.msra.mxu0 %v620
    %1358 = vmatprep.subr.bf16.mxu0 %v631
    %1359 = vmatpush1.bf16.msra.mxu0 %v630
    %1360 = vmatprep.subr.bf16.mxu0 %v641
    %1361 = vmatpush1.bf16.msra.mxu0 %v640
    %1362 = vmatprep.subr.bf16.mxu0 %v651
    %1363 = vmatpush1.bf16.msra.mxu0 %v650
    %1364 = vmatprep.subr.bf16.mxu0 %v661
    %1365 = vmatpush1.bf16.msra.mxu0 %v660
    %1366 = vmatprep.subr.bf16.mxu0 %v671
    %1367 = vmatpush1.bf16.msra.mxu0 %v670
    %1368 = vmatprep.subr.bf16.mxu0 %v681
    %1369 = vmatpush1.bf16.msra.mxu0 %v680
    %1370 = vmatprep.mubr.bf16.mxu0 %v1005
    %1371 = vmatmul.mubr.bf16.gmra.mrb[0].mxu0 %v1004
    %v1372 = vpop.f32.mrb[0].mxu0
    %v1373 = vadd.f32 %v1260, %v1372
    %v1374 = vpop.f32.mrb[0].mxu0
    %v1375 = vadd.f32 %v1262, %v1374
    %v1376 = vpop.f32.mrb[0].mxu0
    %v1377 = vadd.f32 %v1264, %v1376
    %v1378 = vpop.f32.mrb[0].mxu0
    %v1379 = vadd.f32 %v1266, %v1378
    %1380 = vmatprep.mubr.bf16.mxu0 %v1012
    %1381 = vmatmul.mubr.bf16.gmra.mrb[0].mxu0 %v1011
    %v1382 = vpop.f32.mrb[0].mxu0
    %v1383 = vadd.f32 %v1270, %v1382
    %v1384 = vpop.f32.mrb[0].mxu0
    %v1385 = vadd.f32 %v1272, %v1384
    %v1386 = vpop.f32.mrb[0].mxu0
    %v1387 = vadd.f32 %v1274, %v1386
    %v1388 = vpop.f32.mrb[0].mxu0
    %v1389 = vadd.f32 %v1276, %v1388
    %1390 = vmatprep.mubr.bf16.mxu0 %v1019
    %1391 = vmatmul.mubr.bf16.gmra.mrb[0].mxu0 %v1018
    %v1392 = vpop.f32.mrb[0].mxu0
    %v1393 = vadd.f32 %v1280, %v1392
    %v1394 = vpop.f32.mrb[0].mxu0
    %v1395 = vadd.f32 %v1282, %v1394
    %v1396 = vpop.f32.mrb[0].mxu0
    %v1397 = vadd.f32 %v1284, %v1396
    %v1398 = vpop.f32.mrb[0].mxu0
    %v1399 = vadd.f32 %v1286, %v1398
    %1400 = vmatprep.mubr.bf16.mxu0 %v1026
    %1401 = vmatmul.mubr.bf16.gmra.mrb[0].mxu0 %v1025
    %v1402 = vpop.f32.mrb[0].mxu0
    %v1403 = vadd.f32 %v1290, %v1402
    %v1404 = vpop.f32.mrb[0].mxu0
    %v1405 = vadd.f32 %v1292, %v1404
    %v1406 = vpop.f32.mrb[0].mxu0
    %v1407 = vadd.f32 %v1294, %v1406
    %v1408 = vpop.f32.mrb[0].mxu0
    %v1409 = vadd.f32 %v1296, %v1408
    %1410 = vmatprep.mubr.bf16.mxu0 %v1033
    %1411 = vmatmul.mubr.bf16.gmra.mrb[0].mxu0 %v1032
    %v1412 = vpop.f32.mrb[0].mxu0
    %v1413 = vadd.f32 %v1300, %v1412
    %v1414 = vpop.f32.mrb[0].mxu0
    %v1415 = vadd.f32 %v1302, %v1414
    %v1416 = vpop.f32.mrb[0].mxu0
    %v1417 = vadd.f32 %v1304, %v1416
    %v1418 = vpop.f32.mrb[0].mxu0
    %v1419 = vadd.f32 %v1306, %v1418
    %1420 = vmatprep.mubr.bf16.mxu0 %v1040
    %1421 = vmatmul.mubr.bf16.gmra.mrb[0].mxu0 %v1039
    %v1422 = vpop.f32.mrb[0].mxu0
    %v1423 = vadd.f32 %v1310, %v1422
    %v1424 = vpop.f32.mrb[0].mxu0
    %v1425 = vadd.f32 %v1312, %v1424
    %v1426 = vpop.f32.mrb[0].mxu0
    %v1427 = vadd.f32 %v1314, %v1426
    %v1428 = vpop.f32.mrb[0].mxu0
    %v1429 = vadd.f32 %v1316, %v1428
    %1430 = vmatprep.mubr.bf16.mxu0 %v1047
    %1431 = vmatmul.mubr.bf16.gmra.mrb[0].mxu0 %v1046
    %v1432 = vpop.f32.mrb[0].mxu0
    %v1433 = vadd.f32 %v1320, %v1432
    %v1434 = vpop.f32.mrb[0].mxu0
    %v1435 = vadd.f32 %v1322, %v1434
    %v1436 = vpop.f32.mrb[0].mxu0
    %v1437 = vadd.f32 %v1324, %v1436
    %v1438 = vpop.f32.mrb[0].mxu0
    %v1439 = vadd.f32 %v1326, %v1438
    %1440 = vmatprep.mubr.bf16.mxu0 %v1054
    %1441 = vmatmul.mubr.bf16.gmra.mrb[0].mxu0 %v1053
    %v1442 = vpop.f32.mrb[0].mxu0
    %v1443 = vadd.f32 %v1330, %v1442
    %v1444 = vpop.f32.mrb[0].mxu0
    %v1445 = vadd.f32 %v1332, %v1444
    %v1446 = vpop.f32.mrb[0].mxu0
    %v1447 = vadd.f32 %v1334, %v1446
    %v1448 = vpop.f32.mrb[0].mxu0
    %v1449 = vadd.f32 %v1336, %v1448
    %1450 = vdwg.mxu0
    %1451 = vmatprep.subr.bf16.mxu0 %v691
    %1452 = vmatpush1.bf16.msra.mxu0 %v690
    %1453 = vmatprep.subr.bf16.mxu0 %v701
    %1454 = vmatpush1.bf16.msra.mxu0 %v700
    %1455 = vmatprep.subr.bf16.mxu0 %v711
    %1456 = vmatpush1.bf16.msra.mxu0 %v710
    %1457 = vmatprep.subr.bf16.mxu0 %v721
    %1458 = vmatpush1.bf16.msra.mxu0 %v720
    %1459 = vmatprep.subr.bf16.mxu0 %v731
    %1460 = vmatpush1.bf16.msra.mxu0 %v730
    %1461 = vmatprep.subr.bf16.mxu0 %v741
    %1462 = vmatpush1.bf16.msra.mxu0 %v740
    %1463 = vmatprep.subr.bf16.mxu0 %v751
    %1464 = vmatpush1.bf16.msra.mxu0 %v750
    %1465 = vmatprep.subr.bf16.mxu0 %v761
    %1466 = vmatpush1.bf16.msra.mxu0 %v760
    %1467 = vmatprep.subr.bf16.mxu0 0
    %1468 = vmatpush1.bf16.msra.mxu0 0
    %1469 = vmatprep.subr.bf16.mxu0 0
    %1470 = vmatpush1.bf16.msra.mxu0 0
    %1471 = vmatprep.subr.bf16.mxu0 0
    %1472 = vmatpush1.bf16.msra.mxu0 0
    %1473 = vmatprep.subr.bf16.mxu0 0
    %1474 = vmatpush1.bf16.msra.mxu0 0
    %1475 = vmatprep.subr.bf16.mxu0 0
    %1476 = vmatpush1.bf16.msra.mxu0 0
    %1477 = vmatprep.subr.bf16.mxu0 0
    %1478 = vmatpush1.bf16.msra.mxu0 0
    %1479 = vmatprep.subr.bf16.mxu0 0
    %1480 = vmatpush1.bf16.msra.mxu0 0
    %1481 = vmatprep.subr.bf16.mxu0 0
    %1482 = vmatpush1.bf16.msra.mxu0 0
    %1483 = vmatprep.mubr.bf16.mxu0 0
    %1484 = vmatmul.mubr.bf16.gmra.mrb[0].mxu0 %v1006
    %v1485 = vpop.f32.mrb[0].mxu0
    %v1486 = vadd.f32 %v1373, %v1485
    %v1487 = vpop.f32.mrb[0].mxu0
    %v1488 = vadd.f32 %v1375, %v1487
    %v1489 = vpop.f32.mrb[0].mxu0
    %v1490 = vadd.f32 %v1377, %v1489
    %v1491 = vpop.f32.mrb[0].mxu0
    %v1492 = vadd.f32 %v1379, %v1491
    %1493 = vmatprep.mubr.bf16.mxu0 0
    %1494 = vmatmul.mubr.bf16.gmra.mrb[0].mxu0 %v1013
    %v1495 = vpop.f32.mrb[0].mxu0
    %v1496 = vadd.f32 %v1383, %v1495
    %v1497 = vpop.f32.mrb[0].mxu0
    %v1498 = vadd.f32 %v1385, %v1497
    %v1499 = vpop.f32.mrb[0].mxu0
    %v1500 = vadd.f32 %v1387, %v1499
    %v1501 = vpop.f32.mrb[0].mxu0
    %v1502 = vadd.f32 %v1389, %v1501
    %1503 = vmatprep.mubr.bf16.mxu0 0
    %1504 = vmatmul.mubr.bf16.gmra.mrb[0].mxu0 %v1020
    %v1505 = vpop.f32.mrb[0].mxu0
    %v1506 = vadd.f32 %v1393, %v1505
    %v1507 = vpop.f32.mrb[0].mxu0
    %v1508 = vadd.f32 %v1395, %v1507
    %v1509 = vpop.f32.mrb[0].mxu0
    %v1510 = vadd.f32 %v1397, %v1509
    %v1511 = vpop.f32.mrb[0].mxu0
    %v1512 = vadd.f32 %v1399, %v1511
    %1513 = vmatprep.mubr.bf16.mxu0 0
    %1514 = vmatmul.mubr.bf16.gmra.mrb[0].mxu0 %v1027
    %v1515 = vpop.f32.mrb[0].mxu0
    %v1516 = vadd.f32 %v1403, %v1515
    %v1517 = vpop.f32.mrb[0].mxu0
    %v1518 = vadd.f32 %v1405, %v1517
    %v1519 = vpop.f32.mrb[0].mxu0
    %v1520 = vadd.f32 %v1407, %v1519
    %v1521 = vpop.f32.mrb[0].mxu0
    %v1522 = vadd.f32 %v1409, %v1521
    %1523 = vmatprep.mubr.bf16.mxu0 0
    %1524 = vmatmul.mubr.bf16.gmra.mrb[0].mxu0 %v1034
    %v1525 = vpop.f32.mrb[0].mxu0
    %v1526 = vadd.f32 %v1413, %v1525
    %v1527 = vpop.f32.mrb[0].mxu0
    %v1528 = vadd.f32 %v1415, %v1527
    %v1529 = vpop.f32.mrb[0].mxu0
    %v1530 = vadd.f32 %v1417, %v1529
    %v1531 = vpop.f32.mrb[0].mxu0
    %v1532 = vadd.f32 %v1419, %v1531
    %1533 = vmatprep.mubr.bf16.mxu0 0
    %1534 = vmatmul.mubr.bf16.gmra.mrb[0].mxu0 %v1041
    %v1535 = vpop.f32.mrb[0].mxu0
    %v1536 = vadd.f32 %v1423, %v1535
    %v1537 = vpop.f32.mrb[0].mxu0
    %v1538 = vadd.f32 %v1425, %v1537
    %v1539 = vpop.f32.mrb[0].mxu0
    %v1540 = vadd.f32 %v1427, %v1539
    %v1541 = vpop.f32.mrb[0].mxu0
    %v1542 = vadd.f32 %v1429, %v1541
    %1543 = vmatprep.mubr.bf16.mxu0 0
    %1544 = vmatmul.mubr.bf16.gmra.mrb[0].mxu0 %v1048
    %v1545 = vpop.f32.mrb[0].mxu0
    %v1546 = vadd.f32 %v1433, %v1545
    %v1547 = vpop.f32.mrb[0].mxu0
    %v1548 = vadd.f32 %v1435, %v1547
    %v1549 = vpop.f32.mrb[0].mxu0
    %v1550 = vadd.f32 %v1437, %v1549
    %v1551 = vpop.f32.mrb[0].mxu0
    %v1552 = vadd.f32 %v1439, %v1551
    %1553 = vmatprep.mubr.bf16.mxu0 0
    %1554 = vmatmul.mubr.bf16.gmra.mrb[0].mxu0 %v1055
    %v1555 = vpop.f32.mrb[0].mxu0
    %v1556 = vadd.f32 %v1443, %v1555
    %v1557 = vpop.f32.mrb[0].mxu0
    %v1558 = vadd.f32 %v1445, %v1557
    %v1559 = vpop.f32.mrb[0].mxu0
    %v1560 = vadd.f32 %v1447, %v1559
    %v1561 = vpop.f32.mrb[0].mxu0
    %v1562 = vadd.f32 %v1449, %v1561
    %1563 = vdwg.mxu0
    %1564 = vmatprep.subr.bf16.mxu0 %v213
    %1565 = vmatpush1.bf16.msra.mxu0 %v212
    %1566 = vmatprep.subr.bf16.mxu0 %v223
    %1567 = vmatpush1.bf16.msra.mxu0 %v222
    %1568 = vmatprep.subr.bf16.mxu0 %v233
    %1569 = vmatpush1.bf16.msra.mxu0 %v232
    %1570 = vmatprep.subr.bf16.mxu0 %v243
    %1571 = vmatpush1.bf16.msra.mxu0 %v242
    %1572 = vmatprep.subr.bf16.mxu0 %v253
    %1573 = vmatpush1.bf16.msra.mxu0 %v252
    %1574 = vmatprep.subr.bf16.mxu0 %v263
    %1575 = vmatpush1.bf16.msra.mxu0 %v262
    %1576 = vmatprep.subr.bf16.mxu0 %v273
    %1577 = vmatpush1.bf16.msra.mxu0 %v272
    %1578 = vmatprep.subr.bf16.mxu0 %v283
    %1579 = vmatpush1.bf16.msra.mxu0 %v282
    %1580 = vmatprep.subr.bf16.mxu0 %v293
    %1581 = vmatpush1.bf16.msra.mxu0 %v292
    %1582 = vmatprep.subr.bf16.mxu0 %v303
    %1583 = vmatpush1.bf16.msra.mxu0 %v302
    %1584 = vmatprep.subr.bf16.mxu0 %v313
    %1585 = vmatpush1.bf16.msra.mxu0 %v312
    %1586 = vmatprep.subr.bf16.mxu0 %v323
    %1587 = vmatpush1.bf16.msra.mxu0 %v322
    %1588 = vmatprep.subr.bf16.mxu0 %v333
    %1589 = vmatpush1.bf16.msra.mxu0 %v332
    %1590 = vmatprep.subr.bf16.mxu0 %v343
    %1591 = vmatpush1.bf16.msra.mxu0 %v342
    %1592 = vmatprep.subr.bf16.mxu0 %v353
    %1593 = vmatpush1.bf16.msra.mxu0 %v352
    %1594 = vmatprep.subr.bf16.mxu0 %v363
    %1595 = vmatpush1.bf16.msra.mxu0 %v362
    %1596 = vmatprep.mubr.bf16.mxu0 %v1001
    %1597 = vmatmul.mubr.bf16.gmra.mrb[0].mxu0 %v1000
    %v1598 = vpop.f32.mrb[0].mxu0
    %v1599 = vadd.f32 %v785, %v1598
    %v1600 = vpop.f32.mrb[0].mxu0
    %v1601 = vadd.f32 %v789, %v1600
    %v1602 = vpop.f32.mrb[0].mxu0
    %v1603 = vadd.f32 %v785, %v1602
    %v1604 = vpop.f32.mrb[0].mxu0
    %v1605 = vadd.f32 %v789, %v1604
    %1606 = vmatprep.mubr.bf16.mxu0 %v1008
    %1607 = vmatmul.mubr.bf16.gmra.mrb[0].mxu0 %v1007
    %v1608 = vpop.f32.mrb[0].mxu0
    %v1609 = vadd.f32 %v785, %v1608
    %v1610 = vpop.f32.mrb[0].mxu0
    %v1611 = vadd.f32 %v789, %v1610
    %v1612 = vpop.f32.mrb[0].mxu0
    %v1613 = vadd.f32 %v785, %v1612
    %v1614 = vpop.f32.mrb[0].mxu0
    %v1615 = vadd.f32 %v789, %v1614
    %1616 = vmatprep.mubr.bf16.mxu0 %v1015
    %1617 = vmatmul.mubr.bf16.gmra.mrb[0].mxu0 %v1014
    %v1618 = vpop.f32.mrb[0].mxu0
    %v1619 = vadd.f32 %v785, %v1618
    %v1620 = vpop.f32.mrb[0].mxu0
    %v1621 = vadd.f32 %v789, %v1620
    %v1622 = vpop.f32.mrb[0].mxu0
    %v1623 = vadd.f32 %v785, %v1622
    %v1624 = vpop.f32.mrb[0].mxu0
    %v1625 = vadd.f32 %v789, %v1624
    %1626 = vmatprep.mubr.bf16.mxu0 %v1022
    %1627 = vmatmul.mubr.bf16.gmra.mrb[0].mxu0 %v1021
    %v1628 = vpop.f32.mrb[0].mxu0
    %v1629 = vadd.f32 %v785, %v1628
    %v1630 = vpop.f32.mrb[0].mxu0
    %v1631 = vadd.f32 %v789, %v1630
    %v1632 = vpop.f32.mrb[0].mxu0
    %v1633 = vadd.f32 %v785, %v1632
    %v1634 = vpop.f32.mrb[0].mxu0
    %v1635 = vadd.f32 %v789, %v1634
    %1636 = vmatprep.mubr.bf16.mxu0 %v1029
    %1637 = vmatmul.mubr.bf16.gmra.mrb[0].mxu0 %v1028
    %v1638 = vpop.f32.mrb[0].mxu0
    %v1639 = vadd.f32 %v785, %v1638
    %v1640 = vpop.f32.mrb[0].mxu0
    %v1641 = vadd.f32 %v789, %v1640
    %v1642 = vpop.f32.mrb[0].mxu0
    %v1643 = vadd.f32 %v785, %v1642
    %v1644 = vpop.f32.mrb[0].mxu0
    %v1645 = vadd.f32 %v789, %v1644
    %1646 = vmatprep.mubr.bf16.mxu0 %v1036
    %1647 = vmatmul.mubr.bf16.gmra.mrb[0].mxu0 %v1035
    %v1648 = vpop.f32.mrb[0].mxu0
    %v1649 = vadd.f32 %v785, %v1648
    %v1650 = vpop.f32.mrb[0].mxu0
    %v1651 = vadd.f32 %v789, %v1650
    %v1652 = vpop.f32.mrb[0].mxu0
    %v1653 = vadd.f32 %v785, %v1652
    %v1654 = vpop.f32.mrb[0].mxu0
    %v1655 = vadd.f32 %v789, %v1654
    %1656 = vmatprep.mubr.bf16.mxu0 %v1043
    %1657 = vmatmul.mubr.bf16.gmra.mrb[0].mxu0 %v1042
    %v1658 = vpop.f32.mrb[0].mxu0
    %v1659 = vadd.f32 %v785, %v1658
    %v1660 = vpop.f32.mrb[0].mxu0
    %v1661 = vadd.f32 %v789, %v1660
    %v1662 = vpop.f32.mrb[0].mxu0
    %v1663 = vadd.f32 %v785, %v1662
    %v1664 = vpop.f32.mrb[0].mxu0
    %v1665 = vadd.f32 %v789, %v1664
    %1666 = vmatprep.mubr.bf16.mxu0 %v1050
    %1667 = vmatmul.mubr.bf16.gmra.mrb[0].mxu0 %v1049
    %v1668 = vpop.f32.mrb[0].mxu0
    %v1669 = vadd.f32 %v785, %v1668
    %v1670 = vpop.f32.mrb[0].mxu0
    %v1671 = vadd.f32 %v789, %v1670
    %v1672 = vpop.f32.mrb[0].mxu0
    %v1673 = vadd.f32 %v785, %v1672
    %v1674 = vpop.f32.mrb[0].mxu0
    %v1675 = vadd.f32 %v789, %v1674
    %1676 = vdwg.mxu0
    %1677 = vmatprep.subr.bf16.mxu0 %v373
    %1678 = vmatpush1.bf16.msra.mxu0 %v372
    %1679 = vmatprep.subr.bf16.mxu0 %v383
    %1680 = vmatpush1.bf16.msra.mxu0 %v382
    %1681 = vmatprep.subr.bf16.mxu0 %v393
    %1682 = vmatpush1.bf16.msra.mxu0 %v392
    %1683 = vmatprep.subr.bf16.mxu0 %v403
    %1684 = vmatpush1.bf16.msra.mxu0 %v402
    %1685 = vmatprep.subr.bf16.mxu0 %v413
    %1686 = vmatpush1.bf16.msra.mxu0 %v412
    %1687 = vmatprep.subr.bf16.mxu0 %v423
    %1688 = vmatpush1.bf16.msra.mxu0 %v422
    %1689 = vmatprep.subr.bf16.mxu0 %v433
    %1690 = vmatpush1.bf16.msra.mxu0 %v432
    %1691 = vmatprep.subr.bf16.mxu0 %v443
    %1692 = vmatpush1.bf16.msra.mxu0 %v442
    %1693 = vmatprep.subr.bf16.mxu0 %v453
    %1694 = vmatpush1.bf16.msra.mxu0 %v452
    %1695 = vmatprep.subr.bf16.mxu0 %v463
    %1696 = vmatpush1.bf16.msra.mxu0 %v462
    %1697 = vmatprep.subr.bf16.mxu0 %v473
    %1698 = vmatpush1.bf16.msra.mxu0 %v472
    %1699 = vmatprep.subr.bf16.mxu0 %v483
    %1700 = vmatpush1.bf16.msra.mxu0 %v482
    %1701 = vmatprep.subr.bf16.mxu0 %v493
    %1702 = vmatpush1.bf16.msra.mxu0 %v492
    %1703 = vmatprep.subr.bf16.mxu0 %v503
    %1704 = vmatpush1.bf16.msra.mxu0 %v502
    %1705 = vmatprep.subr.bf16.mxu0 %v513
    %1706 = vmatpush1.bf16.msra.mxu0 %v512
    %1707 = vmatprep.subr.bf16.mxu0 %v523
    %1708 = vmatpush1.bf16.msra.mxu0 %v522
    %1709 = vmatprep.mubr.bf16.mxu0 %v1003
    %1710 = vmatmul.mubr.bf16.gmra.mrb[0].mxu0 %v1002
    %v1711 = vpop.f32.mrb[0].mxu0
    %v1712 = vadd.f32 %v1599, %v1711
    %v1713 = vpop.f32.mrb[0].mxu0
    %v1714 = vadd.f32 %v1601, %v1713
    %v1715 = vpop.f32.mrb[0].mxu0
    %v1716 = vadd.f32 %v1603, %v1715
    %v1717 = vpop.f32.mrb[0].mxu0
    %v1718 = vadd.f32 %v1605, %v1717
    %1719 = vmatprep.mubr.bf16.mxu0 %v1010
    %1720 = vmatmul.mubr.bf16.gmra.mrb[0].mxu0 %v1009
    %v1721 = vpop.f32.mrb[0].mxu0
    %v1722 = vadd.f32 %v1609, %v1721
    %v1723 = vpop.f32.mrb[0].mxu0
    %v1724 = vadd.f32 %v1611, %v1723
    %v1725 = vpop.f32.mrb[0].mxu0
    %v1726 = vadd.f32 %v1613, %v1725
    %v1727 = vpop.f32.mrb[0].mxu0
    %v1728 = vadd.f32 %v1615, %v1727
    %1729 = vmatprep.mubr.bf16.mxu0 %v1017
    %1730 = vmatmul.mubr.bf16.gmra.mrb[0].mxu0 %v1016
    %v1731 = vpop.f32.mrb[0].mxu0
    %v1732 = vadd.f32 %v1619, %v1731
    %v1733 = vpop.f32.mrb[0].mxu0
    %v1734 = vadd.f32 %v1621, %v1733
    %v1735 = vpop.f32.mrb[0].mxu0
    %v1736 = vadd.f32 %v1623, %v1735
    %v1737 = vpop.f32.mrb[0].mxu0
    %v1738 = vadd.f32 %v1625, %v1737
    %1739 = vmatprep.mubr.bf16.mxu0 %v1024
    %1740 = vmatmul.mubr.bf16.gmra.mrb[0].mxu0 %v1023
    %v1741 = vpop.f32.mrb[0].mxu0
    %v1742 = vadd.f32 %v1629, %v1741
    %v1743 = vpop.f32.mrb[0].mxu0
    %v1744 = vadd.f32 %v1631, %v1743
    %v1745 = vpop.f32.mrb[0].mxu0
    %v1746 = vadd.f32 %v1633, %v1745
    %v1747 = vpop.f32.mrb[0].mxu0
    %v1748 = vadd.f32 %v1635, %v1747
    %1749 = vmatprep.mubr.bf16.mxu0 %v1031
    %1750 = vmatmul.mubr.bf16.gmra.mrb[0].mxu0 %v1030
    %v1751 = vpop.f32.mrb[0].mxu0
    %v1752 = vadd.f32 %v1639, %v1751
    %v1753 = vpop.f32.mrb[0].mxu0
    %v1754 = vadd.f32 %v1641, %v1753
    %v1755 = vpop.f32.mrb[0].mxu0
    %v1756 = vadd.f32 %v1643, %v1755
    %v1757 = vpop.f32.mrb[0].mxu0
    %v1758 = vadd.f32 %v1645, %v1757
    %1759 = vmatprep.mubr.bf16.mxu0 %v1038
    %1760 = vmatmul.mubr.bf16.gmra.mrb[0].mxu0 %v1037
    %v1761 = vpop.f32.mrb[0].mxu0
    %v1762 = vadd.f32 %v1649, %v1761
    %v1763 = vpop.f32.mrb[0].mxu0
    %v1764 = vadd.f32 %v1651, %v1763
    %v1765 = vpop.f32.mrb[0].mxu0
    %v1766 = vadd.f32 %v1653, %v1765
    %v1767 = vpop.f32.mrb[0].mxu0
    %v1768 = vadd.f32 %v1655, %v1767
    %1769 = vmatprep.mubr.bf16.mxu0 %v1045
    %1770 = vmatmul.mubr.bf16.gmra.mrb[0].mxu0 %v1044
    %v1771 = vpop.f32.mrb[0].mxu0
    %v1772 = vadd.f32 %v1659, %v1771
    %v1773 = vpop.f32.mrb[0].mxu0
    %v1774 = vadd.f32 %v1661, %v1773
    %v1775 = vpop.f32.mrb[0].mxu0
    %v1776 = vadd.f32 %v1663, %v1775
    %v1777 = vpop.f32.mrb[0].mxu0
    %v1778 = vadd.f32 %v1665, %v1777
    %1779 = vmatprep.mubr.bf16.mxu0 %v1052
    %1780 = vmatmul.mubr.bf16.gmra.mrb[0].mxu0 %v1051
    %v1781 = vpop.f32.mrb[0].mxu0
    %v1782 = vadd.f32 %v1669, %v1781
    %v1783 = vpop.f32.mrb[0].mxu0
    %v1784 = vadd.f32 %v1671, %v1783
    %v1785 = vpop.f32.mrb[0].mxu0
    %v1786 = vadd.f32 %v1673, %v1785
    %v1787 = vpop.f32.mrb[0].mxu0
    %v1788 = vadd.f32 %v1675, %v1787
    %1789 = vdwg.mxu0
    %1790 = vmatprep.subr.bf16.mxu0 %v533
    %1791 = vmatpush1.bf16.msra.mxu0 %v532
    %1792 = vmatprep.subr.bf16.mxu0 %v543
    %1793 = vmatpush1.bf16.msra.mxu0 %v542
    %1794 = vmatprep.subr.bf16.mxu0 %v553
    %1795 = vmatpush1.bf16.msra.mxu0 %v552
    %1796 = vmatprep.subr.bf16.mxu0 %v563
    %1797 = vmatpush1.bf16.msra.mxu0 %v562
    %1798 = vmatprep.subr.bf16.mxu0 %v573
    %1799 = vmatpush1.bf16.msra.mxu0 %v572
    %1800 = vmatprep.subr.bf16.mxu0 %v583
    %1801 = vmatpush1.bf16.msra.mxu0 %v582
    %1802 = vmatprep.subr.bf16.mxu0 %v593
    %1803 = vmatpush1.bf16.msra.mxu0 %v592
    %1804 = vmatprep.subr.bf16.mxu0 %v603
    %1805 = vmatpush1.bf16.msra.mxu0 %v602
    %1806 = vmatprep.subr.bf16.mxu0 %v613
    %1807 = vmatpush1.bf16.msra.mxu0 %v612
    %1808 = vmatprep.subr.bf16.mxu0 %v623
    %1809 = vmatpush1.bf16.msra.mxu0 %v622
    %1810 = vmatprep.subr.bf16.mxu0 %v633
    %1811 = vmatpush1.bf16.msra.mxu0 %v632
    %1812 = vmatprep.subr.bf16.mxu0 %v643
    %1813 = vmatpush1.bf16.msra.mxu0 %v642
    %1814 = vmatprep.subr.bf16.mxu0 %v653
    %1815 = vmatpush1.bf16.msra.mxu0 %v652
    %1816 = vmatprep.subr.bf16.mxu0 %v663
    %1817 = vmatpush1.bf16.msra.mxu0 %v662
    %1818 = vmatprep.subr.bf16.mxu0 %v673
    %1819 = vmatpush1.bf16.msra.mxu0 %v672
    %1820 = vmatprep.subr.bf16.mxu0 %v683
    %1821 = vmatpush1.bf16.msra.mxu0 %v682
    %1822 = vmatprep.mubr.bf16.mxu0 %v1005
    %1823 = vmatmul.mubr.bf16.gmra.mrb[0].mxu0 %v1004
    %v1824 = vpop.f32.mrb[0].mxu0
    %v1825 = vadd.f32 %v1712, %v1824
    %v1826 = vpop.f32.mrb[0].mxu0
    %v1827 = vadd.f32 %v1714, %v1826
    %v1828 = vpop.f32.mrb[0].mxu0
    %v1829 = vadd.f32 %v1716, %v1828
    %v1830 = vpop.f32.mrb[0].mxu0
    %v1831 = vadd.f32 %v1718, %v1830
    %1832 = vmatprep.mubr.bf16.mxu0 %v1012
    %1833 = vmatmul.mubr.bf16.gmra.mrb[0].mxu0 %v1011
    %v1834 = vpop.f32.mrb[0].mxu0
    %v1835 = vadd.f32 %v1722, %v1834
    %v1836 = vpop.f32.mrb[0].mxu0
    %v1837 = vadd.f32 %v1724, %v1836
    %v1838 = vpop.f32.mrb[0].mxu0
    %v1839 = vadd.f32 %v1726, %v1838
    %v1840 = vpop.f32.mrb[0].mxu0
    %v1841 = vadd.f32 %v1728, %v1840
    %1842 = vmatprep.mubr.bf16.mxu0 %v1019
    %1843 = vmatmul.mubr.bf16.gmra.mrb[0].mxu0 %v1018
    %v1844 = vpop.f32.mrb[0].mxu0
    %v1845 = vadd.f32 %v1732, %v1844
    %v1846 = vpop.f32.mrb[0].mxu0
    %v1847 = vadd.f32 %v1734, %v1846
    %v1848 = vpop.f32.mrb[0].mxu0
    %v1849 = vadd.f32 %v1736, %v1848
    %v1850 = vpop.f32.mrb[0].mxu0
    %v1851 = vadd.f32 %v1738, %v1850
    %1852 = vmatprep.mubr.bf16.mxu0 %v1026
    %1853 = vmatmul.mubr.bf16.gmra.mrb[0].mxu0 %v1025
    %v1854 = vpop.f32.mrb[0].mxu0
    %v1855 = vadd.f32 %v1742, %v1854
    %v1856 = vpop.f32.mrb[0].mxu0
    %v1857 = vadd.f32 %v1744, %v1856
    %v1858 = vpop.f32.mrb[0].mxu0
    %v1859 = vadd.f32 %v1746, %v1858
    %v1860 = vpop.f32.mrb[0].mxu0
    %v1861 = vadd.f32 %v1748, %v1860
    %1862 = vmatprep.mubr.bf16.mxu0 %v1033
    %1863 = vmatmul.mubr.bf16.gmra.mrb[0].mxu0 %v1032
    %v1864 = vpop.f32.mrb[0].mxu0
    %v1865 = vadd.f32 %v1752, %v1864
    %v1866 = vpop.f32.mrb[0].mxu0
    %v1867 = vadd.f32 %v1754, %v1866
    %v1868 = vpop.f32.mrb[0].mxu0
    %v1869 = vadd.f32 %v1756, %v1868
    %v1870 = vpop.f32.mrb[0].mxu0
    %v1871 = vadd.f32 %v1758, %v1870
    %1872 = vmatprep.mubr.bf16.mxu0 %v1040
    %1873 = vmatmul.mubr.bf16.gmra.mrb[0].mxu0 %v1039
    %v1874 = vpop.f32.mrb[0].mxu0
    %v1875 = vadd.f32 %v1762, %v1874
    %v1876 = vpop.f32.mrb[0].mxu0
    %v1877 = vadd.f32 %v1764, %v1876
    %v1878 = vpop.f32.mrb[0].mxu0
    %v1879 = vadd.f32 %v1766, %v1878
    %v1880 = vpop.f32.mrb[0].mxu0
    %v1881 = vadd.f32 %v1768, %v1880
    %1882 = vmatprep.mubr.bf16.mxu0 %v1047
    %1883 = vmatmul.mubr.bf16.gmra.mrb[0].mxu0 %v1046
    %v1884 = vpop.f32.mrb[0].mxu0
    %v1885 = vadd.f32 %v1772, %v1884
    %v1886 = vpop.f32.mrb[0].mxu0
    %v1887 = vadd.f32 %v1774, %v1886
    %v1888 = vpop.f32.mrb[0].mxu0
    %v1889 = vadd.f32 %v1776, %v1888
    %v1890 = vpop.f32.mrb[0].mxu0
    %v1891 = vadd.f32 %v1778, %v1890
    %1892 = vmatprep.mubr.bf16.mxu0 %v1054
    %1893 = vmatmul.mubr.bf16.gmra.mrb[0].mxu0 %v1053
    %v1894 = vpop.f32.mrb[0].mxu0
    %v1895 = vadd.f32 %v1782, %v1894
    %v1896 = vpop.f32.mrb[0].mxu0
    %v1897 = vadd.f32 %v1784, %v1896
    %v1898 = vpop.f32.mrb[0].mxu0
    %v1899 = vadd.f32 %v1786, %v1898
    %v1900 = vpop.f32.mrb[0].mxu0
    %v1901 = vadd.f32 %v1788, %v1900
    %1902 = vdwg.mxu0
    %1903 = vmatprep.subr.bf16.mxu0 %v693
    %1904 = vmatpush1.bf16.msra.mxu0 %v692
    %1905 = vmatprep.subr.bf16.mxu0 %v703
    %1906 = vmatpush1.bf16.msra.mxu0 %v702
    %1907 = vmatprep.subr.bf16.mxu0 %v713
    %1908 = vmatpush1.bf16.msra.mxu0 %v712
    %1909 = vmatprep.subr.bf16.mxu0 %v723
    %1910 = vmatpush1.bf16.msra.mxu0 %v722
    %1911 = vmatprep.subr.bf16.mxu0 %v733
    %1912 = vmatpush1.bf16.msra.mxu0 %v732
    %1913 = vmatprep.subr.bf16.mxu0 %v743
    %1914 = vmatpush1.bf16.msra.mxu0 %v742
    %1915 = vmatprep.subr.bf16.mxu0 %v753
    %1916 = vmatpush1.bf16.msra.mxu0 %v752
    %1917 = vmatprep.subr.bf16.mxu0 %v763
    %1918 = vmatpush1.bf16.msra.mxu0 %v762
    %1919 = vmatprep.subr.bf16.mxu0 0
    %1920 = vmatpush1.bf16.msra.mxu0 0
    %1921 = vmatprep.subr.bf16.mxu0 0
    %1922 = vmatpush1.bf16.msra.mxu0 0
    %1923 = vmatprep.subr.bf16.mxu0 0
    %1924 = vmatpush1.bf16.msra.mxu0 0
    %1925 = vmatprep.subr.bf16.mxu0 0
    %1926 = vmatpush1.bf16.msra.mxu0 0
    %1927 = vmatprep.subr.bf16.mxu0 0
    %1928 = vmatpush1.bf16.msra.mxu0 0
    %1929 = vmatprep.subr.bf16.mxu0 0
    %1930 = vmatpush1.bf16.msra.mxu0 0
    %1931 = vmatprep.subr.bf16.mxu0 0
    %1932 = vmatpush1.bf16.msra.mxu0 0
    %1933 = vmatprep.subr.bf16.mxu0 0
    %1934 = vmatpush1.bf16.msra.mxu0 0
    %1935 = vmatprep.mubr.bf16.mxu0 0
    %1936 = vmatmul.mubr.bf16.gmra.mrb[0].mxu0 %v1006
    %v1937 = vpop.f32.mrb[0].mxu0
    %v1938 = vadd.f32 %v1825, %v1937
    %v1939 = vpop.f32.mrb[0].mxu0
    %v1940 = vadd.f32 %v1827, %v1939
    %v1941 = vpop.f32.mrb[0].mxu0
    %v1942 = vadd.f32 %v1829, %v1941
    %v1943 = vpop.f32.mrb[0].mxu0
    %v1944 = vadd.f32 %v1831, %v1943
    %1945 = vmatprep.mubr.bf16.mxu0 0
    %1946 = vmatmul.mubr.bf16.gmra.mrb[0].mxu0 %v1013
    %v1947 = vpop.f32.mrb[0].mxu0
    %v1948 = vadd.f32 %v1835, %v1947
    %v1949 = vpop.f32.mrb[0].mxu0
    %v1950 = vadd.f32 %v1837, %v1949
    %v1951 = vpop.f32.mrb[0].mxu0
    %v1952 = vadd.f32 %v1839, %v1951
    %v1953 = vpop.f32.mrb[0].mxu0
    %v1954 = vadd.f32 %v1841, %v1953
    %1955 = vmatprep.mubr.bf16.mxu0 0
    %1956 = vmatmul.mubr.bf16.gmra.mrb[0].mxu0 %v1020
    %v1957 = vpop.f32.mrb[0].mxu0
    %v1958 = vadd.f32 %v1845, %v1957
    %v1959 = vpop.f32.mrb[0].mxu0
    %v1960 = vadd.f32 %v1847, %v1959
    %v1961 = vpop.f32.mrb[0].mxu0
    %v1962 = vadd.f32 %v1849, %v1961
    %v1963 = vpop.f32.mrb[0].mxu0
    %v1964 = vadd.f32 %v1851, %v1963
    %1965 = vmatprep.mubr.bf16.mxu0 0
    %1966 = vmatmul.mubr.bf16.gmra.mrb[0].mxu0 %v1027
    %v1967 = vpop.f32.mrb[0].mxu0
    %v1968 = vadd.f32 %v1855, %v1967
    %v1969 = vpop.f32.mrb[0].mxu0
    %v1970 = vadd.f32 %v1857, %v1969
    %v1971 = vpop.f32.mrb[0].mxu0
    %v1972 = vadd.f32 %v1859, %v1971
    %v1973 = vpop.f32.mrb[0].mxu0
    %v1974 = vadd.f32 %v1861, %v1973
    %1975 = vmatprep.mubr.bf16.mxu0 0
    %1976 = vmatmul.mubr.bf16.gmra.mrb[0].mxu0 %v1034
    %v1977 = vpop.f32.mrb[0].mxu0
    %v1978 = vadd.f32 %v1865, %v1977
    %v1979 = vpop.f32.mrb[0].mxu0
    %v1980 = vadd.f32 %v1867, %v1979
    %v1981 = vpop.f32.mrb[0].mxu0
    %v1982 = vadd.f32 %v1869, %v1981
    %v1983 = vpop.f32.mrb[0].mxu0
    %v1984 = vadd.f32 %v1871, %v1983
    %1985 = vmatprep.mubr.bf16.mxu0 0
    %1986 = vmatmul.mubr.bf16.gmra.mrb[0].mxu0 %v1041
    %v1987 = vpop.f32.mrb[0].mxu0
    %v1988 = vadd.f32 %v1875, %v1987
    %v1989 = vpop.f32.mrb[0].mxu0
    %v1990 = vadd.f32 %v1877, %v1989
    %v1991 = vpop.f32.mrb[0].mxu0
    %v1992 = vadd.f32 %v1879, %v1991
    %v1993 = vpop.f32.mrb[0].mxu0
    %v1994 = vadd.f32 %v1881, %v1993
    %1995 = vmatprep.mubr.bf16.mxu0 0
    %1996 = vmatmul.mubr.bf16.gmra.mrb[0].mxu0 %v1048
    %v1997 = vpop.f32.mrb[0].mxu0
    %v1998 = vadd.f32 %v1885, %v1997
    %v1999 = vpop.f32.mrb[0].mxu0
    %v2000 = vadd.f32 %v1887, %v1999
    %v2001 = vpop.f32.mrb[0].mxu0
    %v2002 = vadd.f32 %v1889, %v2001
    %v2003 = vpop.f32.mrb[0].mxu0
    %v2004 = vadd.f32 %v1891, %v2003
    %2005 = vmatprep.mubr.bf16.mxu0 0
    %2006 = vmatmul.mubr.bf16.gmra.mrb[0].mxu0 %v1055
    %v2007 = vpop.f32.mrb[0].mxu0
    %v2008 = vadd.f32 %v1895, %v2007
    %v2009 = vpop.f32.mrb[0].mxu0
    %v2010 = vadd.f32 %v1897, %v2009
    %v2011 = vpop.f32.mrb[0].mxu0
    %v2012 = vadd.f32 %v1899, %v2011
    %v2013 = vpop.f32.mrb[0].mxu0
    %v2014 = vadd.f32 %v1901, %v2013
    %2015 = vdwg.mxu0
    %2016 = vmatprep.subr.bf16.mxu0 %v215
    %2017 = vmatpush1.bf16.msra.mxu0 %v214
    %2018 = vmatprep.subr.bf16.mxu0 %v225
    %2019 = vmatpush1.bf16.msra.mxu0 %v224
    %2020 = vmatprep.subr.bf16.mxu0 %v235
    %2021 = vmatpush1.bf16.msra.mxu0 %v234
    %2022 = vmatprep.subr.bf16.mxu0 %v245
    %2023 = vmatpush1.bf16.msra.mxu0 %v244
    %2024 = vmatprep.subr.bf16.mxu0 %v255
    %2025 = vmatpush1.bf16.msra.mxu0 %v254
    %2026 = vmatprep.subr.bf16.mxu0 %v265
    %2027 = vmatpush1.bf16.msra.mxu0 %v264
    %2028 = vmatprep.subr.bf16.mxu0 %v275
    %2029 = vmatpush1.bf16.msra.mxu0 %v274
    %2030 = vmatprep.subr.bf16.mxu0 %v285
    %2031 = vmatpush1.bf16.msra.mxu0 %v284
    %2032 = vmatprep.subr.bf16.mxu0 %v295
    %2033 = vmatpush1.bf16.msra.mxu0 %v294
    %2034 = vmatprep.subr.bf16.mxu0 %v305
    %2035 = vmatpush1.bf16.msra.mxu0 %v304
    %2036 = vmatprep.subr.bf16.mxu0 %v315
    %2037 = vmatpush1.bf16.msra.mxu0 %v314
    %2038 = vmatprep.subr.bf16.mxu0 %v325
    %2039 = vmatpush1.bf16.msra.mxu0 %v324
    %2040 = vmatprep.subr.bf16.mxu0 %v335
    %2041 = vmatpush1.bf16.msra.mxu0 %v334
    %2042 = vmatprep.subr.bf16.mxu0 %v345
    %2043 = vmatpush1.bf16.msra.mxu0 %v344
    %2044 = vmatprep.subr.bf16.mxu0 %v355
    %2045 = vmatpush1.bf16.msra.mxu0 %v354
    %2046 = vmatprep.subr.bf16.mxu0 %v365
    %2047 = vmatpush1.bf16.msra.mxu0 %v364
    %2048 = vmatprep.mubr.bf16.mxu0 %v1001
    %2049 = vmatmul.mubr.bf16.gmra.mrb[0].mxu0 %v1000
    %v2050 = vpop.f32.mrb[0].mxu0
    %v2051 = vadd.f32 %v793, %v2050
    %v2052 = vpop.f32.mrb[0].mxu0
    %v2053 = vadd.f32 %v797, %v2052
    %v2054 = vpop.f32.mrb[0].mxu0
    %v2055 = vadd.f32 %v793, %v2054
    %v2056 = vpop.f32.mrb[0].mxu0
    %v2057 = vadd.f32 %v797, %v2056
    %2058 = vmatprep.mubr.bf16.mxu0 %v1008
    %2059 = vmatmul.mubr.bf16.gmra.mrb[0].mxu0 %v1007
    %v2060 = vpop.f32.mrb[0].mxu0
    %v2061 = vadd.f32 %v793, %v2060
    %v2062 = vpop.f32.mrb[0].mxu0
    %v2063 = vadd.f32 %v797, %v2062
    %v2064 = vpop.f32.mrb[0].mxu0
    %v2065 = vadd.f32 %v793, %v2064
    %v2066 = vpop.f32.mrb[0].mxu0
    %v2067 = vadd.f32 %v797, %v2066
    %2068 = vmatprep.mubr.bf16.mxu0 %v1015
    %2069 = vmatmul.mubr.bf16.gmra.mrb[0].mxu0 %v1014
    %v2070 = vpop.f32.mrb[0].mxu0
    %v2071 = vadd.f32 %v793, %v2070
    %v2072 = vpop.f32.mrb[0].mxu0
    %v2073 = vadd.f32 %v797, %v2072
    %v2074 = vpop.f32.mrb[0].mxu0
    %v2075 = vadd.f32 %v793, %v2074
    %v2076 = vpop.f32.mrb[0].mxu0
    %v2077 = vadd.f32 %v797, %v2076
    %2078 = vmatprep.mubr.bf16.mxu0 %v1022
    %2079 = vmatmul.mubr.bf16.gmra.mrb[0].mxu0 %v1021
    %v2080 = vpop.f32.mrb[0].mxu0
    %v2081 = vadd.f32 %v793, %v2080
    %v2082 = vpop.f32.mrb[0].mxu0
    %v2083 = vadd.f32 %v797, %v2082
    %v2084 = vpop.f32.mrb[0].mxu0
    %v2085 = vadd.f32 %v793, %v2084
    %v2086 = vpop.f32.mrb[0].mxu0
    %v2087 = vadd.f32 %v797, %v2086
    %2088 = vmatprep.mubr.bf16.mxu0 %v1029
    %2089 = vmatmul.mubr.bf16.gmra.mrb[0].mxu0 %v1028
    %v2090 = vpop.f32.mrb[0].mxu0
    %v2091 = vadd.f32 %v793, %v2090
    %v2092 = vpop.f32.mrb[0].mxu0
    %v2093 = vadd.f32 %v797, %v2092
    %v2094 = vpop.f32.mrb[0].mxu0
    %v2095 = vadd.f32 %v793, %v2094
    %v2096 = vpop.f32.mrb[0].mxu0
    %v2097 = vadd.f32 %v797, %v2096
    %2098 = vmatprep.mubr.bf16.mxu0 %v1036
    %2099 = vmatmul.mubr.bf16.gmra.mrb[0].mxu0 %v1035
    %v2100 = vpop.f32.mrb[0].mxu0
    %v2101 = vadd.f32 %v793, %v2100
    %v2102 = vpop.f32.mrb[0].mxu0
    %v2103 = vadd.f32 %v797, %v2102
    %v2104 = vpop.f32.mrb[0].mxu0
    %v2105 = vadd.f32 %v793, %v2104
    %v2106 = vpop.f32.mrb[0].mxu0
    %v2107 = vadd.f32 %v797, %v2106
    %2108 = vmatprep.mubr.bf16.mxu0 %v1043
    %2109 = vmatmul.mubr.bf16.gmra.mrb[0].mxu0 %v1042
    %v2110 = vpop.f32.mrb[0].mxu0
    %v2111 = vadd.f32 %v793, %v2110
    %v2112 = vpop.f32.mrb[0].mxu0
    %v2113 = vadd.f32 %v797, %v2112
    %v2114 = vpop.f32.mrb[0].mxu0
    %v2115 = vadd.f32 %v793, %v2114
    %v2116 = vpop.f32.mrb[0].mxu0
    %v2117 = vadd.f32 %v797, %v2116
    %2118 = vmatprep.mubr.bf16.mxu0 %v1050
    %2119 = vmatmul.mubr.bf16.gmra.mrb[0].mxu0 %v1049
    %v2120 = vpop.f32.mrb[0].mxu0
    %v2121 = vadd.f32 %v793, %v2120
    %v2122 = vpop.f32.mrb[0].mxu0
    %v2123 = vadd.f32 %v797, %v2122
    %v2124 = vpop.f32.mrb[0].mxu0
    %v2125 = vadd.f32 %v793, %v2124
    %v2126 = vpop.f32.mrb[0].mxu0
    %v2127 = vadd.f32 %v797, %v2126
    %2128 = vdwg.mxu0
    %2129 = vmatprep.subr.bf16.mxu0 %v375
    %2130 = vmatpush1.bf16.msra.mxu0 %v374
    %2131 = vmatprep.subr.bf16.mxu0 %v385
    %2132 = vmatpush1.bf16.msra.mxu0 %v384
    %2133 = vmatprep.subr.bf16.mxu0 %v395
    %2134 = vmatpush1.bf16.msra.mxu0 %v394
    %2135 = vmatprep.subr.bf16.mxu0 %v405
    %2136 = vmatpush1.bf16.msra.mxu0 %v404
    %2137 = vmatprep.subr.bf16.mxu0 %v415
    %2138 = vmatpush1.bf16.msra.mxu0 %v414
    %2139 = vmatprep.subr.bf16.mxu0 %v425
    %2140 = vmatpush1.bf16.msra.mxu0 %v424
    %2141 = vmatprep.subr.bf16.mxu0 %v435
    %2142 = vmatpush1.bf16.msra.mxu0 %v434
    %2143 = vmatprep.subr.bf16.mxu0 %v445
    %2144 = vmatpush1.bf16.msra.mxu0 %v444
    %2145 = vmatprep.subr.bf16.mxu0 %v455
    %2146 = vmatpush1.bf16.msra.mxu0 %v454
    %2147 = vmatprep.subr.bf16.mxu0 %v465
    %2148 = vmatpush1.bf16.msra.mxu0 %v464
    %2149 = vmatprep.subr.bf16.mxu0 %v475
    %2150 = vmatpush1.bf16.msra.mxu0 %v474
    %2151 = vmatprep.subr.bf16.mxu0 %v485
    %2152 = vmatpush1.bf16.msra.mxu0 %v484
    %2153 = vmatprep.subr.bf16.mxu0 %v495
    %2154 = vmatpush1.bf16.msra.mxu0 %v494
    %2155 = vmatprep.subr.bf16.mxu0 %v505
    %2156 = vmatpush1.bf16.msra.mxu0 %v504
    %2157 = vmatprep.subr.bf16.mxu0 %v515
    %2158 = vmatpush1.bf16.msra.mxu0 %v514
    %2159 = vmatprep.subr.bf16.mxu0 %v525
    %2160 = vmatpush1.bf16.msra.mxu0 %v524
    %2161 = vmatprep.mubr.bf16.mxu0 %v1003
    %2162 = vmatmul.mubr.bf16.gmra.mrb[0].mxu0 %v1002
    %v2163 = vpop.f32.mrb[0].mxu0
    %v2164 = vadd.f32 %v2051, %v2163
    %v2165 = vpop.f32.mrb[0].mxu0
    %v2166 = vadd.f32 %v2053, %v2165
    %v2167 = vpop.f32.mrb[0].mxu0
    %v2168 = vadd.f32 %v2055, %v2167
    %v2169 = vpop.f32.mrb[0].mxu0
    %v2170 = vadd.f32 %v2057, %v2169
    %2171 = vmatprep.mubr.bf16.mxu0 %v1010
    %2172 = vmatmul.mubr.bf16.gmra.mrb[0].mxu0 %v1009
    %v2173 = vpop.f32.mrb[0].mxu0
    %v2174 = vadd.f32 %v2061, %v2173
    %v2175 = vpop.f32.mrb[0].mxu0
    %v2176 = vadd.f32 %v2063, %v2175
    %v2177 = vpop.f32.mrb[0].mxu0
    %v2178 = vadd.f32 %v2065, %v2177
    %v2179 = vpop.f32.mrb[0].mxu0
    %v2180 = vadd.f32 %v2067, %v2179
    %2181 = vmatprep.mubr.bf16.mxu0 %v1017
    %2182 = vmatmul.mubr.bf16.gmra.mrb[0].mxu0 %v1016
    %v2183 = vpop.f32.mrb[0].mxu0
    %v2184 = vadd.f32 %v2071, %v2183
    %v2185 = vpop.f32.mrb[0].mxu0
    %v2186 = vadd.f32 %v2073, %v2185
    %v2187 = vpop.f32.mrb[0].mxu0
    %v2188 = vadd.f32 %v2075, %v2187
    %v2189 = vpop.f32.mrb[0].mxu0
    %v2190 = vadd.f32 %v2077, %v2189
    %2191 = vmatprep.mubr.bf16.mxu0 %v1024
    %2192 = vmatmul.mubr.bf16.gmra.mrb[0].mxu0 %v1023
    %v2193 = vpop.f32.mrb[0].mxu0
    %v2194 = vadd.f32 %v2081, %v2193
    %v2195 = vpop.f32.mrb[0].mxu0
    %v2196 = vadd.f32 %v2083, %v2195
    %v2197 = vpop.f32.mrb[0].mxu0
    %v2198 = vadd.f32 %v2085, %v2197
    %v2199 = vpop.f32.mrb[0].mxu0
    %v2200 = vadd.f32 %v2087, %v2199
    %2201 = vmatprep.mubr.bf16.mxu0 %v1031
    %2202 = vmatmul.mubr.bf16.gmra.mrb[0].mxu0 %v1030
    %v2203 = vpop.f32.mrb[0].mxu0
    %v2204 = vadd.f32 %v2091, %v2203
    %v2205 = vpop.f32.mrb[0].mxu0
    %v2206 = vadd.f32 %v2093, %v2205
    %v2207 = vpop.f32.mrb[0].mxu0
    %v2208 = vadd.f32 %v2095, %v2207
    %v2209 = vpop.f32.mrb[0].mxu0
    %v2210 = vadd.f32 %v2097, %v2209
    %2211 = vmatprep.mubr.bf16.mxu0 %v1038
    %2212 = vmatmul.mubr.bf16.gmra.mrb[0].mxu0 %v1037
    %v2213 = vpop.f32.mrb[0].mxu0
    %v2214 = vadd.f32 %v2101, %v2213
    %v2215 = vpop.f32.mrb[0].mxu0
    %v2216 = vadd.f32 %v2103, %v2215
    %v2217 = vpop.f32.mrb[0].mxu0
    %v2218 = vadd.f32 %v2105, %v2217
    %v2219 = vpop.f32.mrb[0].mxu0
    %v2220 = vadd.f32 %v2107, %v2219
    %2221 = vmatprep.mubr.bf16.mxu0 %v1045
    %2222 = vmatmul.mubr.bf16.gmra.mrb[0].mxu0 %v1044
    %v2223 = vpop.f32.mrb[0].mxu0
    %v2224 = vadd.f32 %v2111, %v2223
    %v2225 = vpop.f32.mrb[0].mxu0
    %v2226 = vadd.f32 %v2113, %v2225
    %v2227 = vpop.f32.mrb[0].mxu0
    %v2228 = vadd.f32 %v2115, %v2227
    %v2229 = vpop.f32.mrb[0].mxu0
    %v2230 = vadd.f32 %v2117, %v2229
    %2231 = vmatprep.mubr.bf16.mxu0 %v1052
    %2232 = vmatmul.mubr.bf16.gmra.mrb[0].mxu0 %v1051
    %v2233 = vpop.f32.mrb[0].mxu0
    %v2234 = vadd.f32 %v2121, %v2233
    %v2235 = vpop.f32.mrb[0].mxu0
    %v2236 = vadd.f32 %v2123, %v2235
    %v2237 = vpop.f32.mrb[0].mxu0
    %v2238 = vadd.f32 %v2125, %v2237
    %v2239 = vpop.f32.mrb[0].mxu0
    %v2240 = vadd.f32 %v2127, %v2239
    %2241 = vdwg.mxu0
    %2242 = vmatprep.subr.bf16.mxu0 %v535
    %2243 = vmatpush1.bf16.msra.mxu0 %v534
    %2244 = vmatprep.subr.bf16.mxu0 %v545
    %2245 = vmatpush1.bf16.msra.mxu0 %v544
    %2246 = vmatprep.subr.bf16.mxu0 %v555
    %2247 = vmatpush1.bf16.msra.mxu0 %v554
    %2248 = vmatprep.subr.bf16.mxu0 %v565
    %2249 = vmatpush1.bf16.msra.mxu0 %v564
    %2250 = vmatprep.subr.bf16.mxu0 %v575
    %2251 = vmatpush1.bf16.msra.mxu0 %v574
    %2252 = vmatprep.subr.bf16.mxu0 %v585
    %2253 = vmatpush1.bf16.msra.mxu0 %v584
    %2254 = vmatprep.subr.bf16.mxu0 %v595
    %2255 = vmatpush1.bf16.msra.mxu0 %v594
    %2256 = vmatprep.subr.bf16.mxu0 %v605
    %2257 = vmatpush1.bf16.msra.mxu0 %v604
    %2258 = vmatprep.subr.bf16.mxu0 %v615
    %2259 = vmatpush1.bf16.msra.mxu0 %v614
    %2260 = vmatprep.subr.bf16.mxu0 %v625
    %2261 = vmatpush1.bf16.msra.mxu0 %v624
    %2262 = vmatprep.subr.bf16.mxu0 %v635
    %2263 = vmatpush1.bf16.msra.mxu0 %v634
    %2264 = vmatprep.subr.bf16.mxu0 %v645
    %2265 = vmatpush1.bf16.msra.mxu0 %v644
    %2266 = vmatprep.subr.bf16.mxu0 %v655
    %2267 = vmatpush1.bf16.msra.mxu0 %v654
    %2268 = vmatprep.subr.bf16.mxu0 %v665
    %2269 = vmatpush1.bf16.msra.mxu0 %v664
    %2270 = vmatprep.subr.bf16.mxu0 %v675
    %2271 = vmatpush1.bf16.msra.mxu0 %v674
    %2272 = vmatprep.subr.bf16.mxu0 %v685
    %2273 = vmatpush1.bf16.msra.mxu0 %v684
    %2274 = vmatprep.mubr.bf16.mxu0 %v1005
    %2275 = vmatmul.mubr.bf16.gmra.mrb[0].mxu0 %v1004
    %v2276 = vpop.f32.mrb[0].mxu0
    %v2277 = vadd.f32 %v2164, %v2276
    %v2278 = vpop.f32.mrb[0].mxu0
    %v2279 = vadd.f32 %v2166, %v2278
    %v2280 = vpop.f32.mrb[0].mxu0
    %v2281 = vadd.f32 %v2168, %v2280
    %v2282 = vpop.f32.mrb[0].mxu0
    %v2283 = vadd.f32 %v2170, %v2282
    %2284 = vmatprep.mubr.bf16.mxu0 %v1012
    %2285 = vmatmul.mubr.bf16.gmra.mrb[0].mxu0 %v1011
    %v2286 = vpop.f32.mrb[0].mxu0
    %v2287 = vadd.f32 %v2174, %v2286
    %v2288 = vpop.f32.mrb[0].mxu0
    %v2289 = vadd.f32 %v2176, %v2288
    %v2290 = vpop.f32.mrb[0].mxu0
    %v2291 = vadd.f32 %v2178, %v2290
    %v2292 = vpop.f32.mrb[0].mxu0
    %v2293 = vadd.f32 %v2180, %v2292
    %2294 = vmatprep.mubr.bf16.mxu0 %v1019
    %2295 = vmatmul.mubr.bf16.gmra.mrb[0].mxu0 %v1018
    %v2296 = vpop.f32.mrb[0].mxu0
    %v2297 = vadd.f32 %v2184, %v2296
    %v2298 = vpop.f32.mrb[0].mxu0
    %v2299 = vadd.f32 %v2186, %v2298
    %v2300 = vpop.f32.mrb[0].mxu0
    %v2301 = vadd.f32 %v2188, %v2300
    %v2302 = vpop.f32.mrb[0].mxu0
    %v2303 = vadd.f32 %v2190, %v2302
    %2304 = vmatprep.mubr.bf16.mxu0 %v1026
    %2305 = vmatmul.mubr.bf16.gmra.mrb[0].mxu0 %v1025
    %v2306 = vpop.f32.mrb[0].mxu0
    %v2307 = vadd.f32 %v2194, %v2306
    %v2308 = vpop.f32.mrb[0].mxu0
    %v2309 = vadd.f32 %v2196, %v2308
    %v2310 = vpop.f32.mrb[0].mxu0
    %v2311 = vadd.f32 %v2198, %v2310
    %v2312 = vpop.f32.mrb[0].mxu0
    %v2313 = vadd.f32 %v2200, %v2312
    %2314 = vmatprep.mubr.bf16.mxu0 %v1033
    %2315 = vmatmul.mubr.bf16.gmra.mrb[0].mxu0 %v1032
    %v2316 = vpop.f32.mrb[0].mxu0
    %v2317 = vadd.f32 %v2204, %v2316
    %v2318 = vpop.f32.mrb[0].mxu0
    %v2319 = vadd.f32 %v2206, %v2318
    %v2320 = vpop.f32.mrb[0].mxu0
    %v2321 = vadd.f32 %v2208, %v2320
    %v2322 = vpop.f32.mrb[0].mxu0
    %v2323 = vadd.f32 %v2210, %v2322
    %2324 = vmatprep.mubr.bf16.mxu0 %v1040
    %2325 = vmatmul.mubr.bf16.gmra.mrb[0].mxu0 %v1039
    %v2326 = vpop.f32.mrb[0].mxu0
    %v2327 = vadd.f32 %v2214, %v2326
    %v2328 = vpop.f32.mrb[0].mxu0
    %v2329 = vadd.f32 %v2216, %v2328
    %v2330 = vpop.f32.mrb[0].mxu0
    %v2331 = vadd.f32 %v2218, %v2330
    %v2332 = vpop.f32.mrb[0].mxu0
    %v2333 = vadd.f32 %v2220, %v2332
    %2334 = vmatprep.mubr.bf16.mxu0 %v1047
    %2335 = vmatmul.mubr.bf16.gmra.mrb[0].mxu0 %v1046
    %v2336 = vpop.f32.mrb[0].mxu0
    %v2337 = vadd.f32 %v2224, %v2336
    %v2338 = vpop.f32.mrb[0].mxu0
    %v2339 = vadd.f32 %v2226, %v2338
    %v2340 = vpop.f32.mrb[0].mxu0
    %v2341 = vadd.f32 %v2228, %v2340
    %v2342 = vpop.f32.mrb[0].mxu0
    %v2343 = vadd.f32 %v2230, %v2342
    %2344 = vmatprep.mubr.bf16.mxu0 %v1054
    %2345 = vmatmul.mubr.bf16.gmra.mrb[0].mxu0 %v1053
    %v2346 = vpop.f32.mrb[0].mxu0
    %v2347 = vadd.f32 %v2234, %v2346
    %v2348 = vpop.f32.mrb[0].mxu0
    %v2349 = vadd.f32 %v2236, %v2348
    %v2350 = vpop.f32.mrb[0].mxu0
    %v2351 = vadd.f32 %v2238, %v2350
    %v2352 = vpop.f32.mrb[0].mxu0
    %v2353 = vadd.f32 %v2240, %v2352
    %2354 = vdwg.mxu0
    %2355 = vmatprep.subr.bf16.mxu0 %v695
    %2356 = vmatpush1.bf16.msra.mxu0 %v694
    %2357 = vmatprep.subr.bf16.mxu0 %v705
    %2358 = vmatpush1.bf16.msra.mxu0 %v704
    %2359 = vmatprep.subr.bf16.mxu0 %v715
    %2360 = vmatpush1.bf16.msra.mxu0 %v714
    %2361 = vmatprep.subr.bf16.mxu0 %v725
    %2362 = vmatpush1.bf16.msra.mxu0 %v724
    %2363 = vmatprep.subr.bf16.mxu0 %v735
    %2364 = vmatpush1.bf16.msra.mxu0 %v734
    %2365 = vmatprep.subr.bf16.mxu0 %v745
    %2366 = vmatpush1.bf16.msra.mxu0 %v744
    %2367 = vmatprep.subr.bf16.mxu0 %v755
    %2368 = vmatpush1.bf16.msra.mxu0 %v754
    %2369 = vmatprep.subr.bf16.mxu0 %v765
    %2370 = vmatpush1.bf16.msra.mxu0 %v764
    %2371 = vmatprep.subr.bf16.mxu0 0
    %2372 = vmatpush1.bf16.msra.mxu0 0
    %2373 = vmatprep.subr.bf16.mxu0 0
    %2374 = vmatpush1.bf16.msra.mxu0 0
    %2375 = vmatprep.subr.bf16.mxu0 0
    %2376 = vmatpush1.bf16.msra.mxu0 0
    %2377 = vmatprep.subr.bf16.mxu0 0
    %2378 = vmatpush1.bf16.msra.mxu0 0
    %2379 = vmatprep.subr.bf16.mxu0 0
    %2380 = vmatpush1.bf16.msra.mxu0 0
    %2381 = vmatprep.subr.bf16.mxu0 0
    %2382 = vmatpush1.bf16.msra.mxu0 0
    %2383 = vmatprep.subr.bf16.mxu0 0
    %2384 = vmatpush1.bf16.msra.mxu0 0
    %2385 = vmatprep.subr.bf16.mxu0 0
    %2386 = vmatpush1.bf16.msra.mxu0 0
    %2387 = vmatprep.mubr.bf16.mxu0 0
    %2388 = vmatmul.mubr.bf16.gmra.mrb[0].mxu0 %v1006
    %v2389 = vpop.f32.mrb[0].mxu0
    %v2390 = vadd.f32 %v2277, %v2389
    %v2391 = vpop.f32.mrb[0].mxu0
    %v2392 = vadd.f32 %v2279, %v2391
    %v2393 = vpop.f32.mrb[0].mxu0
    %v2394 = vadd.f32 %v2281, %v2393
    %v2395 = vpop.f32.mrb[0].mxu0
    %v2396 = vadd.f32 %v2283, %v2395
    %2397 = vmatprep.mubr.bf16.mxu0 0
    %2398 = vmatmul.mubr.bf16.gmra.mrb[0].mxu0 %v1013
    %v2399 = vpop.f32.mrb[0].mxu0
    %v2400 = vadd.f32 %v2287, %v2399
    %v2401 = vpop.f32.mrb[0].mxu0
    %v2402 = vadd.f32 %v2289, %v2401
    %v2403 = vpop.f32.mrb[0].mxu0
    %v2404 = vadd.f32 %v2291, %v2403
    %v2405 = vpop.f32.mrb[0].mxu0
    %v2406 = vadd.f32 %v2293, %v2405
    %2407 = vmatprep.mubr.bf16.mxu0 0
    %2408 = vmatmul.mubr.bf16.gmra.mrb[0].mxu0 %v1020
    %v2409 = vpop.f32.mrb[0].mxu0
    %v2410 = vadd.f32 %v2297, %v2409
    %v2411 = vpop.f32.mrb[0].mxu0
    %v2412 = vadd.f32 %v2299, %v2411
    %v2413 = vpop.f32.mrb[0].mxu0
    %v2414 = vadd.f32 %v2301, %v2413
    %v2415 = vpop.f32.mrb[0].mxu0
    %v2416 = vadd.f32 %v2303, %v2415
    %2417 = vmatprep.mubr.bf16.mxu0 0
    %2418 = vmatmul.mubr.bf16.gmra.mrb[0].mxu0 %v1027
    %v2419 = vpop.f32.mrb[0].mxu0
    %v2420 = vadd.f32 %v2307, %v2419
    %v2421 = vpop.f32.mrb[0].mxu0
    %v2422 = vadd.f32 %v2309, %v2421
    %v2423 = vpop.f32.mrb[0].mxu0
    %v2424 = vadd.f32 %v2311, %v2423
    %v2425 = vpop.f32.mrb[0].mxu0
    %v2426 = vadd.f32 %v2313, %v2425
    %2427 = vmatprep.mubr.bf16.mxu0 0
    %2428 = vmatmul.mubr.bf16.gmra.mrb[0].mxu0 %v1034
    %v2429 = vpop.f32.mrb[0].mxu0
    %v2430 = vadd.f32 %v2317, %v2429
    %v2431 = vpop.f32.mrb[0].mxu0
    %v2432 = vadd.f32 %v2319, %v2431
    %v2433 = vpop.f32.mrb[0].mxu0
    %v2434 = vadd.f32 %v2321, %v2433
    %v2435 = vpop.f32.mrb[0].mxu0
    %v2436 = vadd.f32 %v2323, %v2435
    %2437 = vmatprep.mubr.bf16.mxu0 0
    %2438 = vmatmul.mubr.bf16.gmra.mrb[0].mxu0 %v1041
    %v2439 = vpop.f32.mrb[0].mxu0
    %v2440 = vadd.f32 %v2327, %v2439
    %v2441 = vpop.f32.mrb[0].mxu0
    %v2442 = vadd.f32 %v2329, %v2441
    %v2443 = vpop.f32.mrb[0].mxu0
    %v2444 = vadd.f32 %v2331, %v2443
    %v2445 = vpop.f32.mrb[0].mxu0
    %v2446 = vadd.f32 %v2333, %v2445
    %2447 = vmatprep.mubr.bf16.mxu0 0
    %2448 = vmatmul.mubr.bf16.gmra.mrb[0].mxu0 %v1048
    %v2449 = vpop.f32.mrb[0].mxu0
    %v2450 = vadd.f32 %v2337, %v2449
    %v2451 = vpop.f32.mrb[0].mxu0
    %v2452 = vadd.f32 %v2339, %v2451
    %v2453 = vpop.f32.mrb[0].mxu0
    %v2454 = vadd.f32 %v2341, %v2453
    %v2455 = vpop.f32.mrb[0].mxu0
    %v2456 = vadd.f32 %v2343, %v2455
    %2457 = vmatprep.mubr.bf16.mxu0 0
    %2458 = vmatmul.mubr.bf16.gmra.mrb[0].mxu0 %v1055
    %v2459 = vpop.f32.mrb[0].mxu0
    %v2460 = vadd.f32 %v2347, %v2459
    %v2461 = vpop.f32.mrb[0].mxu0
    %v2462 = vadd.f32 %v2349, %v2461
    %v2463 = vpop.f32.mrb[0].mxu0
    %v2464 = vadd.f32 %v2351, %v2463
    %v2465 = vpop.f32.mrb[0].mxu0
    %v2466 = vadd.f32 %v2353, %v2465
    %2467 = vdwg.mxu0
    %2468 = vmatprep.subr.bf16.mxu0 %v217
    %2469 = vmatpush1.bf16.msra.mxu0 %v216
    %2470 = vmatprep.subr.bf16.mxu0 %v227
    %2471 = vmatpush1.bf16.msra.mxu0 %v226
    %2472 = vmatprep.subr.bf16.mxu0 %v237
    %2473 = vmatpush1.bf16.msra.mxu0 %v236
    %2474 = vmatprep.subr.bf16.mxu0 %v247
    %2475 = vmatpush1.bf16.msra.mxu0 %v246
    %2476 = vmatprep.subr.bf16.mxu0 %v257
    %2477 = vmatpush1.bf16.msra.mxu0 %v256
    %2478 = vmatprep.subr.bf16.mxu0 %v267
    %2479 = vmatpush1.bf16.msra.mxu0 %v266
    %2480 = vmatprep.subr.bf16.mxu0 %v277
    %2481 = vmatpush1.bf16.msra.mxu0 %v276
    %2482 = vmatprep.subr.bf16.mxu0 %v287
    %2483 = vmatpush1.bf16.msra.mxu0 %v286
    %2484 = vmatprep.subr.bf16.mxu0 %v297
    %2485 = vmatpush1.bf16.msra.mxu0 %v296
    %2486 = vmatprep.subr.bf16.mxu0 %v307
    %2487 = vmatpush1.bf16.msra.mxu0 %v306
    %2488 = vmatprep.subr.bf16.mxu0 %v317
    %2489 = vmatpush1.bf16.msra.mxu0 %v316
    %2490 = vmatprep.subr.bf16.mxu0 %v327
    %2491 = vmatpush1.bf16.msra.mxu0 %v326
    %2492 = vmatprep.subr.bf16.mxu0 %v337
    %2493 = vmatpush1.bf16.msra.mxu0 %v336
    %2494 = vmatprep.subr.bf16.mxu0 %v347
    %2495 = vmatpush1.bf16.msra.mxu0 %v346
    %2496 = vmatprep.subr.bf16.mxu0 %v357
    %2497 = vmatpush1.bf16.msra.mxu0 %v356
    %2498 = vmatprep.subr.bf16.mxu0 %v367
    %2499 = vmatpush1.bf16.msra.mxu0 %v366
    %2500 = vmatprep.mubr.bf16.mxu0 %v1001
    %2501 = vmatmul.mubr.bf16.gmra.mrb[0].mxu0 %v1000
    %v2502 = vpop.f32.mrb[0].mxu0
    %v2503 = vadd.f32 %v801, %v2502
    %v2504 = vpop.f32.mrb[0].mxu0
    %v2505 = vadd.f32 %v805, %v2504
    %v2506 = vpop.f32.mrb[0].mxu0
    %v2507 = vadd.f32 %v801, %v2506
    %v2508 = vpop.f32.mrb[0].mxu0
    %v2509 = vadd.f32 %v805, %v2508
    %2510 = vmatprep.mubr.bf16.mxu0 %v1008
    %2511 = vmatmul.mubr.bf16.gmra.mrb[0].mxu0 %v1007
    %v2512 = vpop.f32.mrb[0].mxu0
    %v2513 = vadd.f32 %v801, %v2512
    %v2514 = vpop.f32.mrb[0].mxu0
    %v2515 = vadd.f32 %v805, %v2514
    %v2516 = vpop.f32.mrb[0].mxu0
    %v2517 = vadd.f32 %v801, %v2516
    %v2518 = vpop.f32.mrb[0].mxu0
    %v2519 = vadd.f32 %v805, %v2518
    %2520 = vmatprep.mubr.bf16.mxu0 %v1015
    %2521 = vmatmul.mubr.bf16.gmra.mrb[0].mxu0 %v1014
    %v2522 = vpop.f32.mrb[0].mxu0
    %v2523 = vadd.f32 %v801, %v2522
    %v2524 = vpop.f32.mrb[0].mxu0
    %v2525 = vadd.f32 %v805, %v2524
    %v2526 = vpop.f32.mrb[0].mxu0
    %v2527 = vadd.f32 %v801, %v2526
    %v2528 = vpop.f32.mrb[0].mxu0
    %v2529 = vadd.f32 %v805, %v2528
    %2530 = vmatprep.mubr.bf16.mxu0 %v1022
    %2531 = vmatmul.mubr.bf16.gmra.mrb[0].mxu0 %v1021
    %v2532 = vpop.f32.mrb[0].mxu0
    %v2533 = vadd.f32 %v801, %v2532
    %v2534 = vpop.f32.mrb[0].mxu0
    %v2535 = vadd.f32 %v805, %v2534
    %v2536 = vpop.f32.mrb[0].mxu0
    %v2537 = vadd.f32 %v801, %v2536
    %v2538 = vpop.f32.mrb[0].mxu0
    %v2539 = vadd.f32 %v805, %v2538
    %2540 = vmatprep.mubr.bf16.mxu0 %v1029
    %2541 = vmatmul.mubr.bf16.gmra.mrb[0].mxu0 %v1028
    %v2542 = vpop.f32.mrb[0].mxu0
    %v2543 = vadd.f32 %v801, %v2542
    %v2544 = vpop.f32.mrb[0].mxu0
    %v2545 = vadd.f32 %v805, %v2544
    %v2546 = vpop.f32.mrb[0].mxu0
    %v2547 = vadd.f32 %v801, %v2546
    %v2548 = vpop.f32.mrb[0].mxu0
    %v2549 = vadd.f32 %v805, %v2548
    %2550 = vmatprep.mubr.bf16.mxu0 %v1036
    %2551 = vmatmul.mubr.bf16.gmra.mrb[0].mxu0 %v1035
    %v2552 = vpop.f32.mrb[0].mxu0
    %v2553 = vadd.f32 %v801, %v2552
    %v2554 = vpop.f32.mrb[0].mxu0
    %v2555 = vadd.f32 %v805, %v2554
    %v2556 = vpop.f32.mrb[0].mxu0
    %v2557 = vadd.f32 %v801, %v2556
    %v2558 = vpop.f32.mrb[0].mxu0
    %v2559 = vadd.f32 %v805, %v2558
    %2560 = vmatprep.mubr.bf16.mxu0 %v1043
    %2561 = vmatmul.mubr.bf16.gmra.mrb[0].mxu0 %v1042
    %v2562 = vpop.f32.mrb[0].mxu0
    %v2563 = vadd.f32 %v801, %v2562
    %v2564 = vpop.f32.mrb[0].mxu0
    %v2565 = vadd.f32 %v805, %v2564
    %v2566 = vpop.f32.mrb[0].mxu0
    %v2567 = vadd.f32 %v801, %v2566
    %v2568 = vpop.f32.mrb[0].mxu0
    %v2569 = vadd.f32 %v805, %v2568
    %2570 = vmatprep.mubr.bf16.mxu0 %v1050
    %2571 = vmatmul.mubr.bf16.gmra.mrb[0].mxu0 %v1049
    %v2572 = vpop.f32.mrb[0].mxu0
    %v2573 = vadd.f32 %v801, %v2572
    %v2574 = vpop.f32.mrb[0].mxu0
    %v2575 = vadd.f32 %v805, %v2574
    %v2576 = vpop.f32.mrb[0].mxu0
    %v2577 = vadd.f32 %v801, %v2576
    %v2578 = vpop.f32.mrb[0].mxu0
    %v2579 = vadd.f32 %v805, %v2578
    %2580 = vdwg.mxu0
    %2581 = vmatprep.subr.bf16.mxu0 %v377
    %2582 = vmatpush1.bf16.msra.mxu0 %v376
    %2583 = vmatprep.subr.bf16.mxu0 %v387
    %2584 = vmatpush1.bf16.msra.mxu0 %v386
    %2585 = vmatprep.subr.bf16.mxu0 %v397
    %2586 = vmatpush1.bf16.msra.mxu0 %v396
    %2587 = vmatprep.subr.bf16.mxu0 %v407
    %2588 = vmatpush1.bf16.msra.mxu0 %v406
    %2589 = vmatprep.subr.bf16.mxu0 %v417
    %2590 = vmatpush1.bf16.msra.mxu0 %v416
    %2591 = vmatprep.subr.bf16.mxu0 %v427
    %2592 = vmatpush1.bf16.msra.mxu0 %v426
    %2593 = vmatprep.subr.bf16.mxu0 %v437
    %2594 = vmatpush1.bf16.msra.mxu0 %v436
    %2595 = vmatprep.subr.bf16.mxu0 %v447
    %2596 = vmatpush1.bf16.msra.mxu0 %v446
    %2597 = vmatprep.subr.bf16.mxu0 %v457
    %2598 = vmatpush1.bf16.msra.mxu0 %v456
    %2599 = vmatprep.subr.bf16.mxu0 %v467
    %2600 = vmatpush1.bf16.msra.mxu0 %v466
    %2601 = vmatprep.subr.bf16.mxu0 %v477
    %2602 = vmatpush1.bf16.msra.mxu0 %v476
    %2603 = vmatprep.subr.bf16.mxu0 %v487
    %2604 = vmatpush1.bf16.msra.mxu0 %v486
    %2605 = vmatprep.subr.bf16.mxu0 %v497
    %2606 = vmatpush1.bf16.msra.mxu0 %v496
    %2607 = vmatprep.subr.bf16.mxu0 %v507
    %2608 = vmatpush1.bf16.msra.mxu0 %v506
    %2609 = vmatprep.subr.bf16.mxu0 %v517
    %2610 = vmatpush1.bf16.msra.mxu0 %v516
    %2611 = vmatprep.subr.bf16.mxu0 %v527
    %2612 = vmatpush1.bf16.msra.mxu0 %v526
    %2613 = vmatprep.mubr.bf16.mxu0 %v1003
    %2614 = vmatmul.mubr.bf16.gmra.mrb[0].mxu0 %v1002
    %v2615 = vpop.f32.mrb[0].mxu0
    %v2616 = vadd.f32 %v2503, %v2615
    %v2617 = vpop.f32.mrb[0].mxu0
    %v2618 = vadd.f32 %v2505, %v2617
    %v2619 = vpop.f32.mrb[0].mxu0
    %v2620 = vadd.f32 %v2507, %v2619
    %v2621 = vpop.f32.mrb[0].mxu0
    %v2622 = vadd.f32 %v2509, %v2621
    %2623 = vmatprep.mubr.bf16.mxu0 %v1010
    %2624 = vmatmul.mubr.bf16.gmra.mrb[0].mxu0 %v1009
    %v2625 = vpop.f32.mrb[0].mxu0
    %v2626 = vadd.f32 %v2513, %v2625
    %v2627 = vpop.f32.mrb[0].mxu0
    %v2628 = vadd.f32 %v2515, %v2627
    %v2629 = vpop.f32.mrb[0].mxu0
    %v2630 = vadd.f32 %v2517, %v2629
    %v2631 = vpop.f32.mrb[0].mxu0
    %v2632 = vadd.f32 %v2519, %v2631
    %2633 = vmatprep.mubr.bf16.mxu0 %v1017
    %2634 = vmatmul.mubr.bf16.gmra.mrb[0].mxu0 %v1016
    %v2635 = vpop.f32.mrb[0].mxu0
    %v2636 = vadd.f32 %v2523, %v2635
    %v2637 = vpop.f32.mrb[0].mxu0
    %v2638 = vadd.f32 %v2525, %v2637
    %v2639 = vpop.f32.mrb[0].mxu0
    %v2640 = vadd.f32 %v2527, %v2639
    %v2641 = vpop.f32.mrb[0].mxu0
    %v2642 = vadd.f32 %v2529, %v2641
    %2643 = vmatprep.mubr.bf16.mxu0 %v1024
    %2644 = vmatmul.mubr.bf16.gmra.mrb[0].mxu0 %v1023
    %v2645 = vpop.f32.mrb[0].mxu0
    %v2646 = vadd.f32 %v2533, %v2645
    %v2647 = vpop.f32.mrb[0].mxu0
    %v2648 = vadd.f32 %v2535, %v2647
    %v2649 = vpop.f32.mrb[0].mxu0
    %v2650 = vadd.f32 %v2537, %v2649
    %v2651 = vpop.f32.mrb[0].mxu0
    %v2652 = vadd.f32 %v2539, %v2651
    %2653 = vmatprep.mubr.bf16.mxu0 %v1031
    %2654 = vmatmul.mubr.bf16.gmra.mrb[0].mxu0 %v1030
    %v2655 = vpop.f32.mrb[0].mxu0
    %v2656 = vadd.f32 %v2543, %v2655
    %v2657 = vpop.f32.mrb[0].mxu0
    %v2658 = vadd.f32 %v2545, %v2657
    %v2659 = vpop.f32.mrb[0].mxu0
    %v2660 = vadd.f32 %v2547, %v2659
    %v2661 = vpop.f32.mrb[0].mxu0
    %v2662 = vadd.f32 %v2549, %v2661
    %2663 = vmatprep.mubr.bf16.mxu0 %v1038
    %2664 = vmatmul.mubr.bf16.gmra.mrb[0].mxu0 %v1037
    %v2665 = vpop.f32.mrb[0].mxu0
    %v2666 = vadd.f32 %v2553, %v2665
    %v2667 = vpop.f32.mrb[0].mxu0
    %v2668 = vadd.f32 %v2555, %v2667
    %v2669 = vpop.f32.mrb[0].mxu0
    %v2670 = vadd.f32 %v2557, %v2669
    %v2671 = vpop.f32.mrb[0].mxu0
    %v2672 = vadd.f32 %v2559, %v2671
    %2673 = vmatprep.mubr.bf16.mxu0 %v1045
    %2674 = vmatmul.mubr.bf16.gmra.mrb[0].mxu0 %v1044
    %v2675 = vpop.f32.mrb[0].mxu0
    %v2676 = vadd.f32 %v2563, %v2675
    %v2677 = vpop.f32.mrb[0].mxu0
    %v2678 = vadd.f32 %v2565, %v2677
    %v2679 = vpop.f32.mrb[0].mxu0
    %v2680 = vadd.f32 %v2567, %v2679
    %v2681 = vpop.f32.mrb[0].mxu0
    %v2682 = vadd.f32 %v2569, %v2681
    %2683 = vmatprep.mubr.bf16.mxu0 %v1052
    %2684 = vmatmul.mubr.bf16.gmra.mrb[0].mxu0 %v1051
    %v2685 = vpop.f32.mrb[0].mxu0
    %v2686 = vadd.f32 %v2573, %v2685
    %v2687 = vpop.f32.mrb[0].mxu0
    %v2688 = vadd.f32 %v2575, %v2687
    %v2689 = vpop.f32.mrb[0].mxu0
    %v2690 = vadd.f32 %v2577, %v2689
    %v2691 = vpop.f32.mrb[0].mxu0
    %v2692 = vadd.f32 %v2579, %v2691
    %2693 = vdwg.mxu0
    %2694 = vmatprep.subr.bf16.mxu0 %v537
    %2695 = vmatpush1.bf16.msra.mxu0 %v536
    %2696 = vmatprep.subr.bf16.mxu0 %v547
    %2697 = vmatpush1.bf16.msra.mxu0 %v546
    %2698 = vmatprep.subr.bf16.mxu0 %v557
    %2699 = vmatpush1.bf16.msra.mxu0 %v556
    %2700 = vmatprep.subr.bf16.mxu0 %v567
    %2701 = vmatpush1.bf16.msra.mxu0 %v566
    %2702 = vmatprep.subr.bf16.mxu0 %v577
    %2703 = vmatpush1.bf16.msra.mxu0 %v576
    %2704 = vmatprep.subr.bf16.mxu0 %v587
    %2705 = vmatpush1.bf16.msra.mxu0 %v586
    %2706 = vmatprep.subr.bf16.mxu0 %v597
    %2707 = vmatpush1.bf16.msra.mxu0 %v596
    %2708 = vmatprep.subr.bf16.mxu0 %v607
    %2709 = vmatpush1.bf16.msra.mxu0 %v606
    %2710 = vmatprep.subr.bf16.mxu0 %v617
    %2711 = vmatpush1.bf16.msra.mxu0 %v616
    %2712 = vmatprep.subr.bf16.mxu0 %v627
    %2713 = vmatpush1.bf16.msra.mxu0 %v626
    %2714 = vmatprep.subr.bf16.mxu0 %v637
    %2715 = vmatpush1.bf16.msra.mxu0 %v636
    %2716 = vmatprep.subr.bf16.mxu0 %v647
    %2717 = vmatpush1.bf16.msra.mxu0 %v646
    %2718 = vmatprep.subr.bf16.mxu0 %v657
    %2719 = vmatpush1.bf16.msra.mxu0 %v656
    %2720 = vmatprep.subr.bf16.mxu0 %v667
    %2721 = vmatpush1.bf16.msra.mxu0 %v666
    %2722 = vmatprep.subr.bf16.mxu0 %v677
    %2723 = vmatpush1.bf16.msra.mxu0 %v676
    %2724 = vmatprep.subr.bf16.mxu0 %v687
    %2725 = vmatpush1.bf16.msra.mxu0 %v686
    %2726 = vmatprep.mubr.bf16.mxu0 %v1005
    %2727 = vmatmul.mubr.bf16.gmra.mrb[0].mxu0 %v1004
    %v2728 = vpop.f32.mrb[0].mxu0
    %v2729 = vadd.f32 %v2616, %v2728
    %v2730 = vpop.f32.mrb[0].mxu0
    %v2731 = vadd.f32 %v2618, %v2730
    %v2732 = vpop.f32.mrb[0].mxu0
    %v2733 = vadd.f32 %v2620, %v2732
    %v2734 = vpop.f32.mrb[0].mxu0
    %v2735 = vadd.f32 %v2622, %v2734
    %2736 = vmatprep.mubr.bf16.mxu0 %v1012
    %2737 = vmatmul.mubr.bf16.gmra.mrb[0].mxu0 %v1011
    %v2738 = vpop.f32.mrb[0].mxu0
    %v2739 = vadd.f32 %v2626, %v2738
    %v2740 = vpop.f32.mrb[0].mxu0
    %v2741 = vadd.f32 %v2628, %v2740
    %v2742 = vpop.f32.mrb[0].mxu0
    %v2743 = vadd.f32 %v2630, %v2742
    %v2744 = vpop.f32.mrb[0].mxu0
    %v2745 = vadd.f32 %v2632, %v2744
    %2746 = vmatprep.mubr.bf16.mxu0 %v1019
    %2747 = vmatmul.mubr.bf16.gmra.mrb[0].mxu0 %v1018
    %v2748 = vpop.f32.mrb[0].mxu0
    %v2749 = vadd.f32 %v2636, %v2748
    %v2750 = vpop.f32.mrb[0].mxu0
    %v2751 = vadd.f32 %v2638, %v2750
    %v2752 = vpop.f32.mrb[0].mxu0
    %v2753 = vadd.f32 %v2640, %v2752
    %v2754 = vpop.f32.mrb[0].mxu0
    %v2755 = vadd.f32 %v2642, %v2754
    %2756 = vmatprep.mubr.bf16.mxu0 %v1026
    %2757 = vmatmul.mubr.bf16.gmra.mrb[0].mxu0 %v1025
    %v2758 = vpop.f32.mrb[0].mxu0
    %v2759 = vadd.f32 %v2646, %v2758
    %v2760 = vpop.f32.mrb[0].mxu0
    %v2761 = vadd.f32 %v2648, %v2760
    %v2762 = vpop.f32.mrb[0].mxu0
    %v2763 = vadd.f32 %v2650, %v2762
    %v2764 = vpop.f32.mrb[0].mxu0
    %v2765 = vadd.f32 %v2652, %v2764
    %2766 = vmatprep.mubr.bf16.mxu0 %v1033
    %2767 = vmatmul.mubr.bf16.gmra.mrb[0].mxu0 %v1032
    %v2768 = vpop.f32.mrb[0].mxu0
    %v2769 = vadd.f32 %v2656, %v2768
    %v2770 = vpop.f32.mrb[0].mxu0
    %v2771 = vadd.f32 %v2658, %v2770
    %v2772 = vpop.f32.mrb[0].mxu0
    %v2773 = vadd.f32 %v2660, %v2772
    %v2774 = vpop.f32.mrb[0].mxu0
    %v2775 = vadd.f32 %v2662, %v2774
    %2776 = vmatprep.mubr.bf16.mxu0 %v1040
    %2777 = vmatmul.mubr.bf16.gmra.mrb[0].mxu0 %v1039
    %v2778 = vpop.f32.mrb[0].mxu0
    %v2779 = vadd.f32 %v2666, %v2778
    %v2780 = vpop.f32.mrb[0].mxu0
    %v2781 = vadd.f32 %v2668, %v2780
    %v2782 = vpop.f32.mrb[0].mxu0
    %v2783 = vadd.f32 %v2670, %v2782
    %v2784 = vpop.f32.mrb[0].mxu0
    %v2785 = vadd.f32 %v2672, %v2784
    %2786 = vmatprep.mubr.bf16.mxu0 %v1047
    %2787 = vmatmul.mubr.bf16.gmra.mrb[0].mxu0 %v1046
    %v2788 = vpop.f32.mrb[0].mxu0
    %v2789 = vadd.f32 %v2676, %v2788
    %v2790 = vpop.f32.mrb[0].mxu0
    %v2791 = vadd.f32 %v2678, %v2790
    %v2792 = vpop.f32.mrb[0].mxu0
    %v2793 = vadd.f32 %v2680, %v2792
    %v2794 = vpop.f32.mrb[0].mxu0
    %v2795 = vadd.f32 %v2682, %v2794
    %2796 = vmatprep.mubr.bf16.mxu0 %v1054
    %2797 = vmatmul.mubr.bf16.gmra.mrb[0].mxu0 %v1053
    %v2798 = vpop.f32.mrb[0].mxu0
    %v2799 = vadd.f32 %v2686, %v2798
    %v2800 = vpop.f32.mrb[0].mxu0
    %v2801 = vadd.f32 %v2688, %v2800
    %v2802 = vpop.f32.mrb[0].mxu0
    %v2803 = vadd.f32 %v2690, %v2802
    %v2804 = vpop.f32.mrb[0].mxu0
    %v2805 = vadd.f32 %v2692, %v2804
    %2806 = vdwg.mxu0
    %2807 = vmatprep.subr.bf16.mxu0 %v697
    %2808 = vmatpush1.bf16.msra.mxu0 %v696
    %2809 = vmatprep.subr.bf16.mxu0 %v707
    %2810 = vmatpush1.bf16.msra.mxu0 %v706
    %2811 = vmatprep.subr.bf16.mxu0 %v717
    %2812 = vmatpush1.bf16.msra.mxu0 %v716
    %2813 = vmatprep.subr.bf16.mxu0 %v727
    %2814 = vmatpush1.bf16.msra.mxu0 %v726
    %2815 = vmatprep.subr.bf16.mxu0 %v737
    %2816 = vmatpush1.bf16.msra.mxu0 %v736
    %2817 = vmatprep.subr.bf16.mxu0 %v747
    %2818 = vmatpush1.bf16.msra.mxu0 %v746
    %2819 = vmatprep.subr.bf16.mxu0 %v757
    %2820 = vmatpush1.bf16.msra.mxu0 %v756
    %2821 = vmatprep.subr.bf16.mxu0 %v767
    %2822 = vmatpush1.bf16.msra.mxu0 %v766
    %2823 = vmatprep.subr.bf16.mxu0 0
    %2824 = vmatpush1.bf16.msra.mxu0 0
    %2825 = vmatprep.subr.bf16.mxu0 0
    %2826 = vmatpush1.bf16.msra.mxu0 0
    %2827 = vmatprep.subr.bf16.mxu0 0
    %2828 = vmatpush1.bf16.msra.mxu0 0
    %2829 = vmatprep.subr.bf16.mxu0 0
    %2830 = vmatpush1.bf16.msra.mxu0 0
    %2831 = vmatprep.subr.bf16.mxu0 0
    %2832 = vmatpush1.bf16.msra.mxu0 0
    %2833 = vmatprep.subr.bf16.mxu0 0
    %2834 = vmatpush1.bf16.msra.mxu0 0
    %2835 = vmatprep.subr.bf16.mxu0 0
    %2836 = vmatpush1.bf16.msra.mxu0 0
    %2837 = vmatprep.subr.bf16.mxu0 0
    %2838 = vmatpush1.bf16.msra.mxu0 0
    %2839 = vmatprep.mubr.bf16.mxu0 0
    %2840 = vmatmul.mubr.bf16.gmra.mrb[0].mxu0 %v1006
    %v2841 = vpop.f32.mrb[0].mxu0
    %v2842 = vadd.f32 %v2729, %v2841
    %v2843 = vpop.f32.mrb[0].mxu0
    %v2844 = vadd.f32 %v2731, %v2843
    %v2845 = vpop.f32.mrb[0].mxu0
    %v2846 = vadd.f32 %v2733, %v2845
    %v2847 = vpop.f32.mrb[0].mxu0
    %v2848 = vadd.f32 %v2735, %v2847
    %2849 = vmatprep.mubr.bf16.mxu0 0
    %2850 = vmatmul.mubr.bf16.gmra.mrb[0].mxu0 %v1013
    %v2851 = vpop.f32.mrb[0].mxu0
    %v2852 = vadd.f32 %v2739, %v2851
    %v2853 = vpop.f32.mrb[0].mxu0
    %v2854 = vadd.f32 %v2741, %v2853
    %v2855 = vpop.f32.mrb[0].mxu0
    %v2856 = vadd.f32 %v2743, %v2855
    %v2857 = vpop.f32.mrb[0].mxu0
    %v2858 = vadd.f32 %v2745, %v2857
    %2859 = vmatprep.mubr.bf16.mxu0 0
    %2860 = vmatmul.mubr.bf16.gmra.mrb[0].mxu0 %v1020
    %v2861 = vpop.f32.mrb[0].mxu0
    %v2862 = vadd.f32 %v2749, %v2861
    %v2863 = vpop.f32.mrb[0].mxu0
    %v2864 = vadd.f32 %v2751, %v2863
    %v2865 = vpop.f32.mrb[0].mxu0
    %v2866 = vadd.f32 %v2753, %v2865
    %v2867 = vpop.f32.mrb[0].mxu0
    %v2868 = vadd.f32 %v2755, %v2867
    %2869 = vmatprep.mubr.bf16.mxu0 0
    %2870 = vmatmul.mubr.bf16.gmra.mrb[0].mxu0 %v1027
    %v2871 = vpop.f32.mrb[0].mxu0
    %v2872 = vadd.f32 %v2759, %v2871
    %v2873 = vpop.f32.mrb[0].mxu0
    %v2874 = vadd.f32 %v2761, %v2873
    %v2875 = vpop.f32.mrb[0].mxu0
    %v2876 = vadd.f32 %v2763, %v2875
    %v2877 = vpop.f32.mrb[0].mxu0
    %v2878 = vadd.f32 %v2765, %v2877
    %2879 = vmatprep.mubr.bf16.mxu0 0
    %2880 = vmatmul.mubr.bf16.gmra.mrb[0].mxu0 %v1034
    %v2881 = vpop.f32.mrb[0].mxu0
    %v2882 = vadd.f32 %v2769, %v2881
    %v2883 = vpop.f32.mrb[0].mxu0
    %v2884 = vadd.f32 %v2771, %v2883
    %v2885 = vpop.f32.mrb[0].mxu0
    %v2886 = vadd.f32 %v2773, %v2885
    %v2887 = vpop.f32.mrb[0].mxu0
    %v2888 = vadd.f32 %v2775, %v2887
    %2889 = vmatprep.mubr.bf16.mxu0 0
    %2890 = vmatmul.mubr.bf16.gmra.mrb[0].mxu0 %v1041
    %v2891 = vpop.f32.mrb[0].mxu0
    %v2892 = vadd.f32 %v2779, %v2891
    %v2893 = vpop.f32.mrb[0].mxu0
    %v2894 = vadd.f32 %v2781, %v2893
    %v2895 = vpop.f32.mrb[0].mxu0
    %v2896 = vadd.f32 %v2783, %v2895
    %v2897 = vpop.f32.mrb[0].mxu0
    %v2898 = vadd.f32 %v2785, %v2897
    %2899 = vmatprep.mubr.bf16.mxu0 0
    %2900 = vmatmul.mubr.bf16.gmra.mrb[0].mxu0 %v1048
    %v2901 = vpop.f32.mrb[0].mxu0
    %v2902 = vadd.f32 %v2789, %v2901
    %v2903 = vpop.f32.mrb[0].mxu0
    %v2904 = vadd.f32 %v2791, %v2903
    %v2905 = vpop.f32.mrb[0].mxu0
    %v2906 = vadd.f32 %v2793, %v2905
    %v2907 = vpop.f32.mrb[0].mxu0
    %v2908 = vadd.f32 %v2795, %v2907
    %2909 = vmatprep.mubr.bf16.mxu0 0
    %2910 = vmatmul.mubr.bf16.gmra.mrb[0].mxu0 %v1055
    %v2911 = vpop.f32.mrb[0].mxu0
    %v2912 = vadd.f32 %v2799, %v2911
    %v2913 = vpop.f32.mrb[0].mxu0
    %v2914 = vadd.f32 %v2801, %v2913
    %v2915 = vpop.f32.mrb[0].mxu0
    %v2916 = vadd.f32 %v2803, %v2915
    %v2917 = vpop.f32.mrb[0].mxu0
    %v2918 = vadd.f32 %v2805, %v2917
    %2919 = vdwg.mxu0
    %2920 = vmatprep.subr.bf16.mxu0 %v219
    %2921 = vmatpush1.bf16.msra.mxu0 %v218
    %2922 = vmatprep.subr.bf16.mxu0 %v229
    %2923 = vmatpush1.bf16.msra.mxu0 %v228
    %2924 = vmatprep.subr.bf16.mxu0 %v239
    %2925 = vmatpush1.bf16.msra.mxu0 %v238
    %2926 = vmatprep.subr.bf16.mxu0 %v249
    %2927 = vmatpush1.bf16.msra.mxu0 %v248
    %2928 = vmatprep.subr.bf16.mxu0 %v259
    %2929 = vmatpush1.bf16.msra.mxu0 %v258
    %2930 = vmatprep.subr.bf16.mxu0 %v269
    %2931 = vmatpush1.bf16.msra.mxu0 %v268
    %2932 = vmatprep.subr.bf16.mxu0 %v279
    %2933 = vmatpush1.bf16.msra.mxu0 %v278
    %2934 = vmatprep.subr.bf16.mxu0 %v289
    %2935 = vmatpush1.bf16.msra.mxu0 %v288
    %2936 = vmatprep.subr.bf16.mxu0 %v299
    %2937 = vmatpush1.bf16.msra.mxu0 %v298
    %2938 = vmatprep.subr.bf16.mxu0 %v309
    %2939 = vmatpush1.bf16.msra.mxu0 %v308
    %2940 = vmatprep.subr.bf16.mxu0 %v319
    %2941 = vmatpush1.bf16.msra.mxu0 %v318
    %2942 = vmatprep.subr.bf16.mxu0 %v329
    %2943 = vmatpush1.bf16.msra.mxu0 %v328
    %2944 = vmatprep.subr.bf16.mxu0 %v339
    %2945 = vmatpush1.bf16.msra.mxu0 %v338
    %2946 = vmatprep.subr.bf16.mxu0 %v349
    %2947 = vmatpush1.bf16.msra.mxu0 %v348
    %2948 = vmatprep.subr.bf16.mxu0 %v359
    %2949 = vmatpush1.bf16.msra.mxu0 %v358
    %2950 = vmatprep.subr.bf16.mxu0 %v369
    %2951 = vmatpush1.bf16.msra.mxu0 %v368
    %2952 = vmatprep.mubr.bf16.mxu0 %v1001
    %2953 = vmatmul.mubr.bf16.gmra.mrb[0].mxu0 %v1000
    %v2954 = vpop.f32.mrb[0].mxu0
    %v2955 = vadd.f32 %v809, %v2954
    %v2956 = vpop.f32.mrb[0].mxu0
    %v2957 = vadd.f32 %v813, %v2956
    %v2958 = vpop.f32.mrb[0].mxu0
    %v2959 = vadd.f32 %v809, %v2958
    %v2960 = vpop.f32.mrb[0].mxu0
    %v2961 = vadd.f32 %v813, %v2960
    %2962 = vmatprep.mubr.bf16.mxu0 %v1008
    %2963 = vmatmul.mubr.bf16.gmra.mrb[0].mxu0 %v1007
    %v2964 = vpop.f32.mrb[0].mxu0
    %v2965 = vadd.f32 %v809, %v2964
    %v2966 = vpop.f32.mrb[0].mxu0
    %v2967 = vadd.f32 %v813, %v2966
    %v2968 = vpop.f32.mrb[0].mxu0
    %v2969 = vadd.f32 %v809, %v2968
    %v2970 = vpop.f32.mrb[0].mxu0
    %v2971 = vadd.f32 %v813, %v2970
    %2972 = vmatprep.mubr.bf16.mxu0 %v1015
    %2973 = vmatmul.mubr.bf16.gmra.mrb[0].mxu0 %v1014
    %v2974 = vpop.f32.mrb[0].mxu0
    %v2975 = vadd.f32 %v809, %v2974
    %v2976 = vpop.f32.mrb[0].mxu0
    %v2977 = vadd.f32 %v813, %v2976
    %v2978 = vpop.f32.mrb[0].mxu0
    %v2979 = vadd.f32 %v809, %v2978
    %v2980 = vpop.f32.mrb[0].mxu0
    %v2981 = vadd.f32 %v813, %v2980
    %2982 = vmatprep.mubr.bf16.mxu0 %v1022
    %2983 = vmatmul.mubr.bf16.gmra.mrb[0].mxu0 %v1021
    %v2984 = vpop.f32.mrb[0].mxu0
    %v2985 = vadd.f32 %v809, %v2984
    %v2986 = vpop.f32.mrb[0].mxu0
    %v2987 = vadd.f32 %v813, %v2986
    %v2988 = vpop.f32.mrb[0].mxu0
    %v2989 = vadd.f32 %v809, %v2988
    %v2990 = vpop.f32.mrb[0].mxu0
    %v2991 = vadd.f32 %v813, %v2990
    %2992 = vmatprep.mubr.bf16.mxu0 %v1029
    %2993 = vmatmul.mubr.bf16.gmra.mrb[0].mxu0 %v1028
    %v2994 = vpop.f32.mrb[0].mxu0
    %v2995 = vadd.f32 %v809, %v2994
    %v2996 = vpop.f32.mrb[0].mxu0
    %v2997 = vadd.f32 %v813, %v2996
    %v2998 = vpop.f32.mrb[0].mxu0
    %v2999 = vadd.f32 %v809, %v2998
    %v3000 = vpop.f32.mrb[0].mxu0
    %v3001 = vadd.f32 %v813, %v3000
    %3002 = vmatprep.mubr.bf16.mxu0 %v1036
    %3003 = vmatmul.mubr.bf16.gmra.mrb[0].mxu0 %v1035
    %v3004 = vpop.f32.mrb[0].mxu0
    %v3005 = vadd.f32 %v809, %v3004
    %v3006 = vpop.f32.mrb[0].mxu0
    %v3007 = vadd.f32 %v813, %v3006
    %v3008 = vpop.f32.mrb[0].mxu0
    %v3009 = vadd.f32 %v809, %v3008
    %v3010 = vpop.f32.mrb[0].mxu0
    %v3011 = vadd.f32 %v813, %v3010
    %3012 = vmatprep.mubr.bf16.mxu0 %v1043
    %3013 = vmatmul.mubr.bf16.gmra.mrb[0].mxu0 %v1042
    %v3014 = vpop.f32.mrb[0].mxu0
    %v3015 = vadd.f32 %v809, %v3014
    %v3016 = vpop.f32.mrb[0].mxu0
    %v3017 = vadd.f32 %v813, %v3016
    %v3018 = vpop.f32.mrb[0].mxu0
    %v3019 = vadd.f32 %v809, %v3018
    %v3020 = vpop.f32.mrb[0].mxu0
    %v3021 = vadd.f32 %v813, %v3020
    %3022 = vmatprep.mubr.bf16.mxu0 %v1050
    %3023 = vmatmul.mubr.bf16.gmra.mrb[0].mxu0 %v1049
    %v3024 = vpop.f32.mrb[0].mxu0
    %v3025 = vadd.f32 %v809, %v3024
    %v3026 = vpop.f32.mrb[0].mxu0
    %v3027 = vadd.f32 %v813, %v3026
    %v3028 = vpop.f32.mrb[0].mxu0
    %v3029 = vadd.f32 %v809, %v3028
    %v3030 = vpop.f32.mrb[0].mxu0
    %v3031 = vadd.f32 %v813, %v3030
    %3032 = vdwg.mxu0
    %3033 = vmatprep.subr.bf16.mxu0 %v379
    %3034 = vmatpush1.bf16.msra.mxu0 %v378
    %3035 = vmatprep.subr.bf16.mxu0 %v389
    %3036 = vmatpush1.bf16.msra.mxu0 %v388
    %3037 = vmatprep.subr.bf16.mxu0 %v399
    %3038 = vmatpush1.bf16.msra.mxu0 %v398
    %3039 = vmatprep.subr.bf16.mxu0 %v409
    %3040 = vmatpush1.bf16.msra.mxu0 %v408
    %3041 = vmatprep.subr.bf16.mxu0 %v419
    %3042 = vmatpush1.bf16.msra.mxu0 %v418
    %3043 = vmatprep.subr.bf16.mxu0 %v429
    %3044 = vmatpush1.bf16.msra.mxu0 %v428
    %3045 = vmatprep.subr.bf16.mxu0 %v439
    %3046 = vmatpush1.bf16.msra.mxu0 %v438
    %3047 = vmatprep.subr.bf16.mxu0 %v449
    %3048 = vmatpush1.bf16.msra.mxu0 %v448
    %3049 = vmatprep.subr.bf16.mxu0 %v459
    %3050 = vmatpush1.bf16.msra.mxu0 %v458
    %3051 = vmatprep.subr.bf16.mxu0 %v469
    %3052 = vmatpush1.bf16.msra.mxu0 %v468
    %3053 = vmatprep.subr.bf16.mxu0 %v479
    %3054 = vmatpush1.bf16.msra.mxu0 %v478
    %3055 = vmatprep.subr.bf16.mxu0 %v489
    %3056 = vmatpush1.bf16.msra.mxu0 %v488
    %3057 = vmatprep.subr.bf16.mxu0 %v499
    %3058 = vmatpush1.bf16.msra.mxu0 %v498
    %3059 = vmatprep.subr.bf16.mxu0 %v509
    %3060 = vmatpush1.bf16.msra.mxu0 %v508
    %3061 = vmatprep.subr.bf16.mxu0 %v519
    %3062 = vmatpush1.bf16.msra.mxu0 %v518
    %3063 = vmatprep.subr.bf16.mxu0 %v529
    %3064 = vmatpush1.bf16.msra.mxu0 %v528
    %3065 = vmatprep.mubr.bf16.mxu0 %v1003
    %3066 = vmatmul.mubr.bf16.gmra.mrb[0].mxu0 %v1002
    %v3067 = vpop.f32.mrb[0].mxu0
    %v3068 = vadd.f32 %v2955, %v3067
    %v3069 = vpop.f32.mrb[0].mxu0
    %v3070 = vadd.f32 %v2957, %v3069
    %v3071 = vpop.f32.mrb[0].mxu0
    %v3072 = vadd.f32 %v2959, %v3071
    %v3073 = vpop.f32.mrb[0].mxu0
    %v3074 = vadd.f32 %v2961, %v3073
    %3075 = vmatprep.mubr.bf16.mxu0 %v1010
    %3076 = vmatmul.mubr.bf16.gmra.mrb[0].mxu0 %v1009
    %v3077 = vpop.f32.mrb[0].mxu0
    %v3078 = vadd.f32 %v2965, %v3077
    %v3079 = vpop.f32.mrb[0].mxu0
    %v3080 = vadd.f32 %v2967, %v3079
    %v3081 = vpop.f32.mrb[0].mxu0
    %v3082 = vadd.f32 %v2969, %v3081
    %v3083 = vpop.f32.mrb[0].mxu0
    %v3084 = vadd.f32 %v2971, %v3083
    %3085 = vmatprep.mubr.bf16.mxu0 %v1017
    %3086 = vmatmul.mubr.bf16.gmra.mrb[0].mxu0 %v1016
    %v3087 = vpop.f32.mrb[0].mxu0
    %v3088 = vadd.f32 %v2975, %v3087
    %v3089 = vpop.f32.mrb[0].mxu0
    %v3090 = vadd.f32 %v2977, %v3089
    %v3091 = vpop.f32.mrb[0].mxu0
    %v3092 = vadd.f32 %v2979, %v3091
    %v3093 = vpop.f32.mrb[0].mxu0
    %v3094 = vadd.f32 %v2981, %v3093
    %3095 = vmatprep.mubr.bf16.mxu0 %v1024
    %3096 = vmatmul.mubr.bf16.gmra.mrb[0].mxu0 %v1023
    %v3097 = vpop.f32.mrb[0].mxu0
    %v3098 = vadd.f32 %v2985, %v3097
    %v3099 = vpop.f32.mrb[0].mxu0
    %v3100 = vadd.f32 %v2987, %v3099
    %v3101 = vpop.f32.mrb[0].mxu0
    %v3102 = vadd.f32 %v2989, %v3101
    %v3103 = vpop.f32.mrb[0].mxu0
    %v3104 = vadd.f32 %v2991, %v3103
    %3105 = vmatprep.mubr.bf16.mxu0 %v1031
    %3106 = vmatmul.mubr.bf16.gmra.mrb[0].mxu0 %v1030
    %v3107 = vpop.f32.mrb[0].mxu0
    %v3108 = vadd.f32 %v2995, %v3107
    %v3109 = vpop.f32.mrb[0].mxu0
    %v3110 = vadd.f32 %v2997, %v3109
    %v3111 = vpop.f32.mrb[0].mxu0
    %v3112 = vadd.f32 %v2999, %v3111
    %v3113 = vpop.f32.mrb[0].mxu0
    %v3114 = vadd.f32 %v3001, %v3113
    %3115 = vmatprep.mubr.bf16.mxu0 %v1038
    %3116 = vmatmul.mubr.bf16.gmra.mrb[0].mxu0 %v1037
    %v3117 = vpop.f32.mrb[0].mxu0
    %v3118 = vadd.f32 %v3005, %v3117
    %v3119 = vpop.f32.mrb[0].mxu0
    %v3120 = vadd.f32 %v3007, %v3119
    %v3121 = vpop.f32.mrb[0].mxu0
    %v3122 = vadd.f32 %v3009, %v3121
    %v3123 = vpop.f32.mrb[0].mxu0
    %v3124 = vadd.f32 %v3011, %v3123
    %3125 = vmatprep.mubr.bf16.mxu0 %v1045
    %3126 = vmatmul.mubr.bf16.gmra.mrb[0].mxu0 %v1044
    %v3127 = vpop.f32.mrb[0].mxu0
    %v3128 = vadd.f32 %v3015, %v3127
    %v3129 = vpop.f32.mrb[0].mxu0
    %v3130 = vadd.f32 %v3017, %v3129
    %v3131 = vpop.f32.mrb[0].mxu0
    %v3132 = vadd.f32 %v3019, %v3131
    %v3133 = vpop.f32.mrb[0].mxu0
    %v3134 = vadd.f32 %v3021, %v3133
    %3135 = vmatprep.mubr.bf16.mxu0 %v1052
    %3136 = vmatmul.mubr.bf16.gmra.mrb[0].mxu0 %v1051
    %v3137 = vpop.f32.mrb[0].mxu0
    %v3138 = vadd.f32 %v3025, %v3137
    %v3139 = vpop.f32.mrb[0].mxu0
    %v3140 = vadd.f32 %v3027, %v3139
    %v3141 = vpop.f32.mrb[0].mxu0
    %v3142 = vadd.f32 %v3029, %v3141
    %v3143 = vpop.f32.mrb[0].mxu0
    %v3144 = vadd.f32 %v3031, %v3143
    %3145 = vdwg.mxu0
    %3146 = vmatprep.subr.bf16.mxu0 %v539
    %3147 = vmatpush1.bf16.msra.mxu0 %v538
    %3148 = vmatprep.subr.bf16.mxu0 %v549
    %3149 = vmatpush1.bf16.msra.mxu0 %v548
    %3150 = vmatprep.subr.bf16.mxu0 %v559
    %3151 = vmatpush1.bf16.msra.mxu0 %v558
    %3152 = vmatprep.subr.bf16.mxu0 %v569
    %3153 = vmatpush1.bf16.msra.mxu0 %v568
    %3154 = vmatprep.subr.bf16.mxu0 %v579
    %3155 = vmatpush1.bf16.msra.mxu0 %v578
    %3156 = vmatprep.subr.bf16.mxu0 %v589
    %3157 = vmatpush1.bf16.msra.mxu0 %v588
    %3158 = vmatprep.subr.bf16.mxu0 %v599
    %3159 = vmatpush1.bf16.msra.mxu0 %v598
    %3160 = vmatprep.subr.bf16.mxu0 %v609
    %3161 = vmatpush1.bf16.msra.mxu0 %v608
    %3162 = vmatprep.subr.bf16.mxu0 %v619
    %3163 = vmatpush1.bf16.msra.mxu0 %v618
    %3164 = vmatprep.subr.bf16.mxu0 %v629
    %3165 = vmatpush1.bf16.msra.mxu0 %v628
    %3166 = vmatprep.subr.bf16.mxu0 %v639
    %3167 = vmatpush1.bf16.msra.mxu0 %v638
    %3168 = vmatprep.subr.bf16.mxu0 %v649
    %3169 = vmatpush1.bf16.msra.mxu0 %v648
    %3170 = vmatprep.subr.bf16.mxu0 %v659
    %3171 = vmatpush1.bf16.msra.mxu0 %v658
    %3172 = vmatprep.subr.bf16.mxu0 %v669
    %3173 = vmatpush1.bf16.msra.mxu0 %v668
    %3174 = vmatprep.subr.bf16.mxu0 %v679
    %3175 = vmatpush1.bf16.msra.mxu0 %v678
    %3176 = vmatprep.subr.bf16.mxu0 %v689
    %3177 = vmatpush1.bf16.msra.mxu0 %v688
    %3178 = vmatprep.mubr.bf16.mxu0 %v1005
    %3179 = vmatmul.mubr.bf16.gmra.mrb[0].mxu0 %v1004
    %v3180 = vpop.f32.mrb[0].mxu0
    %v3181 = vadd.f32 %v3068, %v3180
    %v3182 = vpop.f32.mrb[0].mxu0
    %v3183 = vadd.f32 %v3070, %v3182
    %v3184 = vpop.f32.mrb[0].mxu0
    %v3185 = vadd.f32 %v3072, %v3184
    %v3186 = vpop.f32.mrb[0].mxu0
    %v3187 = vadd.f32 %v3074, %v3186
    %3188 = vmatprep.mubr.bf16.mxu0 %v1012
    %3189 = vmatmul.mubr.bf16.gmra.mrb[0].mxu0 %v1011
    %v3190 = vpop.f32.mrb[0].mxu0
    %v3191 = vadd.f32 %v3078, %v3190
    %v3192 = vpop.f32.mrb[0].mxu0
    %v3193 = vadd.f32 %v3080, %v3192
    %v3194 = vpop.f32.mrb[0].mxu0
    %v3195 = vadd.f32 %v3082, %v3194
    %v3196 = vpop.f32.mrb[0].mxu0
    %v3197 = vadd.f32 %v3084, %v3196
    %3198 = vmatprep.mubr.bf16.mxu0 %v1019
    %3199 = vmatmul.mubr.bf16.gmra.mrb[0].mxu0 %v1018
    %v3200 = vpop.f32.mrb[0].mxu0
    %v3201 = vadd.f32 %v3088, %v3200
    %v3202 = vpop.f32.mrb[0].mxu0
    %v3203 = vadd.f32 %v3090, %v3202
    %v3204 = vpop.f32.mrb[0].mxu0
    %v3205 = vadd.f32 %v3092, %v3204
    %v3206 = vpop.f32.mrb[0].mxu0
    %v3207 = vadd.f32 %v3094, %v3206
    %3208 = vmatprep.mubr.bf16.mxu0 %v1026
    %3209 = vmatmul.mubr.bf16.gmra.mrb[0].mxu0 %v1025
    %v3210 = vpop.f32.mrb[0].mxu0
    %v3211 = vadd.f32 %v3098, %v3210
    %v3212 = vpop.f32.mrb[0].mxu0
    %v3213 = vadd.f32 %v3100, %v3212
    %v3214 = vpop.f32.mrb[0].mxu0
    %v3215 = vadd.f32 %v3102, %v3214
    %v3216 = vpop.f32.mrb[0].mxu0
    %v3217 = vadd.f32 %v3104, %v3216
    %3218 = vmatprep.mubr.bf16.mxu0 %v1033
    %3219 = vmatmul.mubr.bf16.gmra.mrb[0].mxu0 %v1032
    %v3220 = vpop.f32.mrb[0].mxu0
    %v3221 = vadd.f32 %v3108, %v3220
    %v3222 = vpop.f32.mrb[0].mxu0
    %v3223 = vadd.f32 %v3110, %v3222
    %v3224 = vpop.f32.mrb[0].mxu0
    %v3225 = vadd.f32 %v3112, %v3224
    %v3226 = vpop.f32.mrb[0].mxu0
    %v3227 = vadd.f32 %v3114, %v3226
    %3228 = vmatprep.mubr.bf16.mxu0 %v1040
    %3229 = vmatmul.mubr.bf16.gmra.mrb[0].mxu0 %v1039
    %v3230 = vpop.f32.mrb[0].mxu0
    %v3231 = vadd.f32 %v3118, %v3230
    %v3232 = vpop.f32.mrb[0].mxu0
    %v3233 = vadd.f32 %v3120, %v3232
    %v3234 = vpop.f32.mrb[0].mxu0
    %v3235 = vadd.f32 %v3122, %v3234
    %v3236 = vpop.f32.mrb[0].mxu0
    %v3237 = vadd.f32 %v3124, %v3236
    %3238 = vmatprep.mubr.bf16.mxu0 %v1047
    %3239 = vmatmul.mubr.bf16.gmra.mrb[0].mxu0 %v1046
    %v3240 = vpop.f32.mrb[0].mxu0
    %v3241 = vadd.f32 %v3128, %v3240
    %v3242 = vpop.f32.mrb[0].mxu0
    %v3243 = vadd.f32 %v3130, %v3242
    %v3244 = vpop.f32.mrb[0].mxu0
    %v3245 = vadd.f32 %v3132, %v3244
    %v3246 = vpop.f32.mrb[0].mxu0
    %v3247 = vadd.f32 %v3134, %v3246
    %3248 = vmatprep.mubr.bf16.mxu0 %v1054
    %3249 = vmatmul.mubr.bf16.gmra.mrb[0].mxu0 %v1053
    %v3250 = vpop.f32.mrb[0].mxu0
    %v3251 = vadd.f32 %v3138, %v3250
    %v3252 = vpop.f32.mrb[0].mxu0
    %v3253 = vadd.f32 %v3140, %v3252
    %v3254 = vpop.f32.mrb[0].mxu0
    %v3255 = vadd.f32 %v3142, %v3254
    %v3256 = vpop.f32.mrb[0].mxu0
    %v3257 = vadd.f32 %v3144, %v3256
    %3258 = vdwg.mxu0
    %3259 = vmatprep.subr.bf16.mxu0 %v699
    %3260 = vmatpush1.bf16.msra.mxu0 %v698
    %3261 = vmatprep.subr.bf16.mxu0 %v709
    %3262 = vmatpush1.bf16.msra.mxu0 %v708
    %3263 = vmatprep.subr.bf16.mxu0 %v719
    %3264 = vmatpush1.bf16.msra.mxu0 %v718
    %3265 = vmatprep.subr.bf16.mxu0 %v729
    %3266 = vmatpush1.bf16.msra.mxu0 %v728
    %3267 = vmatprep.subr.bf16.mxu0 %v739
    %3268 = vmatpush1.bf16.msra.mxu0 %v738
    %3269 = vmatprep.subr.bf16.mxu0 %v749
    %3270 = vmatpush1.bf16.msra.mxu0 %v748
    %3271 = vmatprep.subr.bf16.mxu0 %v759
    %3272 = vmatpush1.bf16.msra.mxu0 %v758
    %3273 = vmatprep.subr.bf16.mxu0 %v769
    %3274 = vmatpush1.bf16.msra.mxu0 %v768
    %3275 = vmatprep.subr.bf16.mxu0 0
    %3276 = vmatpush1.bf16.msra.mxu0 0
    %3277 = vmatprep.subr.bf16.mxu0 0
    %3278 = vmatpush1.bf16.msra.mxu0 0
    %3279 = vmatprep.subr.bf16.mxu0 0
    %3280 = vmatpush1.bf16.msra.mxu0 0
    %3281 = vmatprep.subr.bf16.mxu0 0
    %3282 = vmatpush1.bf16.msra.mxu0 0
    %3283 = vmatprep.subr.bf16.mxu0 0
    %3284 = vmatpush1.bf16.msra.mxu0 0
    %3285 = vmatprep.subr.bf16.mxu0 0
    %3286 = vmatpush1.bf16.msra.mxu0 0
    %3287 = vmatprep.subr.bf16.mxu0 0
    %3288 = vmatpush1.bf16.msra.mxu0 0
    %3289 = vmatprep.subr.bf16.mxu0 0
    %3290 = vmatpush1.bf16.msra.mxu0 0
    %3291 = vmatprep.mubr.bf16.mxu0 0
    %3292 = vmatmul.mubr.bf16.gmra.mrb[0].mxu0 %v1006
    %v3293 = vpop.f32.mrb[0].mxu0
    %v3294 = vadd.f32 %v3181, %v3293
    %v3295 = vpop.f32.mrb[0].mxu0
    %v3296 = vadd.f32 %v3183, %v3295
    %v3297 = vpop.f32.mrb[0].mxu0
    %v3298 = vadd.f32 %v3185, %v3297
    %v3299 = vpop.f32.mrb[0].mxu0
    %v3300 = vadd.f32 %v3187, %v3299
    %3301 = vmatprep.mubr.bf16.mxu0 0
    %3302 = vmatmul.mubr.bf16.gmra.mrb[0].mxu0 %v1013
    %v3303 = vpop.f32.mrb[0].mxu0
    %v3304 = vadd.f32 %v3191, %v3303
    %v3305 = vpop.f32.mrb[0].mxu0
    %v3306 = vadd.f32 %v3193, %v3305
    %v3307 = vpop.f32.mrb[0].mxu0
    %v3308 = vadd.f32 %v3195, %v3307
    %v3309 = vpop.f32.mrb[0].mxu0
    %v3310 = vadd.f32 %v3197, %v3309
    %3311 = vmatprep.mubr.bf16.mxu0 0
    %3312 = vmatmul.mubr.bf16.gmra.mrb[0].mxu0 %v1020
    %v3313 = vpop.f32.mrb[0].mxu0
    %v3314 = vadd.f32 %v3201, %v3313
    %v3315 = vpop.f32.mrb[0].mxu0
    %v3316 = vadd.f32 %v3203, %v3315
    %v3317 = vpop.f32.mrb[0].mxu0
    %v3318 = vadd.f32 %v3205, %v3317
    %v3319 = vpop.f32.mrb[0].mxu0
    %v3320 = vadd.f32 %v3207, %v3319
    %3321 = vmatprep.mubr.bf16.mxu0 0
    %3322 = vmatmul.mubr.bf16.gmra.mrb[0].mxu0 %v1027
    %v3323 = vpop.f32.mrb[0].mxu0
    %v3324 = vadd.f32 %v3211, %v3323
    %v3325 = vpop.f32.mrb[0].mxu0
    %v3326 = vadd.f32 %v3213, %v3325
    %v3327 = vpop.f32.mrb[0].mxu0
    %v3328 = vadd.f32 %v3215, %v3327
    %v3329 = vpop.f32.mrb[0].mxu0
    %v3330 = vadd.f32 %v3217, %v3329
    %3331 = vmatprep.mubr.bf16.mxu0 0
    %3332 = vmatmul.mubr.bf16.gmra.mrb[0].mxu0 %v1034
    %v3333 = vpop.f32.mrb[0].mxu0
    %v3334 = vadd.f32 %v3221, %v3333
    %v3335 = vpop.f32.mrb[0].mxu0
    %v3336 = vadd.f32 %v3223, %v3335
    %v3337 = vpop.f32.mrb[0].mxu0
    %v3338 = vadd.f32 %v3225, %v3337
    %v3339 = vpop.f32.mrb[0].mxu0
    %v3340 = vadd.f32 %v3227, %v3339
    %3341 = vmatprep.mubr.bf16.mxu0 0
    %3342 = vmatmul.mubr.bf16.gmra.mrb[0].mxu0 %v1041
    %v3343 = vpop.f32.mrb[0].mxu0
    %v3344 = vadd.f32 %v3231, %v3343
    %v3345 = vpop.f32.mrb[0].mxu0
    %v3346 = vadd.f32 %v3233, %v3345
    %v3347 = vpop.f32.mrb[0].mxu0
    %v3348 = vadd.f32 %v3235, %v3347
    %v3349 = vpop.f32.mrb[0].mxu0
    %v3350 = vadd.f32 %v3237, %v3349
    %3351 = vmatprep.mubr.bf16.mxu0 0
    %3352 = vmatmul.mubr.bf16.gmra.mrb[0].mxu0 %v1048
    %v3353 = vpop.f32.mrb[0].mxu0
    %v3354 = vadd.f32 %v3241, %v3353
    %v3355 = vpop.f32.mrb[0].mxu0
    %v3356 = vadd.f32 %v3243, %v3355
    %v3357 = vpop.f32.mrb[0].mxu0
    %v3358 = vadd.f32 %v3245, %v3357
    %v3359 = vpop.f32.mrb[0].mxu0
    %v3360 = vadd.f32 %v3247, %v3359
    %3361 = vmatprep.mubr.bf16.mxu0 0
    %3362 = vmatmul.mubr.bf16.gmra.mrb[0].mxu0 %v1055
    %v3363 = vpop.f32.mrb[0].mxu0
    %v3364 = vadd.f32 %v3251, %v3363
    %v3365 = vpop.f32.mrb[0].mxu0
    %v3366 = vadd.f32 %v3253, %v3365
    %v3367 = vpop.f32.mrb[0].mxu0
    %v3368 = vadd.f32 %v3255, %v3367
    %v3369 = vpop.f32.mrb[0].mxu0
    %v3370 = vadd.f32 %v3257, %v3369
    %3371 = vdwg.mxu0
    %v3372 = vmax.f32 %v1486, 0.0
    %v3373 = vmax.f32 %v1488, 0.0
    %v3374 = vmax.f32 %v1938, 0.0
    %v3375 = vmax.f32 %v1940, 0.0
    %v3376 = vmax.f32 %v2390, 0.0
    %v3377 = vmax.f32 %v2392, 0.0
    %v3378 = vmax.f32 %v2842, 0.0
    %v3379 = vmax.f32 %v2844, 0.0
    %v3380 = vmax.f32 %v3294, 0.0
    %v3381 = vmax.f32 %v3296, 0.0
    %v3382 = vmax.f32 %v1490, 0.0
    %v3383 = vmax.f32 %v1492, 0.0
    %v3384 = vmax.f32 %v1942, 0.0
    %v3385 = vmax.f32 %v1944, 0.0
    %v3386 = vmax.f32 %v2394, 0.0
    %v3387 = vmax.f32 %v2396, 0.0
    %v3388 = vmax.f32 %v2846, 0.0
    %v3389 = vmax.f32 %v2848, 0.0
    %v3390 = vmax.f32 %v3298, 0.0
    %v3391 = vmax.f32 %v3300, 0.0
    %v3392 = vmax.f32 %v1496, 0.0
    %v3393 = vmax.f32 %v1498, 0.0
    %v3394 = vmax.f32 %v1948, 0.0
    %v3395 = vmax.f32 %v1950, 0.0
    %v3396 = vmax.f32 %v2400, 0.0
    %v3397 = vmax.f32 %v2402, 0.0
    %v3398 = vmax.f32 %v2852, 0.0
    %v3399 = vmax.f32 %v2854, 0.0
    %v3400 = vmax.f32 %v3304, 0.0
    %v3401 = vmax.f32 %v3306, 0.0
    %v3402 = vmax.f32 %v1500, 0.0
    %v3403 = vmax.f32 %v1502, 0.0
    %v3404 = vmax.f32 %v1952, 0.0
    %v3405 = vmax.f32 %v1954, 0.0
    %v3406 = vmax.f32 %v2404, 0.0
    %v3407 = vmax.f32 %v2406, 0.0
    %v3408 = vmax.f32 %v2856, 0.0
    %v3409 = vmax.f32 %v2858, 0.0
    %v3410 = vmax.f32 %v3308, 0.0
    %v3411 = vmax.f32 %v3310, 0.0
    %v3412 = vmax.f32 %v1506, 0.0
    %v3413 = vmax.f32 %v1508, 0.0
    %v3414 = vmax.f32 %v1958, 0.0
    %v3415 = vmax.f32 %v1960, 0.0
    %v3416 = vmax.f32 %v2410, 0.0
    %v3417 = vmax.f32 %v2412, 0.0
    %v3418 = vmax.f32 %v2862, 0.0
    %v3419 = vmax.f32 %v2864, 0.0
    %v3420 = vmax.f32 %v3314, 0.0
    %v3421 = vmax.f32 %v3316, 0.0
    %v3422 = vmax.f32 %v1510, 0.0
    %v3423 = vmax.f32 %v1512, 0.0
    %v3424 = vmax.f32 %v1962, 0.0
    %v3425 = vmax.f32 %v1964, 0.0
    %v3426 = vmax.f32 %v2414, 0.0
    %v3427 = vmax.f32 %v2416, 0.0
    %v3428 = vmax.f32 %v2866, 0.0
    %v3429 = vmax.f32 %v2868, 0.0
    %v3430 = vmax.f32 %v3318, 0.0
    %v3431 = vmax.f32 %v3320, 0.0
    %v3432 = vmax.f32 %v1516, 0.0
    %v3433 = vmax.f32 %v1518, 0.0
    %v3434 = vmax.f32 %v1968, 0.0
    %v3435 = vmax.f32 %v1970, 0.0
    %v3436 = vmax.f32 %v2420, 0.0
    %v3437 = vmax.f32 %v2422, 0.0
    %v3438 = vmax.f32 %v2872, 0.0
    %v3439 = vmax.f32 %v2874, 0.0
    %v3440 = vmax.f32 %v3324, 0.0
    %v3441 = vmax.f32 %v3326, 0.0
    %v3442 = vmax.f32 %v1520, 0.0
    %v3443 = vmax.f32 %v1522, 0.0
    %v3444 = vmax.f32 %v1972, 0.0
    %v3445 = vmax.f32 %v1974, 0.0
    %v3446 = vmax.f32 %v2424, 0.0
    %v3447 = vmax.f32 %v2426, 0.0
    %v3448 = vmax.f32 %v2876, 0.0
    %v3449 = vmax.f32 %v2878, 0.0
    %v3450 = vmax.f32 %v3328, 0.0
    %v3451 = vmax.f32 %v3330, 0.0
    %v3452 = vmax.f32 %v1526, 0.0
    %v3453 = vmax.f32 %v1528, 0.0
    %v3454 = vmax.f32 %v1978, 0.0
    %v3455 = vmax.f32 %v1980, 0.0
    %v3456 = vmax.f32 %v2430, 0.0
    %v3457 = vmax.f32 %v2432, 0.0
    %v3458 = vmax.f32 %v2882, 0.0
    %v3459 = vmax.f32 %v2884, 0.0
    %v3460 = vmax.f32 %v3334, 0.0
    %v3461 = vmax.f32 %v3336, 0.0
    %v3462 = vmax.f32 %v1530, 0.0
    %v3463 = vmax.f32 %v1532, 0.0
    %v3464 = vmax.f32 %v1982, 0.0
    %v3465 = vmax.f32 %v1984, 0.0
    %v3466 = vmax.f32 %v2434, 0.0
    %v3467 = vmax.f32 %v2436, 0.0
    %v3468 = vmax.f32 %v2886, 0.0
    %v3469 = vmax.f32 %v2888, 0.0
    %v3470 = vmax.f32 %v3338, 0.0
    %v3471 = vmax.f32 %v3340, 0.0
    %v3472 = vmax.f32 %v1536, 0.0
    %v3473 = vmax.f32 %v1538, 0.0
    %v3474 = vmax.f32 %v1988, 0.0
    %v3475 = vmax.f32 %v1990, 0.0
    %v3476 = vmax.f32 %v2440, 0.0
    %v3477 = vmax.f32 %v2442, 0.0
    %v3478 = vmax.f32 %v2892, 0.0
    %v3479 = vmax.f32 %v2894, 0.0
    %v3480 = vmax.f32 %v3344, 0.0
    %v3481 = vmax.f32 %v3346, 0.0
    %v3482 = vmax.f32 %v1540, 0.0
    %v3483 = vmax.f32 %v1542, 0.0
    %v3484 = vmax.f32 %v1992, 0.0
    %v3485 = vmax.f32 %v1994, 0.0
    %v3486 = vmax.f32 %v2444, 0.0
    %v3487 = vmax.f32 %v2446, 0.0
    %v3488 = vmax.f32 %v2896, 0.0
    %v3489 = vmax.f32 %v2898, 0.0
    %v3490 = vmax.f32 %v3348, 0.0
    %v3491 = vmax.f32 %v3350, 0.0
    %v3492 = vmax.f32 %v1546, 0.0
    %v3493 = vmax.f32 %v1548, 0.0
    %v3494 = vmax.f32 %v1998, 0.0
    %v3495 = vmax.f32 %v2000, 0.0
    %v3496 = vmax.f32 %v2450, 0.0
    %v3497 = vmax.f32 %v2452, 0.0
    %v3498 = vmax.f32 %v2902, 0.0
    %v3499 = vmax.f32 %v2904, 0.0
    %v3500 = vmax.f32 %v3354, 0.0
    %v3501 = vmax.f32 %v3356, 0.0
    %v3502 = vmax.f32 %v1550, 0.0
    %v3503 = vmax.f32 %v1552, 0.0
    %v3504 = vmax.f32 %v2002, 0.0
    %v3505 = vmax.f32 %v2004, 0.0
    %v3506 = vmax.f32 %v2454, 0.0
    %v3507 = vmax.f32 %v2456, 0.0
    %v3508 = vmax.f32 %v2906, 0.0
    %v3509 = vmax.f32 %v2908, 0.0
    %v3510 = vmax.f32 %v3358, 0.0
    %v3511 = vmax.f32 %v3360, 0.0
    %v3512 = vmax.f32 %v1556, 0.0
    %v3513 = vmax.f32 %v1558, 0.0
    %v3514 = vmax.f32 %v2008, 0.0
    %v3515 = vmax.f32 %v2010, 0.0
    %v3516 = vmax.f32 %v2460, 0.0
    %v3517 = vmax.f32 %v2462, 0.0
    %v3518 = vmax.f32 %v2912, 0.0
    %v3519 = vmax.f32 %v2914, 0.0
    %v3520 = vmax.f32 %v3364, 0.0
    %v3521 = vmax.f32 %v3366, 0.0
    %v3522 = vmax.f32 %v1560, 0.0
    %v3523 = vmax.f32 %v1562, 0.0
    %v3524 = vmax.f32 %v2012, 0.0
    %v3525 = vmax.f32 %v2014, 0.0
    %v3526 = vmax.f32 %v2464, 0.0
    %v3527 = vmax.f32 %v2466, 0.0
    %v3528 = vmax.f32 %v2916, 0.0
    %v3529 = vmax.f32 %v2918, 0.0
    %v3530 = vmax.f32 %v3368, 0.0
    %v3531 = vmax.f32 %v3370, 0.0
    %v3532 = vpack.c.bf16 %v3382, %v3372
    %v3533 = vpack.c.bf16 %v3383, %v3373
    %v3534 = vpack.c.bf16 %v3384, %v3374
    %v3535 = vpack.c.bf16 %v3385, %v3375
    %v3536 = vpack.c.bf16 %v3386, %v3376
    %v3537 = vpack.c.bf16 %v3387, %v3377
    %v3538 = vpack.c.bf16 %v3388, %v3378
    %v3539 = vpack.c.bf16 %v3389, %v3379
    %v3540 = vpack.c.bf16 %v3390, %v3380
    %v3541 = vpack.c.bf16 %v3391, %v3381
    %v3542 = vpack.c.bf16 %v3402, %v3392
    %v3543 = vpack.c.bf16 %v3403, %v3393
    %v3544 = vpack.c.bf16 %v3404, %v3394
    %v3545 = vpack.c.bf16 %v3405, %v3395
    %v3546 = vpack.c.bf16 %v3406, %v3396
    %v3547 = vpack.c.bf16 %v3407, %v3397
    %v3548 = vpack.c.bf16 %v3408, %v3398
    %v3549 = vpack.c.bf16 %v3409, %v3399
    %v3550 = vpack.c.bf16 %v3410, %v3400
    %v3551 = vpack.c.bf16 %v3411, %v3401
    %v3552 = vpack.c.bf16 %v3422, %v3412
    %v3553 = vpack.c.bf16 %v3423, %v3413
    %v3554 = vpack.c.bf16 %v3424, %v3414
    %v3555 = vpack.c.bf16 %v3425, %v3415
    %v3556 = vpack.c.bf16 %v3426, %v3416
    %v3557 = vpack.c.bf16 %v3427, %v3417
    %v3558 = vpack.c.bf16 %v3428, %v3418
    %v3559 = vpack.c.bf16 %v3429, %v3419
    %v3560 = vpack.c.bf16 %v3430, %v3420
    %v3561 = vpack.c.bf16 %v3431, %v3421
    %v3562 = vpack.c.bf16 %v3442, %v3432
    %v3563 = vpack.c.bf16 %v3443, %v3433
    %v3564 = vpack.c.bf16 %v3444, %v3434
    %v3565 = vpack.c.bf16 %v3445, %v3435
    %v3566 = vpack.c.bf16 %v3446, %v3436
    %v3567 = vpack.c.bf16 %v3447, %v3437
    %v3568 = vpack.c.bf16 %v3448, %v3438
    %v3569 = vpack.c.bf16 %v3449, %v3439
    %v3570 = vpack.c.bf16 %v3450, %v3440
    %v3571 = vpack.c.bf16 %v3451, %v3441
    %v3572 = vpack.c.bf16 %v3462, %v3452
    %v3573 = vpack.c.bf16 %v3463, %v3453
    %v3574 = vpack.c.bf16 %v3464, %v3454
    %v3575 = vpack.c.bf16 %v3465, %v3455
    %v3576 = vpack.c.bf16 %v3466, %v3456
    %v3577 = vpack.c.bf16 %v3467, %v3457
    %v3578 = vpack.c.bf16 %v3468, %v3458
    %v3579 = vpack.c.bf16 %v3469, %v3459
    %v3580 = vpack.c.bf16 %v3470, %v3460
    %v3581 = vpack.c.bf16 %v3471, %v3461
    %v3582 = vpack.c.bf16 %v3482, %v3472
    %v3583 = vpack.c.bf16 %v3483, %v3473
    %v3584 = vpack.c.bf16 %v3484, %v3474
    %v3585 = vpack.c.bf16 %v3485, %v3475
    %v3586 = vpack.c.bf16 %v3486, %v3476
    %v3587 = vpack.c.bf16 %v3487, %v3477
    %v3588 = vpack.c.bf16 %v3488, %v3478
    %v3589 = vpack.c.bf16 %v3489, %v3479
    %v3590 = vpack.c.bf16 %v3490, %v3480
    %v3591 = vpack.c.bf16 %v3491, %v3481
    %v3592 = vpack.c.bf16 %v3502, %v3492
    %v3593 = vpack.c.bf16 %v3503, %v3493
    %v3594 = vpack.c.bf16 %v3504, %v3494
    %v3595 = vpack.c.bf16 %v3505, %v3495
    %v3596 = vpack.c.bf16 %v3506, %v3496
    %v3597 = vpack.c.bf16 %v3507, %v3497
    %v3598 = vpack.c.bf16 %v3508, %v3498
    %v3599 = vpack.c.bf16 %v3509, %v3499
    %v3600 = vpack.c.bf16 %v3510, %v3500
    %v3601 = vpack.c.bf16 %v3511, %v3501
    %v3602 = vpack.c.bf16 %v3522, %v3512
    %v3603 = vpack.c.bf16 %v3523, %v3513
    %v3604 = vpack.c.bf16 %v3524, %v3514
    %v3605 = vpack.c.bf16 %v3525, %v3515
    %v3606 = vpack.c.bf16 %v3526, %v3516
    %v3607 = vpack.c.bf16 %v3527, %v3517
    %v3608 = vpack.c.bf16 %v3528, %v3518
    %v3609 = vpack.c.bf16 %v3529, %v3519
    %v3610 = vpack.c.bf16 %v3530, %v3520
    %v3611 = vpack.c.bf16 %v3531, %v3521
    // Predicated region
    $region38: #{bayesian_network_forward.1} parent=1 // pred_check
      %p3612 = pneg %p56
    $region39: #{bayesian_network_forward.1} parent=1 // pred_check_branch
      %3614 = sbr.rel (%p3612) target = $region41
    $region40: #{bayesian_network_forward.1} parent=1 // pred_region
      %s3615 = scalar_lea.sflag [#allocation5], 1
      %s3616 = smul.u32 4, 160
      %s3617 = smul.u32 %s3616, 10
      %s3618 = sshll.u32 %s3617, 4
      %3619 = dma.done %s3615, %s3618
    $region41: #{bayesian_network_forward.1} parent=1 // pred_fallthru
      _
    %v3620 = vld [vmem:[#allocation3] sm:$0xff]
    %v3621 = vld [vmem:[#allocation3 + $0x8] sm:$0xff]
    %v3622 = vld [vmem:[#allocation3 + $0x10] sm:$0xff]
    %v3623 = vld [vmem:[#allocation3 + $0x18] sm:$0xff]
    %v3624 = vld [vmem:[#allocation3 + $0x20] sm:$0xff]
    %v3625 = vld [vmem:[#allocation3 + $0x28] sm:$0xff]
    %v3626 = vld [vmem:[#allocation3 + $0x30] sm:$0xff]
    %v3627 = vld [vmem:[#allocation3 + $0x38] sm:$0xff]
    %v3628 = vld [vmem:[#allocation3 + $0x40] sm:$0xff]
    %v3629 = vld [vmem:[#allocation3 + $0x48] sm:$0xff]
    %v3630 = vld [vmem:[#allocation3 + $0x50] sm:$0xff]
    %v3631 = vld [vmem:[#allocation3 + $0x58] sm:$0xff]
    %v3632 = vld [vmem:[#allocation3 + $0x60] sm:$0xff]
    %v3633 = vld [vmem:[#allocation3 + $0x68] sm:$0xff]
    %v3634 = vld [vmem:[#allocation3 + $0x70] sm:$0xff]
    %v3635 = vld [vmem:[#allocation3 + $0x78] sm:$0xff]
    %v3636 = vld [vmem:[#allocation3 + $0x80] sm:$0xff]
    %v3637 = vld [vmem:[#allocation3 + $0x88] sm:$0xff]
    %v3638 = vld [vmem:[#allocation3 + $0x90] sm:$0xff]
    %v3639 = vld [vmem:[#allocation3 + $0x98] sm:$0xff]
    %v3640 = vld [vmem:[#allocation3 + $0xa0] sm:$0xff]
    %v3641 = vld [vmem:[#allocation3 + $0xa8] sm:$0xff]
    %v3642 = vld [vmem:[#allocation3 + $0xb0] sm:$0xff]
    %v3643 = vld [vmem:[#allocation3 + $0xb8] sm:$0xff]
    %v3644 = vld [vmem:[#allocation3 + $0xc0] sm:$0xff]
    %v3645 = vld [vmem:[#allocation3 + $0xc8] sm:$0xff]
    %v3646 = vld [vmem:[#allocation3 + $0xd0] sm:$0xff]
    %v3647 = vld [vmem:[#allocation3 + $0xd8] sm:$0xff]
    %v3648 = vld [vmem:[#allocation3 + $0xe0] sm:$0xff]
    %v3649 = vld [vmem:[#allocation3 + $0xe8] sm:$0xff]
    %v3650 = vld [vmem:[#allocation3 + $0xf0] sm:$0xff]
    %v3651 = vld [vmem:[#allocation3 + $0xf8] sm:$0xff]
    %v3652 = vld [vmem:[#allocation3 + $0x100] sm:$0xff]
    %v3653 = vld [vmem:[#allocation3 + $0x108] sm:$0xff]
    %v3654 = vld [vmem:[#allocation3 + $0x110] sm:$0xff]
    %v3655 = vld [vmem:[#allocation3 + $0x118] sm:$0xff]
    %v3656 = vld [vmem:[#allocation3 + $0x120] sm:$0xff]
    %v3657 = vld [vmem:[#allocation3 + $0x128] sm:$0xff]
    %v3658 = vld [vmem:[#allocation3 + $0x130] sm:$0xff]
    %v3659 = vld [vmem:[#allocation3 + $0x138] sm:$0xff]
    %v3660 = vld [vmem:[#allocation3 + $0x140] sm:$0xff]
    %v3661 = vld [vmem:[#allocation3 + $0x148] sm:$0xff]
    %v3662 = vld [vmem:[#allocation3 + $0x150] sm:$0xff]
    %v3663 = vld [vmem:[#allocation3 + $0x158] sm:$0xff]
    %v3664 = vld [vmem:[#allocation3 + $0x160] sm:$0xff]
    %v3665 = vld [vmem:[#allocation3 + $0x168] sm:$0xff]
    %v3666 = vld [vmem:[#allocation3 + $0x170] sm:$0xff]
    %v3667 = vld [vmem:[#allocation3 + $0x178] sm:$0xff]
    %v3668 = vld [vmem:[#allocation3 + $0x180] sm:$0xff]
    %v3669 = vld [vmem:[#allocation3 + $0x188] sm:$0xff]
    %v3670 = vld [vmem:[#allocation3 + $0x190] sm:$0xff]
    %v3671 = vld [vmem:[#allocation3 + $0x198] sm:$0xff]
    %v3672 = vld [vmem:[#allocation3 + $0x1a0] sm:$0xff]
    %v3673 = vld [vmem:[#allocation3 + $0x1a8] sm:$0xff]
    %v3674 = vld [vmem:[#allocation3 + $0x1b0] sm:$0xff]
    %v3675 = vld [vmem:[#allocation3 + $0x1b8] sm:$0xff]
    %v3676 = vld [vmem:[#allocation3 + $0x1c0] sm:$0xff]
    %v3677 = vld [vmem:[#allocation3 + $0x1c8] sm:$0xff]
    %v3678 = vld [vmem:[#allocation3 + $0x1d0] sm:$0xff]
    %v3679 = vld [vmem:[#allocation3 + $0x1d8] sm:$0xff]
    %v3680 = vld [vmem:[#allocation3 + $0x1e0] sm:$0xff]
    %v3681 = vld [vmem:[#allocation3 + $0x1e8] sm:$0xff]
    %v3682 = vld [vmem:[#allocation3 + $0x1f0] sm:$0xff]
    %v3683 = vld [vmem:[#allocation3 + $0x1f8] sm:$0xff]
    %v3684 = vld [vmem:[#allocation3 + $0x200] sm:$0xff]
    %v3685 = vld [vmem:[#allocation3 + $0x208] sm:$0xff]
    %v3686 = vld [vmem:[#allocation3 + $0x210] sm:$0xff]
    %v3687 = vld [vmem:[#allocation3 + $0x218] sm:$0xff]
    %v3688 = vld [vmem:[#allocation3 + $0x220] sm:$0xff]
    %v3689 = vld [vmem:[#allocation3 + $0x228] sm:$0xff]
    %v3690 = vld [vmem:[#allocation3 + $0x230] sm:$0xff]
    %v3691 = vld [vmem:[#allocation3 + $0x238] sm:$0xff]
    %v3692 = vld [vmem:[#allocation3 + $0x240] sm:$0xff]
    %v3693 = vld [vmem:[#allocation3 + $0x248] sm:$0xff]
    %v3694 = vld [vmem:[#allocation3 + $0x250] sm:$0xff]
    %v3695 = vld [vmem:[#allocation3 + $0x258] sm:$0xff]
    %v3696 = vld [vmem:[#allocation3 + $0x260] sm:$0xff]
    %v3697 = vld [vmem:[#allocation3 + $0x268] sm:$0xff]
    %v3698 = vld [vmem:[#allocation3 + $0x270] sm:$0xff]
    %v3699 = vld [vmem:[#allocation3 + $0x278] sm:$0xff]
    %v3700 = vld [vmem:[#allocation3 + $0x280] sm:$0xff]
    %v3701 = vld [vmem:[#allocation3 + $0x288] sm:$0xff]
    %v3702 = vld [vmem:[#allocation3 + $0x290] sm:$0xff]
    %v3703 = vld [vmem:[#allocation3 + $0x298] sm:$0xff]
    %v3704 = vld [vmem:[#allocation3 + $0x2a0] sm:$0xff]
    %v3705 = vld [vmem:[#allocation3 + $0x2a8] sm:$0xff]
    %v3706 = vld [vmem:[#allocation3 + $0x2b0] sm:$0xff]
    %v3707 = vld [vmem:[#allocation3 + $0x2b8] sm:$0xff]
    %v3708 = vld [vmem:[#allocation3 + $0x2c0] sm:$0xff]
    %v3709 = vld [vmem:[#allocation3 + $0x2c8] sm:$0xff]
    %v3710 = vld [vmem:[#allocation3 + $0x2d0] sm:$0xff]
    %v3711 = vld [vmem:[#allocation3 + $0x2d8] sm:$0xff]
    %v3712 = vld [vmem:[#allocation3 + $0x2e0] sm:$0xff]
    %v3713 = vld [vmem:[#allocation3 + $0x2e8] sm:$0xff]
    %v3714 = vld [vmem:[#allocation3 + $0x2f0] sm:$0xff]
    %v3715 = vld [vmem:[#allocation3 + $0x2f8] sm:$0xff]
    %v3716 = vld [vmem:[#allocation3 + $0x300] sm:$0xff]
    %v3717 = vld [vmem:[#allocation3 + $0x308] sm:$0xff]
    %v3718 = vld [vmem:[#allocation3 + $0x310] sm:$0xff]
    %v3719 = vld [vmem:[#allocation3 + $0x318] sm:$0xff]
    %v3720 = vld [vmem:[#allocation3 + $0x320] sm:$0xff]
    %v3721 = vld [vmem:[#allocation3 + $0x328] sm:$0xff]
    %v3722 = vld [vmem:[#allocation3 + $0x330] sm:$0xff]
    %v3723 = vld [vmem:[#allocation3 + $0x338] sm:$0xff]
    %v3724 = vld [vmem:[#allocation3 + $0x340] sm:$0xff]
    %v3725 = vld [vmem:[#allocation3 + $0x348] sm:$0xff]
    %v3726 = vld [vmem:[#allocation3 + $0x350] sm:$0xff]
    %v3727 = vld [vmem:[#allocation3 + $0x358] sm:$0xff]
    %v3728 = vld [vmem:[#allocation3 + $0x360] sm:$0xff]
    %v3729 = vld [vmem:[#allocation3 + $0x368] sm:$0xff]
    %v3730 = vld [vmem:[#allocation3 + $0x370] sm:$0xff]
    %v3731 = vld [vmem:[#allocation3 + $0x378] sm:$0xff]
    %v3732 = vld [vmem:[#allocation3 + $0x380] sm:$0xff]
    %v3733 = vld [vmem:[#allocation3 + $0x388] sm:$0xff]
    %v3734 = vld [vmem:[#allocation3 + $0x390] sm:$0xff]
    %v3735 = vld [vmem:[#allocation3 + $0x398] sm:$0xff]
    %v3736 = vld [vmem:[#allocation3 + $0x3a0] sm:$0xff]
    %v3737 = vld [vmem:[#allocation3 + $0x3a8] sm:$0xff]
    %v3738 = vld [vmem:[#allocation3 + $0x3b0] sm:$0xff]
    %v3739 = vld [vmem:[#allocation3 + $0x3b8] sm:$0xff]
    %v3740 = vld [vmem:[#allocation3 + $0x3c0] sm:$0xff]
    %v3741 = vld [vmem:[#allocation3 + $0x3c8] sm:$0xff]
    %v3742 = vld [vmem:[#allocation3 + $0x3d0] sm:$0xff]
    %v3743 = vld [vmem:[#allocation3 + $0x3d8] sm:$0xff]
    %v3744 = vld [vmem:[#allocation3 + $0x3e0] sm:$0xff]
    %v3745 = vld [vmem:[#allocation3 + $0x3e8] sm:$0xff]
    %v3746 = vld [vmem:[#allocation3 + $0x3f0] sm:$0xff]
    %v3747 = vld [vmem:[#allocation3 + $0x3f8] sm:$0xff]
    %v3748 = vld [vmem:[#allocation3 + $0x400] sm:$0xff]
    %v3749 = vld [vmem:[#allocation3 + $0x408] sm:$0xff]
    %v3750 = vld [vmem:[#allocation3 + $0x410] sm:$0xff]
    %v3751 = vld [vmem:[#allocation3 + $0x418] sm:$0xff]
    %v3752 = vld [vmem:[#allocation3 + $0x420] sm:$0xff]
    %v3753 = vld [vmem:[#allocation3 + $0x428] sm:$0xff]
    %v3754 = vld [vmem:[#allocation3 + $0x430] sm:$0xff]
    %v3755 = vld [vmem:[#allocation3 + $0x438] sm:$0xff]
    %v3756 = vld [vmem:[#allocation3 + $0x440] sm:$0xff]
    %v3757 = vld [vmem:[#allocation3 + $0x448] sm:$0xff]
    %v3758 = vld [vmem:[#allocation3 + $0x450] sm:$0xff]
    %v3759 = vld [vmem:[#allocation3 + $0x458] sm:$0xff]
    %v3760 = vld [vmem:[#allocation3 + $0x460] sm:$0xff]
    %v3761 = vld [vmem:[#allocation3 + $0x468] sm:$0xff]
    %v3762 = vld [vmem:[#allocation3 + $0x470] sm:$0xff]
    %v3763 = vld [vmem:[#allocation3 + $0x478] sm:$0xff]
    %v3764 = vld [vmem:[#allocation3 + $0x480] sm:$0xff]
    %v3765 = vld [vmem:[#allocation3 + $0x488] sm:$0xff]
    %v3766 = vld [vmem:[#allocation3 + $0x490] sm:$0xff]
    %v3767 = vld [vmem:[#allocation3 + $0x498] sm:$0xff]
    %v3768 = vld [vmem:[#allocation3 + $0x4a0] sm:$0xff]
    %v3769 = vld [vmem:[#allocation3 + $0x4a8] sm:$0xff]
    %v3770 = vld [vmem:[#allocation3 + $0x4b0] sm:$0xff]
    %v3771 = vld [vmem:[#allocation3 + $0x4b8] sm:$0xff]
    %v3772 = vld [vmem:[#allocation3 + $0x4c0] sm:$0xff]
    %v3773 = vld [vmem:[#allocation3 + $0x4c8] sm:$0xff]
    %v3774 = vld [vmem:[#allocation3 + $0x4d0] sm:$0xff]
    %v3775 = vld [vmem:[#allocation3 + $0x4d8] sm:$0xff]
    %v3776 = vld [vmem:[#allocation3 + $0x4e0] sm:$0xff]
    %v3777 = vld [vmem:[#allocation3 + $0x4e8] sm:$0xff]
    %v3778 = vld [vmem:[#allocation3 + $0x4f0] sm:$0xff]
    %v3779 = vld [vmem:[#allocation3 + $0x4f8] sm:$0xff]
    %v3780 = vld [vmem:[#allocation3 + $0x500] sm:$0xff]
    %v3781 = vld [vmem:[#allocation3 + $0x508] sm:$0xff]
    %v3782 = vld [vmem:[#allocation3 + $0x510] sm:$0xff]
    %v3783 = vld [vmem:[#allocation3 + $0x518] sm:$0xff]
    %v3784 = vld [vmem:[#allocation3 + $0x520] sm:$0xff]
    %v3785 = vld [vmem:[#allocation3 + $0x528] sm:$0xff]
    %v3786 = vld [vmem:[#allocation3 + $0x530] sm:$0xff]
    %v3787 = vld [vmem:[#allocation3 + $0x538] sm:$0xff]
    %v3788 = vld [vmem:[#allocation3 + $0x540] sm:$0xff]
    %v3789 = vld [vmem:[#allocation3 + $0x548] sm:$0xff]
    %v3790 = vld [vmem:[#allocation3 + $0x550] sm:$0xff]
    %v3791 = vld [vmem:[#allocation3 + $0x558] sm:$0xff]
    %v3792 = vld [vmem:[#allocation3 + $0x560] sm:$0xff]
    %v3793 = vld [vmem:[#allocation3 + $0x568] sm:$0xff]
    %v3794 = vld [vmem:[#allocation3 + $0x570] sm:$0xff]
    %v3795 = vld [vmem:[#allocation3 + $0x578] sm:$0xff]
    %v3796 = vld [vmem:[#allocation3 + $0x580] sm:$0xff]
    %v3797 = vld [vmem:[#allocation3 + $0x588] sm:$0xff]
    %v3798 = vld [vmem:[#allocation3 + $0x590] sm:$0xff]
    %v3799 = vld [vmem:[#allocation3 + $0x598] sm:$0xff]
    %v3800 = vld [vmem:[#allocation3 + $0x5a0] sm:$0xff]
    %v3801 = vld [vmem:[#allocation3 + $0x5a8] sm:$0xff]
    %v3802 = vld [vmem:[#allocation3 + $0x5b0] sm:$0xff]
    %v3803 = vld [vmem:[#allocation3 + $0x5b8] sm:$0xff]
    %v3804 = vld [vmem:[#allocation3 + $0x5c0] sm:$0xff]
    %v3805 = vld [vmem:[#allocation3 + $0x5c8] sm:$0xff]
    %v3806 = vld [vmem:[#allocation3 + $0x5d0] sm:$0xff]
    %v3807 = vld [vmem:[#allocation3 + $0x5d8] sm:$0xff]
    %v3808 = vld [vmem:[#allocation3 + $0x5e0] sm:$0xff]
    %v3809 = vld [vmem:[#allocation3 + $0x5e8] sm:$0xff]
    %v3810 = vld [vmem:[#allocation3 + $0x5f0] sm:$0xff]
    %v3811 = vld [vmem:[#allocation3 + $0x5f8] sm:$0xff]
    %v3812 = vld [vmem:[#allocation3 + $0x600] sm:$0xff]
    %v3813 = vld [vmem:[#allocation3 + $0x608] sm:$0xff]
    %v3814 = vld [vmem:[#allocation3 + $0x610] sm:$0xff]
    %v3815 = vld [vmem:[#allocation3 + $0x618] sm:$0xff]
    %v3816 = vld [vmem:[#allocation3 + $0x620] sm:$0xff]
    %v3817 = vld [vmem:[#allocation3 + $0x628] sm:$0xff]
    %v3818 = vld [vmem:[#allocation3 + $0x630] sm:$0xff]
    %v3819 = vld [vmem:[#allocation3 + $0x638] sm:$0xff]
    %v3820 = vld [vmem:[#allocation3 + $0x640] sm:$0xff]
    %v3821 = vld [vmem:[#allocation3 + $0x648] sm:$0xff]
    %v3822 = vld [vmem:[#allocation3 + $0x650] sm:$0xff]
    %v3823 = vld [vmem:[#allocation3 + $0x658] sm:$0xff]
    %v3824 = vld [vmem:[#allocation3 + $0x660] sm:$0xff]
    %v3825 = vld [vmem:[#allocation3 + $0x668] sm:$0xff]
    %v3826 = vld [vmem:[#allocation3 + $0x670] sm:$0xff]
    %v3827 = vld [vmem:[#allocation3 + $0x678] sm:$0xff]
    %v3828 = vld [vmem:[#allocation3 + $0x680] sm:$0xff]
    %v3829 = vld [vmem:[#allocation3 + $0x688] sm:$0xff]
    %v3830 = vld [vmem:[#allocation3 + $0x690] sm:$0xff]
    %v3831 = vld [vmem:[#allocation3 + $0x698] sm:$0xff]
    %v3832 = vld [vmem:[#allocation3 + $0x6a0] sm:$0xff]
    %v3833 = vld [vmem:[#allocation3 + $0x6a8] sm:$0xff]
    %v3834 = vld [vmem:[#allocation3 + $0x6b0] sm:$0xff]
    %v3835 = vld [vmem:[#allocation3 + $0x6b8] sm:$0xff]
    %v3836 = vld [vmem:[#allocation3 + $0x6c0] sm:$0xff]
    %v3837 = vld [vmem:[#allocation3 + $0x6c8] sm:$0xff]
    %v3838 = vld [vmem:[#allocation3 + $0x6d0] sm:$0xff]
    %v3839 = vld [vmem:[#allocation3 + $0x6d8] sm:$0xff]
    %v3840 = vld [vmem:[#allocation3 + $0x6e0] sm:$0xff]
    %v3841 = vld [vmem:[#allocation3 + $0x6e8] sm:$0xff]
    %v3842 = vld [vmem:[#allocation3 + $0x6f0] sm:$0xff]
    %v3843 = vld [vmem:[#allocation3 + $0x6f8] sm:$0xff]
    %v3844 = vld [vmem:[#allocation3 + $0x700] sm:$0xff]
    %v3845 = vld [vmem:[#allocation3 + $0x708] sm:$0xff]
    %v3846 = vld [vmem:[#allocation3 + $0x710] sm:$0xff]
    %v3847 = vld [vmem:[#allocation3 + $0x718] sm:$0xff]
    %v3848 = vld [vmem:[#allocation3 + $0x720] sm:$0xff]
    %v3849 = vld [vmem:[#allocation3 + $0x728] sm:$0xff]
    %v3850 = vld [vmem:[#allocation3 + $0x730] sm:$0xff]
    %v3851 = vld [vmem:[#allocation3 + $0x738] sm:$0xff]
    %v3852 = vld [vmem:[#allocation3 + $0x740] sm:$0xff]
    %v3853 = vld [vmem:[#allocation3 + $0x748] sm:$0xff]
    %v3854 = vld [vmem:[#allocation3 + $0x750] sm:$0xff]
    %v3855 = vld [vmem:[#allocation3 + $0x758] sm:$0xff]
    %v3856 = vld [vmem:[#allocation3 + $0x760] sm:$0xff]
    %v3857 = vld [vmem:[#allocation3 + $0x768] sm:$0xff]
    %v3858 = vld [vmem:[#allocation3 + $0x770] sm:$0xff]
    %v3859 = vld [vmem:[#allocation3 + $0x778] sm:$0xff]
    %v3860 = vld [vmem:[#allocation3 + $0x780] sm:$0xff]
    %v3861 = vld [vmem:[#allocation3 + $0x788] sm:$0xff]
    %v3862 = vld [vmem:[#allocation3 + $0x790] sm:$0xff]
    %v3863 = vld [vmem:[#allocation3 + $0x798] sm:$0xff]
    %v3864 = vld [vmem:[#allocation3 + $0x7a0] sm:$0xff]
    %v3865 = vld [vmem:[#allocation3 + $0x7a8] sm:$0xff]
    %v3866 = vld [vmem:[#allocation3 + $0x7b0] sm:$0xff]
    %v3867 = vld [vmem:[#allocation3 + $0x7b8] sm:$0xff]
    %v3868 = vld [vmem:[#allocation3 + $0x7c0] sm:$0xff]
    %v3869 = vld [vmem:[#allocation3 + $0x7c8] sm:$0xff]
    %v3870 = vld [vmem:[#allocation3 + $0x7d0] sm:$0xff]
    %v3871 = vld [vmem:[#allocation3 + $0x7d8] sm:$0xff]
    %v3872 = vld [vmem:[#allocation3 + $0x7e0] sm:$0xff]
    %v3873 = vld [vmem:[#allocation3 + $0x7e8] sm:$0xff]
    %v3874 = vld [vmem:[#allocation3 + $0x7f0] sm:$0xff]
    %v3875 = vld [vmem:[#allocation3 + $0x7f8] sm:$0xff]
    %v3876 = vld [vmem:[#allocation3 + $0x800] sm:$0xff]
    %v3877 = vld [vmem:[#allocation3 + $0x808] sm:$0xff]
    %v3878 = vld [vmem:[#allocation3 + $0x810] sm:$0xff]
    %v3879 = vld [vmem:[#allocation3 + $0x818] sm:$0xff]
    %v3880 = vld [vmem:[#allocation3 + $0x820] sm:$0xff]
    %v3881 = vld [vmem:[#allocation3 + $0x828] sm:$0xff]
    %v3882 = vld [vmem:[#allocation3 + $0x830] sm:$0xff]
    %v3883 = vld [vmem:[#allocation3 + $0x838] sm:$0xff]
    %v3884 = vld [vmem:[#allocation3 + $0x840] sm:$0xff]
    %v3885 = vld [vmem:[#allocation3 + $0x848] sm:$0xff]
    %v3886 = vld [vmem:[#allocation3 + $0x850] sm:$0xff]
    %v3887 = vld [vmem:[#allocation3 + $0x858] sm:$0xff]
    %v3888 = vld [vmem:[#allocation3 + $0x860] sm:$0xff]
    %v3889 = vld [vmem:[#allocation3 + $0x868] sm:$0xff]
    %v3890 = vld [vmem:[#allocation3 + $0x870] sm:$0xff]
    %v3891 = vld [vmem:[#allocation3 + $0x878] sm:$0xff]
    %v3892 = vld [vmem:[#allocation3 + $0x880] sm:$0xff]
    %v3893 = vld [vmem:[#allocation3 + $0x888] sm:$0xff]
    %v3894 = vld [vmem:[#allocation3 + $0x890] sm:$0xff]
    %v3895 = vld [vmem:[#allocation3 + $0x898] sm:$0xff]
    %v3896 = vld [vmem:[#allocation3 + $0x8a0] sm:$0xff]
    %v3897 = vld [vmem:[#allocation3 + $0x8a8] sm:$0xff]
    %v3898 = vld [vmem:[#allocation3 + $0x8b0] sm:$0xff]
    %v3899 = vld [vmem:[#allocation3 + $0x8b8] sm:$0xff]
    %v3900 = vld [vmem:[#allocation3 + $0x8c0] sm:$0xff]
    %v3901 = vld [vmem:[#allocation3 + $0x8c8] sm:$0xff]
    %v3902 = vld [vmem:[#allocation3 + $0x8d0] sm:$0xff]
    %v3903 = vld [vmem:[#allocation3 + $0x8d8] sm:$0xff]
    %v3904 = vld [vmem:[#allocation3 + $0x8e0] sm:$0xff]
    %v3905 = vld [vmem:[#allocation3 + $0x8e8] sm:$0xff]
    %v3906 = vld [vmem:[#allocation3 + $0x8f0] sm:$0xff]
    %v3907 = vld [vmem:[#allocation3 + $0x8f8] sm:$0xff]
    %v3908 = vld [vmem:[#allocation3 + $0x900] sm:$0xff]
    %v3909 = vld [vmem:[#allocation3 + $0x908] sm:$0xff]
    %v3910 = vld [vmem:[#allocation3 + $0x910] sm:$0xff]
    %v3911 = vld [vmem:[#allocation3 + $0x918] sm:$0xff]
    %v3912 = vld [vmem:[#allocation3 + $0x920] sm:$0xff]
    %v3913 = vld [vmem:[#allocation3 + $0x928] sm:$0xff]
    %v3914 = vld [vmem:[#allocation3 + $0x930] sm:$0xff]
    %v3915 = vld [vmem:[#allocation3 + $0x938] sm:$0xff]
    %v3916 = vld [vmem:[#allocation3 + $0x940] sm:$0xff]
    %v3917 = vld [vmem:[#allocation3 + $0x948] sm:$0xff]
    %v3918 = vld [vmem:[#allocation3 + $0x950] sm:$0xff]
    %v3919 = vld [vmem:[#allocation3 + $0x958] sm:$0xff]
    %v3920 = vld [vmem:[#allocation3 + $0x960] sm:$0xff]
    %v3921 = vld [vmem:[#allocation3 + $0x968] sm:$0xff]
    %v3922 = vld [vmem:[#allocation3 + $0x970] sm:$0xff]
    %v3923 = vld [vmem:[#allocation3 + $0x978] sm:$0xff]
    %v3924 = vld [vmem:[#allocation3 + $0x980] sm:$0xff]
    %v3925 = vld [vmem:[#allocation3 + $0x988] sm:$0xff]
    %v3926 = vld [vmem:[#allocation3 + $0x990] sm:$0xff]
    %v3927 = vld [vmem:[#allocation3 + $0x998] sm:$0xff]
    %v3928 = vld [vmem:[#allocation3 + $0x9a0] sm:$0xff]
    %v3929 = vld [vmem:[#allocation3 + $0x9a8] sm:$0xff]
    %v3930 = vld [vmem:[#allocation3 + $0x9b0] sm:$0xff]
    %v3931 = vld [vmem:[#allocation3 + $0x9b8] sm:$0xff]
    %v3932 = vld [vmem:[#allocation3 + $0x9c0] sm:$0xff]
    %v3933 = vld [vmem:[#allocation3 + $0x9c8] sm:$0xff]
    %v3934 = vld [vmem:[#allocation3 + $0x9d0] sm:$0xff]
    %v3935 = vld [vmem:[#allocation3 + $0x9d8] sm:$0xff]
    %v3936 = vld [vmem:[#allocation3 + $0x9e0] sm:$0xff]
    %v3937 = vld [vmem:[#allocation3 + $0x9e8] sm:$0xff]
    %v3938 = vld [vmem:[#allocation3 + $0x9f0] sm:$0xff]
    %v3939 = vld [vmem:[#allocation3 + $0x9f8] sm:$0xff]
    %v3940 = vld [vmem:[#allocation3 + $0xa00] sm:$0xff]
    %v3941 = vld [vmem:[#allocation3 + $0xa08] sm:$0xff]
    %v3942 = vld [vmem:[#allocation3 + $0xa10] sm:$0xff]
    %v3943 = vld [vmem:[#allocation3 + $0xa18] sm:$0xff]
    %v3944 = vld [vmem:[#allocation3 + $0xa20] sm:$0xff]
    %v3945 = vld [vmem:[#allocation3 + $0xa28] sm:$0xff]
    %v3946 = vld [vmem:[#allocation3 + $0xa30] sm:$0xff]
    %v3947 = vld [vmem:[#allocation3 + $0xa38] sm:$0xff]
    %v3948 = vld [vmem:[#allocation3 + $0xa40] sm:$0xff]
    %v3949 = vld [vmem:[#allocation3 + $0xa48] sm:$0xff]
    %v3950 = vld [vmem:[#allocation3 + $0xa50] sm:$0xff]
    %v3951 = vld [vmem:[#allocation3 + $0xa58] sm:$0xff]
    %v3952 = vld [vmem:[#allocation3 + $0xa60] sm:$0xff]
    %v3953 = vld [vmem:[#allocation3 + $0xa68] sm:$0xff]
    %v3954 = vld [vmem:[#allocation3 + $0xa70] sm:$0xff]
    %v3955 = vld [vmem:[#allocation3 + $0xa78] sm:$0xff]
    %v3956 = vld [vmem:[#allocation3 + $0xa80] sm:$0xff]
    %v3957 = vld [vmem:[#allocation3 + $0xa88] sm:$0xff]
    %v3958 = vld [vmem:[#allocation3 + $0xa90] sm:$0xff]
    %v3959 = vld [vmem:[#allocation3 + $0xa98] sm:$0xff]
    %v3960 = vld [vmem:[#allocation3 + $0xaa0] sm:$0xff]
    %v3961 = vld [vmem:[#allocation3 + $0xaa8] sm:$0xff]
    %v3962 = vld [vmem:[#allocation3 + $0xab0] sm:$0xff]
    %v3963 = vld [vmem:[#allocation3 + $0xab8] sm:$0xff]
    %v3964 = vld [vmem:[#allocation3 + $0xac0] sm:$0xff]
    %v3965 = vld [vmem:[#allocation3 + $0xac8] sm:$0xff]
    %v3966 = vld [vmem:[#allocation3 + $0xad0] sm:$0xff]
    %v3967 = vld [vmem:[#allocation3 + $0xad8] sm:$0xff]
    %v3968 = vld [vmem:[#allocation3 + $0xae0] sm:$0xff]
    %v3969 = vld [vmem:[#allocation3 + $0xae8] sm:$0xff]
    %v3970 = vld [vmem:[#allocation3 + $0xaf0] sm:$0xff]
    %v3971 = vld [vmem:[#allocation3 + $0xaf8] sm:$0xff]
    %v3972 = vld [vmem:[#allocation3 + $0xb00] sm:$0xff]
    %v3973 = vld [vmem:[#allocation3 + $0xb08] sm:$0xff]
    %v3974 = vld [vmem:[#allocation3 + $0xb10] sm:$0xff]
    %v3975 = vld [vmem:[#allocation3 + $0xb18] sm:$0xff]
    %v3976 = vld [vmem:[#allocation3 + $0xb20] sm:$0xff]
    %v3977 = vld [vmem:[#allocation3 + $0xb28] sm:$0xff]
    %v3978 = vld [vmem:[#allocation3 + $0xb30] sm:$0xff]
    %v3979 = vld [vmem:[#allocation3 + $0xb38] sm:$0xff]
    %v3980 = vld [vmem:[#allocation3 + $0xb40] sm:$0xff]
    %v3981 = vld [vmem:[#allocation3 + $0xb48] sm:$0xff]
    %v3982 = vld [vmem:[#allocation3 + $0xb50] sm:$0xff]
    %v3983 = vld [vmem:[#allocation3 + $0xb58] sm:$0xff]
    %v3984 = vld [vmem:[#allocation3 + $0xb60] sm:$0xff]
    %v3985 = vld [vmem:[#allocation3 + $0xb68] sm:$0xff]
    %v3986 = vld [vmem:[#allocation3 + $0xb70] sm:$0xff]
    %v3987 = vld [vmem:[#allocation3 + $0xb78] sm:$0xff]
    %v3988 = vld [vmem:[#allocation3 + $0xb80] sm:$0xff]
    %v3989 = vld [vmem:[#allocation3 + $0xb88] sm:$0xff]
    %v3990 = vld [vmem:[#allocation3 + $0xb90] sm:$0xff]
    %v3991 = vld [vmem:[#allocation3 + $0xb98] sm:$0xff]
    %v3992 = vld [vmem:[#allocation3 + $0xba0] sm:$0xff]
    %v3993 = vld [vmem:[#allocation3 + $0xba8] sm:$0xff]
    %v3994 = vld [vmem:[#allocation3 + $0xbb0] sm:$0xff]
    %v3995 = vld [vmem:[#allocation3 + $0xbb8] sm:$0xff]
    %v3996 = vld [vmem:[#allocation3 + $0xbc0] sm:$0xff]
    %v3997 = vld [vmem:[#allocation3 + $0xbc8] sm:$0xff]
    %v3998 = vld [vmem:[#allocation3 + $0xbd0] sm:$0xff]
    %v3999 = vld [vmem:[#allocation3 + $0xbd8] sm:$0xff]
    %v4000 = vld [vmem:[#allocation3 + $0xbe0] sm:$0xff]
    %v4001 = vld [vmem:[#allocation3 + $0xbe8] sm:$0xff]
    %v4002 = vld [vmem:[#allocation3 + $0xbf0] sm:$0xff]
    %v4003 = vld [vmem:[#allocation3 + $0xbf8] sm:$0xff]
    %v4004 = vld [vmem:[#allocation3 + $0xc00] sm:$0xff]
    %v4005 = vld [vmem:[#allocation3 + $0xc08] sm:$0xff]
    %v4006 = vld [vmem:[#allocation3 + $0xc10] sm:$0xff]
    %v4007 = vld [vmem:[#allocation3 + $0xc18] sm:$0xff]
    %v4008 = vld [vmem:[#allocation3 + $0xc20] sm:$0xff]
    %v4009 = vld [vmem:[#allocation3 + $0xc28] sm:$0xff]
    %v4010 = vld [vmem:[#allocation3 + $0xc30] sm:$0xff]
    %v4011 = vld [vmem:[#allocation3 + $0xc38] sm:$0xff]
    %v4012 = vld [vmem:[#allocation3 + $0xc40] sm:$0xff]
    %v4013 = vld [vmem:[#allocation3 + $0xc48] sm:$0xff]
    %v4014 = vld [vmem:[#allocation3 + $0xc50] sm:$0xff]
    %v4015 = vld [vmem:[#allocation3 + $0xc58] sm:$0xff]
    %v4016 = vld [vmem:[#allocation3 + $0xc60] sm:$0xff]
    %v4017 = vld [vmem:[#allocation3 + $0xc68] sm:$0xff]
    %v4018 = vld [vmem:[#allocation3 + $0xc70] sm:$0xff]
    %v4019 = vld [vmem:[#allocation3 + $0xc78] sm:$0xff]
    %v4020 = vld [vmem:[#allocation3 + $0xc80] sm:$0xff]
    %v4021 = vld [vmem:[#allocation3 + $0xc88] sm:$0xff]
    %v4022 = vld [vmem:[#allocation3 + $0xc90] sm:$0xff]
    %v4023 = vld [vmem:[#allocation3 + $0xc98] sm:$0xff]
    %v4024 = vld [vmem:[#allocation3 + $0xca0] sm:$0xff]
    %v4025 = vld [vmem:[#allocation3 + $0xca8] sm:$0xff]
    %v4026 = vld [vmem:[#allocation3 + $0xcb0] sm:$0xff]
    %v4027 = vld [vmem:[#allocation3 + $0xcb8] sm:$0xff]
    %v4028 = vld [vmem:[#allocation3 + $0xcc0] sm:$0xff]
    %v4029 = vld [vmem:[#allocation3 + $0xcc8] sm:$0xff]
    %v4030 = vld [vmem:[#allocation3 + $0xcd0] sm:$0xff]
    %v4031 = vld [vmem:[#allocation3 + $0xcd8] sm:$0xff]
    %v4032 = vld [vmem:[#allocation3 + $0xce0] sm:$0xff]
    %v4033 = vld [vmem:[#allocation3 + $0xce8] sm:$0xff]
    %v4034 = vld [vmem:[#allocation3 + $0xcf0] sm:$0xff]
    %v4035 = vld [vmem:[#allocation3 + $0xcf8] sm:$0xff]
    %v4036 = vld [vmem:[#allocation3 + $0xd00] sm:$0xff]
    %v4037 = vld [vmem:[#allocation3 + $0xd08] sm:$0xff]
    %v4038 = vld [vmem:[#allocation3 + $0xd10] sm:$0xff]
    %v4039 = vld [vmem:[#allocation3 + $0xd18] sm:$0xff]
    %v4040 = vld [vmem:[#allocation3 + $0xd20] sm:$0xff]
    %v4041 = vld [vmem:[#allocation3 + $0xd28] sm:$0xff]
    %v4042 = vld [vmem:[#allocation3 + $0xd30] sm:$0xff]
    %v4043 = vld [vmem:[#allocation3 + $0xd38] sm:$0xff]
    %v4044 = vld [vmem:[#allocation3 + $0xd40] sm:$0xff]
    %v4045 = vld [vmem:[#allocation3 + $0xd48] sm:$0xff]
    %v4046 = vld [vmem:[#allocation3 + $0xd50] sm:$0xff]
    %v4047 = vld [vmem:[#allocation3 + $0xd58] sm:$0xff]
    %v4048 = vld [vmem:[#allocation3 + $0xd60] sm:$0xff]
    %v4049 = vld [vmem:[#allocation3 + $0xd68] sm:$0xff]
    %v4050 = vld [vmem:[#allocation3 + $0xd70] sm:$0xff]
    %v4051 = vld [vmem:[#allocation3 + $0xd78] sm:$0xff]
    %v4052 = vld [vmem:[#allocation3 + $0xd80] sm:$0xff]
    %v4053 = vld [vmem:[#allocation3 + $0xd88] sm:$0xff]
    %v4054 = vld [vmem:[#allocation3 + $0xd90] sm:$0xff]
    %v4055 = vld [vmem:[#allocation3 + $0xd98] sm:$0xff]
    %v4056 = vld [vmem:[#allocation3 + $0xda0] sm:$0xff]
    %v4057 = vld [vmem:[#allocation3 + $0xda8] sm:$0xff]
    %v4058 = vld [vmem:[#allocation3 + $0xdb0] sm:$0xff]
    %v4059 = vld [vmem:[#allocation3 + $0xdb8] sm:$0xff]
    %v4060 = vld [vmem:[#allocation3 + $0xdc0] sm:$0xff]
    %v4061 = vld [vmem:[#allocation3 + $0xdc8] sm:$0xff]
    %v4062 = vld [vmem:[#allocation3 + $0xdd0] sm:$0xff]
    %v4063 = vld [vmem:[#allocation3 + $0xdd8] sm:$0xff]
    %v4064 = vld [vmem:[#allocation3 + $0xde0] sm:$0xff]
    %v4065 = vld [vmem:[#allocation3 + $0xde8] sm:$0xff]
    %v4066 = vld [vmem:[#allocation3 + $0xdf0] sm:$0xff]
    %v4067 = vld [vmem:[#allocation3 + $0xdf8] sm:$0xff]
    %v4068 = vld [vmem:[#allocation3 + $0xe00] sm:$0xff]
    %v4069 = vld [vmem:[#allocation3 + $0xe08] sm:$0xff]
    %v4070 = vld [vmem:[#allocation3 + $0xe10] sm:$0xff]
    %v4071 = vld [vmem:[#allocation3 + $0xe18] sm:$0xff]
    %v4072 = vld [vmem:[#allocation3 + $0xe20] sm:$0xff]
    %v4073 = vld [vmem:[#allocation3 + $0xe28] sm:$0xff]
    %v4074 = vld [vmem:[#allocation3 + $0xe30] sm:$0xff]
    %v4075 = vld [vmem:[#allocation3 + $0xe38] sm:$0xff]
    %v4076 = vld [vmem:[#allocation3 + $0xe40] sm:$0xff]
    %v4077 = vld [vmem:[#allocation3 + $0xe48] sm:$0xff]
    %v4078 = vld [vmem:[#allocation3 + $0xe50] sm:$0xff]
    %v4079 = vld [vmem:[#allocation3 + $0xe58] sm:$0xff]
    %v4080 = vld [vmem:[#allocation3 + $0xe60] sm:$0xff]
    %v4081 = vld [vmem:[#allocation3 + $0xe68] sm:$0xff]
    %v4082 = vld [vmem:[#allocation3 + $0xe70] sm:$0xff]
    %v4083 = vld [vmem:[#allocation3 + $0xe78] sm:$0xff]
    %v4084 = vld [vmem:[#allocation3 + $0xe80] sm:$0xff]
    %v4085 = vld [vmem:[#allocation3 + $0xe88] sm:$0xff]
    %v4086 = vld [vmem:[#allocation3 + $0xe90] sm:$0xff]
    %v4087 = vld [vmem:[#allocation3 + $0xe98] sm:$0xff]
    %v4088 = vld [vmem:[#allocation3 + $0xea0] sm:$0xff]
    %v4089 = vld [vmem:[#allocation3 + $0xea8] sm:$0xff]
    %v4090 = vld [vmem:[#allocation3 + $0xeb0] sm:$0xff]
    %v4091 = vld [vmem:[#allocation3 + $0xeb8] sm:$0xff]
    %v4092 = vld [vmem:[#allocation3 + $0xec0] sm:$0xff]
    %v4093 = vld [vmem:[#allocation3 + $0xec8] sm:$0xff]
    %v4094 = vld [vmem:[#allocation3 + $0xed0] sm:$0xff]
    %v4095 = vld [vmem:[#allocation3 + $0xed8] sm:$0xff]
    %v4096 = vld [vmem:[#allocation3 + $0xee0] sm:$0xff]
    %v4097 = vld [vmem:[#allocation3 + $0xee8] sm:$0xff]
    %v4098 = vld [vmem:[#allocation3 + $0xef0] sm:$0xff]
    %v4099 = vld [vmem:[#allocation3 + $0xef8] sm:$0xff]
    %v4100 = vld [vmem:[#allocation3 + $0xf00] sm:$0xff]
    %v4101 = vld [vmem:[#allocation3 + $0xf08] sm:$0xff]
    %v4102 = vld [vmem:[#allocation3 + $0xf10] sm:$0xff]
    %v4103 = vld [vmem:[#allocation3 + $0xf18] sm:$0xff]
    %v4104 = vld [vmem:[#allocation3 + $0xf20] sm:$0xff]
    %v4105 = vld [vmem:[#allocation3 + $0xf28] sm:$0xff]
    %v4106 = vld [vmem:[#allocation3 + $0xf30] sm:$0xff]
    %v4107 = vld [vmem:[#allocation3 + $0xf38] sm:$0xff]
    %v4108 = vld [vmem:[#allocation3 + $0xf40] sm:$0xff]
    %v4109 = vld [vmem:[#allocation3 + $0xf48] sm:$0xff]
    %v4110 = vld [vmem:[#allocation3 + $0xf50] sm:$0xff]
    %v4111 = vld [vmem:[#allocation3 + $0xf58] sm:$0xff]
    %v4112 = vld [vmem:[#allocation3 + $0xf60] sm:$0xff]
    %v4113 = vld [vmem:[#allocation3 + $0xf68] sm:$0xff]
    %v4114 = vld [vmem:[#allocation3 + $0xf70] sm:$0xff]
    %v4115 = vld [vmem:[#allocation3 + $0xf78] sm:$0xff]
    %v4116 = vld [vmem:[#allocation3 + $0xf80] sm:$0xff]
    %v4117 = vld [vmem:[#allocation3 + $0xf88] sm:$0xff]
    %v4118 = vld [vmem:[#allocation3 + $0xf90] sm:$0xff]
    %v4119 = vld [vmem:[#allocation3 + $0xf98] sm:$0xff]
    %v4120 = vld [vmem:[#allocation3 + $0xfa0] sm:$0xff]
    %v4121 = vld [vmem:[#allocation3 + $0xfa8] sm:$0xff]
    %v4122 = vld [vmem:[#allocation3 + $0xfb0] sm:$0xff]
    %v4123 = vld [vmem:[#allocation3 + $0xfb8] sm:$0xff]
    %v4124 = vld [vmem:[#allocation3 + $0xfc0] sm:$0xff]
    %v4125 = vld [vmem:[#allocation3 + $0xfc8] sm:$0xff]
    %v4126 = vld [vmem:[#allocation3 + $0xfd0] sm:$0xff]
    %v4127 = vld [vmem:[#allocation3 + $0xfd8] sm:$0xff]
    %v4128 = vld [vmem:[#allocation3 + $0xfe0] sm:$0xff]
    %v4129 = vld [vmem:[#allocation3 + $0xfe8] sm:$0xff]
    %v4130 = vld [vmem:[#allocation3 + $0xff0] sm:$0xff]
    %v4131 = vld [vmem:[#allocation3 + $0xff8] sm:$0xff]
    %v4132 = vld [vmem:[#allocation3 + $0x1000] sm:$0xff]
    %v4133 = vld [vmem:[#allocation3 + $0x1008] sm:$0xff]
    %v4134 = vld [vmem:[#allocation3 + $0x1010] sm:$0xff]
    %v4135 = vld [vmem:[#allocation3 + $0x1018] sm:$0xff]
    %v4136 = vld [vmem:[#allocation3 + $0x1020] sm:$0xff]
    %v4137 = vld [vmem:[#allocation3 + $0x1028] sm:$0xff]
    %v4138 = vld [vmem:[#allocation3 + $0x1030] sm:$0xff]
    %v4139 = vld [vmem:[#allocation3 + $0x1038] sm:$0xff]
    %v4140 = vld [vmem:[#allocation3 + $0x1040] sm:$0xff]
    %v4141 = vld [vmem:[#allocation3 + $0x1048] sm:$0xff]
    %v4142 = vld [vmem:[#allocation3 + $0x1050] sm:$0xff]
    %v4143 = vld [vmem:[#allocation3 + $0x1058] sm:$0xff]
    %v4144 = vld [vmem:[#allocation3 + $0x1060] sm:$0xff]
    %v4145 = vld [vmem:[#allocation3 + $0x1068] sm:$0xff]
    %v4146 = vld [vmem:[#allocation3 + $0x1070] sm:$0xff]
    %v4147 = vld [vmem:[#allocation3 + $0x1078] sm:$0xff]
    %v4148 = vld [vmem:[#allocation3 + $0x1080] sm:$0xff]
    %v4149 = vld [vmem:[#allocation3 + $0x1088] sm:$0xff]
    %v4150 = vld [vmem:[#allocation3 + $0x1090] sm:$0xff]
    %v4151 = vld [vmem:[#allocation3 + $0x1098] sm:$0xff]
    %v4152 = vld [vmem:[#allocation3 + $0x10a0] sm:$0xff]
    %v4153 = vld [vmem:[#allocation3 + $0x10a8] sm:$0xff]
    %v4154 = vld [vmem:[#allocation3 + $0x10b0] sm:$0xff]
    %v4155 = vld [vmem:[#allocation3 + $0x10b8] sm:$0xff]
    %v4156 = vld [vmem:[#allocation3 + $0x10c0] sm:$0xff]
    %v4157 = vld [vmem:[#allocation3 + $0x10c8] sm:$0xff]
    %v4158 = vld [vmem:[#allocation3 + $0x10d0] sm:$0xff]
    %v4159 = vld [vmem:[#allocation3 + $0x10d8] sm:$0xff]
    %v4160 = vld [vmem:[#allocation3 + $0x10e0] sm:$0xff]
    %v4161 = vld [vmem:[#allocation3 + $0x10e8] sm:$0xff]
    %v4162 = vld [vmem:[#allocation3 + $0x10f0] sm:$0xff]
    %v4163 = vld [vmem:[#allocation3 + $0x10f8] sm:$0xff]
    %v4164 = vld [vmem:[#allocation3 + $0x1100] sm:$0xff]
    %v4165 = vld [vmem:[#allocation3 + $0x1108] sm:$0xff]
    %v4166 = vld [vmem:[#allocation3 + $0x1110] sm:$0xff]
    %v4167 = vld [vmem:[#allocation3 + $0x1118] sm:$0xff]
    %v4168 = vld [vmem:[#allocation3 + $0x1120] sm:$0xff]
    %v4169 = vld [vmem:[#allocation3 + $0x1128] sm:$0xff]
    %v4170 = vld [vmem:[#allocation3 + $0x1130] sm:$0xff]
    %v4171 = vld [vmem:[#allocation3 + $0x1138] sm:$0xff]
    %v4172 = vld [vmem:[#allocation3 + $0x1140] sm:$0xff]
    %v4173 = vld [vmem:[#allocation3 + $0x1148] sm:$0xff]
    %v4174 = vld [vmem:[#allocation3 + $0x1150] sm:$0xff]
    %v4175 = vld [vmem:[#allocation3 + $0x1158] sm:$0xff]
    %v4176 = vld [vmem:[#allocation3 + $0x1160] sm:$0xff]
    %v4177 = vld [vmem:[#allocation3 + $0x1168] sm:$0xff]
    %v4178 = vld [vmem:[#allocation3 + $0x1170] sm:$0xff]
    %v4179 = vld [vmem:[#allocation3 + $0x1178] sm:$0xff]
    %v4180 = vld [vmem:[#allocation3 + $0x1180] sm:$0xff]
    %v4181 = vld [vmem:[#allocation3 + $0x1188] sm:$0xff]
    %v4182 = vld [vmem:[#allocation3 + $0x1190] sm:$0xff]
    %v4183 = vld [vmem:[#allocation3 + $0x1198] sm:$0xff]
    %v4184 = vld [vmem:[#allocation3 + $0x11a0] sm:$0xff]
    %v4185 = vld [vmem:[#allocation3 + $0x11a8] sm:$0xff]
    %v4186 = vld [vmem:[#allocation3 + $0x11b0] sm:$0xff]
    %v4187 = vld [vmem:[#allocation3 + $0x11b8] sm:$0xff]
    %v4188 = vld [vmem:[#allocation3 + $0x11c0] sm:$0xff]
    %v4189 = vld [vmem:[#allocation3 + $0x11c8] sm:$0xff]
    %v4190 = vld [vmem:[#allocation3 + $0x11d0] sm:$0xff]
    %v4191 = vld [vmem:[#allocation3 + $0x11d8] sm:$0xff]
    %v4192 = vld [vmem:[#allocation3 + $0x11e0] sm:$0xff]
    %v4193 = vld [vmem:[#allocation3 + $0x11e8] sm:$0xff]
    %v4194 = vld [vmem:[#allocation3 + $0x11f0] sm:$0xff]
    %v4195 = vld [vmem:[#allocation3 + $0x11f8] sm:$0xff]
    %v4196 = vld [vmem:[#allocation3 + $0x1200] sm:$0xff]
    %v4197 = vld [vmem:[#allocation3 + $0x1208] sm:$0xff]
    %v4198 = vld [vmem:[#allocation3 + $0x1210] sm:$0xff]
    %v4199 = vld [vmem:[#allocation3 + $0x1218] sm:$0xff]
    %v4200 = vld [vmem:[#allocation3 + $0x1220] sm:$0xff]
    %v4201 = vld [vmem:[#allocation3 + $0x1228] sm:$0xff]
    %v4202 = vld [vmem:[#allocation3 + $0x1230] sm:$0xff]
    %v4203 = vld [vmem:[#allocation3 + $0x1238] sm:$0xff]
    %v4204 = vld [vmem:[#allocation3 + $0x1240] sm:$0xff]
    %v4205 = vld [vmem:[#allocation3 + $0x1248] sm:$0xff]
    %v4206 = vld [vmem:[#allocation3 + $0x1250] sm:$0xff]
    %v4207 = vld [vmem:[#allocation3 + $0x1258] sm:$0xff]
    %v4208 = vld [vmem:[#allocation3 + $0x1260] sm:$0xff]
    %v4209 = vld [vmem:[#allocation3 + $0x1268] sm:$0xff]
    %v4210 = vld [vmem:[#allocation3 + $0x1270] sm:$0xff]
    %v4211 = vld [vmem:[#allocation3 + $0x1278] sm:$0xff]
    %v4212 = vld [vmem:[#allocation3 + $0x1280] sm:$0xff]
    %v4213 = vld [vmem:[#allocation3 + $0x1288] sm:$0xff]
    %v4214 = vld [vmem:[#allocation3 + $0x1290] sm:$0xff]
    %v4215 = vld [vmem:[#allocation3 + $0x1298] sm:$0xff]
    %v4216 = vld [vmem:[#allocation3 + $0x12a0] sm:$0xff]
    %v4217 = vld [vmem:[#allocation3 + $0x12a8] sm:$0xff]
    %v4218 = vld [vmem:[#allocation3 + $0x12b0] sm:$0xff]
    %v4219 = vld [vmem:[#allocation3 + $0x12b8] sm:$0xff]
    %v4220 = vld [vmem:[#allocation3 + $0x12c0] sm:$0xff]
    %v4221 = vld [vmem:[#allocation3 + $0x12c8] sm:$0xff]
    %v4222 = vld [vmem:[#allocation3 + $0x12d0] sm:$0xff]
    %v4223 = vld [vmem:[#allocation3 + $0x12d8] sm:$0xff]
    %v4224 = vld [vmem:[#allocation3 + $0x12e0] sm:$0xff]
    %v4225 = vld [vmem:[#allocation3 + $0x12e8] sm:$0xff]
    %v4226 = vld [vmem:[#allocation3 + $0x12f0] sm:$0xff]
    %v4227 = vld [vmem:[#allocation3 + $0x12f8] sm:$0xff]
    %v4228 = vld [vmem:[#allocation3 + $0x1300] sm:$0xff]
    %v4229 = vld [vmem:[#allocation3 + $0x1308] sm:$0xff]
    %v4230 = vld [vmem:[#allocation3 + $0x1310] sm:$0xff]
    %v4231 = vld [vmem:[#allocation3 + $0x1318] sm:$0xff]
    %v4232 = vld [vmem:[#allocation3 + $0x1320] sm:$0xff]
    %v4233 = vld [vmem:[#allocation3 + $0x1328] sm:$0xff]
    %v4234 = vld [vmem:[#allocation3 + $0x1330] sm:$0xff]
    %v4235 = vld [vmem:[#allocation3 + $0x1338] sm:$0xff]
    %v4236 = vld [vmem:[#allocation3 + $0x1340] sm:$0xff]
    %v4237 = vld [vmem:[#allocation3 + $0x1348] sm:$0xff]
    %v4238 = vld [vmem:[#allocation3 + $0x1350] sm:$0xff]
    %v4239 = vld [vmem:[#allocation3 + $0x1358] sm:$0xff]
    %v4240 = vld [vmem:[#allocation3 + $0x1360] sm:$0xff]
    %v4241 = vld [vmem:[#allocation3 + $0x1368] sm:$0xff]
    %v4242 = vld [vmem:[#allocation3 + $0x1370] sm:$0xff]
    %v4243 = vld [vmem:[#allocation3 + $0x1378] sm:$0xff]
    %v4244 = vld [vmem:[#allocation3 + $0x1380] sm:$0xff]
    %v4245 = vld [vmem:[#allocation3 + $0x1388] sm:$0xff]
    %v4246 = vld [vmem:[#allocation3 + $0x1390] sm:$0xff]
    %v4247 = vld [vmem:[#allocation3 + $0x1398] sm:$0xff]
    %v4248 = vld [vmem:[#allocation3 + $0x13a0] sm:$0xff]
    %v4249 = vld [vmem:[#allocation3 + $0x13a8] sm:$0xff]
    %v4250 = vld [vmem:[#allocation3 + $0x13b0] sm:$0xff]
    %v4251 = vld [vmem:[#allocation3 + $0x13b8] sm:$0xff]
    %v4252 = vld [vmem:[#allocation3 + $0x13c0] sm:$0xff]
    %v4253 = vld [vmem:[#allocation3 + $0x13c8] sm:$0xff]
    %v4254 = vld [vmem:[#allocation3 + $0x13d0] sm:$0xff]
    %v4255 = vld [vmem:[#allocation3 + $0x13d8] sm:$0xff]
    %v4256 = vld [vmem:[#allocation3 + $0x13e0] sm:$0xff]
    %v4257 = vld [vmem:[#allocation3 + $0x13e8] sm:$0xff]
    %v4258 = vld [vmem:[#allocation3 + $0x13f0] sm:$0xff]
    %v4259 = vld [vmem:[#allocation3 + $0x13f8] sm:$0xff]
    %v4260 = vld [vmem:[#allocation3 + $0x1400] sm:$0xff]
    %v4261 = vld [vmem:[#allocation3 + $0x1408] sm:$0xff]
    %v4262 = vld [vmem:[#allocation3 + $0x1410] sm:$0xff]
    %v4263 = vld [vmem:[#allocation3 + $0x1418] sm:$0xff]
    %v4264 = vld [vmem:[#allocation3 + $0x1420] sm:$0xff]
    %v4265 = vld [vmem:[#allocation3 + $0x1428] sm:$0xff]
    %v4266 = vld [vmem:[#allocation3 + $0x1430] sm:$0xff]
    %v4267 = vld [vmem:[#allocation3 + $0x1438] sm:$0xff]
    %v4268 = vld [vmem:[#allocation3 + $0x1440] sm:$0xff]
    %v4269 = vld [vmem:[#allocation3 + $0x1448] sm:$0xff]
    %v4270 = vld [vmem:[#allocation3 + $0x1450] sm:$0xff]
    %v4271 = vld [vmem:[#allocation3 + $0x1458] sm:$0xff]
    %v4272 = vld [vmem:[#allocation3 + $0x1460] sm:$0xff]
    %v4273 = vld [vmem:[#allocation3 + $0x1468] sm:$0xff]
    %v4274 = vld [vmem:[#allocation3 + $0x1470] sm:$0xff]
    %v4275 = vld [vmem:[#allocation3 + $0x1478] sm:$0xff]
    %v4276 = vld [vmem:[#allocation3 + $0x1480] sm:$0xff]
    %v4277 = vld [vmem:[#allocation3 + $0x1488] sm:$0xff]
    %v4278 = vld [vmem:[#allocation3 + $0x1490] sm:$0xff]
    %v4279 = vld [vmem:[#allocation3 + $0x1498] sm:$0xff]
    %v4280 = vld [vmem:[#allocation3 + $0x14a0] sm:$0xff]
    %v4281 = vld [vmem:[#allocation3 + $0x14a8] sm:$0xff]
    %v4282 = vld [vmem:[#allocation3 + $0x14b0] sm:$0xff]
    %v4283 = vld [vmem:[#allocation3 + $0x14b8] sm:$0xff]
    %v4284 = vld [vmem:[#allocation3 + $0x14c0] sm:$0xff]
    %v4285 = vld [vmem:[#allocation3 + $0x14c8] sm:$0xff]
    %v4286 = vld [vmem:[#allocation3 + $0x14d0] sm:$0xff]
    %v4287 = vld [vmem:[#allocation3 + $0x14d8] sm:$0xff]
    %v4288 = vld [vmem:[#allocation3 + $0x14e0] sm:$0xff]
    %v4289 = vld [vmem:[#allocation3 + $0x14e8] sm:$0xff]
    %v4290 = vld [vmem:[#allocation3 + $0x14f0] sm:$0xff]
    %v4291 = vld [vmem:[#allocation3 + $0x14f8] sm:$0xff]
    %v4292 = vld [vmem:[#allocation3 + $0x1500] sm:$0xff]
    %v4293 = vld [vmem:[#allocation3 + $0x1508] sm:$0xff]
    %v4294 = vld [vmem:[#allocation3 + $0x1510] sm:$0xff]
    %v4295 = vld [vmem:[#allocation3 + $0x1518] sm:$0xff]
    %v4296 = vld [vmem:[#allocation3 + $0x1520] sm:$0xff]
    %v4297 = vld [vmem:[#allocation3 + $0x1528] sm:$0xff]
    %v4298 = vld [vmem:[#allocation3 + $0x1530] sm:$0xff]
    %v4299 = vld [vmem:[#allocation3 + $0x1538] sm:$0xff]
    %v4300 = vld [vmem:[#allocation3 + $0x1540] sm:$0xff]
    %v4301 = vld [vmem:[#allocation3 + $0x1548] sm:$0xff]
    %v4302 = vld [vmem:[#allocation3 + $0x1550] sm:$0xff]
    %v4303 = vld [vmem:[#allocation3 + $0x1558] sm:$0xff]
    %v4304 = vld [vmem:[#allocation3 + $0x1560] sm:$0xff]
    %v4305 = vld [vmem:[#allocation3 + $0x1568] sm:$0xff]
    %v4306 = vld [vmem:[#allocation3 + $0x1570] sm:$0xff]
    %v4307 = vld [vmem:[#allocation3 + $0x1578] sm:$0xff]
    %v4308 = vld [vmem:[#allocation3 + $0x1580] sm:$0xff]
    %v4309 = vld [vmem:[#allocation3 + $0x1588] sm:$0xff]
    %v4310 = vld [vmem:[#allocation3 + $0x1590] sm:$0xff]
    %v4311 = vld [vmem:[#allocation3 + $0x1598] sm:$0xff]
    %v4312 = vld [vmem:[#allocation3 + $0x15a0] sm:$0xff]
    %v4313 = vld [vmem:[#allocation3 + $0x15a8] sm:$0xff]
    %v4314 = vld [vmem:[#allocation3 + $0x15b0] sm:$0xff]
    %v4315 = vld [vmem:[#allocation3 + $0x15b8] sm:$0xff]
    %v4316 = vld [vmem:[#allocation3 + $0x15c0] sm:$0xff]
    %v4317 = vld [vmem:[#allocation3 + $0x15c8] sm:$0xff]
    %v4318 = vld [vmem:[#allocation3 + $0x15d0] sm:$0xff]
    %v4319 = vld [vmem:[#allocation3 + $0x15d8] sm:$0xff]
    %v4320 = vld [vmem:[#allocation3 + $0x15e0] sm:$0xff]
    %v4321 = vld [vmem:[#allocation3 + $0x15e8] sm:$0xff]
    %v4322 = vld [vmem:[#allocation3 + $0x15f0] sm:$0xff]
    %v4323 = vld [vmem:[#allocation3 + $0x15f8] sm:$0xff]
    %v4324 = vld [vmem:[#allocation3 + $0x1600] sm:$0xff]
    %v4325 = vld [vmem:[#allocation3 + $0x1608] sm:$0xff]
    %v4326 = vld [vmem:[#allocation3 + $0x1610] sm:$0xff]
    %v4327 = vld [vmem:[#allocation3 + $0x1618] sm:$0xff]
    %v4328 = vld [vmem:[#allocation3 + $0x1620] sm:$0xff]
    %v4329 = vld [vmem:[#allocation3 + $0x1628] sm:$0xff]
    %v4330 = vld [vmem:[#allocation3 + $0x1630] sm:$0xff]
    %v4331 = vld [vmem:[#allocation3 + $0x1638] sm:$0xff]
    %v4332 = vld [vmem:[#allocation3 + $0x1640] sm:$0xff]
    %v4333 = vld [vmem:[#allocation3 + $0x1648] sm:$0xff]
    %v4334 = vld [vmem:[#allocation3 + $0x1650] sm:$0xff]
    %v4335 = vld [vmem:[#allocation3 + $0x1658] sm:$0xff]
    %v4336 = vld [vmem:[#allocation3 + $0x1660] sm:$0xff]
    %v4337 = vld [vmem:[#allocation3 + $0x1668] sm:$0xff]
    %v4338 = vld [vmem:[#allocation3 + $0x1670] sm:$0xff]
    %v4339 = vld [vmem:[#allocation3 + $0x1678] sm:$0xff]
    %v4340 = vld [vmem:[#allocation3 + $0x1680] sm:$0xff]
    %v4341 = vld [vmem:[#allocation3 + $0x1688] sm:$0xff]
    %v4342 = vld [vmem:[#allocation3 + $0x1690] sm:$0xff]
    %v4343 = vld [vmem:[#allocation3 + $0x1698] sm:$0xff]
    %v4344 = vld [vmem:[#allocation3 + $0x16a0] sm:$0xff]
    %v4345 = vld [vmem:[#allocation3 + $0x16a8] sm:$0xff]
    %v4346 = vld [vmem:[#allocation3 + $0x16b0] sm:$0xff]
    %v4347 = vld [vmem:[#allocation3 + $0x16b8] sm:$0xff]
    %v4348 = vld [vmem:[#allocation3 + $0x16c0] sm:$0xff]
    %v4349 = vld [vmem:[#allocation3 + $0x16c8] sm:$0xff]
    %v4350 = vld [vmem:[#allocation3 + $0x16d0] sm:$0xff]
    %v4351 = vld [vmem:[#allocation3 + $0x16d8] sm:$0xff]
    %v4352 = vld [vmem:[#allocation3 + $0x16e0] sm:$0xff]
    %v4353 = vld [vmem:[#allocation3 + $0x16e8] sm:$0xff]
    %v4354 = vld [vmem:[#allocation3 + $0x16f0] sm:$0xff]
    %v4355 = vld [vmem:[#allocation3 + $0x16f8] sm:$0xff]
    %v4356 = vld [vmem:[#allocation3 + $0x1700] sm:$0xff]
    %v4357 = vld [vmem:[#allocation3 + $0x1708] sm:$0xff]
    %v4358 = vld [vmem:[#allocation3 + $0x1710] sm:$0xff]
    %v4359 = vld [vmem:[#allocation3 + $0x1718] sm:$0xff]
    %v4360 = vld [vmem:[#allocation3 + $0x1720] sm:$0xff]
    %v4361 = vld [vmem:[#allocation3 + $0x1728] sm:$0xff]
    %v4362 = vld [vmem:[#allocation3 + $0x1730] sm:$0xff]
    %v4363 = vld [vmem:[#allocation3 + $0x1738] sm:$0xff]
    %v4364 = vld [vmem:[#allocation3 + $0x1740] sm:$0xff]
    %v4365 = vld [vmem:[#allocation3 + $0x1748] sm:$0xff]
    %v4366 = vld [vmem:[#allocation3 + $0x1750] sm:$0xff]
    %v4367 = vld [vmem:[#allocation3 + $0x1758] sm:$0xff]
    %v4368 = vld [vmem:[#allocation3 + $0x1760] sm:$0xff]
    %v4369 = vld [vmem:[#allocation3 + $0x1768] sm:$0xff]
    %v4370 = vld [vmem:[#allocation3 + $0x1770] sm:$0xff]
    %v4371 = vld [vmem:[#allocation3 + $0x1778] sm:$0xff]
    %v4372 = vld [vmem:[#allocation3 + $0x1780] sm:$0xff]
    %v4373 = vld [vmem:[#allocation3 + $0x1788] sm:$0xff]
    %v4374 = vld [vmem:[#allocation3 + $0x1790] sm:$0xff]
    %v4375 = vld [vmem:[#allocation3 + $0x1798] sm:$0xff]
    %v4376 = vld [vmem:[#allocation3 + $0x17a0] sm:$0xff]
    %v4377 = vld [vmem:[#allocation3 + $0x17a8] sm:$0xff]
    %v4378 = vld [vmem:[#allocation3 + $0x17b0] sm:$0xff]
    %v4379 = vld [vmem:[#allocation3 + $0x17b8] sm:$0xff]
    %v4380 = vld [vmem:[#allocation3 + $0x17c0] sm:$0xff]
    %v4381 = vld [vmem:[#allocation3 + $0x17c8] sm:$0xff]
    %v4382 = vld [vmem:[#allocation3 + $0x17d0] sm:$0xff]
    %v4383 = vld [vmem:[#allocation3 + $0x17d8] sm:$0xff]
    %v4384 = vld [vmem:[#allocation3 + $0x17e0] sm:$0xff]
    %v4385 = vld [vmem:[#allocation3 + $0x17e8] sm:$0xff]
    %v4386 = vld [vmem:[#allocation3 + $0x17f0] sm:$0xff]
    %v4387 = vld [vmem:[#allocation3 + $0x17f8] sm:$0xff]
    %v4388 = vld [vmem:[#allocation3 + $0x1800] sm:$0xff]
    %v4389 = vld [vmem:[#allocation3 + $0x1808] sm:$0xff]
    %v4390 = vld [vmem:[#allocation3 + $0x1810] sm:$0xff]
    %v4391 = vld [vmem:[#allocation3 + $0x1818] sm:$0xff]
    %v4392 = vld [vmem:[#allocation3 + $0x1820] sm:$0xff]
    %v4393 = vld [vmem:[#allocation3 + $0x1828] sm:$0xff]
    %v4394 = vld [vmem:[#allocation3 + $0x1830] sm:$0xff]
    %v4395 = vld [vmem:[#allocation3 + $0x1838] sm:$0xff]
    %v4396 = vld [vmem:[#allocation3 + $0x1840] sm:$0xff]
    %v4397 = vld [vmem:[#allocation3 + $0x1848] sm:$0xff]
    %v4398 = vld [vmem:[#allocation3 + $0x1850] sm:$0xff]
    %v4399 = vld [vmem:[#allocation3 + $0x1858] sm:$0xff]
    %v4400 = vld [vmem:[#allocation3 + $0x1860] sm:$0xff]
    %v4401 = vld [vmem:[#allocation3 + $0x1868] sm:$0xff]
    %v4402 = vld [vmem:[#allocation3 + $0x1870] sm:$0xff]
    %v4403 = vld [vmem:[#allocation3 + $0x1878] sm:$0xff]
    %v4404 = vld [vmem:[#allocation3 + $0x1880] sm:$0xff]
    %v4405 = vld [vmem:[#allocation3 + $0x1888] sm:$0xff]
    %v4406 = vld [vmem:[#allocation3 + $0x1890] sm:$0xff]
    %v4407 = vld [vmem:[#allocation3 + $0x1898] sm:$0xff]
    %v4408 = vld [vmem:[#allocation3 + $0x18a0] sm:$0xff]
    %v4409 = vld [vmem:[#allocation3 + $0x18a8] sm:$0xff]
    %v4410 = vld [vmem:[#allocation3 + $0x18b0] sm:$0xff]
    %v4411 = vld [vmem:[#allocation3 + $0x18b8] sm:$0xff]
    %v4412 = vld [vmem:[#allocation3 + $0x18c0] sm:$0xff]
    %v4413 = vld [vmem:[#allocation3 + $0x18c8] sm:$0xff]
    %v4414 = vld [vmem:[#allocation3 + $0x18d0] sm:$0xff]
    %v4415 = vld [vmem:[#allocation3 + $0x18d8] sm:$0xff]
    %v4416 = vld [vmem:[#allocation3 + $0x18e0] sm:$0xff]
    %v4417 = vld [vmem:[#allocation3 + $0x18e8] sm:$0xff]
    %v4418 = vld [vmem:[#allocation3 + $0x18f0] sm:$0xff]
    %v4419 = vld [vmem:[#allocation3 + $0x18f8] sm:$0xff]
    %v4420 = vld [vmem:[#allocation8] sm:$0xff]
    %v4421 = vld [vmem:[#allocation8 + $0x8] sm:$0x3]
    %v4424 = vlaneseq
    %v4425 = vshrl.u32 %v4424, 7
    %v4426 = vsub.s32 0, %v4425
    %v4427 = vrot.slane %v4420, %v4426
    %v4428 = vlaneseq
    %v4429 = vshrl.u32 %v4428, 7
    %v4430 = vsub.s32 1, %v4429
    %v4431 = vrot.slane %v4420, %v4430
    %v4432 = vlaneseq
    %v4433 = vshrl.u32 %v4432, 7
    %v4434 = vsub.s32 2, %v4433
    %v4435 = vrot.slane %v4420, %v4434
    %v4436 = vlaneseq
    %v4437 = vshrl.u32 %v4436, 7
    %v4438 = vsub.s32 3, %v4437
    %v4439 = vrot.slane %v4420, %v4438
    %v4440 = vlaneseq
    %v4441 = vshrl.u32 %v4440, 7
    %v4442 = vsub.s32 4, %v4441
    %v4443 = vrot.slane %v4420, %v4442
    %v4444 = vlaneseq
    %v4445 = vshrl.u32 %v4444, 7
    %v4446 = vsub.s32 5, %v4445
    %v4447 = vrot.slane %v4420, %v4446
    %v4448 = vlaneseq
    %v4449 = vshrl.u32 %v4448, 7
    %v4450 = vsub.s32 6, %v4449
    %v4451 = vrot.slane %v4420, %v4450
    %v4452 = vlaneseq
    %v4453 = vshrl.u32 %v4452, 7
    %v4454 = vsub.s32 7, %v4453
    %v4455 = vrot.slane %v4420, %v4454
    %v4456 = vlaneseq
    %v4457 = vshrl.u32 %v4456, 7
    %v4458 = vsub.s32 0, %v4457
    %v4459 = vrot.slane %v4421, %v4458
    %v4460 = vlaneseq
    %v4461 = vshrl.u32 %v4460, 7
    %v4462 = vsub.s32 1, %v4461
    %v4463 = vrot.slane %v4421, %v4462
    %4474 = vmatprep.subr.bf16.mxu0 %v3621
    %4475 = vmatpush1.bf16.msra.mxu0 %v3620
    %4476 = vmatprep.subr.bf16.mxu0 %v3631
    %4477 = vmatpush1.bf16.msra.mxu0 %v3630
    %4478 = vmatprep.subr.bf16.mxu0 %v3641
    %4479 = vmatpush1.bf16.msra.mxu0 %v3640
    %4480 = vmatprep.subr.bf16.mxu0 %v3651
    %4481 = vmatpush1.bf16.msra.mxu0 %v3650
    %4482 = vmatprep.subr.bf16.mxu0 %v3661
    %4483 = vmatpush1.bf16.msra.mxu0 %v3660
    %4484 = vmatprep.subr.bf16.mxu0 %v3671
    %4485 = vmatpush1.bf16.msra.mxu0 %v3670
    %4486 = vmatprep.subr.bf16.mxu0 %v3681
    %4487 = vmatpush1.bf16.msra.mxu0 %v3680
    %4488 = vmatprep.subr.bf16.mxu0 %v3691
    %4489 = vmatpush1.bf16.msra.mxu0 %v3690
    %4490 = vmatprep.subr.bf16.mxu0 %v3701
    %4491 = vmatpush1.bf16.msra.mxu0 %v3700
    %4492 = vmatprep.subr.bf16.mxu0 %v3711
    %4493 = vmatpush1.bf16.msra.mxu0 %v3710
    %4494 = vmatprep.subr.bf16.mxu0 %v3721
    %4495 = vmatpush1.bf16.msra.mxu0 %v3720
    %4496 = vmatprep.subr.bf16.mxu0 %v3731
    %4497 = vmatpush1.bf16.msra.mxu0 %v3730
    %4498 = vmatprep.subr.bf16.mxu0 %v3741
    %4499 = vmatpush1.bf16.msra.mxu0 %v3740
    %4500 = vmatprep.subr.bf16.mxu0 %v3751
    %4501 = vmatpush1.bf16.msra.mxu0 %v3750
    %4502 = vmatprep.subr.bf16.mxu0 %v3761
    %4503 = vmatpush1.bf16.msra.mxu0 %v3760
    %4504 = vmatprep.subr.bf16.mxu0 %v3771
    %4505 = vmatpush1.bf16.msra.mxu0 %v3770
    %4506 = vmatprep.mubr.bf16.mxu0 %v3533
    %4507 = vmatmul.mubr.bf16.gmra.mrb[0].mxu0 %v3532
    %v4508 = vpop.f32.mrb[0].mxu0
    %v4509 = vadd.f32 %v4427, %v4508
    %v4510 = vpop.f32.mrb[0].mxu0
    %v4511 = vadd.f32 %v4431, %v4510
    %v4512 = vpop.f32.mrb[0].mxu0
    %v4513 = vadd.f32 %v4427, %v4512
    %v4514 = vpop.f32.mrb[0].mxu0
    %v4515 = vadd.f32 %v4431, %v4514
    %4516 = vmatprep.mubr.bf16.mxu0 %v3543
    %4517 = vmatmul.mubr.bf16.gmra.mrb[0].mxu0 %v3542
    %v4518 = vpop.f32.mrb[0].mxu0
    %v4519 = vadd.f32 %v4427, %v4518
    %v4520 = vpop.f32.mrb[0].mxu0
    %v4521 = vadd.f32 %v4431, %v4520
    %v4522 = vpop.f32.mrb[0].mxu0
    %v4523 = vadd.f32 %v4427, %v4522
    %v4524 = vpop.f32.mrb[0].mxu0
    %v4525 = vadd.f32 %v4431, %v4524
    %4526 = vmatprep.mubr.bf16.mxu0 %v3553
    %4527 = vmatmul.mubr.bf16.gmra.mrb[0].mxu0 %v3552
    %v4528 = vpop.f32.mrb[0].mxu0
    %v4529 = vadd.f32 %v4427, %v4528
    %v4530 = vpop.f32.mrb[0].mxu0
    %v4531 = vadd.f32 %v4431, %v4530
    %v4532 = vpop.f32.mrb[0].mxu0
    %v4533 = vadd.f32 %v4427, %v4532
    %v4534 = vpop.f32.mrb[0].mxu0
    %v4535 = vadd.f32 %v4431, %v4534
    %4536 = vmatprep.mubr.bf16.mxu0 %v3563
    %4537 = vmatmul.mubr.bf16.gmra.mrb[0].mxu0 %v3562
    %v4538 = vpop.f32.mrb[0].mxu0
    %v4539 = vadd.f32 %v4427, %v4538
    %v4540 = vpop.f32.mrb[0].mxu0
    %v4541 = vadd.f32 %v4431, %v4540
    %v4542 = vpop.f32.mrb[0].mxu0
    %v4543 = vadd.f32 %v4427, %v4542
    %v4544 = vpop.f32.mrb[0].mxu0
    %v4545 = vadd.f32 %v4431, %v4544
    %4546 = vmatprep.mubr.bf16.mxu0 %v3573
    %4547 = vmatmul.mubr.bf16.gmra.mrb[0].mxu0 %v3572
    %v4548 = vpop.f32.mrb[0].mxu0
    %v4549 = vadd.f32 %v4427, %v4548
    %v4550 = vpop.f32.mrb[0].mxu0
    %v4551 = vadd.f32 %v4431, %v4550
    %v4552 = vpop.f32.mrb[0].mxu0
    %v4553 = vadd.f32 %v4427, %v4552
    %v4554 = vpop.f32.mrb[0].mxu0
    %v4555 = vadd.f32 %v4431, %v4554
    %4556 = vmatprep.mubr.bf16.mxu0 %v3583
    %4557 = vmatmul.mubr.bf16.gmra.mrb[0].mxu0 %v3582
    %v4558 = vpop.f32.mrb[0].mxu0
    %v4559 = vadd.f32 %v4427, %v4558
    %v4560 = vpop.f32.mrb[0].mxu0
    %v4561 = vadd.f32 %v4431, %v4560
    %v4562 = vpop.f32.mrb[0].mxu0
    %v4563 = vadd.f32 %v4427, %v4562
    %v4564 = vpop.f32.mrb[0].mxu0
    %v4565 = vadd.f32 %v4431, %v4564
    %4566 = vmatprep.mubr.bf16.mxu0 %v3593
    %4567 = vmatmul.mubr.bf16.gmra.mrb[0].mxu0 %v3592
    %v4568 = vpop.f32.mrb[0].mxu0
    %v4569 = vadd.f32 %v4427, %v4568
    %v4570 = vpop.f32.mrb[0].mxu0
    %v4571 = vadd.f32 %v4431, %v4570
    %v4572 = vpop.f32.mrb[0].mxu0
    %v4573 = vadd.f32 %v4427, %v4572
    %v4574 = vpop.f32.mrb[0].mxu0
    %v4575 = vadd.f32 %v4431, %v4574
    %4576 = vmatprep.mubr.bf16.mxu0 %v3603
    %4577 = vmatmul.mubr.bf16.gmra.mrb[0].mxu0 %v3602
    %v4578 = vpop.f32.mrb[0].mxu0
    %v4579 = vadd.f32 %v4427, %v4578
    %v4580 = vpop.f32.mrb[0].mxu0
    %v4581 = vadd.f32 %v4431, %v4580
    %v4582 = vpop.f32.mrb[0].mxu0
    %v4583 = vadd.f32 %v4427, %v4582
    %v4584 = vpop.f32.mrb[0].mxu0
    %v4585 = vadd.f32 %v4431, %v4584
    %4586 = vdwg.mxu0
    %4587 = vmatprep.subr.bf16.mxu0 %v3781
    %4588 = vmatpush1.bf16.msra.mxu0 %v3780
    %4589 = vmatprep.subr.bf16.mxu0 %v3791
    %4590 = vmatpush1.bf16.msra.mxu0 %v3790
    %4591 = vmatprep.subr.bf16.mxu0 %v3801
    %4592 = vmatpush1.bf16.msra.mxu0 %v3800
    %4593 = vmatprep.subr.bf16.mxu0 %v3811
    %4594 = vmatpush1.bf16.msra.mxu0 %v3810
    %4595 = vmatprep.subr.bf16.mxu0 %v3821
    %4596 = vmatpush1.bf16.msra.mxu0 %v3820
    %4597 = vmatprep.subr.bf16.mxu0 %v3831
    %4598 = vmatpush1.bf16.msra.mxu0 %v3830
    %4599 = vmatprep.subr.bf16.mxu0 %v3841
    %4600 = vmatpush1.bf16.msra.mxu0 %v3840
    %4601 = vmatprep.subr.bf16.mxu0 %v3851
    %4602 = vmatpush1.bf16.msra.mxu0 %v3850
    %4603 = vmatprep.subr.bf16.mxu0 %v3861
    %4604 = vmatpush1.bf16.msra.mxu0 %v3860
    %4605 = vmatprep.subr.bf16.mxu0 %v3871
    %4606 = vmatpush1.bf16.msra.mxu0 %v3870
    %4607 = vmatprep.subr.bf16.mxu0 %v3881
    %4608 = vmatpush1.bf16.msra.mxu0 %v3880
    %4609 = vmatprep.subr.bf16.mxu0 %v3891
    %4610 = vmatpush1.bf16.msra.mxu0 %v3890
    %4611 = vmatprep.subr.bf16.mxu0 %v3901
    %4612 = vmatpush1.bf16.msra.mxu0 %v3900
    %4613 = vmatprep.subr.bf16.mxu0 %v3911
    %4614 = vmatpush1.bf16.msra.mxu0 %v3910
    %4615 = vmatprep.subr.bf16.mxu0 %v3921
    %4616 = vmatpush1.bf16.msra.mxu0 %v3920
    %4617 = vmatprep.subr.bf16.mxu0 %v3931
    %4618 = vmatpush1.bf16.msra.mxu0 %v3930
    %4619 = vmatprep.mubr.bf16.mxu0 %v3535
    %4620 = vmatmul.mubr.bf16.gmra.mrb[0].mxu0 %v3534
    %v4621 = vpop.f32.mrb[0].mxu0
    %v4622 = vadd.f32 %v4509, %v4621
    %v4623 = vpop.f32.mrb[0].mxu0
    %v4624 = vadd.f32 %v4511, %v4623
    %v4625 = vpop.f32.mrb[0].mxu0
    %v4626 = vadd.f32 %v4513, %v4625
    %v4627 = vpop.f32.mrb[0].mxu0
    %v4628 = vadd.f32 %v4515, %v4627
    %4629 = vmatprep.mubr.bf16.mxu0 %v3545
    %4630 = vmatmul.mubr.bf16.gmra.mrb[0].mxu0 %v3544
    %v4631 = vpop.f32.mrb[0].mxu0
    %v4632 = vadd.f32 %v4519, %v4631
    %v4633 = vpop.f32.mrb[0].mxu0
    %v4634 = vadd.f32 %v4521, %v4633
    %v4635 = vpop.f32.mrb[0].mxu0
    %v4636 = vadd.f32 %v4523, %v4635
    %v4637 = vpop.f32.mrb[0].mxu0
    %v4638 = vadd.f32 %v4525, %v4637
    %4639 = vmatprep.mubr.bf16.mxu0 %v3555
    %4640 = vmatmul.mubr.bf16.gmra.mrb[0].mxu0 %v3554
    %v4641 = vpop.f32.mrb[0].mxu0
    %v4642 = vadd.f32 %v4529, %v4641
    %v4643 = vpop.f32.mrb[0].mxu0
    %v4644 = vadd.f32 %v4531, %v4643
    %v4645 = vpop.f32.mrb[0].mxu0
    %v4646 = vadd.f32 %v4533, %v4645
    %v4647 = vpop.f32.mrb[0].mxu0
    %v4648 = vadd.f32 %v4535, %v4647
    %4649 = vmatprep.mubr.bf16.mxu0 %v3565
    %4650 = vmatmul.mubr.bf16.gmra.mrb[0].mxu0 %v3564
    %v4651 = vpop.f32.mrb[0].mxu0
    %v4652 = vadd.f32 %v4539, %v4651
    %v4653 = vpop.f32.mrb[0].mxu0
    %v4654 = vadd.f32 %v4541, %v4653
    %v4655 = vpop.f32.mrb[0].mxu0
    %v4656 = vadd.f32 %v4543, %v4655
    %v4657 = vpop.f32.mrb[0].mxu0
    %v4658 = vadd.f32 %v4545, %v4657
    %4659 = vmatprep.mubr.bf16.mxu0 %v3575
    %4660 = vmatmul.mubr.bf16.gmra.mrb[0].mxu0 %v3574
    %v4661 = vpop.f32.mrb[0].mxu0
    %v4662 = vadd.f32 %v4549, %v4661
    %v4663 = vpop.f32.mrb[0].mxu0
    %v4664 = vadd.f32 %v4551, %v4663
    %v4665 = vpop.f32.mrb[0].mxu0
    %v4666 = vadd.f32 %v4553, %v4665
    %v4667 = vpop.f32.mrb[0].mxu0
    %v4668 = vadd.f32 %v4555, %v4667
    %4669 = vmatprep.mubr.bf16.mxu0 %v3585
    %4670 = vmatmul.mubr.bf16.gmra.mrb[0].mxu0 %v3584
    %v4671 = vpop.f32.mrb[0].mxu0
    %v4672 = vadd.f32 %v4559, %v4671
    %v4673 = vpop.f32.mrb[0].mxu0
    %v4674 = vadd.f32 %v4561, %v4673
    %v4675 = vpop.f32.mrb[0].mxu0
    %v4676 = vadd.f32 %v4563, %v4675
    %v4677 = vpop.f32.mrb[0].mxu0
    %v4678 = vadd.f32 %v4565, %v4677
    %4679 = vmatprep.mubr.bf16.mxu0 %v3595
    %4680 = vmatmul.mubr.bf16.gmra.mrb[0].mxu0 %v3594
    %v4681 = vpop.f32.mrb[0].mxu0
    %v4682 = vadd.f32 %v4569, %v4681
    %v4683 = vpop.f32.mrb[0].mxu0
    %v4684 = vadd.f32 %v4571, %v4683
    %v4685 = vpop.f32.mrb[0].mxu0
    %v4686 = vadd.f32 %v4573, %v4685
    %v4687 = vpop.f32.mrb[0].mxu0
    %v4688 = vadd.f32 %v4575, %v4687
    %4689 = vmatprep.mubr.bf16.mxu0 %v3605
    %4690 = vmatmul.mubr.bf16.gmra.mrb[0].mxu0 %v3604
    %v4691 = vpop.f32.mrb[0].mxu0
    %v4692 = vadd.f32 %v4579, %v4691
    %v4693 = vpop.f32.mrb[0].mxu0
    %v4694 = vadd.f32 %v4581, %v4693
    %v4695 = vpop.f32.mrb[0].mxu0
    %v4696 = vadd.f32 %v4583, %v4695
    %v4697 = vpop.f32.mrb[0].mxu0
    %v4698 = vadd.f32 %v4585, %v4697
    %4699 = vdwg.mxu0
    %4700 = vmatprep.subr.bf16.mxu0 %v3941
    %4701 = vmatpush1.bf16.msra.mxu0 %v3940
    %4702 = vmatprep.subr.bf16.mxu0 %v3951
    %4703 = vmatpush1.bf16.msra.mxu0 %v3950
    %4704 = vmatprep.subr.bf16.mxu0 %v3961
    %4705 = vmatpush1.bf16.msra.mxu0 %v3960
    %4706 = vmatprep.subr.bf16.mxu0 %v3971
    %4707 = vmatpush1.bf16.msra.mxu0 %v3970
    %4708 = vmatprep.subr.bf16.mxu0 %v3981
    %4709 = vmatpush1.bf16.msra.mxu0 %v3980
    %4710 = vmatprep.subr.bf16.mxu0 %v3991
    %4711 = vmatpush1.bf16.msra.mxu0 %v3990
    %4712 = vmatprep.subr.bf16.mxu0 %v4001
    %4713 = vmatpush1.bf16.msra.mxu0 %v4000
    %4714 = vmatprep.subr.bf16.mxu0 %v4011
    %4715 = vmatpush1.bf16.msra.mxu0 %v4010
    %4716 = vmatprep.subr.bf16.mxu0 %v4021
    %4717 = vmatpush1.bf16.msra.mxu0 %v4020
    %4718 = vmatprep.subr.bf16.mxu0 %v4031
    %4719 = vmatpush1.bf16.msra.mxu0 %v4030
    %4720 = vmatprep.subr.bf16.mxu0 %v4041
    %4721 = vmatpush1.bf16.msra.mxu0 %v4040
    %4722 = vmatprep.subr.bf16.mxu0 %v4051
    %4723 = vmatpush1.bf16.msra.mxu0 %v4050
    %4724 = vmatprep.subr.bf16.mxu0 %v4061
    %4725 = vmatpush1.bf16.msra.mxu0 %v4060
    %4726 = vmatprep.subr.bf16.mxu0 %v4071
    %4727 = vmatpush1.bf16.msra.mxu0 %v4070
    %4728 = vmatprep.subr.bf16.mxu0 %v4081
    %4729 = vmatpush1.bf16.msra.mxu0 %v4080
    %4730 = vmatprep.subr.bf16.mxu0 %v4091
    %4731 = vmatpush1.bf16.msra.mxu0 %v4090
    %4732 = vmatprep.mubr.bf16.mxu0 %v3537
    %4733 = vmatmul.mubr.bf16.gmra.mrb[0].mxu0 %v3536
    %v4734 = vpop.f32.mrb[0].mxu0
    %v4735 = vadd.f32 %v4622, %v4734
    %v4736 = vpop.f32.mrb[0].mxu0
    %v4737 = vadd.f32 %v4624, %v4736
    %v4738 = vpop.f32.mrb[0].mxu0
    %v4739 = vadd.f32 %v4626, %v4738
    %v4740 = vpop.f32.mrb[0].mxu0
    %v4741 = vadd.f32 %v4628, %v4740
    %4742 = vmatprep.mubr.bf16.mxu0 %v3547
    %4743 = vmatmul.mubr.bf16.gmra.mrb[0].mxu0 %v3546
    %v4744 = vpop.f32.mrb[0].mxu0
    %v4745 = vadd.f32 %v4632, %v4744
    %v4746 = vpop.f32.mrb[0].mxu0
    %v4747 = vadd.f32 %v4634, %v4746
    %v4748 = vpop.f32.mrb[0].mxu0
    %v4749 = vadd.f32 %v4636, %v4748
    %v4750 = vpop.f32.mrb[0].mxu0
    %v4751 = vadd.f32 %v4638, %v4750
    %4752 = vmatprep.mubr.bf16.mxu0 %v3557
    %4753 = vmatmul.mubr.bf16.gmra.mrb[0].mxu0 %v3556
    %v4754 = vpop.f32.mrb[0].mxu0
    %v4755 = vadd.f32 %v4642, %v4754
    %v4756 = vpop.f32.mrb[0].mxu0
    %v4757 = vadd.f32 %v4644, %v4756
    %v4758 = vpop.f32.mrb[0].mxu0
    %v4759 = vadd.f32 %v4646, %v4758
    %v4760 = vpop.f32.mrb[0].mxu0
    %v4761 = vadd.f32 %v4648, %v4760
    %4762 = vmatprep.mubr.bf16.mxu0 %v3567
    %4763 = vmatmul.mubr.bf16.gmra.mrb[0].mxu0 %v3566
    %v4764 = vpop.f32.mrb[0].mxu0
    %v4765 = vadd.f32 %v4652, %v4764
    %v4766 = vpop.f32.mrb[0].mxu0
    %v4767 = vadd.f32 %v4654, %v4766
    %v4768 = vpop.f32.mrb[0].mxu0
    %v4769 = vadd.f32 %v4656, %v4768
    %v4770 = vpop.f32.mrb[0].mxu0
    %v4771 = vadd.f32 %v4658, %v4770
    %4772 = vmatprep.mubr.bf16.mxu0 %v3577
    %4773 = vmatmul.mubr.bf16.gmra.mrb[0].mxu0 %v3576
    %v4774 = vpop.f32.mrb[0].mxu0
    %v4775 = vadd.f32 %v4662, %v4774
    %v4776 = vpop.f32.mrb[0].mxu0
    %v4777 = vadd.f32 %v4664, %v4776
    %v4778 = vpop.f32.mrb[0].mxu0
    %v4779 = vadd.f32 %v4666, %v4778
    %v4780 = vpop.f32.mrb[0].mxu0
    %v4781 = vadd.f32 %v4668, %v4780
    %4782 = vmatprep.mubr.bf16.mxu0 %v3587
    %4783 = vmatmul.mubr.bf16.gmra.mrb[0].mxu0 %v3586
    %v4784 = vpop.f32.mrb[0].mxu0
    %v4785 = vadd.f32 %v4672, %v4784
    %v4786 = vpop.f32.mrb[0].mxu0
    %v4787 = vadd.f32 %v4674, %v4786
    %v4788 = vpop.f32.mrb[0].mxu0
    %v4789 = vadd.f32 %v4676, %v4788
    %v4790 = vpop.f32.mrb[0].mxu0
    %v4791 = vadd.f32 %v4678, %v4790
    %4792 = vmatprep.mubr.bf16.mxu0 %v3597
    %4793 = vmatmul.mubr.bf16.gmra.mrb[0].mxu0 %v3596
    %v4794 = vpop.f32.mrb[0].mxu0
    %v4795 = vadd.f32 %v4682, %v4794
    %v4796 = vpop.f32.mrb[0].mxu0
    %v4797 = vadd.f32 %v4684, %v4796
    %v4798 = vpop.f32.mrb[0].mxu0
    %v4799 = vadd.f32 %v4686, %v4798
    %v4800 = vpop.f32.mrb[0].mxu0
    %v4801 = vadd.f32 %v4688, %v4800
    %4802 = vmatprep.mubr.bf16.mxu0 %v3607
    %4803 = vmatmul.mubr.bf16.gmra.mrb[0].mxu0 %v3606
    %v4804 = vpop.f32.mrb[0].mxu0
    %v4805 = vadd.f32 %v4692, %v4804
    %v4806 = vpop.f32.mrb[0].mxu0
    %v4807 = vadd.f32 %v4694, %v4806
    %v4808 = vpop.f32.mrb[0].mxu0
    %v4809 = vadd.f32 %v4696, %v4808
    %v4810 = vpop.f32.mrb[0].mxu0
    %v4811 = vadd.f32 %v4698, %v4810
    %4812 = vdwg.mxu0
    %4813 = vmatprep.subr.bf16.mxu0 %v4101
    %4814 = vmatpush1.bf16.msra.mxu0 %v4100
    %4815 = vmatprep.subr.bf16.mxu0 %v4111
    %4816 = vmatpush1.bf16.msra.mxu0 %v4110
    %4817 = vmatprep.subr.bf16.mxu0 %v4121
    %4818 = vmatpush1.bf16.msra.mxu0 %v4120
    %4819 = vmatprep.subr.bf16.mxu0 %v4131
    %4820 = vmatpush1.bf16.msra.mxu0 %v4130
    %4821 = vmatprep.subr.bf16.mxu0 %v4141
    %4822 = vmatpush1.bf16.msra.mxu0 %v4140
    %4823 = vmatprep.subr.bf16.mxu0 %v4151
    %4824 = vmatpush1.bf16.msra.mxu0 %v4150
    %4825 = vmatprep.subr.bf16.mxu0 %v4161
    %4826 = vmatpush1.bf16.msra.mxu0 %v4160
    %4827 = vmatprep.subr.bf16.mxu0 %v4171
    %4828 = vmatpush1.bf16.msra.mxu0 %v4170
    %4829 = vmatprep.subr.bf16.mxu0 %v4181
    %4830 = vmatpush1.bf16.msra.mxu0 %v4180
    %4831 = vmatprep.subr.bf16.mxu0 %v4191
    %4832 = vmatpush1.bf16.msra.mxu0 %v4190
    %4833 = vmatprep.subr.bf16.mxu0 %v4201
    %4834 = vmatpush1.bf16.msra.mxu0 %v4200
    %4835 = vmatprep.subr.bf16.mxu0 %v4211
    %4836 = vmatpush1.bf16.msra.mxu0 %v4210
    %4837 = vmatprep.subr.bf16.mxu0 %v4221
    %4838 = vmatpush1.bf16.msra.mxu0 %v4220
    %4839 = vmatprep.subr.bf16.mxu0 %v4231
    %4840 = vmatpush1.bf16.msra.mxu0 %v4230
    %4841 = vmatprep.subr.bf16.mxu0 %v4241
    %4842 = vmatpush1.bf16.msra.mxu0 %v4240
    %4843 = vmatprep.subr.bf16.mxu0 %v4251
    %4844 = vmatpush1.bf16.msra.mxu0 %v4250
    %4845 = vmatprep.mubr.bf16.mxu0 %v3539
    %4846 = vmatmul.mubr.bf16.gmra.mrb[0].mxu0 %v3538
    %v4847 = vpop.f32.mrb[0].mxu0
    %v4848 = vadd.f32 %v4735, %v4847
    %v4849 = vpop.f32.mrb[0].mxu0
    %v4850 = vadd.f32 %v4737, %v4849
    %v4851 = vpop.f32.mrb[0].mxu0
    %v4852 = vadd.f32 %v4739, %v4851
    %v4853 = vpop.f32.mrb[0].mxu0
    %v4854 = vadd.f32 %v4741, %v4853
    %4855 = vmatprep.mubr.bf16.mxu0 %v3549
    %4856 = vmatmul.mubr.bf16.gmra.mrb[0].mxu0 %v3548
    %v4857 = vpop.f32.mrb[0].mxu0
    %v4858 = vadd.f32 %v4745, %v4857
    %v4859 = vpop.f32.mrb[0].mxu0
    %v4860 = vadd.f32 %v4747, %v4859
    %v4861 = vpop.f32.mrb[0].mxu0
    %v4862 = vadd.f32 %v4749, %v4861
    %v4863 = vpop.f32.mrb[0].mxu0
    %v4864 = vadd.f32 %v4751, %v4863
    %4865 = vmatprep.mubr.bf16.mxu0 %v3559
    %4866 = vmatmul.mubr.bf16.gmra.mrb[0].mxu0 %v3558
    %v4867 = vpop.f32.mrb[0].mxu0
    %v4868 = vadd.f32 %v4755, %v4867
    %v4869 = vpop.f32.mrb[0].mxu0
    %v4870 = vadd.f32 %v4757, %v4869
    %v4871 = vpop.f32.mrb[0].mxu0
    %v4872 = vadd.f32 %v4759, %v4871
    %v4873 = vpop.f32.mrb[0].mxu0
    %v4874 = vadd.f32 %v4761, %v4873
    %4875 = vmatprep.mubr.bf16.mxu0 %v3569
    %4876 = vmatmul.mubr.bf16.gmra.mrb[0].mxu0 %v3568
    %v4877 = vpop.f32.mrb[0].mxu0
    %v4878 = vadd.f32 %v4765, %v4877
    %v4879 = vpop.f32.mrb[0].mxu0
    %v4880 = vadd.f32 %v4767, %v4879
    %v4881 = vpop.f32.mrb[0].mxu0
    %v4882 = vadd.f32 %v4769, %v4881
    %v4883 = vpop.f32.mrb[0].mxu0
    %v4884 = vadd.f32 %v4771, %v4883
    %4885 = vmatprep.mubr.bf16.mxu0 %v3579
    %4886 = vmatmul.mubr.bf16.gmra.mrb[0].mxu0 %v3578
    %v4887 = vpop.f32.mrb[0].mxu0
    %v4888 = vadd.f32 %v4775, %v4887
    %v4889 = vpop.f32.mrb[0].mxu0
    %v4890 = vadd.f32 %v4777, %v4889
    %v4891 = vpop.f32.mrb[0].mxu0
    %v4892 = vadd.f32 %v4779, %v4891
    %v4893 = vpop.f32.mrb[0].mxu0
    %v4894 = vadd.f32 %v4781, %v4893
    %4895 = vmatprep.mubr.bf16.mxu0 %v3589
    %4896 = vmatmul.mubr.bf16.gmra.mrb[0].mxu0 %v3588
    %v4897 = vpop.f32.mrb[0].mxu0
    %v4898 = vadd.f32 %v4785, %v4897
    %v4899 = vpop.f32.mrb[0].mxu0
    %v4900 = vadd.f32 %v4787, %v4899
    %v4901 = vpop.f32.mrb[0].mxu0
    %v4902 = vadd.f32 %v4789, %v4901
    %v4903 = vpop.f32.mrb[0].mxu0
    %v4904 = vadd.f32 %v4791, %v4903
    %4905 = vmatprep.mubr.bf16.mxu0 %v3599
    %4906 = vmatmul.mubr.bf16.gmra.mrb[0].mxu0 %v3598
    %v4907 = vpop.f32.mrb[0].mxu0
    %v4908 = vadd.f32 %v4795, %v4907
    %v4909 = vpop.f32.mrb[0].mxu0
    %v4910 = vadd.f32 %v4797, %v4909
    %v4911 = vpop.f32.mrb[0].mxu0
    %v4912 = vadd.f32 %v4799, %v4911
    %v4913 = vpop.f32.mrb[0].mxu0
    %v4914 = vadd.f32 %v4801, %v4913
    %4915 = vmatprep.mubr.bf16.mxu0 %v3609
    %4916 = vmatmul.mubr.bf16.gmra.mrb[0].mxu0 %v3608
    %v4917 = vpop.f32.mrb[0].mxu0
    %v4918 = vadd.f32 %v4805, %v4917
    %v4919 = vpop.f32.mrb[0].mxu0
    %v4920 = vadd.f32 %v4807, %v4919
    %v4921 = vpop.f32.mrb[0].mxu0
    %v4922 = vadd.f32 %v4809, %v4921
    %v4923 = vpop.f32.mrb[0].mxu0
    %v4924 = vadd.f32 %v4811, %v4923
    %4925 = vdwg.mxu0
    %4926 = vmatprep.subr.bf16.mxu0 %v4261
    %4927 = vmatpush1.bf16.msra.mxu0 %v4260
    %4928 = vmatprep.subr.bf16.mxu0 %v4271
    %4929 = vmatpush1.bf16.msra.mxu0 %v4270
    %4930 = vmatprep.subr.bf16.mxu0 %v4281
    %4931 = vmatpush1.bf16.msra.mxu0 %v4280
    %4932 = vmatprep.subr.bf16.mxu0 %v4291
    %4933 = vmatpush1.bf16.msra.mxu0 %v4290
    %4934 = vmatprep.subr.bf16.mxu0 %v4301
    %4935 = vmatpush1.bf16.msra.mxu0 %v4300
    %4936 = vmatprep.subr.bf16.mxu0 %v4311
    %4937 = vmatpush1.bf16.msra.mxu0 %v4310
    %4938 = vmatprep.subr.bf16.mxu0 %v4321
    %4939 = vmatpush1.bf16.msra.mxu0 %v4320
    %4940 = vmatprep.subr.bf16.mxu0 %v4331
    %4941 = vmatpush1.bf16.msra.mxu0 %v4330
    %4942 = vmatprep.subr.bf16.mxu0 %v4341
    %4943 = vmatpush1.bf16.msra.mxu0 %v4340
    %4944 = vmatprep.subr.bf16.mxu0 %v4351
    %4945 = vmatpush1.bf16.msra.mxu0 %v4350
    %4946 = vmatprep.subr.bf16.mxu0 %v4361
    %4947 = vmatpush1.bf16.msra.mxu0 %v4360
    %4948 = vmatprep.subr.bf16.mxu0 %v4371
    %4949 = vmatpush1.bf16.msra.mxu0 %v4370
    %4950 = vmatprep.subr.bf16.mxu0 %v4381
    %4951 = vmatpush1.bf16.msra.mxu0 %v4380
    %4952 = vmatprep.subr.bf16.mxu0 %v4391
    %4953 = vmatpush1.bf16.msra.mxu0 %v4390
    %4954 = vmatprep.subr.bf16.mxu0 %v4401
    %4955 = vmatpush1.bf16.msra.mxu0 %v4400
    %4956 = vmatprep.subr.bf16.mxu0 %v4411
    %4957 = vmatpush1.bf16.msra.mxu0 %v4410
    %4958 = vmatprep.mubr.bf16.mxu0 %v3541
    %4959 = vmatmul.mubr.bf16.gmra.mrb[0].mxu0 %v3540
    %v4960 = vpop.f32.mrb[0].mxu0
    %v4961 = vadd.f32 %v4848, %v4960
    %v4962 = vpop.f32.mrb[0].mxu0
    %v4963 = vadd.f32 %v4850, %v4962
    %v4964 = vpop.f32.mrb[0].mxu0
    %v4965 = vadd.f32 %v4852, %v4964
    %v4966 = vpop.f32.mrb[0].mxu0
    %v4967 = vadd.f32 %v4854, %v4966
    %4968 = vmatprep.mubr.bf16.mxu0 %v3551
    %4969 = vmatmul.mubr.bf16.gmra.mrb[0].mxu0 %v3550
    %v4970 = vpop.f32.mrb[0].mxu0
    %v4971 = vadd.f32 %v4858, %v4970
    %v4972 = vpop.f32.mrb[0].mxu0
    %v4973 = vadd.f32 %v4860, %v4972
    %v4974 = vpop.f32.mrb[0].mxu0
    %v4975 = vadd.f32 %v4862, %v4974
    %v4976 = vpop.f32.mrb[0].mxu0
    %v4977 = vadd.f32 %v4864, %v4976
    %4978 = vmatprep.mubr.bf16.mxu0 %v3561
    %4979 = vmatmul.mubr.bf16.gmra.mrb[0].mxu0 %v3560
    %v4980 = vpop.f32.mrb[0].mxu0
    %v4981 = vadd.f32 %v4868, %v4980
    %v4982 = vpop.f32.mrb[0].mxu0
    %v4983 = vadd.f32 %v4870, %v4982
    %v4984 = vpop.f32.mrb[0].mxu0
    %v4985 = vadd.f32 %v4872, %v4984
    %v4986 = vpop.f32.mrb[0].mxu0
    %v4987 = vadd.f32 %v4874, %v4986
    %4988 = vmatprep.mubr.bf16.mxu0 %v3571
    %4989 = vmatmul.mubr.bf16.gmra.mrb[0].mxu0 %v3570
    %v4990 = vpop.f32.mrb[0].mxu0
    %v4991 = vadd.f32 %v4878, %v4990
    %v4992 = vpop.f32.mrb[0].mxu0
    %v4993 = vadd.f32 %v4880, %v4992
    %v4994 = vpop.f32.mrb[0].mxu0
    %v4995 = vadd.f32 %v4882, %v4994
    %v4996 = vpop.f32.mrb[0].mxu0
    %v4997 = vadd.f32 %v4884, %v4996
    %4998 = vmatprep.mubr.bf16.mxu0 %v3581
    %4999 = vmatmul.mubr.bf16.gmra.mrb[0].mxu0 %v3580
    %v5000 = vpop.f32.mrb[0].mxu0
    %v5001 = vadd.f32 %v4888, %v5000
    %v5002 = vpop.f32.mrb[0].mxu0
    %v5003 = vadd.f32 %v4890, %v5002
    %v5004 = vpop.f32.mrb[0].mxu0
    %v5005 = vadd.f32 %v4892, %v5004
    %v5006 = vpop.f32.mrb[0].mxu0
    %v5007 = vadd.f32 %v4894, %v5006
    %5008 = vmatprep.mubr.bf16.mxu0 %v3591
    %5009 = vmatmul.mubr.bf16.gmra.mrb[0].mxu0 %v3590
    %v5010 = vpop.f32.mrb[0].mxu0
    %v5011 = vadd.f32 %v4898, %v5010
    %v5012 = vpop.f32.mrb[0].mxu0
    %v5013 = vadd.f32 %v4900, %v5012
    %v5014 = vpop.f32.mrb[0].mxu0
    %v5015 = vadd.f32 %v4902, %v5014
    %v5016 = vpop.f32.mrb[0].mxu0
    %v5017 = vadd.f32 %v4904, %v5016
    %5018 = vmatprep.mubr.bf16.mxu0 %v3601
    %5019 = vmatmul.mubr.bf16.gmra.mrb[0].mxu0 %v3600
    %v5020 = vpop.f32.mrb[0].mxu0
    %v5021 = vadd.f32 %v4908, %v5020
    %v5022 = vpop.f32.mrb[0].mxu0
    %v5023 = vadd.f32 %v4910, %v5022
    %v5024 = vpop.f32.mrb[0].mxu0
    %v5025 = vadd.f32 %v4912, %v5024
    %v5026 = vpop.f32.mrb[0].mxu0
    %v5027 = vadd.f32 %v4914, %v5026
    %5028 = vmatprep.mubr.bf16.mxu0 %v3611
    %5029 = vmatmul.mubr.bf16.gmra.mrb[0].mxu0 %v3610
    %v5030 = vpop.f32.mrb[0].mxu0
    %v5031 = vadd.f32 %v4918, %v5030
    %v5032 = vpop.f32.mrb[0].mxu0
    %v5033 = vadd.f32 %v4920, %v5032
    %v5034 = vpop.f32.mrb[0].mxu0
    %v5035 = vadd.f32 %v4922, %v5034
    %v5036 = vpop.f32.mrb[0].mxu0
    %v5037 = vadd.f32 %v4924, %v5036
    %5038 = vdwg.mxu0
    %5039 = vmatprep.subr.bf16.mxu0 %v3623
    %5040 = vmatpush1.bf16.msra.mxu0 %v3622
    %5041 = vmatprep.subr.bf16.mxu0 %v3633
    %5042 = vmatpush1.bf16.msra.mxu0 %v3632
    %5043 = vmatprep.subr.bf16.mxu0 %v3643
    %5044 = vmatpush1.bf16.msra.mxu0 %v3642
    %5045 = vmatprep.subr.bf16.mxu0 %v3653
    %5046 = vmatpush1.bf16.msra.mxu0 %v3652
    %5047 = vmatprep.subr.bf16.mxu0 %v3663
    %5048 = vmatpush1.bf16.msra.mxu0 %v3662
    %5049 = vmatprep.subr.bf16.mxu0 %v3673
    %5050 = vmatpush1.bf16.msra.mxu0 %v3672
    %5051 = vmatprep.subr.bf16.mxu0 %v3683
    %5052 = vmatpush1.bf16.msra.mxu0 %v3682
    %5053 = vmatprep.subr.bf16.mxu0 %v3693
    %5054 = vmatpush1.bf16.msra.mxu0 %v3692
    %5055 = vmatprep.subr.bf16.mxu0 %v3703
    %5056 = vmatpush1.bf16.msra.mxu0 %v3702
    %5057 = vmatprep.subr.bf16.mxu0 %v3713
    %5058 = vmatpush1.bf16.msra.mxu0 %v3712
    %5059 = vmatprep.subr.bf16.mxu0 %v3723
    %5060 = vmatpush1.bf16.msra.mxu0 %v3722
    %5061 = vmatprep.subr.bf16.mxu0 %v3733
    %5062 = vmatpush1.bf16.msra.mxu0 %v3732
    %5063 = vmatprep.subr.bf16.mxu0 %v3743
    %5064 = vmatpush1.bf16.msra.mxu0 %v3742
    %5065 = vmatprep.subr.bf16.mxu0 %v3753
    %5066 = vmatpush1.bf16.msra.mxu0 %v3752
    %5067 = vmatprep.subr.bf16.mxu0 %v3763
    %5068 = vmatpush1.bf16.msra.mxu0 %v3762
    %5069 = vmatprep.subr.bf16.mxu0 %v3773
    %5070 = vmatpush1.bf16.msra.mxu0 %v3772
    %5071 = vmatprep.mubr.bf16.mxu0 %v3533
    %5072 = vmatmul.mubr.bf16.gmra.mrb[0].mxu0 %v3532
    %v5073 = vpop.f32.mrb[0].mxu0
    %v5074 = vadd.f32 %v4435, %v5073
    %v5075 = vpop.f32.mrb[0].mxu0
    %v5076 = vadd.f32 %v4439, %v5075
    %v5077 = vpop.f32.mrb[0].mxu0
    %v5078 = vadd.f32 %v4435, %v5077
    %v5079 = vpop.f32.mrb[0].mxu0
    %v5080 = vadd.f32 %v4439, %v5079
    %5081 = vmatprep.mubr.bf16.mxu0 %v3543
    %5082 = vmatmul.mubr.bf16.gmra.mrb[0].mxu0 %v3542
    %v5083 = vpop.f32.mrb[0].mxu0
    %v5084 = vadd.f32 %v4435, %v5083
    %v5085 = vpop.f32.mrb[0].mxu0
    %v5086 = vadd.f32 %v4439, %v5085
    %v5087 = vpop.f32.mrb[0].mxu0
    %v5088 = vadd.f32 %v4435, %v5087
    %v5089 = vpop.f32.mrb[0].mxu0
    %v5090 = vadd.f32 %v4439, %v5089
    %5091 = vmatprep.mubr.bf16.mxu0 %v3553
    %5092 = vmatmul.mubr.bf16.gmra.mrb[0].mxu0 %v3552
    %v5093 = vpop.f32.mrb[0].mxu0
    %v5094 = vadd.f32 %v4435, %v5093
    %v5095 = vpop.f32.mrb[0].mxu0
    %v5096 = vadd.f32 %v4439, %v5095
    %v5097 = vpop.f32.mrb[0].mxu0
    %v5098 = vadd.f32 %v4435, %v5097
    %v5099 = vpop.f32.mrb[0].mxu0
    %v5100 = vadd.f32 %v4439, %v5099
    %5101 = vmatprep.mubr.bf16.mxu0 %v3563
    %5102 = vmatmul.mubr.bf16.gmra.mrb[0].mxu0 %v3562
    %v5103 = vpop.f32.mrb[0].mxu0
    %v5104 = vadd.f32 %v4435, %v5103
    %v5105 = vpop.f32.mrb[0].mxu0
    %v5106 = vadd.f32 %v4439, %v5105
    %v5107 = vpop.f32.mrb[0].mxu0
    %v5108 = vadd.f32 %v4435, %v5107
    %v5109 = vpop.f32.mrb[0].mxu0
    %v5110 = vadd.f32 %v4439, %v5109
    %5111 = vmatprep.mubr.bf16.mxu0 %v3573
    %5112 = vmatmul.mubr.bf16.gmra.mrb[0].mxu0 %v3572
    %v5113 = vpop.f32.mrb[0].mxu0
    %v5114 = vadd.f32 %v4435, %v5113
    %v5115 = vpop.f32.mrb[0].mxu0
    %v5116 = vadd.f32 %v4439, %v5115
    %v5117 = vpop.f32.mrb[0].mxu0
    %v5118 = vadd.f32 %v4435, %v5117
    %v5119 = vpop.f32.mrb[0].mxu0
    %v5120 = vadd.f32 %v4439, %v5119
    %5121 = vmatprep.mubr.bf16.mxu0 %v3583
    %5122 = vmatmul.mubr.bf16.gmra.mrb[0].mxu0 %v3582
    %v5123 = vpop.f32.mrb[0].mxu0
    %v5124 = vadd.f32 %v4435, %v5123
    %v5125 = vpop.f32.mrb[0].mxu0
    %v5126 = vadd.f32 %v4439, %v5125
    %v5127 = vpop.f32.mrb[0].mxu0
    %v5128 = vadd.f32 %v4435, %v5127
    %v5129 = vpop.f32.mrb[0].mxu0
    %v5130 = vadd.f32 %v4439, %v5129
    %5131 = vmatprep.mubr.bf16.mxu0 %v3593
    %5132 = vmatmul.mubr.bf16.gmra.mrb[0].mxu0 %v3592
    %v5133 = vpop.f32.mrb[0].mxu0
    %v5134 = vadd.f32 %v4435, %v5133
    %v5135 = vpop.f32.mrb[0].mxu0
    %v5136 = vadd.f32 %v4439, %v5135
    %v5137 = vpop.f32.mrb[0].mxu0
    %v5138 = vadd.f32 %v4435, %v5137
    %v5139 = vpop.f32.mrb[0].mxu0
    %v5140 = vadd.f32 %v4439, %v5139
    %5141 = vmatprep.mubr.bf16.mxu0 %v3603
    %5142 = vmatmul.mubr.bf16.gmra.mrb[0].mxu0 %v3602
    %v5143 = vpop.f32.mrb[0].mxu0
    %v5144 = vadd.f32 %v4435, %v5143
    %v5145 = vpop.f32.mrb[0].mxu0
    %v5146 = vadd.f32 %v4439, %v5145
    %v5147 = vpop.f32.mrb[0].mxu0
    %v5148 = vadd.f32 %v4435, %v5147
    %v5149 = vpop.f32.mrb[0].mxu0
    %v5150 = vadd.f32 %v4439, %v5149
    %5151 = vdwg.mxu0
    %5152 = vmatprep.subr.bf16.mxu0 %v3783
    %5153 = vmatpush1.bf16.msra.mxu0 %v3782
    %5154 = vmatprep.subr.bf16.mxu0 %v3793
    %5155 = vmatpush1.bf16.msra.mxu0 %v3792
    %5156 = vmatprep.subr.bf16.mxu0 %v3803
    %5157 = vmatpush1.bf16.msra.mxu0 %v3802
    %5158 = vmatprep.subr.bf16.mxu0 %v3813
    %5159 = vmatpush1.bf16.msra.mxu0 %v3812
    %5160 = vmatprep.subr.bf16.mxu0 %v3823
    %5161 = vmatpush1.bf16.msra.mxu0 %v3822
    %5162 = vmatprep.subr.bf16.mxu0 %v3833
    %5163 = vmatpush1.bf16.msra.mxu0 %v3832
    %5164 = vmatprep.subr.bf16.mxu0 %v3843
    %5165 = vmatpush1.bf16.msra.mxu0 %v3842
    %5166 = vmatprep.subr.bf16.mxu0 %v3853
    %5167 = vmatpush1.bf16.msra.mxu0 %v3852
    %5168 = vmatprep.subr.bf16.mxu0 %v3863
    %5169 = vmatpush1.bf16.msra.mxu0 %v3862
    %5170 = vmatprep.subr.bf16.mxu0 %v3873
    %5171 = vmatpush1.bf16.msra.mxu0 %v3872
    %5172 = vmatprep.subr.bf16.mxu0 %v3883
    %5173 = vmatpush1.bf16.msra.mxu0 %v3882
    %5174 = vmatprep.subr.bf16.mxu0 %v3893
    %5175 = vmatpush1.bf16.msra.mxu0 %v3892
    %5176 = vmatprep.subr.bf16.mxu0 %v3903
    %5177 = vmatpush1.bf16.msra.mxu0 %v3902
    %5178 = vmatprep.subr.bf16.mxu0 %v3913
    %5179 = vmatpush1.bf16.msra.mxu0 %v3912
    %5180 = vmatprep.subr.bf16.mxu0 %v3923
    %5181 = vmatpush1.bf16.msra.mxu0 %v3922
    %5182 = vmatprep.subr.bf16.mxu0 %v3933
    %5183 = vmatpush1.bf16.msra.mxu0 %v3932
    %5184 = vmatprep.mubr.bf16.mxu0 %v3535
    %5185 = vmatmul.mubr.bf16.gmra.mrb[0].mxu0 %v3534
    %v5186 = vpop.f32.mrb[0].mxu0
    %v5187 = vadd.f32 %v5074, %v5186
    %v5188 = vpop.f32.mrb[0].mxu0
    %v5189 = vadd.f32 %v5076, %v5188
    %v5190 = vpop.f32.mrb[0].mxu0
    %v5191 = vadd.f32 %v5078, %v5190
    %v5192 = vpop.f32.mrb[0].mxu0
    %v5193 = vadd.f32 %v5080, %v5192
    %5194 = vmatprep.mubr.bf16.mxu0 %v3545
    %5195 = vmatmul.mubr.bf16.gmra.mrb[0].mxu0 %v3544
    %v5196 = vpop.f32.mrb[0].mxu0
    %v5197 = vadd.f32 %v5084, %v5196
    %v5198 = vpop.f32.mrb[0].mxu0
    %v5199 = vadd.f32 %v5086, %v5198
    %v5200 = vpop.f32.mrb[0].mxu0
    %v5201 = vadd.f32 %v5088, %v5200
    %v5202 = vpop.f32.mrb[0].mxu0
    %v5203 = vadd.f32 %v5090, %v5202
    %5204 = vmatprep.mubr.bf16.mxu0 %v3555
    %5205 = vmatmul.mubr.bf16.gmra.mrb[0].mxu0 %v3554
    %v5206 = vpop.f32.mrb[0].mxu0
    %v5207 = vadd.f32 %v5094, %v5206
    %v5208 = vpop.f32.mrb[0].mxu0
    %v5209 = vadd.f32 %v5096, %v5208
    %v5210 = vpop.f32.mrb[0].mxu0
    %v5211 = vadd.f32 %v5098, %v5210
    %v5212 = vpop.f32.mrb[0].mxu0
    %v5213 = vadd.f32 %v5100, %v5212
    %5214 = vmatprep.mubr.bf16.mxu0 %v3565
    %5215 = vmatmul.mubr.bf16.gmra.mrb[0].mxu0 %v3564
    %v5216 = vpop.f32.mrb[0].mxu0
    %v5217 = vadd.f32 %v5104, %v5216
    %v5218 = vpop.f32.mrb[0].mxu0
    %v5219 = vadd.f32 %v5106, %v5218
    %v5220 = vpop.f32.mrb[0].mxu0
    %v5221 = vadd.f32 %v5108, %v5220
    %v5222 = vpop.f32.mrb[0].mxu0
    %v5223 = vadd.f32 %v5110, %v5222
    %5224 = vmatprep.mubr.bf16.mxu0 %v3575
    %5225 = vmatmul.mubr.bf16.gmra.mrb[0].mxu0 %v3574
    %v5226 = vpop.f32.mrb[0].mxu0
    %v5227 = vadd.f32 %v5114, %v5226
    %v5228 = vpop.f32.mrb[0].mxu0
    %v5229 = vadd.f32 %v5116, %v5228
    %v5230 = vpop.f32.mrb[0].mxu0
    %v5231 = vadd.f32 %v5118, %v5230
    %v5232 = vpop.f32.mrb[0].mxu0
    %v5233 = vadd.f32 %v5120, %v5232
    %5234 = vmatprep.mubr.bf16.mxu0 %v3585
    %5235 = vmatmul.mubr.bf16.gmra.mrb[0].mxu0 %v3584
    %v5236 = vpop.f32.mrb[0].mxu0
    %v5237 = vadd.f32 %v5124, %v5236
    %v5238 = vpop.f32.mrb[0].mxu0
    %v5239 = vadd.f32 %v5126, %v5238
    %v5240 = vpop.f32.mrb[0].mxu0
    %v5241 = vadd.f32 %v5128, %v5240
    %v5242 = vpop.f32.mrb[0].mxu0
    %v5243 = vadd.f32 %v5130, %v5242
    %5244 = vmatprep.mubr.bf16.mxu0 %v3595
    %5245 = vmatmul.mubr.bf16.gmra.mrb[0].mxu0 %v3594
    %v5246 = vpop.f32.mrb[0].mxu0
    %v5247 = vadd.f32 %v5134, %v5246
    %v5248 = vpop.f32.mrb[0].mxu0
    %v5249 = vadd.f32 %v5136, %v5248
    %v5250 = vpop.f32.mrb[0].mxu0
    %v5251 = vadd.f32 %v5138, %v5250
    %v5252 = vpop.f32.mrb[0].mxu0
    %v5253 = vadd.f32 %v5140, %v5252
    %5254 = vmatprep.mubr.bf16.mxu0 %v3605
    %5255 = vmatmul.mubr.bf16.gmra.mrb[0].mxu0 %v3604
    %v5256 = vpop.f32.mrb[0].mxu0
    %v5257 = vadd.f32 %v5144, %v5256
    %v5258 = vpop.f32.mrb[0].mxu0
    %v5259 = vadd.f32 %v5146, %v5258
    %v5260 = vpop.f32.mrb[0].mxu0
    %v5261 = vadd.f32 %v5148, %v5260
    %v5262 = vpop.f32.mrb[0].mxu0
    %v5263 = vadd.f32 %v5150, %v5262
    %5264 = vdwg.mxu0
    %5265 = vmatprep.subr.bf16.mxu0 %v3943
    %5266 = vmatpush1.bf16.msra.mxu0 %v3942
    %5267 = vmatprep.subr.bf16.mxu0 %v3953
    %5268 = vmatpush1.bf16.msra.mxu0 %v3952
    %5269 = vmatprep.subr.bf16.mxu0 %v3963
    %5270 = vmatpush1.bf16.msra.mxu0 %v3962
    %5271 = vmatprep.subr.bf16.mxu0 %v3973
    %5272 = vmatpush1.bf16.msra.mxu0 %v3972
    %5273 = vmatprep.subr.bf16.mxu0 %v3983
    %5274 = vmatpush1.bf16.msra.mxu0 %v3982
    %5275 = vmatprep.subr.bf16.mxu0 %v3993
    %5276 = vmatpush1.bf16.msra.mxu0 %v3992
    %5277 = vmatprep.subr.bf16.mxu0 %v4003
    %5278 = vmatpush1.bf16.msra.mxu0 %v4002
    %5279 = vmatprep.subr.bf16.mxu0 %v4013
    %5280 = vmatpush1.bf16.msra.mxu0 %v4012
    %5281 = vmatprep.subr.bf16.mxu0 %v4023
    %5282 = vmatpush1.bf16.msra.mxu0 %v4022
    %5283 = vmatprep.subr.bf16.mxu0 %v4033
    %5284 = vmatpush1.bf16.msra.mxu0 %v4032
    %5285 = vmatprep.subr.bf16.mxu0 %v4043
    %5286 = vmatpush1.bf16.msra.mxu0 %v4042
    %5287 = vmatprep.subr.bf16.mxu0 %v4053
    %5288 = vmatpush1.bf16.msra.mxu0 %v4052
    %5289 = vmatprep.subr.bf16.mxu0 %v4063
    %5290 = vmatpush1.bf16.msra.mxu0 %v4062
    %5291 = vmatprep.subr.bf16.mxu0 %v4073
    %5292 = vmatpush1.bf16.msra.mxu0 %v4072
    %5293 = vmatprep.subr.bf16.mxu0 %v4083
    %5294 = vmatpush1.bf16.msra.mxu0 %v4082
    %5295 = vmatprep.subr.bf16.mxu0 %v4093
    %5296 = vmatpush1.bf16.msra.mxu0 %v4092
    %5297 = vmatprep.mubr.bf16.mxu0 %v3537
    %5298 = vmatmul.mubr.bf16.gmra.mrb[0].mxu0 %v3536
    %v5299 = vpop.f32.mrb[0].mxu0
    %v5300 = vadd.f32 %v5187, %v5299
    %v5301 = vpop.f32.mrb[0].mxu0
    %v5302 = vadd.f32 %v5189, %v5301
    %v5303 = vpop.f32.mrb[0].mxu0
    %v5304 = vadd.f32 %v5191, %v5303
    %v5305 = vpop.f32.mrb[0].mxu0
    %v5306 = vadd.f32 %v5193, %v5305
    %5307 = vmatprep.mubr.bf16.mxu0 %v3547
    %5308 = vmatmul.mubr.bf16.gmra.mrb[0].mxu0 %v3546
    %v5309 = vpop.f32.mrb[0].mxu0
    %v5310 = vadd.f32 %v5197, %v5309
    %v5311 = vpop.f32.mrb[0].mxu0
    %v5312 = vadd.f32 %v5199, %v5311
    %v5313 = vpop.f32.mrb[0].mxu0
    %v5314 = vadd.f32 %v5201, %v5313
    %v5315 = vpop.f32.mrb[0].mxu0
    %v5316 = vadd.f32 %v5203, %v5315
    %5317 = vmatprep.mubr.bf16.mxu0 %v3557
    %5318 = vmatmul.mubr.bf16.gmra.mrb[0].mxu0 %v3556
    %v5319 = vpop.f32.mrb[0].mxu0
    %v5320 = vadd.f32 %v5207, %v5319
    %v5321 = vpop.f32.mrb[0].mxu0
    %v5322 = vadd.f32 %v5209, %v5321
    %v5323 = vpop.f32.mrb[0].mxu0
    %v5324 = vadd.f32 %v5211, %v5323
    %v5325 = vpop.f32.mrb[0].mxu0
    %v5326 = vadd.f32 %v5213, %v5325
    %5327 = vmatprep.mubr.bf16.mxu0 %v3567
    %5328 = vmatmul.mubr.bf16.gmra.mrb[0].mxu0 %v3566
    %v5329 = vpop.f32.mrb[0].mxu0
    %v5330 = vadd.f32 %v5217, %v5329
    %v5331 = vpop.f32.mrb[0].mxu0
    %v5332 = vadd.f32 %v5219, %v5331
    %v5333 = vpop.f32.mrb[0].mxu0
    %v5334 = vadd.f32 %v5221, %v5333
    %v5335 = vpop.f32.mrb[0].mxu0
    %v5336 = vadd.f32 %v5223, %v5335
    %5337 = vmatprep.mubr.bf16.mxu0 %v3577
    %5338 = vmatmul.mubr.bf16.gmra.mrb[0].mxu0 %v3576
    %v5339 = vpop.f32.mrb[0].mxu0
    %v5340 = vadd.f32 %v5227, %v5339
    %v5341 = vpop.f32.mrb[0].mxu0
    %v5342 = vadd.f32 %v5229, %v5341
    %v5343 = vpop.f32.mrb[0].mxu0
    %v5344 = vadd.f32 %v5231, %v5343
    %v5345 = vpop.f32.mrb[0].mxu0
    %v5346 = vadd.f32 %v5233, %v5345
    %5347 = vmatprep.mubr.bf16.mxu0 %v3587
    %5348 = vmatmul.mubr.bf16.gmra.mrb[0].mxu0 %v3586
    %v5349 = vpop.f32.mrb[0].mxu0
    %v5350 = vadd.f32 %v5237, %v5349
    %v5351 = vpop.f32.mrb[0].mxu0
    %v5352 = vadd.f32 %v5239, %v5351
    %v5353 = vpop.f32.mrb[0].mxu0
    %v5354 = vadd.f32 %v5241, %v5353
    %v5355 = vpop.f32.mrb[0].mxu0
    %v5356 = vadd.f32 %v5243, %v5355
    %5357 = vmatprep.mubr.bf16.mxu0 %v3597
    %5358 = vmatmul.mubr.bf16.gmra.mrb[0].mxu0 %v3596
    %v5359 = vpop.f32.mrb[0].mxu0
    %v5360 = vadd.f32 %v5247, %v5359
    %v5361 = vpop.f32.mrb[0].mxu0
    %v5362 = vadd.f32 %v5249, %v5361
    %v5363 = vpop.f32.mrb[0].mxu0
    %v5364 = vadd.f32 %v5251, %v5363
    %v5365 = vpop.f32.mrb[0].mxu0
    %v5366 = vadd.f32 %v5253, %v5365
    %5367 = vmatprep.mubr.bf16.mxu0 %v3607
    %5368 = vmatmul.mubr.bf16.gmra.mrb[0].mxu0 %v3606
    %v5369 = vpop.f32.mrb[0].mxu0
    %v5370 = vadd.f32 %v5257, %v5369
    %v5371 = vpop.f32.mrb[0].mxu0
    %v5372 = vadd.f32 %v5259, %v5371
    %v5373 = vpop.f32.mrb[0].mxu0
    %v5374 = vadd.f32 %v5261, %v5373
    %v5375 = vpop.f32.mrb[0].mxu0
    %v5376 = vadd.f32 %v5263, %v5375
    %5377 = vdwg.mxu0
    %5378 = vmatprep.subr.bf16.mxu0 %v4103
    %5379 = vmatpush1.bf16.msra.mxu0 %v4102
    %5380 = vmatprep.subr.bf16.mxu0 %v4113
    %5381 = vmatpush1.bf16.msra.mxu0 %v4112
    %5382 = vmatprep.subr.bf16.mxu0 %v4123
    %5383 = vmatpush1.bf16.msra.mxu0 %v4122
    %5384 = vmatprep.subr.bf16.mxu0 %v4133
    %5385 = vmatpush1.bf16.msra.mxu0 %v4132
    %5386 = vmatprep.subr.bf16.mxu0 %v4143
    %5387 = vmatpush1.bf16.msra.mxu0 %v4142
    %5388 = vmatprep.subr.bf16.mxu0 %v4153
    %5389 = vmatpush1.bf16.msra.mxu0 %v4152
    %5390 = vmatprep.subr.bf16.mxu0 %v4163
    %5391 = vmatpush1.bf16.msra.mxu0 %v4162
    %5392 = vmatprep.subr.bf16.mxu0 %v4173
    %5393 = vmatpush1.bf16.msra.mxu0 %v4172
    %5394 = vmatprep.subr.bf16.mxu0 %v4183
    %5395 = vmatpush1.bf16.msra.mxu0 %v4182
    %5396 = vmatprep.subr.bf16.mxu0 %v4193
    %5397 = vmatpush1.bf16.msra.mxu0 %v4192
    %5398 = vmatprep.subr.bf16.mxu0 %v4203
    %5399 = vmatpush1.bf16.msra.mxu0 %v4202
    %5400 = vmatprep.subr.bf16.mxu0 %v4213
    %5401 = vmatpush1.bf16.msra.mxu0 %v4212
    %5402 = vmatprep.subr.bf16.mxu0 %v4223
    %5403 = vmatpush1.bf16.msra.mxu0 %v4222
    %5404 = vmatprep.subr.bf16.mxu0 %v4233
    %5405 = vmatpush1.bf16.msra.mxu0 %v4232
    %5406 = vmatprep.subr.bf16.mxu0 %v4243
    %5407 = vmatpush1.bf16.msra.mxu0 %v4242
    %5408 = vmatprep.subr.bf16.mxu0 %v4253
    %5409 = vmatpush1.bf16.msra.mxu0 %v4252
    %5410 = vmatprep.mubr.bf16.mxu0 %v3539
    %5411 = vmatmul.mubr.bf16.gmra.mrb[0].mxu0 %v3538
    %v5412 = vpop.f32.mrb[0].mxu0
    %v5413 = vadd.f32 %v5300, %v5412
    %v5414 = vpop.f32.mrb[0].mxu0
    %v5415 = vadd.f32 %v5302, %v5414
    %v5416 = vpop.f32.mrb[0].mxu0
    %v5417 = vadd.f32 %v5304, %v5416
    %v5418 = vpop.f32.mrb[0].mxu0
    %v5419 = vadd.f32 %v5306, %v5418
    %5420 = vmatprep.mubr.bf16.mxu0 %v3549
    %5421 = vmatmul.mubr.bf16.gmra.mrb[0].mxu0 %v3548
    %v5422 = vpop.f32.mrb[0].mxu0
    %v5423 = vadd.f32 %v5310, %v5422
    %v5424 = vpop.f32.mrb[0].mxu0
    %v5425 = vadd.f32 %v5312, %v5424
    %v5426 = vpop.f32.mrb[0].mxu0
    %v5427 = vadd.f32 %v5314, %v5426
    %v5428 = vpop.f32.mrb[0].mxu0
    %v5429 = vadd.f32 %v5316, %v5428
    %5430 = vmatprep.mubr.bf16.mxu0 %v3559
    %5431 = vmatmul.mubr.bf16.gmra.mrb[0].mxu0 %v3558
    %v5432 = vpop.f32.mrb[0].mxu0
    %v5433 = vadd.f32 %v5320, %v5432
    %v5434 = vpop.f32.mrb[0].mxu0
    %v5435 = vadd.f32 %v5322, %v5434
    %v5436 = vpop.f32.mrb[0].mxu0
    %v5437 = vadd.f32 %v5324, %v5436
    %v5438 = vpop.f32.mrb[0].mxu0
    %v5439 = vadd.f32 %v5326, %v5438
    %5440 = vmatprep.mubr.bf16.mxu0 %v3569
    %5441 = vmatmul.mubr.bf16.gmra.mrb[0].mxu0 %v3568
    %v5442 = vpop.f32.mrb[0].mxu0
    %v5443 = vadd.f32 %v5330, %v5442
    %v5444 = vpop.f32.mrb[0].mxu0
    %v5445 = vadd.f32 %v5332, %v5444
    %v5446 = vpop.f32.mrb[0].mxu0
    %v5447 = vadd.f32 %v5334, %v5446
    %v5448 = vpop.f32.mrb[0].mxu0
    %v5449 = vadd.f32 %v5336, %v5448
    %5450 = vmatprep.mubr.bf16.mxu0 %v3579
    %5451 = vmatmul.mubr.bf16.gmra.mrb[0].mxu0 %v3578
    %v5452 = vpop.f32.mrb[0].mxu0
    %v5453 = vadd.f32 %v5340, %v5452
    %v5454 = vpop.f32.mrb[0].mxu0
    %v5455 = vadd.f32 %v5342, %v5454
    %v5456 = vpop.f32.mrb[0].mxu0
    %v5457 = vadd.f32 %v5344, %v5456
    %v5458 = vpop.f32.mrb[0].mxu0
    %v5459 = vadd.f32 %v5346, %v5458
    %5460 = vmatprep.mubr.bf16.mxu0 %v3589
    %5461 = vmatmul.mubr.bf16.gmra.mrb[0].mxu0 %v3588
    %v5462 = vpop.f32.mrb[0].mxu0
    %v5463 = vadd.f32 %v5350, %v5462
    %v5464 = vpop.f32.mrb[0].mxu0
    %v5465 = vadd.f32 %v5352, %v5464
    %v5466 = vpop.f32.mrb[0].mxu0
    %v5467 = vadd.f32 %v5354, %v5466
    %v5468 = vpop.f32.mrb[0].mxu0
    %v5469 = vadd.f32 %v5356, %v5468
    %5470 = vmatprep.mubr.bf16.mxu0 %v3599
    %5471 = vmatmul.mubr.bf16.gmra.mrb[0].mxu0 %v3598
    %v5472 = vpop.f32.mrb[0].mxu0
    %v5473 = vadd.f32 %v5360, %v5472
    %v5474 = vpop.f32.mrb[0].mxu0
    %v5475 = vadd.f32 %v5362, %v5474
    %v5476 = vpop.f32.mrb[0].mxu0
    %v5477 = vadd.f32 %v5364, %v5476
    %v5478 = vpop.f32.mrb[0].mxu0
    %v5479 = vadd.f32 %v5366, %v5478
    %5480 = vmatprep.mubr.bf16.mxu0 %v3609
    %5481 = vmatmul.mubr.bf16.gmra.mrb[0].mxu0 %v3608
    %v5482 = vpop.f32.mrb[0].mxu0
    %v5483 = vadd.f32 %v5370, %v5482
    %v5484 = vpop.f32.mrb[0].mxu0
    %v5485 = vadd.f32 %v5372, %v5484
    %v5486 = vpop.f32.mrb[0].mxu0
    %v5487 = vadd.f32 %v5374, %v5486
    %v5488 = vpop.f32.mrb[0].mxu0
    %v5489 = vadd.f32 %v5376, %v5488
    %5490 = vdwg.mxu0
    %5491 = vmatprep.subr.bf16.mxu0 %v4263
    %5492 = vmatpush1.bf16.msra.mxu0 %v4262
    %5493 = vmatprep.subr.bf16.mxu0 %v4273
    %5494 = vmatpush1.bf16.msra.mxu0 %v4272
    %5495 = vmatprep.subr.bf16.mxu0 %v4283
    %5496 = vmatpush1.bf16.msra.mxu0 %v4282
    %5497 = vmatprep.subr.bf16.mxu0 %v4293
    %5498 = vmatpush1.bf16.msra.mxu0 %v4292
    %5499 = vmatprep.subr.bf16.mxu0 %v4303
    %5500 = vmatpush1.bf16.msra.mxu0 %v4302
    %5501 = vmatprep.subr.bf16.mxu0 %v4313
    %5502 = vmatpush1.bf16.msra.mxu0 %v4312
    %5503 = vmatprep.subr.bf16.mxu0 %v4323
    %5504 = vmatpush1.bf16.msra.mxu0 %v4322
    %5505 = vmatprep.subr.bf16.mxu0 %v4333
    %5506 = vmatpush1.bf16.msra.mxu0 %v4332
    %5507 = vmatprep.subr.bf16.mxu0 %v4343
    %5508 = vmatpush1.bf16.msra.mxu0 %v4342
    %5509 = vmatprep.subr.bf16.mxu0 %v4353
    %5510 = vmatpush1.bf16.msra.mxu0 %v4352
    %5511 = vmatprep.subr.bf16.mxu0 %v4363
    %5512 = vmatpush1.bf16.msra.mxu0 %v4362
    %5513 = vmatprep.subr.bf16.mxu0 %v4373
    %5514 = vmatpush1.bf16.msra.mxu0 %v4372
    %5515 = vmatprep.subr.bf16.mxu0 %v4383
    %5516 = vmatpush1.bf16.msra.mxu0 %v4382
    %5517 = vmatprep.subr.bf16.mxu0 %v4393
    %5518 = vmatpush1.bf16.msra.mxu0 %v4392
    %5519 = vmatprep.subr.bf16.mxu0 %v4403
    %5520 = vmatpush1.bf16.msra.mxu0 %v4402
    %5521 = vmatprep.subr.bf16.mxu0 %v4413
    %5522 = vmatpush1.bf16.msra.mxu0 %v4412
    %5523 = vmatprep.mubr.bf16.mxu0 %v3541
    %5524 = vmatmul.mubr.bf16.gmra.mrb[0].mxu0 %v3540
    %v5525 = vpop.f32.mrb[0].mxu0
    %v5526 = vadd.f32 %v5413, %v5525
    %v5527 = vpop.f32.mrb[0].mxu0
    %v5528 = vadd.f32 %v5415, %v5527
    %v5529 = vpop.f32.mrb[0].mxu0
    %v5530 = vadd.f32 %v5417, %v5529
    %v5531 = vpop.f32.mrb[0].mxu0
    %v5532 = vadd.f32 %v5419, %v5531
    %5533 = vmatprep.mubr.bf16.mxu0 %v3551
    %5534 = vmatmul.mubr.bf16.gmra.mrb[0].mxu0 %v3550
    %v5535 = vpop.f32.mrb[0].mxu0
    %v5536 = vadd.f32 %v5423, %v5535
    %v5537 = vpop.f32.mrb[0].mxu0
    %v5538 = vadd.f32 %v5425, %v5537
    %v5539 = vpop.f32.mrb[0].mxu0
    %v5540 = vadd.f32 %v5427, %v5539
    %v5541 = vpop.f32.mrb[0].mxu0
    %v5542 = vadd.f32 %v5429, %v5541
    %5543 = vmatprep.mubr.bf16.mxu0 %v3561
    %5544 = vmatmul.mubr.bf16.gmra.mrb[0].mxu0 %v3560
    %v5545 = vpop.f32.mrb[0].mxu0
    %v5546 = vadd.f32 %v5433, %v5545
    %v5547 = vpop.f32.mrb[0].mxu0
    %v5548 = vadd.f32 %v5435, %v5547
    %v5549 = vpop.f32.mrb[0].mxu0
    %v5550 = vadd.f32 %v5437, %v5549
    %v5551 = vpop.f32.mrb[0].mxu0
    %v5552 = vadd.f32 %v5439, %v5551
    %5553 = vmatprep.mubr.bf16.mxu0 %v3571
    %5554 = vmatmul.mubr.bf16.gmra.mrb[0].mxu0 %v3570
    %v5555 = vpop.f32.mrb[0].mxu0
    %v5556 = vadd.f32 %v5443, %v5555
    %v5557 = vpop.f32.mrb[0].mxu0
    %v5558 = vadd.f32 %v5445, %v5557
    %v5559 = vpop.f32.mrb[0].mxu0
    %v5560 = vadd.f32 %v5447, %v5559
    %v5561 = vpop.f32.mrb[0].mxu0
    %v5562 = vadd.f32 %v5449, %v5561
    %5563 = vmatprep.mubr.bf16.mxu0 %v3581
    %5564 = vmatmul.mubr.bf16.gmra.mrb[0].mxu0 %v3580
    %v5565 = vpop.f32.mrb[0].mxu0
    %v5566 = vadd.f32 %v5453, %v5565
    %v5567 = vpop.f32.mrb[0].mxu0
    %v5568 = vadd.f32 %v5455, %v5567
    %v5569 = vpop.f32.mrb[0].mxu0
    %v5570 = vadd.f32 %v5457, %v5569
    %v5571 = vpop.f32.mrb[0].mxu0
    %v5572 = vadd.f32 %v5459, %v5571
    %5573 = vmatprep.mubr.bf16.mxu0 %v3591
    %5574 = vmatmul.mubr.bf16.gmra.mrb[0].mxu0 %v3590
    %v5575 = vpop.f32.mrb[0].mxu0
    %v5576 = vadd.f32 %v5463, %v5575
    %v5577 = vpop.f32.mrb[0].mxu0
    %v5578 = vadd.f32 %v5465, %v5577
    %v5579 = vpop.f32.mrb[0].mxu0
    %v5580 = vadd.f32 %v5467, %v5579
    %v5581 = vpop.f32.mrb[0].mxu0
    %v5582 = vadd.f32 %v5469, %v5581
    %5583 = vmatprep.mubr.bf16.mxu0 %v3601
    %5584 = vmatmul.mubr.bf16.gmra.mrb[0].mxu0 %v3600
    %v5585 = vpop.f32.mrb[0].mxu0
    %v5586 = vadd.f32 %v5473, %v5585
    %v5587 = vpop.f32.mrb[0].mxu0
    %v5588 = vadd.f32 %v5475, %v5587
    %v5589 = vpop.f32.mrb[0].mxu0
    %v5590 = vadd.f32 %v5477, %v5589
    %v5591 = vpop.f32.mrb[0].mxu0
    %v5592 = vadd.f32 %v5479, %v5591
    %5593 = vmatprep.mubr.bf16.mxu0 %v3611
    %5594 = vmatmul.mubr.bf16.gmra.mrb[0].mxu0 %v3610
    %v5595 = vpop.f32.mrb[0].mxu0
    %v5596 = vadd.f32 %v5483, %v5595
    %v5597 = vpop.f32.mrb[0].mxu0
    %v5598 = vadd.f32 %v5485, %v5597
    %v5599 = vpop.f32.mrb[0].mxu0
    %v5600 = vadd.f32 %v5487, %v5599
    %v5601 = vpop.f32.mrb[0].mxu0
    %v5602 = vadd.f32 %v5489, %v5601
    %5603 = vdwg.mxu0
    %5604 = vmatprep.subr.bf16.mxu0 %v3625
    %5605 = vmatpush1.bf16.msra.mxu0 %v3624
    %5606 = vmatprep.subr.bf16.mxu0 %v3635
    %5607 = vmatpush1.bf16.msra.mxu0 %v3634
    %5608 = vmatprep.subr.bf16.mxu0 %v3645
    %5609 = vmatpush1.bf16.msra.mxu0 %v3644
    %5610 = vmatprep.subr.bf16.mxu0 %v3655
    %5611 = vmatpush1.bf16.msra.mxu0 %v3654
    %5612 = vmatprep.subr.bf16.mxu0 %v3665
    %5613 = vmatpush1.bf16.msra.mxu0 %v3664
    %5614 = vmatprep.subr.bf16.mxu0 %v3675
    %5615 = vmatpush1.bf16.msra.mxu0 %v3674
    %5616 = vmatprep.subr.bf16.mxu0 %v3685
    %5617 = vmatpush1.bf16.msra.mxu0 %v3684
    %5618 = vmatprep.subr.bf16.mxu0 %v3695
    %5619 = vmatpush1.bf16.msra.mxu0 %v3694
    %5620 = vmatprep.subr.bf16.mxu0 %v3705
    %5621 = vmatpush1.bf16.msra.mxu0 %v3704
    %5622 = vmatprep.subr.bf16.mxu0 %v3715
    %5623 = vmatpush1.bf16.msra.mxu0 %v3714
    %5624 = vmatprep.subr.bf16.mxu0 %v3725
    %5625 = vmatpush1.bf16.msra.mxu0 %v3724
    %5626 = vmatprep.subr.bf16.mxu0 %v3735
    %5627 = vmatpush1.bf16.msra.mxu0 %v3734
    %5628 = vmatprep.subr.bf16.mxu0 %v3745
    %5629 = vmatpush1.bf16.msra.mxu0 %v3744
    %5630 = vmatprep.subr.bf16.mxu0 %v3755
    %5631 = vmatpush1.bf16.msra.mxu0 %v3754
    %5632 = vmatprep.subr.bf16.mxu0 %v3765
    %5633 = vmatpush1.bf16.msra.mxu0 %v3764
    %5634 = vmatprep.subr.bf16.mxu0 %v3775
    %5635 = vmatpush1.bf16.msra.mxu0 %v3774
    %5636 = vmatprep.mubr.bf16.mxu0 %v3533
    %5637 = vmatmul.mubr.bf16.gmra.mrb[0].mxu0 %v3532
    %v5638 = vpop.f32.mrb[0].mxu0
    %v5639 = vadd.f32 %v4443, %v5638
    %v5640 = vpop.f32.mrb[0].mxu0
    %v5641 = vadd.f32 %v4447, %v5640
    %v5642 = vpop.f32.mrb[0].mxu0
    %v5643 = vadd.f32 %v4443, %v5642
    %v5644 = vpop.f32.mrb[0].mxu0
    %v5645 = vadd.f32 %v4447, %v5644
    %5646 = vmatprep.mubr.bf16.mxu0 %v3543
    %5647 = vmatmul.mubr.bf16.gmra.mrb[0].mxu0 %v3542
    %v5648 = vpop.f32.mrb[0].mxu0
    %v5649 = vadd.f32 %v4443, %v5648
    %v5650 = vpop.f32.mrb[0].mxu0
    %v5651 = vadd.f32 %v4447, %v5650
    %v5652 = vpop.f32.mrb[0].mxu0
    %v5653 = vadd.f32 %v4443, %v5652
    %v5654 = vpop.f32.mrb[0].mxu0
    %v5655 = vadd.f32 %v4447, %v5654
    %5656 = vmatprep.mubr.bf16.mxu0 %v3553
    %5657 = vmatmul.mubr.bf16.gmra.mrb[0].mxu0 %v3552
    %v5658 = vpop.f32.mrb[0].mxu0
    %v5659 = vadd.f32 %v4443, %v5658
    %v5660 = vpop.f32.mrb[0].mxu0
    %v5661 = vadd.f32 %v4447, %v5660
    %v5662 = vpop.f32.mrb[0].mxu0
    %v5663 = vadd.f32 %v4443, %v5662
    %v5664 = vpop.f32.mrb[0].mxu0
    %v5665 = vadd.f32 %v4447, %v5664
    %5666 = vmatprep.mubr.bf16.mxu0 %v3563
    %5667 = vmatmul.mubr.bf16.gmra.mrb[0].mxu0 %v3562
    %v5668 = vpop.f32.mrb[0].mxu0
    %v5669 = vadd.f32 %v4443, %v5668
    %v5670 = vpop.f32.mrb[0].mxu0
    %v5671 = vadd.f32 %v4447, %v5670
    %v5672 = vpop.f32.mrb[0].mxu0
    %v5673 = vadd.f32 %v4443, %v5672
    %v5674 = vpop.f32.mrb[0].mxu0
    %v5675 = vadd.f32 %v4447, %v5674
    %5676 = vmatprep.mubr.bf16.mxu0 %v3573
    %5677 = vmatmul.mubr.bf16.gmra.mrb[0].mxu0 %v3572
    %v5678 = vpop.f32.mrb[0].mxu0
    %v5679 = vadd.f32 %v4443, %v5678
    %v5680 = vpop.f32.mrb[0].mxu0
    %v5681 = vadd.f32 %v4447, %v5680
    %v5682 = vpop.f32.mrb[0].mxu0
    %v5683 = vadd.f32 %v4443, %v5682
    %v5684 = vpop.f32.mrb[0].mxu0
    %v5685 = vadd.f32 %v4447, %v5684
    %5686 = vmatprep.mubr.bf16.mxu0 %v3583
    %5687 = vmatmul.mubr.bf16.gmra.mrb[0].mxu0 %v3582
    %v5688 = vpop.f32.mrb[0].mxu0
    %v5689 = vadd.f32 %v4443, %v5688
    %v5690 = vpop.f32.mrb[0].mxu0
    %v5691 = vadd.f32 %v4447, %v5690
    %v5692 = vpop.f32.mrb[0].mxu0
    %v5693 = vadd.f32 %v4443, %v5692
    %v5694 = vpop.f32.mrb[0].mxu0
    %v5695 = vadd.f32 %v4447, %v5694
    %5696 = vmatprep.mubr.bf16.mxu0 %v3593
    %5697 = vmatmul.mubr.bf16.gmra.mrb[0].mxu0 %v3592
    %v5698 = vpop.f32.mrb[0].mxu0
    %v5699 = vadd.f32 %v4443, %v5698
    %v5700 = vpop.f32.mrb[0].mxu0
    %v5701 = vadd.f32 %v4447, %v5700
    %v5702 = vpop.f32.mrb[0].mxu0
    %v5703 = vadd.f32 %v4443, %v5702
    %v5704 = vpop.f32.mrb[0].mxu0
    %v5705 = vadd.f32 %v4447, %v5704
    %5706 = vmatprep.mubr.bf16.mxu0 %v3603
    %5707 = vmatmul.mubr.bf16.gmra.mrb[0].mxu0 %v3602
    %v5708 = vpop.f32.mrb[0].mxu0
    %v5709 = vadd.f32 %v4443, %v5708
    %v5710 = vpop.f32.mrb[0].mxu0
    %v5711 = vadd.f32 %v4447, %v5710
    %v5712 = vpop.f32.mrb[0].mxu0
    %v5713 = vadd.f32 %v4443, %v5712
    %v5714 = vpop.f32.mrb[0].mxu0
    %v5715 = vadd.f32 %v4447, %v5714
    %5716 = vdwg.mxu0
    %5717 = vmatprep.subr.bf16.mxu0 %v3785
    %5718 = vmatpush1.bf16.msra.mxu0 %v3784
    %5719 = vmatprep.subr.bf16.mxu0 %v3795
    %5720 = vmatpush1.bf16.msra.mxu0 %v3794
    %5721 = vmatprep.subr.bf16.mxu0 %v3805
    %5722 = vmatpush1.bf16.msra.mxu0 %v3804
    %5723 = vmatprep.subr.bf16.mxu0 %v3815
    %5724 = vmatpush1.bf16.msra.mxu0 %v3814
    %5725 = vmatprep.subr.bf16.mxu0 %v3825
    %5726 = vmatpush1.bf16.msra.mxu0 %v3824
    %5727 = vmatprep.subr.bf16.mxu0 %v3835
    %5728 = vmatpush1.bf16.msra.mxu0 %v3834
    %5729 = vmatprep.subr.bf16.mxu0 %v3845
    %5730 = vmatpush1.bf16.msra.mxu0 %v3844
    %5731 = vmatprep.subr.bf16.mxu0 %v3855
    %5732 = vmatpush1.bf16.msra.mxu0 %v3854
    %5733 = vmatprep.subr.bf16.mxu0 %v3865
    %5734 = vmatpush1.bf16.msra.mxu0 %v3864
    %5735 = vmatprep.subr.bf16.mxu0 %v3875
    %5736 = vmatpush1.bf16.msra.mxu0 %v3874
    %5737 = vmatprep.subr.bf16.mxu0 %v3885
    %5738 = vmatpush1.bf16.msra.mxu0 %v3884
    %5739 = vmatprep.subr.bf16.mxu0 %v3895
    %5740 = vmatpush1.bf16.msra.mxu0 %v3894
    %5741 = vmatprep.subr.bf16.mxu0 %v3905
    %5742 = vmatpush1.bf16.msra.mxu0 %v3904
    %5743 = vmatprep.subr.bf16.mxu0 %v3915
    %5744 = vmatpush1.bf16.msra.mxu0 %v3914
    %5745 = vmatprep.subr.bf16.mxu0 %v3925
    %5746 = vmatpush1.bf16.msra.mxu0 %v3924
    %5747 = vmatprep.subr.bf16.mxu0 %v3935
    %5748 = vmatpush1.bf16.msra.mxu0 %v3934
    %5749 = vmatprep.mubr.bf16.mxu0 %v3535
    %5750 = vmatmul.mubr.bf16.gmra.mrb[0].mxu0 %v3534
    %v5751 = vpop.f32.mrb[0].mxu0
    %v5752 = vadd.f32 %v5639, %v5751
    %v5753 = vpop.f32.mrb[0].mxu0
    %v5754 = vadd.f32 %v5641, %v5753
    %v5755 = vpop.f32.mrb[0].mxu0
    %v5756 = vadd.f32 %v5643, %v5755
    %v5757 = vpop.f32.mrb[0].mxu0
    %v5758 = vadd.f32 %v5645, %v5757
    %5759 = vmatprep.mubr.bf16.mxu0 %v3545
    %5760 = vmatmul.mubr.bf16.gmra.mrb[0].mxu0 %v3544
    %v5761 = vpop.f32.mrb[0].mxu0
    %v5762 = vadd.f32 %v5649, %v5761
    %v5763 = vpop.f32.mrb[0].mxu0
    %v5764 = vadd.f32 %v5651, %v5763
    %v5765 = vpop.f32.mrb[0].mxu0
    %v5766 = vadd.f32 %v5653, %v5765
    %v5767 = vpop.f32.mrb[0].mxu0
    %v5768 = vadd.f32 %v5655, %v5767
    %5769 = vmatprep.mubr.bf16.mxu0 %v3555
    %5770 = vmatmul.mubr.bf16.gmra.mrb[0].mxu0 %v3554
    %v5771 = vpop.f32.mrb[0].mxu0
    %v5772 = vadd.f32 %v5659, %v5771
    %v5773 = vpop.f32.mrb[0].mxu0
    %v5774 = vadd.f32 %v5661, %v5773
    %v5775 = vpop.f32.mrb[0].mxu0
    %v5776 = vadd.f32 %v5663, %v5775
    %v5777 = vpop.f32.mrb[0].mxu0
    %v5778 = vadd.f32 %v5665, %v5777
    %5779 = vmatprep.mubr.bf16.mxu0 %v3565
    %5780 = vmatmul.mubr.bf16.gmra.mrb[0].mxu0 %v3564
    %v5781 = vpop.f32.mrb[0].mxu0
    %v5782 = vadd.f32 %v5669, %v5781
    %v5783 = vpop.f32.mrb[0].mxu0
    %v5784 = vadd.f32 %v5671, %v5783
    %v5785 = vpop.f32.mrb[0].mxu0
    %v5786 = vadd.f32 %v5673, %v5785
    %v5787 = vpop.f32.mrb[0].mxu0
    %v5788 = vadd.f32 %v5675, %v5787
    %5789 = vmatprep.mubr.bf16.mxu0 %v3575
    %5790 = vmatmul.mubr.bf16.gmra.mrb[0].mxu0 %v3574
    %v5791 = vpop.f32.mrb[0].mxu0
    %v5792 = vadd.f32 %v5679, %v5791
    %v5793 = vpop.f32.mrb[0].mxu0
    %v5794 = vadd.f32 %v5681, %v5793
    %v5795 = vpop.f32.mrb[0].mxu0
    %v5796 = vadd.f32 %v5683, %v5795
    %v5797 = vpop.f32.mrb[0].mxu0
    %v5798 = vadd.f32 %v5685, %v5797
    %5799 = vmatprep.mubr.bf16.mxu0 %v3585
    %5800 = vmatmul.mubr.bf16.gmra.mrb[0].mxu0 %v3584
    %v5801 = vpop.f32.mrb[0].mxu0
    %v5802 = vadd.f32 %v5689, %v5801
    %v5803 = vpop.f32.mrb[0].mxu0
    %v5804 = vadd.f32 %v5691, %v5803
    %v5805 = vpop.f32.mrb[0].mxu0
    %v5806 = vadd.f32 %v5693, %v5805
    %v5807 = vpop.f32.mrb[0].mxu0
    %v5808 = vadd.f32 %v5695, %v5807
    %5809 = vmatprep.mubr.bf16.mxu0 %v3595
    %5810 = vmatmul.mubr.bf16.gmra.mrb[0].mxu0 %v3594
    %v5811 = vpop.f32.mrb[0].mxu0
    %v5812 = vadd.f32 %v5699, %v5811
    %v5813 = vpop.f32.mrb[0].mxu0
    %v5814 = vadd.f32 %v5701, %v5813
    %v5815 = vpop.f32.mrb[0].mxu0
    %v5816 = vadd.f32 %v5703, %v5815
    %v5817 = vpop.f32.mrb[0].mxu0
    %v5818 = vadd.f32 %v5705, %v5817
    %5819 = vmatprep.mubr.bf16.mxu0 %v3605
    %5820 = vmatmul.mubr.bf16.gmra.mrb[0].mxu0 %v3604
    %v5821 = vpop.f32.mrb[0].mxu0
    %v5822 = vadd.f32 %v5709, %v5821
    %v5823 = vpop.f32.mrb[0].mxu0
    %v5824 = vadd.f32 %v5711, %v5823
    %v5825 = vpop.f32.mrb[0].mxu0
    %v5826 = vadd.f32 %v5713, %v5825
    %v5827 = vpop.f32.mrb[0].mxu0
    %v5828 = vadd.f32 %v5715, %v5827
    %5829 = vdwg.mxu0
    %5830 = vmatprep.subr.bf16.mxu0 %v3945
    %5831 = vmatpush1.bf16.msra.mxu0 %v3944
    %5832 = vmatprep.subr.bf16.mxu0 %v3955
    %5833 = vmatpush1.bf16.msra.mxu0 %v3954
    %5834 = vmatprep.subr.bf16.mxu0 %v3965
    %5835 = vmatpush1.bf16.msra.mxu0 %v3964
    %5836 = vmatprep.subr.bf16.mxu0 %v3975
    %5837 = vmatpush1.bf16.msra.mxu0 %v3974
    %5838 = vmatprep.subr.bf16.mxu0 %v3985
    %5839 = vmatpush1.bf16.msra.mxu0 %v3984
    %5840 = vmatprep.subr.bf16.mxu0 %v3995
    %5841 = vmatpush1.bf16.msra.mxu0 %v3994
    %5842 = vmatprep.subr.bf16.mxu0 %v4005
    %5843 = vmatpush1.bf16.msra.mxu0 %v4004
    %5844 = vmatprep.subr.bf16.mxu0 %v4015
    %5845 = vmatpush1.bf16.msra.mxu0 %v4014
    %5846 = vmatprep.subr.bf16.mxu0 %v4025
    %5847 = vmatpush1.bf16.msra.mxu0 %v4024
    %5848 = vmatprep.subr.bf16.mxu0 %v4035
    %5849 = vmatpush1.bf16.msra.mxu0 %v4034
    %5850 = vmatprep.subr.bf16.mxu0 %v4045
    %5851 = vmatpush1.bf16.msra.mxu0 %v4044
    %5852 = vmatprep.subr.bf16.mxu0 %v4055
    %5853 = vmatpush1.bf16.msra.mxu0 %v4054
    %5854 = vmatprep.subr.bf16.mxu0 %v4065
    %5855 = vmatpush1.bf16.msra.mxu0 %v4064
    %5856 = vmatprep.subr.bf16.mxu0 %v4075
    %5857 = vmatpush1.bf16.msra.mxu0 %v4074
    %5858 = vmatprep.subr.bf16.mxu0 %v4085
    %5859 = vmatpush1.bf16.msra.mxu0 %v4084
    %5860 = vmatprep.subr.bf16.mxu0 %v4095
    %5861 = vmatpush1.bf16.msra.mxu0 %v4094
    %5862 = vmatprep.mubr.bf16.mxu0 %v3537
    %5863 = vmatmul.mubr.bf16.gmra.mrb[0].mxu0 %v3536
    %v5864 = vpop.f32.mrb[0].mxu0
    %v5865 = vadd.f32 %v5752, %v5864
    %v5866 = vpop.f32.mrb[0].mxu0
    %v5867 = vadd.f32 %v5754, %v5866
    %v5868 = vpop.f32.mrb[0].mxu0
    %v5869 = vadd.f32 %v5756, %v5868
    %v5870 = vpop.f32.mrb[0].mxu0
    %v5871 = vadd.f32 %v5758, %v5870
    %5872 = vmatprep.mubr.bf16.mxu0 %v3547
    %5873 = vmatmul.mubr.bf16.gmra.mrb[0].mxu0 %v3546
    %v5874 = vpop.f32.mrb[0].mxu0
    %v5875 = vadd.f32 %v5762, %v5874
    %v5876 = vpop.f32.mrb[0].mxu0
    %v5877 = vadd.f32 %v5764, %v5876
    %v5878 = vpop.f32.mrb[0].mxu0
    %v5879 = vadd.f32 %v5766, %v5878
    %v5880 = vpop.f32.mrb[0].mxu0
    %v5881 = vadd.f32 %v5768, %v5880
    %5882 = vmatprep.mubr.bf16.mxu0 %v3557
    %5883 = vmatmul.mubr.bf16.gmra.mrb[0].mxu0 %v3556
    %v5884 = vpop.f32.mrb[0].mxu0
    %v5885 = vadd.f32 %v5772, %v5884
    %v5886 = vpop.f32.mrb[0].mxu0
    %v5887 = vadd.f32 %v5774, %v5886
    %v5888 = vpop.f32.mrb[0].mxu0
    %v5889 = vadd.f32 %v5776, %v5888
    %v5890 = vpop.f32.mrb[0].mxu0
    %v5891 = vadd.f32 %v5778, %v5890
    %5892 = vmatprep.mubr.bf16.mxu0 %v3567
    %5893 = vmatmul.mubr.bf16.gmra.mrb[0].mxu0 %v3566
    %v5894 = vpop.f32.mrb[0].mxu0
    %v5895 = vadd.f32 %v5782, %v5894
    %v5896 = vpop.f32.mrb[0].mxu0
    %v5897 = vadd.f32 %v5784, %v5896
    %v5898 = vpop.f32.mrb[0].mxu0
    %v5899 = vadd.f32 %v5786, %v5898
    %v5900 = vpop.f32.mrb[0].mxu0
    %v5901 = vadd.f32 %v5788, %v5900
    %5902 = vmatprep.mubr.bf16.mxu0 %v3577
    %5903 = vmatmul.mubr.bf16.gmra.mrb[0].mxu0 %v3576
    %v5904 = vpop.f32.mrb[0].mxu0
    %v5905 = vadd.f32 %v5792, %v5904
    %v5906 = vpop.f32.mrb[0].mxu0
    %v5907 = vadd.f32 %v5794, %v5906
    %v5908 = vpop.f32.mrb[0].mxu0
    %v5909 = vadd.f32 %v5796, %v5908
    %v5910 = vpop.f32.mrb[0].mxu0
    %v5911 = vadd.f32 %v5798, %v5910
    %5912 = vmatprep.mubr.bf16.mxu0 %v3587
    %5913 = vmatmul.mubr.bf16.gmra.mrb[0].mxu0 %v3586
    %v5914 = vpop.f32.mrb[0].mxu0
    %v5915 = vadd.f32 %v5802, %v5914
    %v5916 = vpop.f32.mrb[0].mxu0
    %v5917 = vadd.f32 %v5804, %v5916
    %v5918 = vpop.f32.mrb[0].mxu0
    %v5919 = vadd.f32 %v5806, %v5918
    %v5920 = vpop.f32.mrb[0].mxu0
    %v5921 = vadd.f32 %v5808, %v5920
    %5922 = vmatprep.mubr.bf16.mxu0 %v3597
    %5923 = vmatmul.mubr.bf16.gmra.mrb[0].mxu0 %v3596
    %v5924 = vpop.f32.mrb[0].mxu0
    %v5925 = vadd.f32 %v5812, %v5924
    %v5926 = vpop.f32.mrb[0].mxu0
    %v5927 = vadd.f32 %v5814, %v5926
    %v5928 = vpop.f32.mrb[0].mxu0
    %v5929 = vadd.f32 %v5816, %v5928
    %v5930 = vpop.f32.mrb[0].mxu0
    %v5931 = vadd.f32 %v5818, %v5930
    %5932 = vmatprep.mubr.bf16.mxu0 %v3607
    %5933 = vmatmul.mubr.bf16.gmra.mrb[0].mxu0 %v3606
    %v5934 = vpop.f32.mrb[0].mxu0
    %v5935 = vadd.f32 %v5822, %v5934
    %v5936 = vpop.f32.mrb[0].mxu0
    %v5937 = vadd.f32 %v5824, %v5936
    %v5938 = vpop.f32.mrb[0].mxu0
    %v5939 = vadd.f32 %v5826, %v5938
    %v5940 = vpop.f32.mrb[0].mxu0
    %v5941 = vadd.f32 %v5828, %v5940
    %5942 = vdwg.mxu0
    %5943 = vmatprep.subr.bf16.mxu0 %v4105
    %5944 = vmatpush1.bf16.msra.mxu0 %v4104
    %5945 = vmatprep.subr.bf16.mxu0 %v4115
    %5946 = vmatpush1.bf16.msra.mxu0 %v4114
    %5947 = vmatprep.subr.bf16.mxu0 %v4125
    %5948 = vmatpush1.bf16.msra.mxu0 %v4124
    %5949 = vmatprep.subr.bf16.mxu0 %v4135
    %5950 = vmatpush1.bf16.msra.mxu0 %v4134
    %5951 = vmatprep.subr.bf16.mxu0 %v4145
    %5952 = vmatpush1.bf16.msra.mxu0 %v4144
    %5953 = vmatprep.subr.bf16.mxu0 %v4155
    %5954 = vmatpush1.bf16.msra.mxu0 %v4154
    %5955 = vmatprep.subr.bf16.mxu0 %v4165
    %5956 = vmatpush1.bf16.msra.mxu0 %v4164
    %5957 = vmatprep.subr.bf16.mxu0 %v4175
    %5958 = vmatpush1.bf16.msra.mxu0 %v4174
    %5959 = vmatprep.subr.bf16.mxu0 %v4185
    %5960 = vmatpush1.bf16.msra.mxu0 %v4184
    %5961 = vmatprep.subr.bf16.mxu0 %v4195
    %5962 = vmatpush1.bf16.msra.mxu0 %v4194
    %5963 = vmatprep.subr.bf16.mxu0 %v4205
    %5964 = vmatpush1.bf16.msra.mxu0 %v4204
    %5965 = vmatprep.subr.bf16.mxu0 %v4215
    %5966 = vmatpush1.bf16.msra.mxu0 %v4214
    %5967 = vmatprep.subr.bf16.mxu0 %v4225
    %5968 = vmatpush1.bf16.msra.mxu0 %v4224
    %5969 = vmatprep.subr.bf16.mxu0 %v4235
    %5970 = vmatpush1.bf16.msra.mxu0 %v4234
    %5971 = vmatprep.subr.bf16.mxu0 %v4245
    %5972 = vmatpush1.bf16.msra.mxu0 %v4244
    %5973 = vmatprep.subr.bf16.mxu0 %v4255
    %5974 = vmatpush1.bf16.msra.mxu0 %v4254
    %5975 = vmatprep.mubr.bf16.mxu0 %v3539
    %5976 = vmatmul.mubr.bf16.gmra.mrb[0].mxu0 %v3538
    %v5977 = vpop.f32.mrb[0].mxu0
    %v5978 = vadd.f32 %v5865, %v5977
    %v5979 = vpop.f32.mrb[0].mxu0
    %v5980 = vadd.f32 %v5867, %v5979
    %v5981 = vpop.f32.mrb[0].mxu0
    %v5982 = vadd.f32 %v5869, %v5981
    %v5983 = vpop.f32.mrb[0].mxu0
    %v5984 = vadd.f32 %v5871, %v5983
    %5985 = vmatprep.mubr.bf16.mxu0 %v3549
    %5986 = vmatmul.mubr.bf16.gmra.mrb[0].mxu0 %v3548
    %v5987 = vpop.f32.mrb[0].mxu0
    %v5988 = vadd.f32 %v5875, %v5987
    %v5989 = vpop.f32.mrb[0].mxu0
    %v5990 = vadd.f32 %v5877, %v5989
    %v5991 = vpop.f32.mrb[0].mxu0
    %v5992 = vadd.f32 %v5879, %v5991
    %v5993 = vpop.f32.mrb[0].mxu0
    %v5994 = vadd.f32 %v5881, %v5993
    %5995 = vmatprep.mubr.bf16.mxu0 %v3559
    %5996 = vmatmul.mubr.bf16.gmra.mrb[0].mxu0 %v3558
    %v5997 = vpop.f32.mrb[0].mxu0
    %v5998 = vadd.f32 %v5885, %v5997
    %v5999 = vpop.f32.mrb[0].mxu0
    %v6000 = vadd.f32 %v5887, %v5999
    %v6001 = vpop.f32.mrb[0].mxu0
    %v6002 = vadd.f32 %v5889, %v6001
    %v6003 = vpop.f32.mrb[0].mxu0
    %v6004 = vadd.f32 %v5891, %v6003
    %6005 = vmatprep.mubr.bf16.mxu0 %v3569
    %6006 = vmatmul.mubr.bf16.gmra.mrb[0].mxu0 %v3568
    %v6007 = vpop.f32.mrb[0].mxu0
    %v6008 = vadd.f32 %v5895, %v6007
    %v6009 = vpop.f32.mrb[0].mxu0
    %v6010 = vadd.f32 %v5897, %v6009
    %v6011 = vpop.f32.mrb[0].mxu0
    %v6012 = vadd.f32 %v5899, %v6011
    %v6013 = vpop.f32.mrb[0].mxu0
    %v6014 = vadd.f32 %v5901, %v6013
    %6015 = vmatprep.mubr.bf16.mxu0 %v3579
    %6016 = vmatmul.mubr.bf16.gmra.mrb[0].mxu0 %v3578
    %v6017 = vpop.f32.mrb[0].mxu0
    %v6018 = vadd.f32 %v5905, %v6017
    %v6019 = vpop.f32.mrb[0].mxu0
    %v6020 = vadd.f32 %v5907, %v6019
    %v6021 = vpop.f32.mrb[0].mxu0
    %v6022 = vadd.f32 %v5909, %v6021
    %v6023 = vpop.f32.mrb[0].mxu0
    %v6024 = vadd.f32 %v5911, %v6023
    %6025 = vmatprep.mubr.bf16.mxu0 %v3589
    %6026 = vmatmul.mubr.bf16.gmra.mrb[0].mxu0 %v3588
    %v6027 = vpop.f32.mrb[0].mxu0
    %v6028 = vadd.f32 %v5915, %v6027
    %v6029 = vpop.f32.mrb[0].mxu0
    %v6030 = vadd.f32 %v5917, %v6029
    %v6031 = vpop.f32.mrb[0].mxu0
    %v6032 = vadd.f32 %v5919, %v6031
    %v6033 = vpop.f32.mrb[0].mxu0
    %v6034 = vadd.f32 %v5921, %v6033
    %6035 = vmatprep.mubr.bf16.mxu0 %v3599
    %6036 = vmatmul.mubr.bf16.gmra.mrb[0].mxu0 %v3598
    %v6037 = vpop.f32.mrb[0].mxu0
    %v6038 = vadd.f32 %v5925, %v6037
    %v6039 = vpop.f32.mrb[0].mxu0
    %v6040 = vadd.f32 %v5927, %v6039
    %v6041 = vpop.f32.mrb[0].mxu0
    %v6042 = vadd.f32 %v5929, %v6041
    %v6043 = vpop.f32.mrb[0].mxu0
    %v6044 = vadd.f32 %v5931, %v6043
    %6045 = vmatprep.mubr.bf16.mxu0 %v3609
    %6046 = vmatmul.mubr.bf16.gmra.mrb[0].mxu0 %v3608
    %v6047 = vpop.f32.mrb[0].mxu0
    %v6048 = vadd.f32 %v5935, %v6047
    %v6049 = vpop.f32.mrb[0].mxu0
    %v6050 = vadd.f32 %v5937, %v6049
    %v6051 = vpop.f32.mrb[0].mxu0
    %v6052 = vadd.f32 %v5939, %v6051
    %v6053 = vpop.f32.mrb[0].mxu0
    %v6054 = vadd.f32 %v5941, %v6053
    %6055 = vdwg.mxu0
    %6056 = vmatprep.subr.bf16.mxu0 %v4265
    %6057 = vmatpush1.bf16.msra.mxu0 %v4264
    %6058 = vmatprep.subr.bf16.mxu0 %v4275
    %6059 = vmatpush1.bf16.msra.mxu0 %v4274
    %6060 = vmatprep.subr.bf16.mxu0 %v4285
    %6061 = vmatpush1.bf16.msra.mxu0 %v4284
    %6062 = vmatprep.subr.bf16.mxu0 %v4295
    %6063 = vmatpush1.bf16.msra.mxu0 %v4294
    %6064 = vmatprep.subr.bf16.mxu0 %v4305
    %6065 = vmatpush1.bf16.msra.mxu0 %v4304
    %6066 = vmatprep.subr.bf16.mxu0 %v4315
    %6067 = vmatpush1.bf16.msra.mxu0 %v4314
    %6068 = vmatprep.subr.bf16.mxu0 %v4325
    %6069 = vmatpush1.bf16.msra.mxu0 %v4324
    %6070 = vmatprep.subr.bf16.mxu0 %v4335
    %6071 = vmatpush1.bf16.msra.mxu0 %v4334
    %6072 = vmatprep.subr.bf16.mxu0 %v4345
    %6073 = vmatpush1.bf16.msra.mxu0 %v4344
    %6074 = vmatprep.subr.bf16.mxu0 %v4355
    %6075 = vmatpush1.bf16.msra.mxu0 %v4354
    %6076 = vmatprep.subr.bf16.mxu0 %v4365
    %6077 = vmatpush1.bf16.msra.mxu0 %v4364
    %6078 = vmatprep.subr.bf16.mxu0 %v4375
    %6079 = vmatpush1.bf16.msra.mxu0 %v4374
    %6080 = vmatprep.subr.bf16.mxu0 %v4385
    %6081 = vmatpush1.bf16.msra.mxu0 %v4384
    %6082 = vmatprep.subr.bf16.mxu0 %v4395
    %6083 = vmatpush1.bf16.msra.mxu0 %v4394
    %6084 = vmatprep.subr.bf16.mxu0 %v4405
    %6085 = vmatpush1.bf16.msra.mxu0 %v4404
    %6086 = vmatprep.subr.bf16.mxu0 %v4415
    %6087 = vmatpush1.bf16.msra.mxu0 %v4414
    %6088 = vmatprep.mubr.bf16.mxu0 %v3541
    %6089 = vmatmul.mubr.bf16.gmra.mrb[0].mxu0 %v3540
    %v6090 = vpop.f32.mrb[0].mxu0
    %v6091 = vadd.f32 %v5978, %v6090
    %v6092 = vpop.f32.mrb[0].mxu0
    %v6093 = vadd.f32 %v5980, %v6092
    %v6094 = vpop.f32.mrb[0].mxu0
    %v6095 = vadd.f32 %v5982, %v6094
    %v6096 = vpop.f32.mrb[0].mxu0
    %v6097 = vadd.f32 %v5984, %v6096
    %6098 = vmatprep.mubr.bf16.mxu0 %v3551
    %6099 = vmatmul.mubr.bf16.gmra.mrb[0].mxu0 %v3550
    %v6100 = vpop.f32.mrb[0].mxu0
    %v6101 = vadd.f32 %v5988, %v6100
    %v6102 = vpop.f32.mrb[0].mxu0
    %v6103 = vadd.f32 %v5990, %v6102
    %v6104 = vpop.f32.mrb[0].mxu0
    %v6105 = vadd.f32 %v5992, %v6104
    %v6106 = vpop.f32.mrb[0].mxu0
    %v6107 = vadd.f32 %v5994, %v6106
    %6108 = vmatprep.mubr.bf16.mxu0 %v3561
    %6109 = vmatmul.mubr.bf16.gmra.mrb[0].mxu0 %v3560
    %v6110 = vpop.f32.mrb[0].mxu0
    %v6111 = vadd.f32 %v5998, %v6110
    %v6112 = vpop.f32.mrb[0].mxu0
    %v6113 = vadd.f32 %v6000, %v6112
    %v6114 = vpop.f32.mrb[0].mxu0
    %v6115 = vadd.f32 %v6002, %v6114
    %v6116 = vpop.f32.mrb[0].mxu0
    %v6117 = vadd.f32 %v6004, %v6116
    %6118 = vmatprep.mubr.bf16.mxu0 %v3571
    %6119 = vmatmul.mubr.bf16.gmra.mrb[0].mxu0 %v3570
    %v6120 = vpop.f32.mrb[0].mxu0
    %v6121 = vadd.f32 %v6008, %v6120
    %v6122 = vpop.f32.mrb[0].mxu0
    %v6123 = vadd.f32 %v6010, %v6122
    %v6124 = vpop.f32.mrb[0].mxu0
    %v6125 = vadd.f32 %v6012, %v6124
    %v6126 = vpop.f32.mrb[0].mxu0
    %v6127 = vadd.f32 %v6014, %v6126
    %6128 = vmatprep.mubr.bf16.mxu0 %v3581
    %6129 = vmatmul.mubr.bf16.gmra.mrb[0].mxu0 %v3580
    %v6130 = vpop.f32.mrb[0].mxu0
    %v6131 = vadd.f32 %v6018, %v6130
    %v6132 = vpop.f32.mrb[0].mxu0
    %v6133 = vadd.f32 %v6020, %v6132
    %v6134 = vpop.f32.mrb[0].mxu0
    %v6135 = vadd.f32 %v6022, %v6134
    %v6136 = vpop.f32.mrb[0].mxu0
    %v6137 = vadd.f32 %v6024, %v6136
    %6138 = vmatprep.mubr.bf16.mxu0 %v3591
    %6139 = vmatmul.mubr.bf16.gmra.mrb[0].mxu0 %v3590
    %v6140 = vpop.f32.mrb[0].mxu0
    %v6141 = vadd.f32 %v6028, %v6140
    %v6142 = vpop.f32.mrb[0].mxu0
    %v6143 = vadd.f32 %v6030, %v6142
    %v6144 = vpop.f32.mrb[0].mxu0
    %v6145 = vadd.f32 %v6032, %v6144
    %v6146 = vpop.f32.mrb[0].mxu0
    %v6147 = vadd.f32 %v6034, %v6146
    %6148 = vmatprep.mubr.bf16.mxu0 %v3601
    %6149 = vmatmul.mubr.bf16.gmra.mrb[0].mxu0 %v3600
    %v6150 = vpop.f32.mrb[0].mxu0
    %v6151 = vadd.f32 %v6038, %v6150
    %v6152 = vpop.f32.mrb[0].mxu0
    %v6153 = vadd.f32 %v6040, %v6152
    %v6154 = vpop.f32.mrb[0].mxu0
    %v6155 = vadd.f32 %v6042, %v6154
    %v6156 = vpop.f32.mrb[0].mxu0
    %v6157 = vadd.f32 %v6044, %v6156
    %6158 = vmatprep.mubr.bf16.mxu0 %v3611
    %6159 = vmatmul.mubr.bf16.gmra.mrb[0].mxu0 %v3610
    %v6160 = vpop.f32.mrb[0].mxu0
    %v6161 = vadd.f32 %v6048, %v6160
    %v6162 = vpop.f32.mrb[0].mxu0
    %v6163 = vadd.f32 %v6050, %v6162
    %v6164 = vpop.f32.mrb[0].mxu0
    %v6165 = vadd.f32 %v6052, %v6164
    %v6166 = vpop.f32.mrb[0].mxu0
    %v6167 = vadd.f32 %v6054, %v6166
    %6168 = vdwg.mxu0
    %6169 = vmatprep.subr.bf16.mxu0 %v3627
    %6170 = vmatpush1.bf16.msra.mxu0 %v3626
    %6171 = vmatprep.subr.bf16.mxu0 %v3637
    %6172 = vmatpush1.bf16.msra.mxu0 %v3636
    %6173 = vmatprep.subr.bf16.mxu0 %v3647
    %6174 = vmatpush1.bf16.msra.mxu0 %v3646
    %6175 = vmatprep.subr.bf16.mxu0 %v3657
    %6176 = vmatpush1.bf16.msra.mxu0 %v3656
    %6177 = vmatprep.subr.bf16.mxu0 %v3667
    %6178 = vmatpush1.bf16.msra.mxu0 %v3666
    %6179 = vmatprep.subr.bf16.mxu0 %v3677
    %6180 = vmatpush1.bf16.msra.mxu0 %v3676
    %6181 = vmatprep.subr.bf16.mxu0 %v3687
    %6182 = vmatpush1.bf16.msra.mxu0 %v3686
    %6183 = vmatprep.subr.bf16.mxu0 %v3697
    %6184 = vmatpush1.bf16.msra.mxu0 %v3696
    %6185 = vmatprep.subr.bf16.mxu0 %v3707
    %6186 = vmatpush1.bf16.msra.mxu0 %v3706
    %6187 = vmatprep.subr.bf16.mxu0 %v3717
    %6188 = vmatpush1.bf16.msra.mxu0 %v3716
    %6189 = vmatprep.subr.bf16.mxu0 %v3727
    %6190 = vmatpush1.bf16.msra.mxu0 %v3726
    %6191 = vmatprep.subr.bf16.mxu0 %v3737
    %6192 = vmatpush1.bf16.msra.mxu0 %v3736
    %6193 = vmatprep.subr.bf16.mxu0 %v3747
    %6194 = vmatpush1.bf16.msra.mxu0 %v3746
    %6195 = vmatprep.subr.bf16.mxu0 %v3757
    %6196 = vmatpush1.bf16.msra.mxu0 %v3756
    %6197 = vmatprep.subr.bf16.mxu0 %v3767
    %6198 = vmatpush1.bf16.msra.mxu0 %v3766
    %6199 = vmatprep.subr.bf16.mxu0 %v3777
    %6200 = vmatpush1.bf16.msra.mxu0 %v3776
    %6201 = vmatprep.mubr.bf16.mxu0 %v3533
    %6202 = vmatmul.mubr.bf16.gmra.mrb[0].mxu0 %v3532
    %v6203 = vpop.f32.mrb[0].mxu0
    %v6204 = vadd.f32 %v4451, %v6203
    %v6205 = vpop.f32.mrb[0].mxu0
    %v6206 = vadd.f32 %v4455, %v6205
    %v6207 = vpop.f32.mrb[0].mxu0
    %v6208 = vadd.f32 %v4451, %v6207
    %v6209 = vpop.f32.mrb[0].mxu0
    %v6210 = vadd.f32 %v4455, %v6209
    %6211 = vmatprep.mubr.bf16.mxu0 %v3543
    %6212 = vmatmul.mubr.bf16.gmra.mrb[0].mxu0 %v3542
    %v6213 = vpop.f32.mrb[0].mxu0
    %v6214 = vadd.f32 %v4451, %v6213
    %v6215 = vpop.f32.mrb[0].mxu0
    %v6216 = vadd.f32 %v4455, %v6215
    %v6217 = vpop.f32.mrb[0].mxu0
    %v6218 = vadd.f32 %v4451, %v6217
    %v6219 = vpop.f32.mrb[0].mxu0
    %v6220 = vadd.f32 %v4455, %v6219
    %6221 = vmatprep.mubr.bf16.mxu0 %v3553
    %6222 = vmatmul.mubr.bf16.gmra.mrb[0].mxu0 %v3552
    %v6223 = vpop.f32.mrb[0].mxu0
    %v6224 = vadd.f32 %v4451, %v6223
    %v6225 = vpop.f32.mrb[0].mxu0
    %v6226 = vadd.f32 %v4455, %v6225
    %v6227 = vpop.f32.mrb[0].mxu0
    %v6228 = vadd.f32 %v4451, %v6227
    %v6229 = vpop.f32.mrb[0].mxu0
    %v6230 = vadd.f32 %v4455, %v6229
    %6231 = vmatprep.mubr.bf16.mxu0 %v3563
    %6232 = vmatmul.mubr.bf16.gmra.mrb[0].mxu0 %v3562
    %v6233 = vpop.f32.mrb[0].mxu0
    %v6234 = vadd.f32 %v4451, %v6233
    %v6235 = vpop.f32.mrb[0].mxu0
    %v6236 = vadd.f32 %v4455, %v6235
    %v6237 = vpop.f32.mrb[0].mxu0
    %v6238 = vadd.f32 %v4451, %v6237
    %v6239 = vpop.f32.mrb[0].mxu0
    %v6240 = vadd.f32 %v4455, %v6239
    %6241 = vmatprep.mubr.bf16.mxu0 %v3573
    %6242 = vmatmul.mubr.bf16.gmra.mrb[0].mxu0 %v3572
    %v6243 = vpop.f32.mrb[0].mxu0
    %v6244 = vadd.f32 %v4451, %v6243
    %v6245 = vpop.f32.mrb[0].mxu0
    %v6246 = vadd.f32 %v4455, %v6245
    %v6247 = vpop.f32.mrb[0].mxu0
    %v6248 = vadd.f32 %v4451, %v6247
    %v6249 = vpop.f32.mrb[0].mxu0
    %v6250 = vadd.f32 %v4455, %v6249
    %6251 = vmatprep.mubr.bf16.mxu0 %v3583
    %6252 = vmatmul.mubr.bf16.gmra.mrb[0].mxu0 %v3582
    %v6253 = vpop.f32.mrb[0].mxu0
    %v6254 = vadd.f32 %v4451, %v6253
    %v6255 = vpop.f32.mrb[0].mxu0
    %v6256 = vadd.f32 %v4455, %v6255
    %v6257 = vpop.f32.mrb[0].mxu0
    %v6258 = vadd.f32 %v4451, %v6257
    %v6259 = vpop.f32.mrb[0].mxu0
    %v6260 = vadd.f32 %v4455, %v6259
    %6261 = vmatprep.mubr.bf16.mxu0 %v3593
    %6262 = vmatmul.mubr.bf16.gmra.mrb[0].mxu0 %v3592
    %v6263 = vpop.f32.mrb[0].mxu0
    %v6264 = vadd.f32 %v4451, %v6263
    %v6265 = vpop.f32.mrb[0].mxu0
    %v6266 = vadd.f32 %v4455, %v6265
    %v6267 = vpop.f32.mrb[0].mxu0
    %v6268 = vadd.f32 %v4451, %v6267
    %v6269 = vpop.f32.mrb[0].mxu0
    %v6270 = vadd.f32 %v4455, %v6269
    %6271 = vmatprep.mubr.bf16.mxu0 %v3603
    %6272 = vmatmul.mubr.bf16.gmra.mrb[0].mxu0 %v3602
    %v6273 = vpop.f32.mrb[0].mxu0
    %v6274 = vadd.f32 %v4451, %v6273
    %v6275 = vpop.f32.mrb[0].mxu0
    %v6276 = vadd.f32 %v4455, %v6275
    %v6277 = vpop.f32.mrb[0].mxu0
    %v6278 = vadd.f32 %v4451, %v6277
    %v6279 = vpop.f32.mrb[0].mxu0
    %v6280 = vadd.f32 %v4455, %v6279
    %6281 = vdwg.mxu0
    %6282 = vmatprep.subr.bf16.mxu0 %v3787
    %6283 = vmatpush1.bf16.msra.mxu0 %v3786
    %6284 = vmatprep.subr.bf16.mxu0 %v3797
    %6285 = vmatpush1.bf16.msra.mxu0 %v3796
    %6286 = vmatprep.subr.bf16.mxu0 %v3807
    %6287 = vmatpush1.bf16.msra.mxu0 %v3806
    %6288 = vmatprep.subr.bf16.mxu0 %v3817
    %6289 = vmatpush1.bf16.msra.mxu0 %v3816
    %6290 = vmatprep.subr.bf16.mxu0 %v3827
    %6291 = vmatpush1.bf16.msra.mxu0 %v3826
    %6292 = vmatprep.subr.bf16.mxu0 %v3837
    %6293 = vmatpush1.bf16.msra.mxu0 %v3836
    %6294 = vmatprep.subr.bf16.mxu0 %v3847
    %6295 = vmatpush1.bf16.msra.mxu0 %v3846
    %6296 = vmatprep.subr.bf16.mxu0 %v3857
    %6297 = vmatpush1.bf16.msra.mxu0 %v3856
    %6298 = vmatprep.subr.bf16.mxu0 %v3867
    %6299 = vmatpush1.bf16.msra.mxu0 %v3866
    %6300 = vmatprep.subr.bf16.mxu0 %v3877
    %6301 = vmatpush1.bf16.msra.mxu0 %v3876
    %6302 = vmatprep.subr.bf16.mxu0 %v3887
    %6303 = vmatpush1.bf16.msra.mxu0 %v3886
    %6304 = vmatprep.subr.bf16.mxu0 %v3897
    %6305 = vmatpush1.bf16.msra.mxu0 %v3896
    %6306 = vmatprep.subr.bf16.mxu0 %v3907
    %6307 = vmatpush1.bf16.msra.mxu0 %v3906
    %6308 = vmatprep.subr.bf16.mxu0 %v3917
    %6309 = vmatpush1.bf16.msra.mxu0 %v3916
    %6310 = vmatprep.subr.bf16.mxu0 %v3927
    %6311 = vmatpush1.bf16.msra.mxu0 %v3926
    %6312 = vmatprep.subr.bf16.mxu0 %v3937
    %6313 = vmatpush1.bf16.msra.mxu0 %v3936
    %6314 = vmatprep.mubr.bf16.mxu0 %v3535
    %6315 = vmatmul.mubr.bf16.gmra.mrb[0].mxu0 %v3534
    %v6316 = vpop.f32.mrb[0].mxu0
    %v6317 = vadd.f32 %v6204, %v6316
    %v6318 = vpop.f32.mrb[0].mxu0
    %v6319 = vadd.f32 %v6206, %v6318
    %v6320 = vpop.f32.mrb[0].mxu0
    %v6321 = vadd.f32 %v6208, %v6320
    %v6322 = vpop.f32.mrb[0].mxu0
    %v6323 = vadd.f32 %v6210, %v6322
    %6324 = vmatprep.mubr.bf16.mxu0 %v3545
    %6325 = vmatmul.mubr.bf16.gmra.mrb[0].mxu0 %v3544
    %v6326 = vpop.f32.mrb[0].mxu0
    %v6327 = vadd.f32 %v6214, %v6326
    %v6328 = vpop.f32.mrb[0].mxu0
    %v6329 = vadd.f32 %v6216, %v6328
    %v6330 = vpop.f32.mrb[0].mxu0
    %v6331 = vadd.f32 %v6218, %v6330
    %v6332 = vpop.f32.mrb[0].mxu0
    %v6333 = vadd.f32 %v6220, %v6332
    %6334 = vmatprep.mubr.bf16.mxu0 %v3555
    %6335 = vmatmul.mubr.bf16.gmra.mrb[0].mxu0 %v3554
    %v6336 = vpop.f32.mrb[0].mxu0
    %v6337 = vadd.f32 %v6224, %v6336
    %v6338 = vpop.f32.mrb[0].mxu0
    %v6339 = vadd.f32 %v6226, %v6338
    %v6340 = vpop.f32.mrb[0].mxu0
    %v6341 = vadd.f32 %v6228, %v6340
    %v6342 = vpop.f32.mrb[0].mxu0
    %v6343 = vadd.f32 %v6230, %v6342
    %6344 = vmatprep.mubr.bf16.mxu0 %v3565
    %6345 = vmatmul.mubr.bf16.gmra.mrb[0].mxu0 %v3564
    %v6346 = vpop.f32.mrb[0].mxu0
    %v6347 = vadd.f32 %v6234, %v6346
    %v6348 = vpop.f32.mrb[0].mxu0
    %v6349 = vadd.f32 %v6236, %v6348
    %v6350 = vpop.f32.mrb[0].mxu0
    %v6351 = vadd.f32 %v6238, %v6350
    %v6352 = vpop.f32.mrb[0].mxu0
    %v6353 = vadd.f32 %v6240, %v6352
    %6354 = vmatprep.mubr.bf16.mxu0 %v3575
    %6355 = vmatmul.mubr.bf16.gmra.mrb[0].mxu0 %v3574
    %v6356 = vpop.f32.mrb[0].mxu0
    %v6357 = vadd.f32 %v6244, %v6356
    %v6358 = vpop.f32.mrb[0].mxu0
    %v6359 = vadd.f32 %v6246, %v6358
    %v6360 = vpop.f32.mrb[0].mxu0
    %v6361 = vadd.f32 %v6248, %v6360
    %v6362 = vpop.f32.mrb[0].mxu0
    %v6363 = vadd.f32 %v6250, %v6362
    %6364 = vmatprep.mubr.bf16.mxu0 %v3585
    %6365 = vmatmul.mubr.bf16.gmra.mrb[0].mxu0 %v3584
    %v6366 = vpop.f32.mrb[0].mxu0
    %v6367 = vadd.f32 %v6254, %v6366
    %v6368 = vpop.f32.mrb[0].mxu0
    %v6369 = vadd.f32 %v6256, %v6368
    %v6370 = vpop.f32.mrb[0].mxu0
    %v6371 = vadd.f32 %v6258, %v6370
    %v6372 = vpop.f32.mrb[0].mxu0
    %v6373 = vadd.f32 %v6260, %v6372
    %6374 = vmatprep.mubr.bf16.mxu0 %v3595
    %6375 = vmatmul.mubr.bf16.gmra.mrb[0].mxu0 %v3594
    %v6376 = vpop.f32.mrb[0].mxu0
    %v6377 = vadd.f32 %v6264, %v6376
    %v6378 = vpop.f32.mrb[0].mxu0
    %v6379 = vadd.f32 %v6266, %v6378
    %v6380 = vpop.f32.mrb[0].mxu0
    %v6381 = vadd.f32 %v6268, %v6380
    %v6382 = vpop.f32.mrb[0].mxu0
    %v6383 = vadd.f32 %v6270, %v6382
    %6384 = vmatprep.mubr.bf16.mxu0 %v3605
    %6385 = vmatmul.mubr.bf16.gmra.mrb[0].mxu0 %v3604
    %v6386 = vpop.f32.mrb[0].mxu0
    %v6387 = vadd.f32 %v6274, %v6386
    %v6388 = vpop.f32.mrb[0].mxu0
    %v6389 = vadd.f32 %v6276, %v6388
    %v6390 = vpop.f32.mrb[0].mxu0
    %v6391 = vadd.f32 %v6278, %v6390
    %v6392 = vpop.f32.mrb[0].mxu0
    %v6393 = vadd.f32 %v6280, %v6392
    %6394 = vdwg.mxu0
    %6395 = vmatprep.subr.bf16.mxu0 %v3947
    %6396 = vmatpush1.bf16.msra.mxu0 %v3946
    %6397 = vmatprep.subr.bf16.mxu0 %v3957
    %6398 = vmatpush1.bf16.msra.mxu0 %v3956
    %6399 = vmatprep.subr.bf16.mxu0 %v3967
    %6400 = vmatpush1.bf16.msra.mxu0 %v3966
    %6401 = vmatprep.subr.bf16.mxu0 %v3977
    %6402 = vmatpush1.bf16.msra.mxu0 %v3976
    %6403 = vmatprep.subr.bf16.mxu0 %v3987
    %6404 = vmatpush1.bf16.msra.mxu0 %v3986
    %6405 = vmatprep.subr.bf16.mxu0 %v3997
    %6406 = vmatpush1.bf16.msra.mxu0 %v3996
    %6407 = vmatprep.subr.bf16.mxu0 %v4007
    %6408 = vmatpush1.bf16.msra.mxu0 %v4006
    %6409 = vmatprep.subr.bf16.mxu0 %v4017
    %6410 = vmatpush1.bf16.msra.mxu0 %v4016
    %6411 = vmatprep.subr.bf16.mxu0 %v4027
    %6412 = vmatpush1.bf16.msra.mxu0 %v4026
    %6413 = vmatprep.subr.bf16.mxu0 %v4037
    %6414 = vmatpush1.bf16.msra.mxu0 %v4036
    %6415 = vmatprep.subr.bf16.mxu0 %v4047
    %6416 = vmatpush1.bf16.msra.mxu0 %v4046
    %6417 = vmatprep.subr.bf16.mxu0 %v4057
    %6418 = vmatpush1.bf16.msra.mxu0 %v4056
    %6419 = vmatprep.subr.bf16.mxu0 %v4067
    %6420 = vmatpush1.bf16.msra.mxu0 %v4066
    %6421 = vmatprep.subr.bf16.mxu0 %v4077
    %6422 = vmatpush1.bf16.msra.mxu0 %v4076
    %6423 = vmatprep.subr.bf16.mxu0 %v4087
    %6424 = vmatpush1.bf16.msra.mxu0 %v4086
    %6425 = vmatprep.subr.bf16.mxu0 %v4097
    %6426 = vmatpush1.bf16.msra.mxu0 %v4096
    %6427 = vmatprep.mubr.bf16.mxu0 %v3537
    %6428 = vmatmul.mubr.bf16.gmra.mrb[0].mxu0 %v3536
    %v6429 = vpop.f32.mrb[0].mxu0
    %v6430 = vadd.f32 %v6317, %v6429
    %v6431 = vpop.f32.mrb[0].mxu0
    %v6432 = vadd.f32 %v6319, %v6431
    %v6433 = vpop.f32.mrb[0].mxu0
    %v6434 = vadd.f32 %v6321, %v6433
    %v6435 = vpop.f32.mrb[0].mxu0
    %v6436 = vadd.f32 %v6323, %v6435
    %6437 = vmatprep.mubr.bf16.mxu0 %v3547
    %6438 = vmatmul.mubr.bf16.gmra.mrb[0].mxu0 %v3546
    %v6439 = vpop.f32.mrb[0].mxu0
    %v6440 = vadd.f32 %v6327, %v6439
    %v6441 = vpop.f32.mrb[0].mxu0
    %v6442 = vadd.f32 %v6329, %v6441
    %v6443 = vpop.f32.mrb[0].mxu0
    %v6444 = vadd.f32 %v6331, %v6443
    %v6445 = vpop.f32.mrb[0].mxu0
    %v6446 = vadd.f32 %v6333, %v6445
    %6447 = vmatprep.mubr.bf16.mxu0 %v3557
    %6448 = vmatmul.mubr.bf16.gmra.mrb[0].mxu0 %v3556
    %v6449 = vpop.f32.mrb[0].mxu0
    %v6450 = vadd.f32 %v6337, %v6449
    %v6451 = vpop.f32.mrb[0].mxu0
    %v6452 = vadd.f32 %v6339, %v6451
    %v6453 = vpop.f32.mrb[0].mxu0
    %v6454 = vadd.f32 %v6341, %v6453
    %v6455 = vpop.f32.mrb[0].mxu0
    %v6456 = vadd.f32 %v6343, %v6455
    %6457 = vmatprep.mubr.bf16.mxu0 %v3567
    %6458 = vmatmul.mubr.bf16.gmra.mrb[0].mxu0 %v3566
    %v6459 = vpop.f32.mrb[0].mxu0
    %v6460 = vadd.f32 %v6347, %v6459
    %v6461 = vpop.f32.mrb[0].mxu0
    %v6462 = vadd.f32 %v6349, %v6461
    %v6463 = vpop.f32.mrb[0].mxu0
    %v6464 = vadd.f32 %v6351, %v6463
    %v6465 = vpop.f32.mrb[0].mxu0
    %v6466 = vadd.f32 %v6353, %v6465
    %6467 = vmatprep.mubr.bf16.mxu0 %v3577
    %6468 = vmatmul.mubr.bf16.gmra.mrb[0].mxu0 %v3576
    %v6469 = vpop.f32.mrb[0].mxu0
    %v6470 = vadd.f32 %v6357, %v6469
    %v6471 = vpop.f32.mrb[0].mxu0
    %v6472 = vadd.f32 %v6359, %v6471
    %v6473 = vpop.f32.mrb[0].mxu0
    %v6474 = vadd.f32 %v6361, %v6473
    %v6475 = vpop.f32.mrb[0].mxu0
    %v6476 = vadd.f32 %v6363, %v6475
    %6477 = vmatprep.mubr.bf16.mxu0 %v3587
    %6478 = vmatmul.mubr.bf16.gmra.mrb[0].mxu0 %v3586
    %v6479 = vpop.f32.mrb[0].mxu0
    %v6480 = vadd.f32 %v6367, %v6479
    %v6481 = vpop.f32.mrb[0].mxu0
    %v6482 = vadd.f32 %v6369, %v6481
    %v6483 = vpop.f32.mrb[0].mxu0
    %v6484 = vadd.f32 %v6371, %v6483
    %v6485 = vpop.f32.mrb[0].mxu0
    %v6486 = vadd.f32 %v6373, %v6485
    %6487 = vmatprep.mubr.bf16.mxu0 %v3597
    %6488 = vmatmul.mubr.bf16.gmra.mrb[0].mxu0 %v3596
    %v6489 = vpop.f32.mrb[0].mxu0
    %v6490 = vadd.f32 %v6377, %v6489
    %v6491 = vpop.f32.mrb[0].mxu0
    %v6492 = vadd.f32 %v6379, %v6491
    %v6493 = vpop.f32.mrb[0].mxu0
    %v6494 = vadd.f32 %v6381, %v6493
    %v6495 = vpop.f32.mrb[0].mxu0
    %v6496 = vadd.f32 %v6383, %v6495
    %6497 = vmatprep.mubr.bf16.mxu0 %v3607
    %6498 = vmatmul.mubr.bf16.gmra.mrb[0].mxu0 %v3606
    %v6499 = vpop.f32.mrb[0].mxu0
    %v6500 = vadd.f32 %v6387, %v6499
    %v6501 = vpop.f32.mrb[0].mxu0
    %v6502 = vadd.f32 %v6389, %v6501
    %v6503 = vpop.f32.mrb[0].mxu0
    %v6504 = vadd.f32 %v6391, %v6503
    %v6505 = vpop.f32.mrb[0].mxu0
    %v6506 = vadd.f32 %v6393, %v6505
    %6507 = vdwg.mxu0
    %6508 = vmatprep.subr.bf16.mxu0 %v4107
    %6509 = vmatpush1.bf16.msra.mxu0 %v4106
    %6510 = vmatprep.subr.bf16.mxu0 %v4117
    %6511 = vmatpush1.bf16.msra.mxu0 %v4116
    %6512 = vmatprep.subr.bf16.mxu0 %v4127
    %6513 = vmatpush1.bf16.msra.mxu0 %v4126
    %6514 = vmatprep.subr.bf16.mxu0 %v4137
    %6515 = vmatpush1.bf16.msra.mxu0 %v4136
    %6516 = vmatprep.subr.bf16.mxu0 %v4147
    %6517 = vmatpush1.bf16.msra.mxu0 %v4146
    %6518 = vmatprep.subr.bf16.mxu0 %v4157
    %6519 = vmatpush1.bf16.msra.mxu0 %v4156
    %6520 = vmatprep.subr.bf16.mxu0 %v4167
    %6521 = vmatpush1.bf16.msra.mxu0 %v4166
    %6522 = vmatprep.subr.bf16.mxu0 %v4177
    %6523 = vmatpush1.bf16.msra.mxu0 %v4176
    %6524 = vmatprep.subr.bf16.mxu0 %v4187
    %6525 = vmatpush1.bf16.msra.mxu0 %v4186
    %6526 = vmatprep.subr.bf16.mxu0 %v4197
    %6527 = vmatpush1.bf16.msra.mxu0 %v4196
    %6528 = vmatprep.subr.bf16.mxu0 %v4207
    %6529 = vmatpush1.bf16.msra.mxu0 %v4206
    %6530 = vmatprep.subr.bf16.mxu0 %v4217
    %6531 = vmatpush1.bf16.msra.mxu0 %v4216
    %6532 = vmatprep.subr.bf16.mxu0 %v4227
    %6533 = vmatpush1.bf16.msra.mxu0 %v4226
    %6534 = vmatprep.subr.bf16.mxu0 %v4237
    %6535 = vmatpush1.bf16.msra.mxu0 %v4236
    %6536 = vmatprep.subr.bf16.mxu0 %v4247
    %6537 = vmatpush1.bf16.msra.mxu0 %v4246
    %6538 = vmatprep.subr.bf16.mxu0 %v4257
    %6539 = vmatpush1.bf16.msra.mxu0 %v4256
    %6540 = vmatprep.mubr.bf16.mxu0 %v3539
    %6541 = vmatmul.mubr.bf16.gmra.mrb[0].mxu0 %v3538
    %v6542 = vpop.f32.mrb[0].mxu0
    %v6543 = vadd.f32 %v6430, %v6542
    %v6544 = vpop.f32.mrb[0].mxu0
    %v6545 = vadd.f32 %v6432, %v6544
    %v6546 = vpop.f32.mrb[0].mxu0
    %v6547 = vadd.f32 %v6434, %v6546
    %v6548 = vpop.f32.mrb[0].mxu0
    %v6549 = vadd.f32 %v6436, %v6548
    %6550 = vmatprep.mubr.bf16.mxu0 %v3549
    %6551 = vmatmul.mubr.bf16.gmra.mrb[0].mxu0 %v3548
    %v6552 = vpop.f32.mrb[0].mxu0
    %v6553 = vadd.f32 %v6440, %v6552
    %v6554 = vpop.f32.mrb[0].mxu0
    %v6555 = vadd.f32 %v6442, %v6554
    %v6556 = vpop.f32.mrb[0].mxu0
    %v6557 = vadd.f32 %v6444, %v6556
    %v6558 = vpop.f32.mrb[0].mxu0
    %v6559 = vadd.f32 %v6446, %v6558
    %6560 = vmatprep.mubr.bf16.mxu0 %v3559
    %6561 = vmatmul.mubr.bf16.gmra.mrb[0].mxu0 %v3558
    %v6562 = vpop.f32.mrb[0].mxu0
    %v6563 = vadd.f32 %v6450, %v6562
    %v6564 = vpop.f32.mrb[0].mxu0
    %v6565 = vadd.f32 %v6452, %v6564
    %v6566 = vpop.f32.mrb[0].mxu0
    %v6567 = vadd.f32 %v6454, %v6566
    %v6568 = vpop.f32.mrb[0].mxu0
    %v6569 = vadd.f32 %v6456, %v6568
    %6570 = vmatprep.mubr.bf16.mxu0 %v3569
    %6571 = vmatmul.mubr.bf16.gmra.mrb[0].mxu0 %v3568
    %v6572 = vpop.f32.mrb[0].mxu0
    %v6573 = vadd.f32 %v6460, %v6572
    %v6574 = vpop.f32.mrb[0].mxu0
    %v6575 = vadd.f32 %v6462, %v6574
    %v6576 = vpop.f32.mrb[0].mxu0
    %v6577 = vadd.f32 %v6464, %v6576
    %v6578 = vpop.f32.mrb[0].mxu0
    %v6579 = vadd.f32 %v6466, %v6578
    %6580 = vmatprep.mubr.bf16.mxu0 %v3579
    %6581 = vmatmul.mubr.bf16.gmra.mrb[0].mxu0 %v3578
    %v6582 = vpop.f32.mrb[0].mxu0
    %v6583 = vadd.f32 %v6470, %v6582
    %v6584 = vpop.f32.mrb[0].mxu0
    %v6585 = vadd.f32 %v6472, %v6584
    %v6586 = vpop.f32.mrb[0].mxu0
    %v6587 = vadd.f32 %v6474, %v6586
    %v6588 = vpop.f32.mrb[0].mxu0
    %v6589 = vadd.f32 %v6476, %v6588
    %6590 = vmatprep.mubr.bf16.mxu0 %v3589
    %6591 = vmatmul.mubr.bf16.gmra.mrb[0].mxu0 %v3588
    %v6592 = vpop.f32.mrb[0].mxu0
    %v6593 = vadd.f32 %v6480, %v6592
    %v6594 = vpop.f32.mrb[0].mxu0
    %v6595 = vadd.f32 %v6482, %v6594
    %v6596 = vpop.f32.mrb[0].mxu0
    %v6597 = vadd.f32 %v6484, %v6596
    %v6598 = vpop.f32.mrb[0].mxu0
    %v6599 = vadd.f32 %v6486, %v6598
    %6600 = vmatprep.mubr.bf16.mxu0 %v3599
    %6601 = vmatmul.mubr.bf16.gmra.mrb[0].mxu0 %v3598
    %v6602 = vpop.f32.mrb[0].mxu0
    %v6603 = vadd.f32 %v6490, %v6602
    %v6604 = vpop.f32.mrb[0].mxu0
    %v6605 = vadd.f32 %v6492, %v6604
    %v6606 = vpop.f32.mrb[0].mxu0
    %v6607 = vadd.f32 %v6494, %v6606
    %v6608 = vpop.f32.mrb[0].mxu0
    %v6609 = vadd.f32 %v6496, %v6608
    %6610 = vmatprep.mubr.bf16.mxu0 %v3609
    %6611 = vmatmul.mubr.bf16.gmra.mrb[0].mxu0 %v3608
    %v6612 = vpop.f32.mrb[0].mxu0
    %v6613 = vadd.f32 %v6500, %v6612
    %v6614 = vpop.f32.mrb[0].mxu0
    %v6615 = vadd.f32 %v6502, %v6614
    %v6616 = vpop.f32.mrb[0].mxu0
    %v6617 = vadd.f32 %v6504, %v6616
    %v6618 = vpop.f32.mrb[0].mxu0
    %v6619 = vadd.f32 %v6506, %v6618
    %6620 = vdwg.mxu0
    %6621 = vmatprep.subr.bf16.mxu0 %v4267
    %6622 = vmatpush1.bf16.msra.mxu0 %v4266
    %6623 = vmatprep.subr.bf16.mxu0 %v4277
    %6624 = vmatpush1.bf16.msra.mxu0 %v4276
    %6625 = vmatprep.subr.bf16.mxu0 %v4287
    %6626 = vmatpush1.bf16.msra.mxu0 %v4286
    %6627 = vmatprep.subr.bf16.mxu0 %v4297
    %6628 = vmatpush1.bf16.msra.mxu0 %v4296
    %6629 = vmatprep.subr.bf16.mxu0 %v4307
    %6630 = vmatpush1.bf16.msra.mxu0 %v4306
    %6631 = vmatprep.subr.bf16.mxu0 %v4317
    %6632 = vmatpush1.bf16.msra.mxu0 %v4316
    %6633 = vmatprep.subr.bf16.mxu0 %v4327
    %6634 = vmatpush1.bf16.msra.mxu0 %v4326
    %6635 = vmatprep.subr.bf16.mxu0 %v4337
    %6636 = vmatpush1.bf16.msra.mxu0 %v4336
    %6637 = vmatprep.subr.bf16.mxu0 %v4347
    %6638 = vmatpush1.bf16.msra.mxu0 %v4346
    %6639 = vmatprep.subr.bf16.mxu0 %v4357
    %6640 = vmatpush1.bf16.msra.mxu0 %v4356
    %6641 = vmatprep.subr.bf16.mxu0 %v4367
    %6642 = vmatpush1.bf16.msra.mxu0 %v4366
    %6643 = vmatprep.subr.bf16.mxu0 %v4377
    %6644 = vmatpush1.bf16.msra.mxu0 %v4376
    %6645 = vmatprep.subr.bf16.mxu0 %v4387
    %6646 = vmatpush1.bf16.msra.mxu0 %v4386
    %6647 = vmatprep.subr.bf16.mxu0 %v4397
    %6648 = vmatpush1.bf16.msra.mxu0 %v4396
    %6649 = vmatprep.subr.bf16.mxu0 %v4407
    %6650 = vmatpush1.bf16.msra.mxu0 %v4406
    %6651 = vmatprep.subr.bf16.mxu0 %v4417
    %6652 = vmatpush1.bf16.msra.mxu0 %v4416
    %6653 = vmatprep.mubr.bf16.mxu0 %v3541
    %6654 = vmatmul.mubr.bf16.gmra.mrb[0].mxu0 %v3540
    %v6655 = vpop.f32.mrb[0].mxu0
    %v6656 = vadd.f32 %v6543, %v6655
    %v6657 = vpop.f32.mrb[0].mxu0
    %v6658 = vadd.f32 %v6545, %v6657
    %v6659 = vpop.f32.mrb[0].mxu0
    %v6660 = vadd.f32 %v6547, %v6659
    %v6661 = vpop.f32.mrb[0].mxu0
    %v6662 = vadd.f32 %v6549, %v6661
    %6663 = vmatprep.mubr.bf16.mxu0 %v3551
    %6664 = vmatmul.mubr.bf16.gmra.mrb[0].mxu0 %v3550
    %v6665 = vpop.f32.mrb[0].mxu0
    %v6666 = vadd.f32 %v6553, %v6665
    %v6667 = vpop.f32.mrb[0].mxu0
    %v6668 = vadd.f32 %v6555, %v6667
    %v6669 = vpop.f32.mrb[0].mxu0
    %v6670 = vadd.f32 %v6557, %v6669
    %v6671 = vpop.f32.mrb[0].mxu0
    %v6672 = vadd.f32 %v6559, %v6671
    %6673 = vmatprep.mubr.bf16.mxu0 %v3561
    %6674 = vmatmul.mubr.bf16.gmra.mrb[0].mxu0 %v3560
    %v6675 = vpop.f32.mrb[0].mxu0
    %v6676 = vadd.f32 %v6563, %v6675
    %v6677 = vpop.f32.mrb[0].mxu0
    %v6678 = vadd.f32 %v6565, %v6677
    %v6679 = vpop.f32.mrb[0].mxu0
    %v6680 = vadd.f32 %v6567, %v6679
    %v6681 = vpop.f32.mrb[0].mxu0
    %v6682 = vadd.f32 %v6569, %v6681
    %6683 = vmatprep.mubr.bf16.mxu0 %v3571
    %6684 = vmatmul.mubr.bf16.gmra.mrb[0].mxu0 %v3570
    %v6685 = vpop.f32.mrb[0].mxu0
    %v6686 = vadd.f32 %v6573, %v6685
    %v6687 = vpop.f32.mrb[0].mxu0
    %v6688 = vadd.f32 %v6575, %v6687
    %v6689 = vpop.f32.mrb[0].mxu0
    %v6690 = vadd.f32 %v6577, %v6689
    %v6691 = vpop.f32.mrb[0].mxu0
    %v6692 = vadd.f32 %v6579, %v6691
    %6693 = vmatprep.mubr.bf16.mxu0 %v3581
    %6694 = vmatmul.mubr.bf16.gmra.mrb[0].mxu0 %v3580
    %v6695 = vpop.f32.mrb[0].mxu0
    %v6696 = vadd.f32 %v6583, %v6695
    %v6697 = vpop.f32.mrb[0].mxu0
    %v6698 = vadd.f32 %v6585, %v6697
    %v6699 = vpop.f32.mrb[0].mxu0
    %v6700 = vadd.f32 %v6587, %v6699
    %v6701 = vpop.f32.mrb[0].mxu0
    %v6702 = vadd.f32 %v6589, %v6701
    %6703 = vmatprep.mubr.bf16.mxu0 %v3591
    %6704 = vmatmul.mubr.bf16.gmra.mrb[0].mxu0 %v3590
    %v6705 = vpop.f32.mrb[0].mxu0
    %v6706 = vadd.f32 %v6593, %v6705
    %v6707 = vpop.f32.mrb[0].mxu0
    %v6708 = vadd.f32 %v6595, %v6707
    %v6709 = vpop.f32.mrb[0].mxu0
    %v6710 = vadd.f32 %v6597, %v6709
    %v6711 = vpop.f32.mrb[0].mxu0
    %v6712 = vadd.f32 %v6599, %v6711
    %6713 = vmatprep.mubr.bf16.mxu0 %v3601
    %6714 = vmatmul.mubr.bf16.gmra.mrb[0].mxu0 %v3600
    %v6715 = vpop.f32.mrb[0].mxu0
    %v6716 = vadd.f32 %v6603, %v6715
    %v6717 = vpop.f32.mrb[0].mxu0
    %v6718 = vadd.f32 %v6605, %v6717
    %v6719 = vpop.f32.mrb[0].mxu0
    %v6720 = vadd.f32 %v6607, %v6719
    %v6721 = vpop.f32.mrb[0].mxu0
    %v6722 = vadd.f32 %v6609, %v6721
    %6723 = vmatprep.mubr.bf16.mxu0 %v3611
    %6724 = vmatmul.mubr.bf16.gmra.mrb[0].mxu0 %v3610
    %v6725 = vpop.f32.mrb[0].mxu0
    %v6726 = vadd.f32 %v6613, %v6725
    %v6727 = vpop.f32.mrb[0].mxu0
    %v6728 = vadd.f32 %v6615, %v6727
    %v6729 = vpop.f32.mrb[0].mxu0
    %v6730 = vadd.f32 %v6617, %v6729
    %v6731 = vpop.f32.mrb[0].mxu0
    %v6732 = vadd.f32 %v6619, %v6731
    %6733 = vdwg.mxu0
    %6734 = vmatprep.subr.bf16.mxu0 %v3629
    %6735 = vmatpush1.bf16.msra.mxu0 %v3628
    %6736 = vmatprep.subr.bf16.mxu0 %v3639
    %6737 = vmatpush1.bf16.msra.mxu0 %v3638
    %6738 = vmatprep.subr.bf16.mxu0 %v3649
    %6739 = vmatpush1.bf16.msra.mxu0 %v3648
    %6740 = vmatprep.subr.bf16.mxu0 %v3659
    %6741 = vmatpush1.bf16.msra.mxu0 %v3658
    %6742 = vmatprep.subr.bf16.mxu0 %v3669
    %6743 = vmatpush1.bf16.msra.mxu0 %v3668
    %6744 = vmatprep.subr.bf16.mxu0 %v3679
    %6745 = vmatpush1.bf16.msra.mxu0 %v3678
    %6746 = vmatprep.subr.bf16.mxu0 %v3689
    %6747 = vmatpush1.bf16.msra.mxu0 %v3688
    %6748 = vmatprep.subr.bf16.mxu0 %v3699
    %6749 = vmatpush1.bf16.msra.mxu0 %v3698
    %6750 = vmatprep.subr.bf16.mxu0 %v3709
    %6751 = vmatpush1.bf16.msra.mxu0 %v3708
    %6752 = vmatprep.subr.bf16.mxu0 %v3719
    %6753 = vmatpush1.bf16.msra.mxu0 %v3718
    %6754 = vmatprep.subr.bf16.mxu0 %v3729
    %6755 = vmatpush1.bf16.msra.mxu0 %v3728
    %6756 = vmatprep.subr.bf16.mxu0 %v3739
    %6757 = vmatpush1.bf16.msra.mxu0 %v3738
    %6758 = vmatprep.subr.bf16.mxu0 %v3749
    %6759 = vmatpush1.bf16.msra.mxu0 %v3748
    %6760 = vmatprep.subr.bf16.mxu0 %v3759
    %6761 = vmatpush1.bf16.msra.mxu0 %v3758
    %6762 = vmatprep.subr.bf16.mxu0 %v3769
    %6763 = vmatpush1.bf16.msra.mxu0 %v3768
    %6764 = vmatprep.subr.bf16.mxu0 %v3779
    %6765 = vmatpush1.bf16.msra.mxu0 %v3778
    %6766 = vmatprep.mubr.bf16.mxu0 %v3533
    %6767 = vmatmul.mubr.bf16.gmra.mrb[0].mxu0 %v3532
    %v6768 = vpop.f32.mrb[0].mxu0
    %v6769 = vadd.f32 %v4459, %v6768
    %v6770 = vpop.f32.mrb[0].mxu0
    %v6771 = vadd.f32 %v4463, %v6770
    %v6772 = vpop.f32.mrb[0].mxu0
    %v6773 = vadd.f32 %v4459, %v6772
    %v6774 = vpop.f32.mrb[0].mxu0
    %v6775 = vadd.f32 %v4463, %v6774
    %6776 = vmatprep.mubr.bf16.mxu0 %v3543
    %6777 = vmatmul.mubr.bf16.gmra.mrb[0].mxu0 %v3542
    %v6778 = vpop.f32.mrb[0].mxu0
    %v6779 = vadd.f32 %v4459, %v6778
    %v6780 = vpop.f32.mrb[0].mxu0
    %v6781 = vadd.f32 %v4463, %v6780
    %v6782 = vpop.f32.mrb[0].mxu0
    %v6783 = vadd.f32 %v4459, %v6782
    %v6784 = vpop.f32.mrb[0].mxu0
    %v6785 = vadd.f32 %v4463, %v6784
    %6786 = vmatprep.mubr.bf16.mxu0 %v3553
    %6787 = vmatmul.mubr.bf16.gmra.mrb[0].mxu0 %v3552
    %v6788 = vpop.f32.mrb[0].mxu0
    %v6789 = vadd.f32 %v4459, %v6788
    %v6790 = vpop.f32.mrb[0].mxu0
    %v6791 = vadd.f32 %v4463, %v6790
    %v6792 = vpop.f32.mrb[0].mxu0
    %v6793 = vadd.f32 %v4459, %v6792
    %v6794 = vpop.f32.mrb[0].mxu0
    %v6795 = vadd.f32 %v4463, %v6794
    %6796 = vmatprep.mubr.bf16.mxu0 %v3563
    %6797 = vmatmul.mubr.bf16.gmra.mrb[0].mxu0 %v3562
    %v6798 = vpop.f32.mrb[0].mxu0
    %v6799 = vadd.f32 %v4459, %v6798
    %v6800 = vpop.f32.mrb[0].mxu0
    %v6801 = vadd.f32 %v4463, %v6800
    %v6802 = vpop.f32.mrb[0].mxu0
    %v6803 = vadd.f32 %v4459, %v6802
    %v6804 = vpop.f32.mrb[0].mxu0
    %v6805 = vadd.f32 %v4463, %v6804
    %6806 = vmatprep.mubr.bf16.mxu0 %v3573
    %6807 = vmatmul.mubr.bf16.gmra.mrb[0].mxu0 %v3572
    %v6808 = vpop.f32.mrb[0].mxu0
    %v6809 = vadd.f32 %v4459, %v6808
    %v6810 = vpop.f32.mrb[0].mxu0
    %v6811 = vadd.f32 %v4463, %v6810
    %v6812 = vpop.f32.mrb[0].mxu0
    %v6813 = vadd.f32 %v4459, %v6812
    %v6814 = vpop.f32.mrb[0].mxu0
    %v6815 = vadd.f32 %v4463, %v6814
    %6816 = vmatprep.mubr.bf16.mxu0 %v3583
    %6817 = vmatmul.mubr.bf16.gmra.mrb[0].mxu0 %v3582
    %v6818 = vpop.f32.mrb[0].mxu0
    %v6819 = vadd.f32 %v4459, %v6818
    %v6820 = vpop.f32.mrb[0].mxu0
    %v6821 = vadd.f32 %v4463, %v6820
    %v6822 = vpop.f32.mrb[0].mxu0
    %v6823 = vadd.f32 %v4459, %v6822
    %v6824 = vpop.f32.mrb[0].mxu0
    %v6825 = vadd.f32 %v4463, %v6824
    %6826 = vmatprep.mubr.bf16.mxu0 %v3593
    %6827 = vmatmul.mubr.bf16.gmra.mrb[0].mxu0 %v3592
    %v6828 = vpop.f32.mrb[0].mxu0
    %v6829 = vadd.f32 %v4459, %v6828
    %v6830 = vpop.f32.mrb[0].mxu0
    %v6831 = vadd.f32 %v4463, %v6830
    %v6832 = vpop.f32.mrb[0].mxu0
    %v6833 = vadd.f32 %v4459, %v6832
    %v6834 = vpop.f32.mrb[0].mxu0
    %v6835 = vadd.f32 %v4463, %v6834
    %6836 = vmatprep.mubr.bf16.mxu0 %v3603
    %6837 = vmatmul.mubr.bf16.gmra.mrb[0].mxu0 %v3602
    %v6838 = vpop.f32.mrb[0].mxu0
    %v6839 = vadd.f32 %v4459, %v6838
    %v6840 = vpop.f32.mrb[0].mxu0
    %v6841 = vadd.f32 %v4463, %v6840
    %v6842 = vpop.f32.mrb[0].mxu0
    %v6843 = vadd.f32 %v4459, %v6842
    %v6844 = vpop.f32.mrb[0].mxu0
    %v6845 = vadd.f32 %v4463, %v6844
    %6846 = vdwg.mxu0
    %6847 = vmatprep.subr.bf16.mxu0 %v3789
    %6848 = vmatpush1.bf16.msra.mxu0 %v3788
    %6849 = vmatprep.subr.bf16.mxu0 %v3799
    %6850 = vmatpush1.bf16.msra.mxu0 %v3798
    %6851 = vmatprep.subr.bf16.mxu0 %v3809
    %6852 = vmatpush1.bf16.msra.mxu0 %v3808
    %6853 = vmatprep.subr.bf16.mxu0 %v3819
    %6854 = vmatpush1.bf16.msra.mxu0 %v3818
    %6855 = vmatprep.subr.bf16.mxu0 %v3829
    %6856 = vmatpush1.bf16.msra.mxu0 %v3828
    %6857 = vmatprep.subr.bf16.mxu0 %v3839
    %6858 = vmatpush1.bf16.msra.mxu0 %v3838
    %6859 = vmatprep.subr.bf16.mxu0 %v3849
    %6860 = vmatpush1.bf16.msra.mxu0 %v3848
    %6861 = vmatprep.subr.bf16.mxu0 %v3859
    %6862 = vmatpush1.bf16.msra.mxu0 %v3858
    %6863 = vmatprep.subr.bf16.mxu0 %v3869
    %6864 = vmatpush1.bf16.msra.mxu0 %v3868
    %6865 = vmatprep.subr.bf16.mxu0 %v3879
    %6866 = vmatpush1.bf16.msra.mxu0 %v3878
    %6867 = vmatprep.subr.bf16.mxu0 %v3889
    %6868 = vmatpush1.bf16.msra.mxu0 %v3888
    %6869 = vmatprep.subr.bf16.mxu0 %v3899
    %6870 = vmatpush1.bf16.msra.mxu0 %v3898
    %6871 = vmatprep.subr.bf16.mxu0 %v3909
    %6872 = vmatpush1.bf16.msra.mxu0 %v3908
    %6873 = vmatprep.subr.bf16.mxu0 %v3919
    %6874 = vmatpush1.bf16.msra.mxu0 %v3918
    %6875 = vmatprep.subr.bf16.mxu0 %v3929
    %6876 = vmatpush1.bf16.msra.mxu0 %v3928
    %6877 = vmatprep.subr.bf16.mxu0 %v3939
    %6878 = vmatpush1.bf16.msra.mxu0 %v3938
    %6879 = vmatprep.mubr.bf16.mxu0 %v3535
    %6880 = vmatmul.mubr.bf16.gmra.mrb[0].mxu0 %v3534
    %v6881 = vpop.f32.mrb[0].mxu0
    %v6882 = vadd.f32 %v6769, %v6881
    %v6883 = vpop.f32.mrb[0].mxu0
    %v6884 = vadd.f32 %v6771, %v6883
    %v6885 = vpop.f32.mrb[0].mxu0
    %v6886 = vadd.f32 %v6773, %v6885
    %v6887 = vpop.f32.mrb[0].mxu0
    %v6888 = vadd.f32 %v6775, %v6887
    %6889 = vmatprep.mubr.bf16.mxu0 %v3545
    %6890 = vmatmul.mubr.bf16.gmra.mrb[0].mxu0 %v3544
    %v6891 = vpop.f32.mrb[0].mxu0
    %v6892 = vadd.f32 %v6779, %v6891
    %v6893 = vpop.f32.mrb[0].mxu0
    %v6894 = vadd.f32 %v6781, %v6893
    %v6895 = vpop.f32.mrb[0].mxu0
    %v6896 = vadd.f32 %v6783, %v6895
    %v6897 = vpop.f32.mrb[0].mxu0
    %v6898 = vadd.f32 %v6785, %v6897
    %6899 = vmatprep.mubr.bf16.mxu0 %v3555
    %6900 = vmatmul.mubr.bf16.gmra.mrb[0].mxu0 %v3554
    %v6901 = vpop.f32.mrb[0].mxu0
    %v6902 = vadd.f32 %v6789, %v6901
    %v6903 = vpop.f32.mrb[0].mxu0
    %v6904 = vadd.f32 %v6791, %v6903
    %v6905 = vpop.f32.mrb[0].mxu0
    %v6906 = vadd.f32 %v6793, %v6905
    %v6907 = vpop.f32.mrb[0].mxu0
    %v6908 = vadd.f32 %v6795, %v6907
    %6909 = vmatprep.mubr.bf16.mxu0 %v3565
    %6910 = vmatmul.mubr.bf16.gmra.mrb[0].mxu0 %v3564
    %v6911 = vpop.f32.mrb[0].mxu0
    %v6912 = vadd.f32 %v6799, %v6911
    %v6913 = vpop.f32.mrb[0].mxu0
    %v6914 = vadd.f32 %v6801, %v6913
    %v6915 = vpop.f32.mrb[0].mxu0
    %v6916 = vadd.f32 %v6803, %v6915
    %v6917 = vpop.f32.mrb[0].mxu0
    %v6918 = vadd.f32 %v6805, %v6917
    %6919 = vmatprep.mubr.bf16.mxu0 %v3575
    %6920 = vmatmul.mubr.bf16.gmra.mrb[0].mxu0 %v3574
    %v6921 = vpop.f32.mrb[0].mxu0
    %v6922 = vadd.f32 %v6809, %v6921
    %v6923 = vpop.f32.mrb[0].mxu0
    %v6924 = vadd.f32 %v6811, %v6923
    %v6925 = vpop.f32.mrb[0].mxu0
    %v6926 = vadd.f32 %v6813, %v6925
    %v6927 = vpop.f32.mrb[0].mxu0
    %v6928 = vadd.f32 %v6815, %v6927
    %6929 = vmatprep.mubr.bf16.mxu0 %v3585
    %6930 = vmatmul.mubr.bf16.gmra.mrb[0].mxu0 %v3584
    %v6931 = vpop.f32.mrb[0].mxu0
    %v6932 = vadd.f32 %v6819, %v6931
    %v6933 = vpop.f32.mrb[0].mxu0
    %v6934 = vadd.f32 %v6821, %v6933
    %v6935 = vpop.f32.mrb[0].mxu0
    %v6936 = vadd.f32 %v6823, %v6935
    %v6937 = vpop.f32.mrb[0].mxu0
    %v6938 = vadd.f32 %v6825, %v6937
    %6939 = vmatprep.mubr.bf16.mxu0 %v3595
    %6940 = vmatmul.mubr.bf16.gmra.mrb[0].mxu0 %v3594
    %v6941 = vpop.f32.mrb[0].mxu0
    %v6942 = vadd.f32 %v6829, %v6941
    %v6943 = vpop.f32.mrb[0].mxu0
    %v6944 = vadd.f32 %v6831, %v6943
    %v6945 = vpop.f32.mrb[0].mxu0
    %v6946 = vadd.f32 %v6833, %v6945
    %v6947 = vpop.f32.mrb[0].mxu0
    %v6948 = vadd.f32 %v6835, %v6947
    %6949 = vmatprep.mubr.bf16.mxu0 %v3605
    %6950 = vmatmul.mubr.bf16.gmra.mrb[0].mxu0 %v3604
    %v6951 = vpop.f32.mrb[0].mxu0
    %v6952 = vadd.f32 %v6839, %v6951
    %v6953 = vpop.f32.mrb[0].mxu0
    %v6954 = vadd.f32 %v6841, %v6953
    %v6955 = vpop.f32.mrb[0].mxu0
    %v6956 = vadd.f32 %v6843, %v6955
    %v6957 = vpop.f32.mrb[0].mxu0
    %v6958 = vadd.f32 %v6845, %v6957
    %6959 = vdwg.mxu0
    %6960 = vmatprep.subr.bf16.mxu0 %v3949
    %6961 = vmatpush1.bf16.msra.mxu0 %v3948
    %6962 = vmatprep.subr.bf16.mxu0 %v3959
    %6963 = vmatpush1.bf16.msra.mxu0 %v3958
    %6964 = vmatprep.subr.bf16.mxu0 %v3969
    %6965 = vmatpush1.bf16.msra.mxu0 %v3968
    %6966 = vmatprep.subr.bf16.mxu0 %v3979
    %6967 = vmatpush1.bf16.msra.mxu0 %v3978
    %6968 = vmatprep.subr.bf16.mxu0 %v3989
    %6969 = vmatpush1.bf16.msra.mxu0 %v3988
    %6970 = vmatprep.subr.bf16.mxu0 %v3999
    %6971 = vmatpush1.bf16.msra.mxu0 %v3998
    %6972 = vmatprep.subr.bf16.mxu0 %v4009
    %6973 = vmatpush1.bf16.msra.mxu0 %v4008
    %6974 = vmatprep.subr.bf16.mxu0 %v4019
    %6975 = vmatpush1.bf16.msra.mxu0 %v4018
    %6976 = vmatprep.subr.bf16.mxu0 %v4029
    %6977 = vmatpush1.bf16.msra.mxu0 %v4028
    %6978 = vmatprep.subr.bf16.mxu0 %v4039
    %6979 = vmatpush1.bf16.msra.mxu0 %v4038
    %6980 = vmatprep.subr.bf16.mxu0 %v4049
    %6981 = vmatpush1.bf16.msra.mxu0 %v4048
    %6982 = vmatprep.subr.bf16.mxu0 %v4059
    %6983 = vmatpush1.bf16.msra.mxu0 %v4058
    %6984 = vmatprep.subr.bf16.mxu0 %v4069
    %6985 = vmatpush1.bf16.msra.mxu0 %v4068
    %6986 = vmatprep.subr.bf16.mxu0 %v4079
    %6987 = vmatpush1.bf16.msra.mxu0 %v4078
    %6988 = vmatprep.subr.bf16.mxu0 %v4089
    %6989 = vmatpush1.bf16.msra.mxu0 %v4088
    %6990 = vmatprep.subr.bf16.mxu0 %v4099
    %6991 = vmatpush1.bf16.msra.mxu0 %v4098
    %6992 = vmatprep.mubr.bf16.mxu0 %v3537
    %6993 = vmatmul.mubr.bf16.gmra.mrb[0].mxu0 %v3536
    %v6994 = vpop.f32.mrb[0].mxu0
    %v6995 = vadd.f32 %v6882, %v6994
    %v6996 = vpop.f32.mrb[0].mxu0
    %v6997 = vadd.f32 %v6884, %v6996
    %v6998 = vpop.f32.mrb[0].mxu0
    %v6999 = vadd.f32 %v6886, %v6998
    %v7000 = vpop.f32.mrb[0].mxu0
    %v7001 = vadd.f32 %v6888, %v7000
    %7002 = vmatprep.mubr.bf16.mxu0 %v3547
    %7003 = vmatmul.mubr.bf16.gmra.mrb[0].mxu0 %v3546
    %v7004 = vpop.f32.mrb[0].mxu0
    %v7005 = vadd.f32 %v6892, %v7004
    %v7006 = vpop.f32.mrb[0].mxu0
    %v7007 = vadd.f32 %v6894, %v7006
    %v7008 = vpop.f32.mrb[0].mxu0
    %v7009 = vadd.f32 %v6896, %v7008
    %v7010 = vpop.f32.mrb[0].mxu0
    %v7011 = vadd.f32 %v6898, %v7010
    %7012 = vmatprep.mubr.bf16.mxu0 %v3557
    %7013 = vmatmul.mubr.bf16.gmra.mrb[0].mxu0 %v3556
    %v7014 = vpop.f32.mrb[0].mxu0
    %v7015 = vadd.f32 %v6902, %v7014
    %v7016 = vpop.f32.mrb[0].mxu0
    %v7017 = vadd.f32 %v6904, %v7016
    %v7018 = vpop.f32.mrb[0].mxu0
    %v7019 = vadd.f32 %v6906, %v7018
    %v7020 = vpop.f32.mrb[0].mxu0
    %v7021 = vadd.f32 %v6908, %v7020
    %7022 = vmatprep.mubr.bf16.mxu0 %v3567
    %7023 = vmatmul.mubr.bf16.gmra.mrb[0].mxu0 %v3566
    %v7024 = vpop.f32.mrb[0].mxu0
    %v7025 = vadd.f32 %v6912, %v7024
    %v7026 = vpop.f32.mrb[0].mxu0
    %v7027 = vadd.f32 %v6914, %v7026
    %v7028 = vpop.f32.mrb[0].mxu0
    %v7029 = vadd.f32 %v6916, %v7028
    %v7030 = vpop.f32.mrb[0].mxu0
    %v7031 = vadd.f32 %v6918, %v7030
    %7032 = vmatprep.mubr.bf16.mxu0 %v3577
    %7033 = vmatmul.mubr.bf16.gmra.mrb[0].mxu0 %v3576
    %v7034 = vpop.f32.mrb[0].mxu0
    %v7035 = vadd.f32 %v6922, %v7034
    %v7036 = vpop.f32.mrb[0].mxu0
    %v7037 = vadd.f32 %v6924, %v7036
    %v7038 = vpop.f32.mrb[0].mxu0
    %v7039 = vadd.f32 %v6926, %v7038
    %v7040 = vpop.f32.mrb[0].mxu0
    %v7041 = vadd.f32 %v6928, %v7040
    %7042 = vmatprep.mubr.bf16.mxu0 %v3587
    %7043 = vmatmul.mubr.bf16.gmra.mrb[0].mxu0 %v3586
    %v7044 = vpop.f32.mrb[0].mxu0
    %v7045 = vadd.f32 %v6932, %v7044
    %v7046 = vpop.f32.mrb[0].mxu0
    %v7047 = vadd.f32 %v6934, %v7046
    %v7048 = vpop.f32.mrb[0].mxu0
    %v7049 = vadd.f32 %v6936, %v7048
    %v7050 = vpop.f32.mrb[0].mxu0
    %v7051 = vadd.f32 %v6938, %v7050
    %7052 = vmatprep.mubr.bf16.mxu0 %v3597
    %7053 = vmatmul.mubr.bf16.gmra.mrb[0].mxu0 %v3596
    %v7054 = vpop.f32.mrb[0].mxu0
    %v7055 = vadd.f32 %v6942, %v7054
    %v7056 = vpop.f32.mrb[0].mxu0
    %v7057 = vadd.f32 %v6944, %v7056
    %v7058 = vpop.f32.mrb[0].mxu0
    %v7059 = vadd.f32 %v6946, %v7058
    %v7060 = vpop.f32.mrb[0].mxu0
    %v7061 = vadd.f32 %v6948, %v7060
    %7062 = vmatprep.mubr.bf16.mxu0 %v3607
    %7063 = vmatmul.mubr.bf16.gmra.mrb[0].mxu0 %v3606
    %v7064 = vpop.f32.mrb[0].mxu0
    %v7065 = vadd.f32 %v6952, %v7064
    %v7066 = vpop.f32.mrb[0].mxu0
    %v7067 = vadd.f32 %v6954, %v7066
    %v7068 = vpop.f32.mrb[0].mxu0
    %v7069 = vadd.f32 %v6956, %v7068
    %v7070 = vpop.f32.mrb[0].mxu0
    %v7071 = vadd.f32 %v6958, %v7070
    %7072 = vdwg.mxu0
    %7073 = vmatprep.subr.bf16.mxu0 %v4109
    %7074 = vmatpush1.bf16.msra.mxu0 %v4108
    %7075 = vmatprep.subr.bf16.mxu0 %v4119
    %7076 = vmatpush1.bf16.msra.mxu0 %v4118
    %7077 = vmatprep.subr.bf16.mxu0 %v4129
    %7078 = vmatpush1.bf16.msra.mxu0 %v4128
    %7079 = vmatprep.subr.bf16.mxu0 %v4139
    %7080 = vmatpush1.bf16.msra.mxu0 %v4138
    %7081 = vmatprep.subr.bf16.mxu0 %v4149
    %7082 = vmatpush1.bf16.msra.mxu0 %v4148
    %7083 = vmatprep.subr.bf16.mxu0 %v4159
    %7084 = vmatpush1.bf16.msra.mxu0 %v4158
    %7085 = vmatprep.subr.bf16.mxu0 %v4169
    %7086 = vmatpush1.bf16.msra.mxu0 %v4168
    %7087 = vmatprep.subr.bf16.mxu0 %v4179
    %7088 = vmatpush1.bf16.msra.mxu0 %v4178
    %7089 = vmatprep.subr.bf16.mxu0 %v4189
    %7090 = vmatpush1.bf16.msra.mxu0 %v4188
    %7091 = vmatprep.subr.bf16.mxu0 %v4199
    %7092 = vmatpush1.bf16.msra.mxu0 %v4198
    %7093 = vmatprep.subr.bf16.mxu0 %v4209
    %7094 = vmatpush1.bf16.msra.mxu0 %v4208
    %7095 = vmatprep.subr.bf16.mxu0 %v4219
    %7096 = vmatpush1.bf16.msra.mxu0 %v4218
    %7097 = vmatprep.subr.bf16.mxu0 %v4229
    %7098 = vmatpush1.bf16.msra.mxu0 %v4228
    %7099 = vmatprep.subr.bf16.mxu0 %v4239
    %7100 = vmatpush1.bf16.msra.mxu0 %v4238
    %7101 = vmatprep.subr.bf16.mxu0 %v4249
    %7102 = vmatpush1.bf16.msra.mxu0 %v4248
    %7103 = vmatprep.subr.bf16.mxu0 %v4259
    %7104 = vmatpush1.bf16.msra.mxu0 %v4258
    %7105 = vmatprep.mubr.bf16.mxu0 %v3539
    %7106 = vmatmul.mubr.bf16.gmra.mrb[0].mxu0 %v3538
    %v7107 = vpop.f32.mrb[0].mxu0
    %v7108 = vadd.f32 %v6995, %v7107
    %v7109 = vpop.f32.mrb[0].mxu0
    %v7110 = vadd.f32 %v6997, %v7109
    %v7111 = vpop.f32.mrb[0].mxu0
    %v7112 = vadd.f32 %v6999, %v7111
    %v7113 = vpop.f32.mrb[0].mxu0
    %v7114 = vadd.f32 %v7001, %v7113
    %7115 = vmatprep.mubr.bf16.mxu0 %v3549
    %7116 = vmatmul.mubr.bf16.gmra.mrb[0].mxu0 %v3548
    %v7117 = vpop.f32.mrb[0].mxu0
    %v7118 = vadd.f32 %v7005, %v7117
    %v7119 = vpop.f32.mrb[0].mxu0
    %v7120 = vadd.f32 %v7007, %v7119
    %v7121 = vpop.f32.mrb[0].mxu0
    %v7122 = vadd.f32 %v7009, %v7121
    %v7123 = vpop.f32.mrb[0].mxu0
    %v7124 = vadd.f32 %v7011, %v7123
    %7125 = vmatprep.mubr.bf16.mxu0 %v3559
    %7126 = vmatmul.mubr.bf16.gmra.mrb[0].mxu0 %v3558
    %v7127 = vpop.f32.mrb[0].mxu0
    %v7128 = vadd.f32 %v7015, %v7127
    %v7129 = vpop.f32.mrb[0].mxu0
    %v7130 = vadd.f32 %v7017, %v7129
    %v7131 = vpop.f32.mrb[0].mxu0
    %v7132 = vadd.f32 %v7019, %v7131
    %v7133 = vpop.f32.mrb[0].mxu0
    %v7134 = vadd.f32 %v7021, %v7133
    %7135 = vmatprep.mubr.bf16.mxu0 %v3569
    %7136 = vmatmul.mubr.bf16.gmra.mrb[0].mxu0 %v3568
    %v7137 = vpop.f32.mrb[0].mxu0
    %v7138 = vadd.f32 %v7025, %v7137
    %v7139 = vpop.f32.mrb[0].mxu0
    %v7140 = vadd.f32 %v7027, %v7139
    %v7141 = vpop.f32.mrb[0].mxu0
    %v7142 = vadd.f32 %v7029, %v7141
    %v7143 = vpop.f32.mrb[0].mxu0
    %v7144 = vadd.f32 %v7031, %v7143
    %7145 = vmatprep.mubr.bf16.mxu0 %v3579
    %7146 = vmatmul.mubr.bf16.gmra.mrb[0].mxu0 %v3578
    %v7147 = vpop.f32.mrb[0].mxu0
    %v7148 = vadd.f32 %v7035, %v7147
    %v7149 = vpop.f32.mrb[0].mxu0
    %v7150 = vadd.f32 %v7037, %v7149
    %v7151 = vpop.f32.mrb[0].mxu0
    %v7152 = vadd.f32 %v7039, %v7151
    %v7153 = vpop.f32.mrb[0].mxu0
    %v7154 = vadd.f32 %v7041, %v7153
    %7155 = vmatprep.mubr.bf16.mxu0 %v3589
    %7156 = vmatmul.mubr.bf16.gmra.mrb[0].mxu0 %v3588
    %v7157 = vpop.f32.mrb[0].mxu0
    %v7158 = vadd.f32 %v7045, %v7157
    %v7159 = vpop.f32.mrb[0].mxu0
    %v7160 = vadd.f32 %v7047, %v7159
    %v7161 = vpop.f32.mrb[0].mxu0
    %v7162 = vadd.f32 %v7049, %v7161
    %v7163 = vpop.f32.mrb[0].mxu0
    %v7164 = vadd.f32 %v7051, %v7163
    %7165 = vmatprep.mubr.bf16.mxu0 %v3599
    %7166 = vmatmul.mubr.bf16.gmra.mrb[0].mxu0 %v3598
    %v7167 = vpop.f32.mrb[0].mxu0
    %v7168 = vadd.f32 %v7055, %v7167
    %v7169 = vpop.f32.mrb[0].mxu0
    %v7170 = vadd.f32 %v7057, %v7169
    %v7171 = vpop.f32.mrb[0].mxu0
    %v7172 = vadd.f32 %v7059, %v7171
    %v7173 = vpop.f32.mrb[0].mxu0
    %v7174 = vadd.f32 %v7061, %v7173
    %7175 = vmatprep.mubr.bf16.mxu0 %v3609
    %7176 = vmatmul.mubr.bf16.gmra.mrb[0].mxu0 %v3608
    %v7177 = vpop.f32.mrb[0].mxu0
    %v7178 = vadd.f32 %v7065, %v7177
    %v7179 = vpop.f32.mrb[0].mxu0
    %v7180 = vadd.f32 %v7067, %v7179
    %v7181 = vpop.f32.mrb[0].mxu0
    %v7182 = vadd.f32 %v7069, %v7181
    %v7183 = vpop.f32.mrb[0].mxu0
    %v7184 = vadd.f32 %v7071, %v7183
    %7185 = vdwg.mxu0
    %7186 = vmatprep.subr.bf16.mxu0 %v4269
    %7187 = vmatpush1.bf16.msra.mxu0 %v4268
    %7188 = vmatprep.subr.bf16.mxu0 %v4279
    %7189 = vmatpush1.bf16.msra.mxu0 %v4278
    %7190 = vmatprep.subr.bf16.mxu0 %v4289
    %7191 = vmatpush1.bf16.msra.mxu0 %v4288
    %7192 = vmatprep.subr.bf16.mxu0 %v4299
    %7193 = vmatpush1.bf16.msra.mxu0 %v4298
    %7194 = vmatprep.subr.bf16.mxu0 %v4309
    %7195 = vmatpush1.bf16.msra.mxu0 %v4308
    %7196 = vmatprep.subr.bf16.mxu0 %v4319
    %7197 = vmatpush1.bf16.msra.mxu0 %v4318
    %7198 = vmatprep.subr.bf16.mxu0 %v4329
    %7199 = vmatpush1.bf16.msra.mxu0 %v4328
    %7200 = vmatprep.subr.bf16.mxu0 %v4339
    %7201 = vmatpush1.bf16.msra.mxu0 %v4338
    %7202 = vmatprep.subr.bf16.mxu0 %v4349
    %7203 = vmatpush1.bf16.msra.mxu0 %v4348
    %7204 = vmatprep.subr.bf16.mxu0 %v4359
    %7205 = vmatpush1.bf16.msra.mxu0 %v4358
    %7206 = vmatprep.subr.bf16.mxu0 %v4369
    %7207 = vmatpush1.bf16.msra.mxu0 %v4368
    %7208 = vmatprep.subr.bf16.mxu0 %v4379
    %7209 = vmatpush1.bf16.msra.mxu0 %v4378
    %7210 = vmatprep.subr.bf16.mxu0 %v4389
    %7211 = vmatpush1.bf16.msra.mxu0 %v4388
    %7212 = vmatprep.subr.bf16.mxu0 %v4399
    %7213 = vmatpush1.bf16.msra.mxu0 %v4398
    %7214 = vmatprep.subr.bf16.mxu0 %v4409
    %7215 = vmatpush1.bf16.msra.mxu0 %v4408
    %7216 = vmatprep.subr.bf16.mxu0 %v4419
    %7217 = vmatpush1.bf16.msra.mxu0 %v4418
    %7218 = vmatprep.mubr.bf16.mxu0 %v3541
    %7219 = vmatmul.mubr.bf16.gmra.mrb[0].mxu0 %v3540
    %v7220 = vpop.f32.mrb[0].mxu0
    %v7221 = vadd.f32 %v7108, %v7220
    %v7222 = vpop.f32.mrb[0].mxu0
    %v7223 = vadd.f32 %v7110, %v7222
    %v7224 = vpop.f32.mrb[0].mxu0
    %v7225 = vadd.f32 %v7112, %v7224
    %v7226 = vpop.f32.mrb[0].mxu0
    %v7227 = vadd.f32 %v7114, %v7226
    %7228 = vmatprep.mubr.bf16.mxu0 %v3551
    %7229 = vmatmul.mubr.bf16.gmra.mrb[0].mxu0 %v3550
    %v7230 = vpop.f32.mrb[0].mxu0
    %v7231 = vadd.f32 %v7118, %v7230
    %v7232 = vpop.f32.mrb[0].mxu0
    %v7233 = vadd.f32 %v7120, %v7232
    %v7234 = vpop.f32.mrb[0].mxu0
    %v7235 = vadd.f32 %v7122, %v7234
    %v7236 = vpop.f32.mrb[0].mxu0
    %v7237 = vadd.f32 %v7124, %v7236
    %7238 = vmatprep.mubr.bf16.mxu0 %v3561
    %7239 = vmatmul.mubr.bf16.gmra.mrb[0].mxu0 %v3560
    %v7240 = vpop.f32.mrb[0].mxu0
    %v7241 = vadd.f32 %v7128, %v7240
    %v7242 = vpop.f32.mrb[0].mxu0
    %v7243 = vadd.f32 %v7130, %v7242
    %v7244 = vpop.f32.mrb[0].mxu0
    %v7245 = vadd.f32 %v7132, %v7244
    %v7246 = vpop.f32.mrb[0].mxu0
    %v7247 = vadd.f32 %v7134, %v7246
    %7248 = vmatprep.mubr.bf16.mxu0 %v3571
    %7249 = vmatmul.mubr.bf16.gmra.mrb[0].mxu0 %v3570
    %v7250 = vpop.f32.mrb[0].mxu0
    %v7251 = vadd.f32 %v7138, %v7250
    %v7252 = vpop.f32.mrb[0].mxu0
    %v7253 = vadd.f32 %v7140, %v7252
    %v7254 = vpop.f32.mrb[0].mxu0
    %v7255 = vadd.f32 %v7142, %v7254
    %v7256 = vpop.f32.mrb[0].mxu0
    %v7257 = vadd.f32 %v7144, %v7256
    %7258 = vmatprep.mubr.bf16.mxu0 %v3581
    %7259 = vmatmul.mubr.bf16.gmra.mrb[0].mxu0 %v3580
    %v7260 = vpop.f32.mrb[0].mxu0
    %v7261 = vadd.f32 %v7148, %v7260
    %v7262 = vpop.f32.mrb[0].mxu0
    %v7263 = vadd.f32 %v7150, %v7262
    %v7264 = vpop.f32.mrb[0].mxu0
    %v7265 = vadd.f32 %v7152, %v7264
    %v7266 = vpop.f32.mrb[0].mxu0
    %v7267 = vadd.f32 %v7154, %v7266
    %7268 = vmatprep.mubr.bf16.mxu0 %v3591
    %7269 = vmatmul.mubr.bf16.gmra.mrb[0].mxu0 %v3590
    %v7270 = vpop.f32.mrb[0].mxu0
    %v7271 = vadd.f32 %v7158, %v7270
    %v7272 = vpop.f32.mrb[0].mxu0
    %v7273 = vadd.f32 %v7160, %v7272
    %v7274 = vpop.f32.mrb[0].mxu0
    %v7275 = vadd.f32 %v7162, %v7274
    %v7276 = vpop.f32.mrb[0].mxu0
    %v7277 = vadd.f32 %v7164, %v7276
    %7278 = vmatprep.mubr.bf16.mxu0 %v3601
    %7279 = vmatmul.mubr.bf16.gmra.mrb[0].mxu0 %v3600
    %v7280 = vpop.f32.mrb[0].mxu0
    %v7281 = vadd.f32 %v7168, %v7280
    %v7282 = vpop.f32.mrb[0].mxu0
    %v7283 = vadd.f32 %v7170, %v7282
    %v7284 = vpop.f32.mrb[0].mxu0
    %v7285 = vadd.f32 %v7172, %v7284
    %v7286 = vpop.f32.mrb[0].mxu0
    %v7287 = vadd.f32 %v7174, %v7286
    %7288 = vmatprep.mubr.bf16.mxu0 %v3611
    %7289 = vmatmul.mubr.bf16.gmra.mrb[0].mxu0 %v3610
    %v7290 = vpop.f32.mrb[0].mxu0
    %v7291 = vadd.f32 %v7178, %v7290
    %v7292 = vpop.f32.mrb[0].mxu0
    %v7293 = vadd.f32 %v7180, %v7292
    %v7294 = vpop.f32.mrb[0].mxu0
    %v7295 = vadd.f32 %v7182, %v7294
    %v7296 = vpop.f32.mrb[0].mxu0
    %v7297 = vadd.f32 %v7184, %v7296
    %7298 = vdwg.mxu0
    %v7299 = vmax.f32 %v4961, 0.0
    %v7300 = vmax.f32 %v4963, 0.0
    %v7301 = vmax.f32 %v5526, 0.0
    %v7302 = vmax.f32 %v5528, 0.0
    %v7303 = vmax.f32 %v6091, 0.0
    %v7304 = vmax.f32 %v6093, 0.0
    %v7305 = vmax.f32 %v6656, 0.0
    %v7306 = vmax.f32 %v6658, 0.0
    %v7307 = vmax.f32 %v7221, 0.0
    %v7308 = vmax.f32 %v7223, 0.0
    %v7309 = vmax.f32 %v4965, 0.0
    %v7310 = vmax.f32 %v4967, 0.0
    %v7311 = vmax.f32 %v5530, 0.0
    %v7312 = vmax.f32 %v5532, 0.0
    %v7313 = vmax.f32 %v6095, 0.0
    %v7314 = vmax.f32 %v6097, 0.0
    %v7315 = vmax.f32 %v6660, 0.0
    %v7316 = vmax.f32 %v6662, 0.0
    %v7317 = vmax.f32 %v7225, 0.0
    %v7318 = vmax.f32 %v7227, 0.0
    %v7319 = vmax.f32 %v4971, 0.0
    %v7320 = vmax.f32 %v4973, 0.0
    %v7321 = vmax.f32 %v5536, 0.0
    %v7322 = vmax.f32 %v5538, 0.0
    %v7323 = vmax.f32 %v6101, 0.0
    %v7324 = vmax.f32 %v6103, 0.0
    %v7325 = vmax.f32 %v6666, 0.0
    %v7326 = vmax.f32 %v6668, 0.0
    %v7327 = vmax.f32 %v7231, 0.0
    %v7328 = vmax.f32 %v7233, 0.0
    %v7329 = vmax.f32 %v4975, 0.0
    %v7330 = vmax.f32 %v4977, 0.0
    %v7331 = vmax.f32 %v5540, 0.0
    %v7332 = vmax.f32 %v5542, 0.0
    %v7333 = vmax.f32 %v6105, 0.0
    %v7334 = vmax.f32 %v6107, 0.0
    %v7335 = vmax.f32 %v6670, 0.0
    %v7336 = vmax.f32 %v6672, 0.0
    %v7337 = vmax.f32 %v7235, 0.0
    %v7338 = vmax.f32 %v7237, 0.0
    %v7339 = vmax.f32 %v4981, 0.0
    %v7340 = vmax.f32 %v4983, 0.0
    %v7341 = vmax.f32 %v5546, 0.0
    %v7342 = vmax.f32 %v5548, 0.0
    %v7343 = vmax.f32 %v6111, 0.0
    %v7344 = vmax.f32 %v6113, 0.0
    %v7345 = vmax.f32 %v6676, 0.0
    %v7346 = vmax.f32 %v6678, 0.0
    %v7347 = vmax.f32 %v7241, 0.0
    %v7348 = vmax.f32 %v7243, 0.0
    %v7349 = vmax.f32 %v4985, 0.0
    %v7350 = vmax.f32 %v4987, 0.0
    %v7351 = vmax.f32 %v5550, 0.0
    %v7352 = vmax.f32 %v5552, 0.0
    %v7353 = vmax.f32 %v6115, 0.0
    %v7354 = vmax.f32 %v6117, 0.0
    %v7355 = vmax.f32 %v6680, 0.0
    %v7356 = vmax.f32 %v6682, 0.0
    %v7357 = vmax.f32 %v7245, 0.0
    %v7358 = vmax.f32 %v7247, 0.0
    %v7359 = vmax.f32 %v4991, 0.0
    %v7360 = vmax.f32 %v4993, 0.0
    %v7361 = vmax.f32 %v5556, 0.0
    %v7362 = vmax.f32 %v5558, 0.0
    %v7363 = vmax.f32 %v6121, 0.0
    %v7364 = vmax.f32 %v6123, 0.0
    %v7365 = vmax.f32 %v6686, 0.0
    %v7366 = vmax.f32 %v6688, 0.0
    %v7367 = vmax.f32 %v7251, 0.0
    %v7368 = vmax.f32 %v7253, 0.0
    %v7369 = vmax.f32 %v4995, 0.0
    %v7370 = vmax.f32 %v4997, 0.0
    %v7371 = vmax.f32 %v5560, 0.0
    %v7372 = vmax.f32 %v5562, 0.0
    %v7373 = vmax.f32 %v6125, 0.0
    %v7374 = vmax.f32 %v6127, 0.0
    %v7375 = vmax.f32 %v6690, 0.0
    %v7376 = vmax.f32 %v6692, 0.0
    %v7377 = vmax.f32 %v7255, 0.0
    %v7378 = vmax.f32 %v7257, 0.0
    %v7379 = vmax.f32 %v5001, 0.0
    %v7380 = vmax.f32 %v5003, 0.0
    %v7381 = vmax.f32 %v5566, 0.0
    %v7382 = vmax.f32 %v5568, 0.0
    %v7383 = vmax.f32 %v6131, 0.0
    %v7384 = vmax.f32 %v6133, 0.0
    %v7385 = vmax.f32 %v6696, 0.0
    %v7386 = vmax.f32 %v6698, 0.0
    %v7387 = vmax.f32 %v7261, 0.0
    %v7388 = vmax.f32 %v7263, 0.0
    %v7389 = vmax.f32 %v5005, 0.0
    %v7390 = vmax.f32 %v5007, 0.0
    %v7391 = vmax.f32 %v5570, 0.0
    %v7392 = vmax.f32 %v5572, 0.0
    %v7393 = vmax.f32 %v6135, 0.0
    %v7394 = vmax.f32 %v6137, 0.0
    %v7395 = vmax.f32 %v6700, 0.0
    %v7396 = vmax.f32 %v6702, 0.0
    %v7397 = vmax.f32 %v7265, 0.0
    %v7398 = vmax.f32 %v7267, 0.0
    %v7399 = vmax.f32 %v5011, 0.0
    %v7400 = vmax.f32 %v5013, 0.0
    %v7401 = vmax.f32 %v5576, 0.0
    %v7402 = vmax.f32 %v5578, 0.0
    %v7403 = vmax.f32 %v6141, 0.0
    %v7404 = vmax.f32 %v6143, 0.0
    %v7405 = vmax.f32 %v6706, 0.0
    %v7406 = vmax.f32 %v6708, 0.0
    %v7407 = vmax.f32 %v7271, 0.0
    %v7408 = vmax.f32 %v7273, 0.0
    %v7409 = vmax.f32 %v5015, 0.0
    %v7410 = vmax.f32 %v5017, 0.0
    %v7411 = vmax.f32 %v5580, 0.0
    %v7412 = vmax.f32 %v5582, 0.0
    %v7413 = vmax.f32 %v6145, 0.0
    %v7414 = vmax.f32 %v6147, 0.0
    %v7415 = vmax.f32 %v6710, 0.0
    %v7416 = vmax.f32 %v6712, 0.0
    %v7417 = vmax.f32 %v7275, 0.0
    %v7418 = vmax.f32 %v7277, 0.0
    %v7419 = vmax.f32 %v5021, 0.0
    %v7420 = vmax.f32 %v5023, 0.0
    %v7421 = vmax.f32 %v5586, 0.0
    %v7422 = vmax.f32 %v5588, 0.0
    %v7423 = vmax.f32 %v6151, 0.0
    %v7424 = vmax.f32 %v6153, 0.0
    %v7425 = vmax.f32 %v6716, 0.0
    %v7426 = vmax.f32 %v6718, 0.0
    %v7427 = vmax.f32 %v7281, 0.0
    %v7428 = vmax.f32 %v7283, 0.0
    %v7429 = vmax.f32 %v5025, 0.0
    %v7430 = vmax.f32 %v5027, 0.0
    %v7431 = vmax.f32 %v5590, 0.0
    %v7432 = vmax.f32 %v5592, 0.0
    %v7433 = vmax.f32 %v6155, 0.0
    %v7434 = vmax.f32 %v6157, 0.0
    %v7435 = vmax.f32 %v6720, 0.0
    %v7436 = vmax.f32 %v6722, 0.0
    %v7437 = vmax.f32 %v7285, 0.0
    %v7438 = vmax.f32 %v7287, 0.0
    %v7439 = vmax.f32 %v5031, 0.0
    %v7440 = vmax.f32 %v5033, 0.0
    %v7441 = vmax.f32 %v5596, 0.0
    %v7442 = vmax.f32 %v5598, 0.0
    %v7443 = vmax.f32 %v6161, 0.0
    %v7444 = vmax.f32 %v6163, 0.0
    %v7445 = vmax.f32 %v6726, 0.0
    %v7446 = vmax.f32 %v6728, 0.0
    %v7447 = vmax.f32 %v7291, 0.0
    %v7448 = vmax.f32 %v7293, 0.0
    %v7449 = vmax.f32 %v5035, 0.0
    %v7450 = vmax.f32 %v5037, 0.0
    %v7451 = vmax.f32 %v5600, 0.0
    %v7452 = vmax.f32 %v5602, 0.0
    %v7453 = vmax.f32 %v6165, 0.0
    %v7454 = vmax.f32 %v6167, 0.0
    %v7455 = vmax.f32 %v6730, 0.0
    %v7456 = vmax.f32 %v6732, 0.0
    %v7457 = vmax.f32 %v7295, 0.0
    %v7458 = vmax.f32 %v7297, 0.0
    %v7459 = vpack.c.bf16 %v7309, %v7299
    %v7460 = vpack.c.bf16 %v7310, %v7300
    %v7461 = vpack.c.bf16 %v7311, %v7301
    %v7462 = vpack.c.bf16 %v7312, %v7302
    %v7463 = vpack.c.bf16 %v7313, %v7303
    %v7464 = vpack.c.bf16 %v7314, %v7304
    %v7465 = vpack.c.bf16 %v7315, %v7305
    %v7466 = vpack.c.bf16 %v7316, %v7306
    %v7467 = vpack.c.bf16 %v7317, %v7307
    %v7468 = vpack.c.bf16 %v7318, %v7308
    %v7469 = vpack.c.bf16 %v7329, %v7319
    %v7470 = vpack.c.bf16 %v7330, %v7320
    %v7471 = vpack.c.bf16 %v7331, %v7321
    %v7472 = vpack.c.bf16 %v7332, %v7322
    %v7473 = vpack.c.bf16 %v7333, %v7323
    %v7474 = vpack.c.bf16 %v7334, %v7324
    %v7475 = vpack.c.bf16 %v7335, %v7325
    %v7476 = vpack.c.bf16 %v7336, %v7326
    %v7477 = vpack.c.bf16 %v7337, %v7327
    %v7478 = vpack.c.bf16 %v7338, %v7328
    %v7479 = vpack.c.bf16 %v7349, %v7339
    %v7480 = vpack.c.bf16 %v7350, %v7340
    %v7481 = vpack.c.bf16 %v7351, %v7341
    %v7482 = vpack.c.bf16 %v7352, %v7342
    %v7483 = vpack.c.bf16 %v7353, %v7343
    %v7484 = vpack.c.bf16 %v7354, %v7344
    %v7485 = vpack.c.bf16 %v7355, %v7345
    %v7486 = vpack.c.bf16 %v7356, %v7346
    %v7487 = vpack.c.bf16 %v7357, %v7347
    %v7488 = vpack.c.bf16 %v7358, %v7348
    %v7489 = vpack.c.bf16 %v7369, %v7359
    %v7490 = vpack.c.bf16 %v7370, %v7360
    %v7491 = vpack.c.bf16 %v7371, %v7361
    %v7492 = vpack.c.bf16 %v7372, %v7362
    %v7493 = vpack.c.bf16 %v7373, %v7363
    %v7494 = vpack.c.bf16 %v7374, %v7364
    %v7495 = vpack.c.bf16 %v7375, %v7365
    %v7496 = vpack.c.bf16 %v7376, %v7366
    %v7497 = vpack.c.bf16 %v7377, %v7367
    %v7498 = vpack.c.bf16 %v7378, %v7368
    %v7499 = vpack.c.bf16 %v7389, %v7379
    %v7500 = vpack.c.bf16 %v7390, %v7380
    %v7501 = vpack.c.bf16 %v7391, %v7381
    %v7502 = vpack.c.bf16 %v7392, %v7382
    %v7503 = vpack.c.bf16 %v7393, %v7383
    %v7504 = vpack.c.bf16 %v7394, %v7384
    %v7505 = vpack.c.bf16 %v7395, %v7385
    %v7506 = vpack.c.bf16 %v7396, %v7386
    %v7507 = vpack.c.bf16 %v7397, %v7387
    %v7508 = vpack.c.bf16 %v7398, %v7388
    %v7509 = vpack.c.bf16 %v7409, %v7399
    %v7510 = vpack.c.bf16 %v7410, %v7400
    %v7511 = vpack.c.bf16 %v7411, %v7401
    %v7512 = vpack.c.bf16 %v7412, %v7402
    %v7513 = vpack.c.bf16 %v7413, %v7403
    %v7514 = vpack.c.bf16 %v7414, %v7404
    %v7515 = vpack.c.bf16 %v7415, %v7405
    %v7516 = vpack.c.bf16 %v7416, %v7406
    %v7517 = vpack.c.bf16 %v7417, %v7407
    %v7518 = vpack.c.bf16 %v7418, %v7408
    %v7519 = vpack.c.bf16 %v7429, %v7419
    %v7520 = vpack.c.bf16 %v7430, %v7420
    %v7521 = vpack.c.bf16 %v7431, %v7421
    %v7522 = vpack.c.bf16 %v7432, %v7422
    %v7523 = vpack.c.bf16 %v7433, %v7423
    %v7524 = vpack.c.bf16 %v7434, %v7424
    %v7525 = vpack.c.bf16 %v7435, %v7425
    %v7526 = vpack.c.bf16 %v7436, %v7426
    %v7527 = vpack.c.bf16 %v7437, %v7427
    %v7528 = vpack.c.bf16 %v7438, %v7428
    %v7529 = vpack.c.bf16 %v7449, %v7439
    %v7530 = vpack.c.bf16 %v7450, %v7440
    %v7531 = vpack.c.bf16 %v7451, %v7441
    %v7532 = vpack.c.bf16 %v7452, %v7442
    %v7533 = vpack.c.bf16 %v7453, %v7443
    %v7534 = vpack.c.bf16 %v7454, %v7444
    %v7535 = vpack.c.bf16 %v7455, %v7445
    %v7536 = vpack.c.bf16 %v7456, %v7446
    %v7537 = vpack.c.bf16 %v7457, %v7447
    %v7538 = vpack.c.bf16 %v7458, %v7448
    // Predicated region
    $region42: #{bayesian_network_forward.1} parent=1 // pred_check
      %p7539 = pneg %p56
    $region43: #{bayesian_network_forward.1} parent=1 // pred_check_branch
      %7541 = sbr.rel (%p7539) target = $region45
    $region44: #{bayesian_network_forward.1} parent=1 // pred_region
      %s7542 = scalar_lea.sflag [#allocation5], 2
      %s7543 = smul.u32 4, 160
      %s7544 = smul.u32 %s7543, 1
      %s7545 = sshll.u32 %s7544, 4
      %7546 = dma.done %s7542, %s7545
    $region45: #{bayesian_network_forward.1} parent=1 // pred_fallthru
      _
    %v7547 = vld [vmem:[#allocation4] sm:$0xff]
    %v7548 = vld [vmem:[#allocation4 + $0x8] sm:$0xff]
    %v7549 = vld [vmem:[#allocation4 + $0x10] sm:$0xff]
    %v7550 = vld [vmem:[#allocation4 + $0x18] sm:$0xff]
    %v7551 = vld [vmem:[#allocation4 + $0x20] sm:$0xff]
    %v7552 = vld [vmem:[#allocation4 + $0x28] sm:$0xff]
    %v7553 = vld [vmem:[#allocation4 + $0x30] sm:$0xff]
    %v7554 = vld [vmem:[#allocation4 + $0x38] sm:$0xff]
    %v7555 = vld [vmem:[#allocation4 + $0x40] sm:$0xff]
    %v7556 = vld [vmem:[#allocation4 + $0x48] sm:$0xff]
    %v7557 = vld [vmem:[#allocation4 + $0x50] sm:$0xff]
    %v7558 = vld [vmem:[#allocation4 + $0x58] sm:$0xff]
    %v7559 = vld [vmem:[#allocation4 + $0x60] sm:$0xff]
    %v7560 = vld [vmem:[#allocation4 + $0x68] sm:$0xff]
    %v7561 = vld [vmem:[#allocation4 + $0x70] sm:$0xff]
    %v7562 = vld [vmem:[#allocation4 + $0x78] sm:$0xff]
    %v7563 = vld [vmem:[#allocation4 + $0x80] sm:$0xff]
    %v7564 = vld [vmem:[#allocation4 + $0x88] sm:$0xff]
    %v7565 = vld [vmem:[#allocation4 + $0x90] sm:$0xff]
    %v7566 = vld [vmem:[#allocation4 + $0x98] sm:$0xff]
    %v7567 = vld [vmem:[#allocation4 + $0xa0] sm:$0xff]
    %v7568 = vld [vmem:[#allocation4 + $0xa8] sm:$0xff]
    %v7569 = vld [vmem:[#allocation4 + $0xb0] sm:$0xff]
    %v7570 = vld [vmem:[#allocation4 + $0xb8] sm:$0xff]
    %v7571 = vld [vmem:[#allocation4 + $0xc0] sm:$0xff]
    %v7572 = vld [vmem:[#allocation4 + $0xc8] sm:$0xff]
    %v7573 = vld [vmem:[#allocation4 + $0xd0] sm:$0xff]
    %v7574 = vld [vmem:[#allocation4 + $0xd8] sm:$0xff]
    %v7575 = vld [vmem:[#allocation4 + $0xe0] sm:$0xff]
    %v7576 = vld [vmem:[#allocation4 + $0xe8] sm:$0xff]
    %v7577 = vld [vmem:[#allocation4 + $0xf0] sm:$0xff]
    %v7578 = vld [vmem:[#allocation4 + $0xf8] sm:$0xff]
    %v7579 = vld [vmem:[#allocation4 + $0x100] sm:$0xff]
    %v7580 = vld [vmem:[#allocation4 + $0x108] sm:$0xff]
    %v7581 = vld [vmem:[#allocation4 + $0x110] sm:$0xff]
    %v7582 = vld [vmem:[#allocation4 + $0x118] sm:$0xff]
    %v7583 = vld [vmem:[#allocation4 + $0x120] sm:$0xff]
    %v7584 = vld [vmem:[#allocation4 + $0x128] sm:$0xff]
    %v7585 = vld [vmem:[#allocation4 + $0x130] sm:$0xff]
    %v7586 = vld [vmem:[#allocation4 + $0x138] sm:$0xff]
    %v7587 = vld [vmem:[#allocation4 + $0x140] sm:$0xff]
    %v7588 = vld [vmem:[#allocation4 + $0x148] sm:$0xff]
    %v7589 = vld [vmem:[#allocation4 + $0x150] sm:$0xff]
    %v7590 = vld [vmem:[#allocation4 + $0x158] sm:$0xff]
    %v7591 = vld [vmem:[#allocation4 + $0x160] sm:$0xff]
    %v7592 = vld [vmem:[#allocation4 + $0x168] sm:$0xff]
    %v7593 = vld [vmem:[#allocation4 + $0x170] sm:$0xff]
    %v7594 = vld [vmem:[#allocation4 + $0x178] sm:$0xff]
    %v7595 = vld [vmem:[#allocation4 + $0x180] sm:$0xff]
    %v7596 = vld [vmem:[#allocation4 + $0x188] sm:$0xff]
    %v7597 = vld [vmem:[#allocation4 + $0x190] sm:$0xff]
    %v7598 = vld [vmem:[#allocation4 + $0x198] sm:$0xff]
    %v7599 = vld [vmem:[#allocation4 + $0x1a0] sm:$0xff]
    %v7600 = vld [vmem:[#allocation4 + $0x1a8] sm:$0xff]
    %v7601 = vld [vmem:[#allocation4 + $0x1b0] sm:$0xff]
    %v7602 = vld [vmem:[#allocation4 + $0x1b8] sm:$0xff]
    %v7603 = vld [vmem:[#allocation4 + $0x1c0] sm:$0xff]
    %v7604 = vld [vmem:[#allocation4 + $0x1c8] sm:$0xff]
    %v7605 = vld [vmem:[#allocation4 + $0x1d0] sm:$0xff]
    %v7606 = vld [vmem:[#allocation4 + $0x1d8] sm:$0xff]
    %v7607 = vld [vmem:[#allocation4 + $0x1e0] sm:$0xff]
    %v7608 = vld [vmem:[#allocation4 + $0x1e8] sm:$0xff]
    %v7609 = vld [vmem:[#allocation4 + $0x1f0] sm:$0xff]
    %v7610 = vld [vmem:[#allocation4 + $0x1f8] sm:$0xff]
    %v7611 = vld [vmem:[#allocation4 + $0x200] sm:$0xff]
    %v7612 = vld [vmem:[#allocation4 + $0x208] sm:$0xff]
    %v7613 = vld [vmem:[#allocation4 + $0x210] sm:$0xff]
    %v7614 = vld [vmem:[#allocation4 + $0x218] sm:$0xff]
    %v7615 = vld [vmem:[#allocation4 + $0x220] sm:$0xff]
    %v7616 = vld [vmem:[#allocation4 + $0x228] sm:$0xff]
    %v7617 = vld [vmem:[#allocation4 + $0x230] sm:$0xff]
    %v7618 = vld [vmem:[#allocation4 + $0x238] sm:$0xff]
    %v7619 = vld [vmem:[#allocation4 + $0x240] sm:$0xff]
    %v7620 = vld [vmem:[#allocation4 + $0x248] sm:$0xff]
    %v7621 = vld [vmem:[#allocation4 + $0x250] sm:$0xff]
    %v7622 = vld [vmem:[#allocation4 + $0x258] sm:$0xff]
    %v7623 = vld [vmem:[#allocation4 + $0x260] sm:$0xff]
    %v7624 = vld [vmem:[#allocation4 + $0x268] sm:$0xff]
    %v7625 = vld [vmem:[#allocation4 + $0x270] sm:$0xff]
    %v7626 = vld [vmem:[#allocation4 + $0x278] sm:$0xff]
    %v7627 = vld [vmem:[#allocation10] sm:$0x1]
    %v7629 = vlaneseq
    %v7630 = vshrl.u32 %v7629, 7
    %v7631 = vsub.s32 0, %v7630
    %v7632 = vrot.slane %v7627, %v7631
    %7634 = vmatprep.subr.bf16.mxu0 0
    %7635 = vmatpush1.bf16.msra.mxu0 %v7547
    %7636 = vmatprep.subr.bf16.mxu0 0
    %7637 = vmatpush1.bf16.msra.mxu0 %v7548
    %7638 = vmatprep.subr.bf16.mxu0 0
    %7639 = vmatpush1.bf16.msra.mxu0 %v7549
    %7640 = vmatprep.subr.bf16.mxu0 0
    %7641 = vmatpush1.bf16.msra.mxu0 %v7550
    %7642 = vmatprep.subr.bf16.mxu0 0
    %7643 = vmatpush1.bf16.msra.mxu0 %v7551
    %7644 = vmatprep.subr.bf16.mxu0 0
    %7645 = vmatpush1.bf16.msra.mxu0 %v7552
    %7646 = vmatprep.subr.bf16.mxu0 0
    %7647 = vmatpush1.bf16.msra.mxu0 %v7553
    %7648 = vmatprep.subr.bf16.mxu0 0
    %7649 = vmatpush1.bf16.msra.mxu0 %v7554
    %7650 = vmatprep.subr.bf16.mxu0 0
    %7651 = vmatpush1.bf16.msra.mxu0 %v7555
    %7652 = vmatprep.subr.bf16.mxu0 0
    %7653 = vmatpush1.bf16.msra.mxu0 %v7556
    %7654 = vmatprep.subr.bf16.mxu0 0
    %7655 = vmatpush1.bf16.msra.mxu0 %v7557
    %7656 = vmatprep.subr.bf16.mxu0 0
    %7657 = vmatpush1.bf16.msra.mxu0 %v7558
    %7658 = vmatprep.subr.bf16.mxu0 0
    %7659 = vmatpush1.bf16.msra.mxu0 %v7559
    %7660 = vmatprep.subr.bf16.mxu0 0
    %7661 = vmatpush1.bf16.msra.mxu0 %v7560
    %7662 = vmatprep.subr.bf16.mxu0 0
    %7663 = vmatpush1.bf16.msra.mxu0 %v7561
    %7664 = vmatprep.subr.bf16.mxu0 0
    %7665 = vmatpush1.bf16.msra.mxu0 %v7562
    %7666 = vmatprep.mubr.bf16.mxu0 %v7460
    %7667 = vmatmul.mubr.bf16.gmra.mrb[0].mxu0 %v7459
    %v7668 = vpop.f32.mrb[0].mxu0
    %v7669 = vadd.f32 %v7632, %v7668
    %v7670 = vpop.f32.mrb[0].mxu0
    %v7671 = vpop.f32.mrb[0].mxu0
    %v7672 = vadd.f32 %v7632, %v7671
    %v7673 = vpop.f32.mrb[0].mxu0
    %7674 = vmatprep.mubr.bf16.mxu0 %v7470
    %7675 = vmatmul.mubr.bf16.gmra.mrb[0].mxu0 %v7469
    %v7676 = vpop.f32.mrb[0].mxu0
    %v7677 = vadd.f32 %v7632, %v7676
    %v7678 = vpop.f32.mrb[0].mxu0
    %v7679 = vpop.f32.mrb[0].mxu0
    %v7680 = vadd.f32 %v7632, %v7679
    %v7681 = vpop.f32.mrb[0].mxu0
    %7682 = vmatprep.mubr.bf16.mxu0 %v7480
    %7683 = vmatmul.mubr.bf16.gmra.mrb[0].mxu0 %v7479
    %v7684 = vpop.f32.mrb[0].mxu0
    %v7685 = vadd.f32 %v7632, %v7684
    %v7686 = vpop.f32.mrb[0].mxu0
    %v7687 = vpop.f32.mrb[0].mxu0
    %v7688 = vadd.f32 %v7632, %v7687
    %v7689 = vpop.f32.mrb[0].mxu0
    %7690 = vmatprep.mubr.bf16.mxu0 %v7490
    %7691 = vmatmul.mubr.bf16.gmra.mrb[0].mxu0 %v7489
    %v7692 = vpop.f32.mrb[0].mxu0
    %v7693 = vadd.f32 %v7632, %v7692
    %v7694 = vpop.f32.mrb[0].mxu0
    %v7695 = vpop.f32.mrb[0].mxu0
    %v7696 = vadd.f32 %v7632, %v7695
    %v7697 = vpop.f32.mrb[0].mxu0
    %7698 = vmatprep.mubr.bf16.mxu0 %v7500
    %7699 = vmatmul.mubr.bf16.gmra.mrb[0].mxu0 %v7499
    %v7700 = vpop.f32.mrb[0].mxu0
    %v7701 = vadd.f32 %v7632, %v7700
    %v7702 = vpop.f32.mrb[0].mxu0
    %v7703 = vpop.f32.mrb[0].mxu0
    %v7704 = vadd.f32 %v7632, %v7703
    %v7705 = vpop.f32.mrb[0].mxu0
    %7706 = vmatprep.mubr.bf16.mxu0 %v7510
    %7707 = vmatmul.mubr.bf16.gmra.mrb[0].mxu0 %v7509
    %v7708 = vpop.f32.mrb[0].mxu0
    %v7709 = vadd.f32 %v7632, %v7708
    %v7710 = vpop.f32.mrb[0].mxu0
    %v7711 = vpop.f32.mrb[0].mxu0
    %v7712 = vadd.f32 %v7632, %v7711
    %v7713 = vpop.f32.mrb[0].mxu0
    %7714 = vmatprep.mubr.bf16.mxu0 %v7520
    %7715 = vmatmul.mubr.bf16.gmra.mrb[0].mxu0 %v7519
    %v7716 = vpop.f32.mrb[0].mxu0
    %v7717 = vadd.f32 %v7632, %v7716
    %v7718 = vpop.f32.mrb[0].mxu0
    %v7719 = vpop.f32.mrb[0].mxu0
    %v7720 = vadd.f32 %v7632, %v7719
    %v7721 = vpop.f32.mrb[0].mxu0
    %7722 = vmatprep.mubr.bf16.mxu0 %v7530
    %7723 = vmatmul.mubr.bf16.gmra.mrb[0].mxu0 %v7529
    %v7724 = vpop.f32.mrb[0].mxu0
    %v7725 = vadd.f32 %v7632, %v7724
    %v7726 = vpop.f32.mrb[0].mxu0
    %v7727 = vpop.f32.mrb[0].mxu0
    %v7728 = vadd.f32 %v7632, %v7727
    %v7729 = vpop.f32.mrb[0].mxu0
    %7730 = vdwg.mxu0
    %7731 = vmatprep.subr.bf16.mxu0 0
    %7732 = vmatpush1.bf16.msra.mxu0 %v7563
    %7733 = vmatprep.subr.bf16.mxu0 0
    %7734 = vmatpush1.bf16.msra.mxu0 %v7564
    %7735 = vmatprep.subr.bf16.mxu0 0
    %7736 = vmatpush1.bf16.msra.mxu0 %v7565
    %7737 = vmatprep.subr.bf16.mxu0 0
    %7738 = vmatpush1.bf16.msra.mxu0 %v7566
    %7739 = vmatprep.subr.bf16.mxu0 0
    %7740 = vmatpush1.bf16.msra.mxu0 %v7567
    %7741 = vmatprep.subr.bf16.mxu0 0
    %7742 = vmatpush1.bf16.msra.mxu0 %v7568
    %7743 = vmatprep.subr.bf16.mxu0 0
    %7744 = vmatpush1.bf16.msra.mxu0 %v7569
    %7745 = vmatprep.subr.bf16.mxu0 0
    %7746 = vmatpush1.bf16.msra.mxu0 %v7570
    %7747 = vmatprep.subr.bf16.mxu0 0
    %7748 = vmatpush1.bf16.msra.mxu0 %v7571
    %7749 = vmatprep.subr.bf16.mxu0 0
    %7750 = vmatpush1.bf16.msra.mxu0 %v7572
    %7751 = vmatprep.subr.bf16.mxu0 0
    %7752 = vmatpush1.bf16.msra.mxu0 %v7573
    %7753 = vmatprep.subr.bf16.mxu0 0
    %7754 = vmatpush1.bf16.msra.mxu0 %v7574
    %7755 = vmatprep.subr.bf16.mxu0 0
    %7756 = vmatpush1.bf16.msra.mxu0 %v7575
    %7757 = vmatprep.subr.bf16.mxu0 0
    %7758 = vmatpush1.bf16.msra.mxu0 %v7576
    %7759 = vmatprep.subr.bf16.mxu0 0
    %7760 = vmatpush1.bf16.msra.mxu0 %v7577
    %7761 = vmatprep.subr.bf16.mxu0 0
    %7762 = vmatpush1.bf16.msra.mxu0 %v7578
    %7763 = vmatprep.mubr.bf16.mxu0 %v7462
    %7764 = vmatmul.mubr.bf16.gmra.mrb[0].mxu0 %v7461
    %v7765 = vpop.f32.mrb[0].mxu0
    %v7766 = vadd.f32 %v7669, %v7765
    %v7767 = vpop.f32.mrb[0].mxu0
    %v7768 = vpop.f32.mrb[0].mxu0
    %v7769 = vadd.f32 %v7672, %v7768
    %v7770 = vpop.f32.mrb[0].mxu0
    %7771 = vmatprep.mubr.bf16.mxu0 %v7472
    %7772 = vmatmul.mubr.bf16.gmra.mrb[0].mxu0 %v7471
    %v7773 = vpop.f32.mrb[0].mxu0
    %v7774 = vadd.f32 %v7677, %v7773
    %v7775 = vpop.f32.mrb[0].mxu0
    %v7776 = vpop.f32.mrb[0].mxu0
    %v7777 = vadd.f32 %v7680, %v7776
    %v7778 = vpop.f32.mrb[0].mxu0
    %7779 = vmatprep.mubr.bf16.mxu0 %v7482
    %7780 = vmatmul.mubr.bf16.gmra.mrb[0].mxu0 %v7481
    %v7781 = vpop.f32.mrb[0].mxu0
    %v7782 = vadd.f32 %v7685, %v7781
    %v7783 = vpop.f32.mrb[0].mxu0
    %v7784 = vpop.f32.mrb[0].mxu0
    %v7785 = vadd.f32 %v7688, %v7784
    %v7786 = vpop.f32.mrb[0].mxu0
    %7787 = vmatprep.mubr.bf16.mxu0 %v7492
    %7788 = vmatmul.mubr.bf16.gmra.mrb[0].mxu0 %v7491
    %v7789 = vpop.f32.mrb[0].mxu0
    %v7790 = vadd.f32 %v7693, %v7789
    %v7791 = vpop.f32.mrb[0].mxu0
    %v7792 = vpop.f32.mrb[0].mxu0
    %v7793 = vadd.f32 %v7696, %v7792
    %v7794 = vpop.f32.mrb[0].mxu0
    %7795 = vmatprep.mubr.bf16.mxu0 %v7502
    %7796 = vmatmul.mubr.bf16.gmra.mrb[0].mxu0 %v7501
    %v7797 = vpop.f32.mrb[0].mxu0
    %v7798 = vadd.f32 %v7701, %v7797
    %v7799 = vpop.f32.mrb[0].mxu0
    %v7800 = vpop.f32.mrb[0].mxu0
    %v7801 = vadd.f32 %v7704, %v7800
    %v7802 = vpop.f32.mrb[0].mxu0
    %7803 = vmatprep.mubr.bf16.mxu0 %v7512
    %7804 = vmatmul.mubr.bf16.gmra.mrb[0].mxu0 %v7511
    %v7805 = vpop.f32.mrb[0].mxu0
    %v7806 = vadd.f32 %v7709, %v7805
    %v7807 = vpop.f32.mrb[0].mxu0
    %v7808 = vpop.f32.mrb[0].mxu0
    %v7809 = vadd.f32 %v7712, %v7808
    %v7810 = vpop.f32.mrb[0].mxu0
    %7811 = vmatprep.mubr.bf16.mxu0 %v7522
    %7812 = vmatmul.mubr.bf16.gmra.mrb[0].mxu0 %v7521
    %v7813 = vpop.f32.mrb[0].mxu0
    %v7814 = vadd.f32 %v7717, %v7813
    %v7815 = vpop.f32.mrb[0].mxu0
    %v7816 = vpop.f32.mrb[0].mxu0
    %v7817 = vadd.f32 %v7720, %v7816
    %v7818 = vpop.f32.mrb[0].mxu0
    %7819 = vmatprep.mubr.bf16.mxu0 %v7532
    %7820 = vmatmul.mubr.bf16.gmra.mrb[0].mxu0 %v7531
    %v7821 = vpop.f32.mrb[0].mxu0
    %v7822 = vadd.f32 %v7725, %v7821
    %v7823 = vpop.f32.mrb[0].mxu0
    %v7824 = vpop.f32.mrb[0].mxu0
    %v7825 = vadd.f32 %v7728, %v7824
    %v7826 = vpop.f32.mrb[0].mxu0
    %7827 = vdwg.mxu0
    %7828 = vmatprep.subr.bf16.mxu0 0
    %7829 = vmatpush1.bf16.msra.mxu0 %v7579
    %7830 = vmatprep.subr.bf16.mxu0 0
    %7831 = vmatpush1.bf16.msra.mxu0 %v7580
    %7832 = vmatprep.subr.bf16.mxu0 0
    %7833 = vmatpush1.bf16.msra.mxu0 %v7581
    %7834 = vmatprep.subr.bf16.mxu0 0
    %7835 = vmatpush1.bf16.msra.mxu0 %v7582
    %7836 = vmatprep.subr.bf16.mxu0 0
    %7837 = vmatpush1.bf16.msra.mxu0 %v7583
    %7838 = vmatprep.subr.bf16.mxu0 0
    %7839 = vmatpush1.bf16.msra.mxu0 %v7584
    %7840 = vmatprep.subr.bf16.mxu0 0
    %7841 = vmatpush1.bf16.msra.mxu0 %v7585
    %7842 = vmatprep.subr.bf16.mxu0 0
    %7843 = vmatpush1.bf16.msra.mxu0 %v7586
    %7844 = vmatprep.subr.bf16.mxu0 0
    %7845 = vmatpush1.bf16.msra.mxu0 %v7587
    %7846 = vmatprep.subr.bf16.mxu0 0
    %7847 = vmatpush1.bf16.msra.mxu0 %v7588
    %7848 = vmatprep.subr.bf16.mxu0 0
    %7849 = vmatpush1.bf16.msra.mxu0 %v7589
    %7850 = vmatprep.subr.bf16.mxu0 0
    %7851 = vmatpush1.bf16.msra.mxu0 %v7590
    %7852 = vmatprep.subr.bf16.mxu0 0
    %7853 = vmatpush1.bf16.msra.mxu0 %v7591
    %7854 = vmatprep.subr.bf16.mxu0 0
    %7855 = vmatpush1.bf16.msra.mxu0 %v7592
    %7856 = vmatprep.subr.bf16.mxu0 0
    %7857 = vmatpush1.bf16.msra.mxu0 %v7593
    %7858 = vmatprep.subr.bf16.mxu0 0
    %7859 = vmatpush1.bf16.msra.mxu0 %v7594
    %7860 = vmatprep.mubr.bf16.mxu0 %v7464
    %7861 = vmatmul.mubr.bf16.gmra.mrb[0].mxu0 %v7463
    %v7862 = vpop.f32.mrb[0].mxu0
    %v7863 = vadd.f32 %v7766, %v7862
    %v7864 = vpop.f32.mrb[0].mxu0
    %v7865 = vpop.f32.mrb[0].mxu0
    %v7866 = vadd.f32 %v7769, %v7865
    %v7867 = vpop.f32.mrb[0].mxu0
    %7868 = vmatprep.mubr.bf16.mxu0 %v7474
    %7869 = vmatmul.mubr.bf16.gmra.mrb[0].mxu0 %v7473
    %v7870 = vpop.f32.mrb[0].mxu0
    %v7871 = vadd.f32 %v7774, %v7870
    %v7872 = vpop.f32.mrb[0].mxu0
    %v7873 = vpop.f32.mrb[0].mxu0
    %v7874 = vadd.f32 %v7777, %v7873
    %v7875 = vpop.f32.mrb[0].mxu0
    %7876 = vmatprep.mubr.bf16.mxu0 %v7484
    %7877 = vmatmul.mubr.bf16.gmra.mrb[0].mxu0 %v7483
    %v7878 = vpop.f32.mrb[0].mxu0
    %v7879 = vadd.f32 %v7782, %v7878
    %v7880 = vpop.f32.mrb[0].mxu0
    %v7881 = vpop.f32.mrb[0].mxu0
    %v7882 = vadd.f32 %v7785, %v7881
    %v7883 = vpop.f32.mrb[0].mxu0
    %7884 = vmatprep.mubr.bf16.mxu0 %v7494
    %7885 = vmatmul.mubr.bf16.gmra.mrb[0].mxu0 %v7493
    %v7886 = vpop.f32.mrb[0].mxu0
    %v7887 = vadd.f32 %v7790, %v7886
    %v7888 = vpop.f32.mrb[0].mxu0
    %v7889 = vpop.f32.mrb[0].mxu0
    %v7890 = vadd.f32 %v7793, %v7889
    %v7891 = vpop.f32.mrb[0].mxu0
    %7892 = vmatprep.mubr.bf16.mxu0 %v7504
    %7893 = vmatmul.mubr.bf16.gmra.mrb[0].mxu0 %v7503
    %v7894 = vpop.f32.mrb[0].mxu0
    %v7895 = vadd.f32 %v7798, %v7894
    %v7896 = vpop.f32.mrb[0].mxu0
    %v7897 = vpop.f32.mrb[0].mxu0
    %v7898 = vadd.f32 %v7801, %v7897
    %v7899 = vpop.f32.mrb[0].mxu0
    %7900 = vmatprep.mubr.bf16.mxu0 %v7514
    %7901 = vmatmul.mubr.bf16.gmra.mrb[0].mxu0 %v7513
    %v7902 = vpop.f32.mrb[0].mxu0
    %v7903 = vadd.f32 %v7806, %v7902
    %v7904 = vpop.f32.mrb[0].mxu0
    %v7905 = vpop.f32.mrb[0].mxu0
    %v7906 = vadd.f32 %v7809, %v7905
    %v7907 = vpop.f32.mrb[0].mxu0
    %7908 = vmatprep.mubr.bf16.mxu0 %v7524
    %7909 = vmatmul.mubr.bf16.gmra.mrb[0].mxu0 %v7523
    %v7910 = vpop.f32.mrb[0].mxu0
    %v7911 = vadd.f32 %v7814, %v7910
    %v7912 = vpop.f32.mrb[0].mxu0
    %v7913 = vpop.f32.mrb[0].mxu0
    %v7914 = vadd.f32 %v7817, %v7913
    %v7915 = vpop.f32.mrb[0].mxu0
    %7916 = vmatprep.mubr.bf16.mxu0 %v7534
    %7917 = vmatmul.mubr.bf16.gmra.mrb[0].mxu0 %v7533
    %v7918 = vpop.f32.mrb[0].mxu0
    %v7919 = vadd.f32 %v7822, %v7918
    %v7920 = vpop.f32.mrb[0].mxu0
    %v7921 = vpop.f32.mrb[0].mxu0
    %v7922 = vadd.f32 %v7825, %v7921
    %v7923 = vpop.f32.mrb[0].mxu0
    %7924 = vdwg.mxu0
    %7925 = vmatprep.subr.bf16.mxu0 0
    %7926 = vmatpush1.bf16.msra.mxu0 %v7595
    %7927 = vmatprep.subr.bf16.mxu0 0
    %7928 = vmatpush1.bf16.msra.mxu0 %v7596
    %7929 = vmatprep.subr.bf16.mxu0 0
    %7930 = vmatpush1.bf16.msra.mxu0 %v7597
    %7931 = vmatprep.subr.bf16.mxu0 0
    %7932 = vmatpush1.bf16.msra.mxu0 %v7598
    %7933 = vmatprep.subr.bf16.mxu0 0
    %7934 = vmatpush1.bf16.msra.mxu0 %v7599
    %7935 = vmatprep.subr.bf16.mxu0 0
    %7936 = vmatpush1.bf16.msra.mxu0 %v7600
    %7937 = vmatprep.subr.bf16.mxu0 0
    %7938 = vmatpush1.bf16.msra.mxu0 %v7601
    %7939 = vmatprep.subr.bf16.mxu0 0
    %7940 = vmatpush1.bf16.msra.mxu0 %v7602
    %7941 = vmatprep.subr.bf16.mxu0 0
    %7942 = vmatpush1.bf16.msra.mxu0 %v7603
    %7943 = vmatprep.subr.bf16.mxu0 0
    %7944 = vmatpush1.bf16.msra.mxu0 %v7604
    %7945 = vmatprep.subr.bf16.mxu0 0
    %7946 = vmatpush1.bf16.msra.mxu0 %v7605
    %7947 = vmatprep.subr.bf16.mxu0 0
    %7948 = vmatpush1.bf16.msra.mxu0 %v7606
    %7949 = vmatprep.subr.bf16.mxu0 0
    %7950 = vmatpush1.bf16.msra.mxu0 %v7607
    %7951 = vmatprep.subr.bf16.mxu0 0
    %7952 = vmatpush1.bf16.msra.mxu0 %v7608
    %7953 = vmatprep.subr.bf16.mxu0 0
    %7954 = vmatpush1.bf16.msra.mxu0 %v7609
    %7955 = vmatprep.subr.bf16.mxu0 0
    %7956 = vmatpush1.bf16.msra.mxu0 %v7610
    %7957 = vmatprep.mubr.bf16.mxu0 %v7466
    %7958 = vmatmul.mubr.bf16.gmra.mrb[0].mxu0 %v7465
    %v7959 = vpop.f32.mrb[0].mxu0
    %v7960 = vadd.f32 %v7863, %v7959
    %v7961 = vpop.f32.mrb[0].mxu0
    %v7962 = vpop.f32.mrb[0].mxu0
    %v7963 = vadd.f32 %v7866, %v7962
    %v7964 = vpop.f32.mrb[0].mxu0
    %7965 = vmatprep.mubr.bf16.mxu0 %v7476
    %7966 = vmatmul.mubr.bf16.gmra.mrb[0].mxu0 %v7475
    %v7967 = vpop.f32.mrb[0].mxu0
    %v7968 = vadd.f32 %v7871, %v7967
    %v7969 = vpop.f32.mrb[0].mxu0
    %v7970 = vpop.f32.mrb[0].mxu0
    %v7971 = vadd.f32 %v7874, %v7970
    %v7972 = vpop.f32.mrb[0].mxu0
    %7973 = vmatprep.mubr.bf16.mxu0 %v7486
    %7974 = vmatmul.mubr.bf16.gmra.mrb[0].mxu0 %v7485
    %v7975 = vpop.f32.mrb[0].mxu0
    %v7976 = vadd.f32 %v7879, %v7975
    %v7977 = vpop.f32.mrb[0].mxu0
    %v7978 = vpop.f32.mrb[0].mxu0
    %v7979 = vadd.f32 %v7882, %v7978
    %v7980 = vpop.f32.mrb[0].mxu0
    %7981 = vmatprep.mubr.bf16.mxu0 %v7496
    %7982 = vmatmul.mubr.bf16.gmra.mrb[0].mxu0 %v7495
    %v7983 = vpop.f32.mrb[0].mxu0
    %v7984 = vadd.f32 %v7887, %v7983
    %v7985 = vpop.f32.mrb[0].mxu0
    %v7986 = vpop.f32.mrb[0].mxu0
    %v7987 = vadd.f32 %v7890, %v7986
    %v7988 = vpop.f32.mrb[0].mxu0
    %7989 = vmatprep.mubr.bf16.mxu0 %v7506
    %7990 = vmatmul.mubr.bf16.gmra.mrb[0].mxu0 %v7505
    %v7991 = vpop.f32.mrb[0].mxu0
    %v7992 = vadd.f32 %v7895, %v7991
    %v7993 = vpop.f32.mrb[0].mxu0
    %v7994 = vpop.f32.mrb[0].mxu0
    %v7995 = vadd.f32 %v7898, %v7994
    %v7996 = vpop.f32.mrb[0].mxu0
    %7997 = vmatprep.mubr.bf16.mxu0 %v7516
    %7998 = vmatmul.mubr.bf16.gmra.mrb[0].mxu0 %v7515
    %v7999 = vpop.f32.mrb[0].mxu0
    %v8000 = vadd.f32 %v7903, %v7999
    %v8001 = vpop.f32.mrb[0].mxu0
    %v8002 = vpop.f32.mrb[0].mxu0
    %v8003 = vadd.f32 %v7906, %v8002
    %v8004 = vpop.f32.mrb[0].mxu0
    %8005 = vmatprep.mubr.bf16.mxu0 %v7526
    %8006 = vmatmul.mubr.bf16.gmra.mrb[0].mxu0 %v7525
    %v8007 = vpop.f32.mrb[0].mxu0
    %v8008 = vadd.f32 %v7911, %v8007
    %v8009 = vpop.f32.mrb[0].mxu0
    %v8010 = vpop.f32.mrb[0].mxu0
    %v8011 = vadd.f32 %v7914, %v8010
    %v8012 = vpop.f32.mrb[0].mxu0
    %8013 = vmatprep.mubr.bf16.mxu0 %v7536
    %8014 = vmatmul.mubr.bf16.gmra.mrb[0].mxu0 %v7535
    %v8015 = vpop.f32.mrb[0].mxu0
    %v8016 = vadd.f32 %v7919, %v8015
    %v8017 = vpop.f32.mrb[0].mxu0
    %v8018 = vpop.f32.mrb[0].mxu0
    %v8019 = vadd.f32 %v7922, %v8018
    %v8020 = vpop.f32.mrb[0].mxu0
    %8021 = vdwg.mxu0
    %8022 = vmatprep.subr.bf16.mxu0 0
    %8023 = vmatpush1.bf16.msra.mxu0 %v7611
    %8024 = vmatprep.subr.bf16.mxu0 0
    %8025 = vmatpush1.bf16.msra.mxu0 %v7612
    %8026 = vmatprep.subr.bf16.mxu0 0
    %8027 = vmatpush1.bf16.msra.mxu0 %v7613
    %8028 = vmatprep.subr.bf16.mxu0 0
    %8029 = vmatpush1.bf16.msra.mxu0 %v7614
    %8030 = vmatprep.subr.bf16.mxu0 0
    %8031 = vmatpush1.bf16.msra.mxu0 %v7615
    %8032 = vmatprep.subr.bf16.mxu0 0
    %8033 = vmatpush1.bf16.msra.mxu0 %v7616
    %8034 = vmatprep.subr.bf16.mxu0 0
    %8035 = vmatpush1.bf16.msra.mxu0 %v7617
    %8036 = vmatprep.subr.bf16.mxu0 0
    %8037 = vmatpush1.bf16.msra.mxu0 %v7618
    %8038 = vmatprep.subr.bf16.mxu0 0
    %8039 = vmatpush1.bf16.msra.mxu0 %v7619
    %8040 = vmatprep.subr.bf16.mxu0 0
    %8041 = vmatpush1.bf16.msra.mxu0 %v7620
    %8042 = vmatprep.subr.bf16.mxu0 0
    %8043 = vmatpush1.bf16.msra.mxu0 %v7621
    %8044 = vmatprep.subr.bf16.mxu0 0
    %8045 = vmatpush1.bf16.msra.mxu0 %v7622
    %8046 = vmatprep.subr.bf16.mxu0 0
    %8047 = vmatpush1.bf16.msra.mxu0 %v7623
    %8048 = vmatprep.subr.bf16.mxu0 0
    %8049 = vmatpush1.bf16.msra.mxu0 %v7624
    %8050 = vmatprep.subr.bf16.mxu0 0
    %8051 = vmatpush1.bf16.msra.mxu0 %v7625
    %8052 = vmatprep.subr.bf16.mxu0 0
    %8053 = vmatpush1.bf16.msra.mxu0 %v7626
    %8054 = vmatprep.mubr.bf16.mxu0 %v7468
    %8055 = vmatmul.mubr.bf16.gmra.mrb[0].mxu0 %v7467
    %v8056 = vpop.f32.mrb[0].mxu0
    %v8057 = vadd.f32 %v7960, %v8056
    %v8058 = vpop.f32.mrb[0].mxu0
    %v8059 = vpop.f32.mrb[0].mxu0
    %v8060 = vadd.f32 %v7963, %v8059
    %v8061 = vpop.f32.mrb[0].mxu0
    %8062 = vmatprep.mubr.bf16.mxu0 %v7478
    %8063 = vmatmul.mubr.bf16.gmra.mrb[0].mxu0 %v7477
    %v8064 = vpop.f32.mrb[0].mxu0
    %v8065 = vadd.f32 %v7968, %v8064
    %v8066 = vpop.f32.mrb[0].mxu0
    %v8067 = vpop.f32.mrb[0].mxu0
    %v8068 = vadd.f32 %v7971, %v8067
    %v8069 = vpop.f32.mrb[0].mxu0
    %8070 = vmatprep.mubr.bf16.mxu0 %v7488
    %8071 = vmatmul.mubr.bf16.gmra.mrb[0].mxu0 %v7487
    %v8072 = vpop.f32.mrb[0].mxu0
    %v8073 = vadd.f32 %v7976, %v8072
    %v8074 = vpop.f32.mrb[0].mxu0
    %v8075 = vpop.f32.mrb[0].mxu0
    %v8076 = vadd.f32 %v7979, %v8075
    %v8077 = vpop.f32.mrb[0].mxu0
    %8078 = vmatprep.mubr.bf16.mxu0 %v7498
    %8079 = vmatmul.mubr.bf16.gmra.mrb[0].mxu0 %v7497
    %v8080 = vpop.f32.mrb[0].mxu0
    %v8081 = vadd.f32 %v7984, %v8080
    %v8082 = vpop.f32.mrb[0].mxu0
    %v8083 = vpop.f32.mrb[0].mxu0
    %v8084 = vadd.f32 %v7987, %v8083
    %v8085 = vpop.f32.mrb[0].mxu0
    %8086 = vmatprep.mubr.bf16.mxu0 %v7508
    %8087 = vmatmul.mubr.bf16.gmra.mrb[0].mxu0 %v7507
    %v8088 = vpop.f32.mrb[0].mxu0
    %v8089 = vadd.f32 %v7992, %v8088
    %v8090 = vpop.f32.mrb[0].mxu0
    %v8091 = vpop.f32.mrb[0].mxu0
    %v8092 = vadd.f32 %v7995, %v8091
    %v8093 = vpop.f32.mrb[0].mxu0
    %8094 = vmatprep.mubr.bf16.mxu0 %v7518
    %8095 = vmatmul.mubr.bf16.gmra.mrb[0].mxu0 %v7517
    %v8096 = vpop.f32.mrb[0].mxu0
    %v8097 = vadd.f32 %v8000, %v8096
    %v8098 = vpop.f32.mrb[0].mxu0
    %v8099 = vpop.f32.mrb[0].mxu0
    %v8100 = vadd.f32 %v8003, %v8099
    %v8101 = vpop.f32.mrb[0].mxu0
    %8102 = vmatprep.mubr.bf16.mxu0 %v7528
    %8103 = vmatmul.mubr.bf16.gmra.mrb[0].mxu0 %v7527
    %v8104 = vpop.f32.mrb[0].mxu0
    %v8105 = vadd.f32 %v8008, %v8104
    %v8106 = vpop.f32.mrb[0].mxu0
    %v8107 = vpop.f32.mrb[0].mxu0
    %v8108 = vadd.f32 %v8011, %v8107
    %v8109 = vpop.f32.mrb[0].mxu0
    %8110 = vmatprep.mubr.bf16.mxu0 %v7538
    %8111 = vmatmul.mubr.bf16.gmra.mrb[0].mxu0 %v7537
    %v8112 = vpop.f32.mrb[0].mxu0
    %v8113 = vadd.f32 %v8016, %v8112
    %v8114 = vpop.f32.mrb[0].mxu0
    %v8115 = vpop.f32.mrb[0].mxu0
    %v8116 = vadd.f32 %v8019, %v8115
    %v8117 = vpop.f32.mrb[0].mxu0
    %8118 = vdwg.mxu0
    %8119 = vst [vmem:[%s7] sm:$0xff] %v8057
    %8120 = vst [vmem:[%s7 + $0x8] sm:$0xff] %v8060
    %8121 = vst [vmem:[%s7 + $0x10] sm:$0xff] %v8065
    %8122 = vst [vmem:[%s7 + $0x18] sm:$0xff] %v8068
    %8123 = vst [vmem:[%s7 + $0x20] sm:$0xff] %v8073
    %8124 = vst [vmem:[%s7 + $0x28] sm:$0xff] %v8076
    %8125 = vst [vmem:[%s7 + $0x30] sm:$0xff] %v8081
    %8126 = vst [vmem:[%s7 + $0x38] sm:$0xff] %v8084
    %8127 = vst [vmem:[%s7 + $0x40] sm:$0xff] %v8089
    %8128 = vst [vmem:[%s7 + $0x48] sm:$0xff] %v8092
    %8129 = vst [vmem:[%s7 + $0x50] sm:$0xff] %v8097
    %8130 = vst [vmem:[%s7 + $0x58] sm:$0xff] %v8100
    %8131 = vst [vmem:[%s7 + $0x60] sm:$0xff] %v8105
    %8132 = vst [vmem:[%s7 + $0x68] sm:$0xff] %v8108
    %8133 = vst [vmem:[%s7 + $0x70] sm:$0xff] %v8113
    %8134 = vst [vmem:[%s7 + $0x78] sm:$0xff] %v8116
    // Predicated region
    $region46: #{bayesian_network_forward.1} parent=1 // pred_check
      _
    $region47: #{bayesian_network_forward.1} parent=1 // pred_check_branch
      %8136 = sbr.rel (0) target = $region49
    $region48: #{bayesian_network_forward.1} parent=1 // pred_region
      _
    $region49: #{bayesian_network_forward.1} parent=1 // pred_fallthru
      _
    // Predicated region
    $region50: #{bayesian_network_forward.1} parent=1 // pred_check
      _
    $region51: #{bayesian_network_forward.1} parent=1 // pred_check_branch
      %8138 = sbr.rel (0) target = $region53
    $region52: #{bayesian_network_forward.1} parent=1 // pred_region
      _
    $region53: #{bayesian_network_forward.1} parent=1 // pred_fallthru
      _
    %8139 = vsyncpa [#allocation7], 1
    %8140 = vsyncpa [#allocation9], 1
  %8141 = vsyncmov [#allocation5]
  %s8142 = vpop.sfrf %8141
  %p8143 = scmp.eq.s32.totalorder %s8142, 0
  %p8144 = pneg %p8143
  %8146 = shalt.err (%p8144)
  %s8147 = scalar_lea.sflag [#allocation5], 1
  %8148 = vsyncmov %s8147
  %s8149 = vpop.sfrf %8148
  %p8150 = scmp.eq.s32.totalorder %s8149, 0
  %p8151 = pneg %p8150
  %8153 = shalt.err (%p8151)
  %s8154 = scalar_lea.sflag [#allocation5], 2
  %8155 = vsyncmov %s8154
  %s8156 = vpop.sfrf %8155
  %p8157 = scmp.eq.s32.totalorder %s8156, 0
  %p8158 = pneg %p8157
  %8160 = shalt.err (%p8158)

</llo_original>
